<compile_context>
chip_gen: v7x
topology: tpu7x:2x2x1
jax: 0.10.0
libtpu: 0.0.40
codegen_flags: <defaults>
</compile_context>

<pallas_src>
import functools
import math

import jax
import jax.numpy as jnp
from jax.experimental import pallas as pl
from jax.experimental.pallas import tpu as pltpu

# ----------------------------------------------------------------------------
# Config (small, self-consistent sizes)
# ----------------------------------------------------------------------------
CFG = dict(
    win=160,            # analysis window / hop (non-overlapping frames)
    hop=160,
    fft_bins=128,       # "rfft" bins used for the power spectrum
    n_mels=64,
    conformer_size=128,
    ff_dim=256,
    num_heads=4,
    conv_kernel=7,
    num_layers=2,
    label_target_size=15,   # -> vocab = label_target_size + 1 = 16
)
CFG["vocab"] = CFG["label_target_size"] + 1
CFG["vocab_pad"] = 128                      # lane-dense padded output dim
CFG["head_dim"] = CFG["conformer_size"] // CFG["num_heads"]

_LN_EPS = 1e-5

# ordering of the per-block weight refs (kernel signature must match)
BLOCK_KEYS = [
    "ff1_g", "ff1_b", "ff1_w1", "ff1_b1", "ff1_w2", "ff1_b2",
    "att_g", "att_b", "att_wqkv", "att_bqkv", "att_wo", "att_bo",
    "cv_g", "cv_b", "cv_pw1_w", "cv_pw1_b", "cv_dw_w", "cv_dw_b",
    "cv_nm_g", "cv_nm_b", "cv_pw2_w", "cv_pw2_b",
    "ff2_g", "ff2_b", "ff2_w1", "ff2_b1", "ff2_w2", "ff2_b2",
    "fin_g", "fin_b",
]


# ----------------------------------------------------------------------------
# helpers
# ----------------------------------------------------------------------------
def _row_tile(n):
    for t in (512, 256, 128, 64, 32, 16, 8):
        if n >= t and n % t == 0:
            return t
    return n


def _parallel(n_axes=1):
    return pltpu.CompilerParams(dimension_semantics=("parallel",) * n_axes)


# ---- in-kernel math helpers (traced inside the kernels) ----
def _ln(x, g_ref, b_ref):
    mu = jnp.mean(x, axis=-1, keepdims=True)
    xc = x - mu
    var = jnp.mean(xc * xc, axis=-1, keepdims=True)
    return xc * jax.lax.rsqrt(var + _LN_EPS) * g_ref[...] + b_ref[...]


def _mm(x, w_ref, b_ref):
    """bf16 MXU operands, f32 accumulation, f32 bias add."""
    return jnp.dot(x.astype(jnp.bfloat16), w_ref[...],
                   preferred_element_type=jnp.float32) + b_ref[...]


def _silu(x):
    return x * jax.nn.sigmoid(x)


# ----------------------------------------------------------------------------
# Pallas kernels
# ----------------------------------------------------------------------------
def _logmel_kernel(fr_ref, dft_ref, mel_ref, o_ref, *, F):
    fr = fr_ref[0].astype(jnp.bfloat16)                               # [Tf, W]
    spec = jnp.dot(fr, dft_ref[...], preferred_element_type=jnp.float32)  # [Tf, 2F]
    re = spec[:, :F]
    im = spec[:, F:]
    power = re * re + im * im                                         # [Tf, F] f32
    mel = jnp.dot(power.astype(jnp.bfloat16), mel_ref[...],
                  preferred_element_type=jnp.float32)                 # [Tf, M]
    o_ref[0] = jnp.log(mel + 1e-10)


def logmel(frames, dft, mel_fb):
    """frames: [B, Tf, W] -> [B, Tf, n_mels].  DFT real|imag fused into one dot."""
    B, Tf, W = frames.shape
    F = dft.shape[1] // 2
    M = mel_fb.shape[1]
    return pl.pallas_call(
        functools.partial(_logmel_kernel, F=F),
        grid=(B,),
        in_specs=[pl.BlockSpec((1, Tf, W), lambda b: (b, 0, 0)),
                  pl.BlockSpec(dft.shape, lambda b: (0, 0)),
                  pl.BlockSpec(mel_fb.shape, lambda b: (0, 0))],
        out_specs=pl.BlockSpec((1, Tf, M), lambda b: (b, 0, 0)),
        out_shape=jax.ShapeDtypeStruct((B, Tf, M), jnp.float32),
        compiler_params=_parallel(),
    )(frames, dft, mel_fb)


def _frontend_kernel(x_ref, w_ref, b_ref, o_ref):
    y = _mm(x_ref[...], w_ref, b_ref)
    o_ref[...] = jnp.maximum(y, 0.0)


def frontend_linear(x, w, b):
    """x: [N, 2M] -> ReLU(x @ w + b): [N, D]; row-tiled parallel grid."""
    N, _ = x.shape
    Dout = w.shape[1]
    rt = _row_tile(N)
    return pl.pallas_call(
        _frontend_kernel,
        grid=(N // rt,),
        in_specs=[pl.BlockSpec((rt, x.shape[1]), lambda i: (i, 0)),
                  pl.BlockSpec(w.shape, lambda i: (0, 0)),
                  pl.BlockSpec(b.shape, lambda i: (0, 0))],
        out_specs=pl.BlockSpec((rt, Dout), lambda i: (i, 0)),
        out_shape=jax.ShapeDtypeStruct((N, Dout), jnp.float32),
        compiler_params=_parallel(),
    )(x, w, b)


def _output_kernel(x_ref, w_ref, b_ref, logits_ref, lp_ref):
    logits = _mm(x_ref[...], w_ref, b_ref)          # [rt, Vp]; pad cols biased -1e30
    logits_ref[...] = logits
    z = logits - jnp.max(logits, axis=-1, keepdims=True)
    lp_ref[...] = z - jnp.log(jnp.sum(jnp.exp(z), axis=-1, keepdims=True))


def output_head(x, w, b):
    """Fused output linear + log_softmax over a lane-dense padded vocab."""
    N, _ = x.shape
    Vp = w.shape[1]
    rt = _row_tile(N)
    return pl.pallas_call(
        _output_kernel,
        grid=(N // rt,),
        in_specs=[pl.BlockSpec((rt, x.shape[1]), lambda i: (i, 0)),
                  pl.BlockSpec(w.shape, lambda i: (0, 0)),
                  pl.BlockSpec(b.shape, lambda i: (0, 0))],
        out_specs=(pl.BlockSpec((rt, Vp), lambda i: (i, 0)),
                   pl.BlockSpec((rt, Vp), lambda i: (i, 0))),
        out_shape=(jax.ShapeDtypeStruct((N, Vp), jnp.float32),
                   jax.ShapeDtypeStruct((N, Vp), jnp.float32)),
        compiler_params=_parallel(),
    )(x, w, b)


def _conformer_block_kernel(
        x_ref, mrow_ref, mcol_ref,
        ff1_g, ff1_b, ff1_w1, ff1_b1, ff1_w2, ff1_b2,
        att_g, att_b, att_wqkv, att_bqkv, att_wo, att_bo,
        cv_g, cv_b, cv_pw1_w, cv_pw1_b, cv_dw_w, cv_dw_b,
        cv_nm_g, cv_nm_b, cv_pw2_w, cv_pw2_b,
        ff2_g, ff2_b, ff2_w1, ff2_b1, ff2_w2, ff2_b2,
        fin_g, fin_b,
        o_ref, *, nh, dh, K):
    x = x_ref[0]                       # [T, D] f32
    mrow = mrow_ref[0]                 # [T, 1] f32  (1 = valid frame)
    mcol = mcol_ref[0]                 # [1, T] f32  (key mask)
    T, D = x.shape

    # ---------------- 0.5 * FF1 ----------------
    y = _ln(x, ff1_g, ff1_b)
    y = _silu(_mm(y, ff1_w1, ff1_b1))
    y = _mm(y, ff1_w2, ff1_b2)
    x = x + 0.5 * y

    # ---------------- MHSA ----------------
    y = _ln(x, att_g, att_b)
    qkv = _mm(y, att_wqkv, att_bqkv)                 # [T, 3D]
    q = qkv[:, :D]
    k = qkv[:, D:2 * D]
    v = qkv[:, 2 * D:]
    scale = 1.0 / math.sqrt(dh)
    lane = jax.lax.broadcasted_iota(jnp.int32, (1, D), 1)
    qb = q.astype(jnp.bfloat16)
    att = jnp.zeros((T, D), jnp.float32)
    for h in range(nh):
        # lane-dense per-head handling: zero other heads' lanes instead of
        # taking 32-lane slices; full K=D dots keep everything 128-aligned.
        hm = jnp.where((lane >= h * dh) & (lane < (h + 1) * dh), 1.0, 0.0)  # [1, D]
        kh = (k * hm).astype(jnp.bfloat16)
        s = jax.lax.dot_general(qb, kh, (((1,), (1,)), ((), ())),
                                preferred_element_type=jnp.float32) * scale  # [T, T]
        s = jnp.where(mcol > 0.5, s, jnp.float32(-1e30))
        s = s - jnp.max(s, axis=-1, keepdims=True)
        e = jnp.exp(s)
        p = e * pl.reciprocal(jnp.sum(e, axis=-1, keepdims=True), approx=True)
        vh = (v * hm).astype(jnp.bfloat16)
        att = att + jnp.dot(p.astype(jnp.bfloat16), vh,
                            preferred_element_type=jnp.float32)
    att = _mm(att, att_wo, att_bo)
    att = att * mrow                                   # zero padded query rows
    x = x + att

    # ---------------- Conv module ----------------
    y = _ln(x, cv_g, cv_b)
    y = _mm(y, cv_pw1_w, cv_pw1_b)                     # [T, 2D]
    glu = y[:, :D] * jax.nn.sigmoid(y[:, D:])          # GLU (aligned lane halves)
    glu = glu * mrow                                   # mask padding before temporal conv
    pad = (K - 1) // 2
    zrow = jnp.zeros((pad, D), jnp.float32)
    yp = jnp.concatenate([zrow, glu, zrow], axis=0)    # [T + K - 1, D] (in VMEM/vregs)
    dw = cv_dw_w[...]                                  # [8, D] f32 (rows >= K are zero)
    acc = jnp.zeros((T, D), jnp.float32) + cv_dw_b[...]
    for kk in range(K):
        acc = acc + yp[kk:kk + T, :] * dw[kk:kk + 1, :]
    y = _ln(acc, cv_nm_g, cv_nm_b)                     # LayerNormNC == LN over channels
    y = _silu(y)
    y = _mm(y, cv_pw2_w, cv_pw2_b)
    x = x + y

    # ---------------- 0.5 * FF2 ----------------
    y = _ln(x, ff2_g, ff2_b)
    y = _silu(_mm(y, ff2_w1, ff2_b1))
    y = _mm(y, ff2_w2, ff2_b2)
    x = x + 0.5 * y

    # ---------------- final LayerNorm ----------------
    o_ref[0] = _ln(x, fin_g, fin_b)


def conformer_block(x, mrow, mcol, blk):
    """One fused conformer block. Grid over batch; weights resident in VMEM."""
    B, T, D = x.shape
    args = [blk[key] for key in BLOCK_KEYS]
    in_specs = ([pl.BlockSpec((1, T, D), lambda b: (b, 0, 0)),
                 pl.BlockSpec((1, T, 1), lambda b: (b, 0, 0)),
                 pl.BlockSpec((1, 1, T), lambda b: (b, 0, 0))]
                + [pl.BlockSpec(a.shape, lambda b, nd=a.ndim: (0,) * nd)
                   for a in args])
    return pl.pallas_call(
        functools.partial(_conformer_block_kernel, nh=CFG["num_heads"],
                          dh=CFG["head_dim"], K=CFG["conv_kernel"]),
        grid=(B,),
        in_specs=in_specs,
        out_specs=pl.BlockSpec((1, T, D), lambda b: (b, 0, 0)),
        out_shape=jax.ShapeDtypeStruct((B, T, D), jnp.float32),
        compiler_params=_parallel(),
    )(x, mrow, mcol, *args)


# ----------------------------------------------------------------------------
# Parameter init (deterministic, in-script); matmul weights stored in bf16
# ----------------------------------------------------------------------------
def _dense(key, din, dout):
    w = (jax.random.normal(key, (din, dout), jnp.float32) / math.sqrt(din)
         ).astype(jnp.bfloat16)
    b = jnp.zeros((1, dout), jnp.float32)
    return w, b


def _block_params(key, d, ff, K):
    ks = jax.random.split(key, 9)
    ones = jnp.ones((1, d), jnp.float32)
    zeros = jnp.zeros((1, d), jnp.float32)
    ff1_w1, ff1_b1 = _dense(ks[0], d, ff)
    ff1_w2, ff1_b2 = _dense(ks[1], ff, d)
    wqkv, bqkv = _dense(ks[2], d, 3 * d)         # fused Q|K|V projection
    wo, bo = _dense(ks[3], d, d)
    pw1_w, pw1_b = _dense(ks[4], d, 2 * d)
    pw2_w, pw2_b = _dense(ks[5], d, d)
    dw = jax.random.normal(ks[6], (K, d), jnp.float32) / math.sqrt(K)
    dw = jnp.concatenate([dw, jnp.zeros((8 - K, d), jnp.float32)], axis=0)  # pad to 8 rows
    ff2_w1, ff2_b1 = _dense(ks[7], d, ff)
    ff2_w2, ff2_b2 = _dense(ks[8], ff, d)
    return {
        "ff1_g": ones, "ff1_b": zeros, "ff1_w1": ff1_w1, "ff1_b1": ff1_b1,
        "ff1_w2": ff1_w2, "ff1_b2": ff1_b2,
        "att_g": ones, "att_b": zeros, "att_wqkv": wqkv, "att_bqkv": bqkv,
        "att_wo": wo, "att_bo": bo,
        "cv_g": ones, "cv_b": zeros, "cv_pw1_w": pw1_w, "cv_pw1_b": pw1_b,
        "cv_dw_w": dw, "cv_dw_b": zeros, "cv_nm_g": ones, "cv_nm_b": zeros,
        "cv_pw2_w": pw2_w, "cv_pw2_b": pw2_b,
        "ff2_g": ones, "ff2_b": zeros, "ff2_w1": ff2_w1, "ff2_b1": ff2_b1,
        "ff2_w2": ff2_w2, "ff2_b2": ff2_b2,
        "fin_g": ones, "fin_b": zeros,
    }


def init_params(key):
    d = CFG["conformer_size"]
    ff = CFG["ff_dim"]
    K = CFG["conv_kernel"]
    V, Vp = CFG["vocab"], CFG["vocab_pad"]
    M = CFG["n_mels"]
    W = CFG["win"]
    F = CFG["fft_bins"]

    keys = iter(jax.random.split(key, 16))
    params = {}

    # ---- fixed log-mel analysis basis (deterministic, not learned) ----
    n = jnp.arange(W, dtype=jnp.float32)
    window = 0.5 - 0.5 * jnp.cos(2.0 * jnp.pi * n / W)               # Hann
    kf = jnp.arange(F, dtype=jnp.float32)
    ang = 2.0 * jnp.pi * n[:, None] * kf[None, :] / (2.0 * F)
    dft_real = window[:, None] * jnp.cos(ang)                        # [W, F]
    dft_imag = -window[:, None] * jnp.sin(ang)                       # [W, F]
    params["dft"] = jnp.concatenate([dft_real, dft_imag],
                                    axis=1).astype(jnp.bfloat16)     # [W, 2F]
    centers = jnp.linspace(0.0, F - 1.0, M + 2)
    fb = jnp.arange(F, dtype=jnp.float32)[:, None]
    left, cen, right = centers[:-2][None, :], centers[1:-1][None, :], centers[2:][None, :]
    up = (fb - left) / jnp.maximum(cen - left, 1e-6)
    down = (right - fb) / jnp.maximum(right - cen, 1e-6)
    params["mel_fb"] = jnp.maximum(0.0, jnp.minimum(up, down)).astype(jnp.bfloat16)  # [F, M]

    # ---- frontend (simplified VGG4LayerActFrontendV1): stack2 + Linear + ReLU ----
    fw, fb_ = _dense(next(keys), 2 * M, d)
    params["frontend_w"], params["frontend_b"] = fw, fb_

    # ---- conformer blocks ----
    params["blocks"] = [_block_params(next(keys), d, ff, K)
                        for _ in range(CFG["num_layers"])]

    # ---- output linear (single head, vocab padded to 128 lanes) ----
    ow = jax.random.normal(next(keys), (d, V), jnp.float32) / math.sqrt(d)
    params["out_w"] = jnp.concatenate(
        [ow, jnp.zeros((d, Vp - V), jnp.float32)], axis=1).astype(jnp.bfloat16)
    params["out_b"] = jnp.concatenate(
        [jnp.zeros((1, V), jnp.float32),
         jnp.full((1, Vp - V), -1e30, jnp.float32)], axis=1)
    return params


# ----------------------------------------------------------------------------
# Model forward (Model.forward, eval path)
# ----------------------------------------------------------------------------
@jax.jit
def forward(params, raw_audio, raw_audio_len):
    B, Traw, _ = raw_audio.shape
    win, hop, M = CFG["win"], CFG["hop"], CFG["n_mels"]
    d = CFG["conformer_size"]
    V, Vp = CFG["vocab"], CFG["vocab_pad"]

    # squeeze [B, T, 1] -> [B, T]
    squeezed = raw_audio[..., 0]

    # --- feature_extraction (LogMelFeatureExtractionV1, simplified basis) ---
    Tf = Traw // win
    frames = squeezed[:, :Tf * win].reshape(B, Tf, win)
    audio_features = logmel(frames, params["dft"], params["mel_fb"])  # [B, Tf, M]
    audio_features_len = jnp.minimum(raw_audio_len // hop, Tf)

    # --- mask_tensor ---
    mask = jnp.arange(Tf)[None, :] < audio_features_len[:, None]      # [B, Tf]

    # --- conformer frontend: stack-2 subsample + Linear + ReLU ---
    Tc = Tf // 2
    feat2 = audio_features.reshape(B, Tc, 2 * M)
    x = frontend_linear(feat2.reshape(B * Tc, 2 * M),
                        params["frontend_w"],
                        params["frontend_b"]).reshape(B, Tc, d)
    out_mask = mask[:, ::2]                                           # [B, Tc]
    mrow = out_mask.astype(jnp.float32)[:, :, None]                   # [B, Tc, 1]
    mcol = out_mask.astype(jnp.float32)[:, None, :]                   # [B, 1, Tc]

    # --- conformer blocks (one fused pallas_call each) ---
    for blk in params["blocks"]:
        x = conformer_block(x, mrow, mcol, blk)
    conformer_out = x                                                 # last layer only

    # --- fused output linear + log_softmax (dropout is identity in eval) ---
    logits_p, log_probs_p = output_head(conformer_out.reshape(B * Tc, d),
                                        params["out_w"], params["out_b"])
    logits = logits_p.reshape(B, Tc, Vp)[:, :, :V]
    log_probs = log_probs_p.reshape(B, Tc, Vp)[:, :, :V]

    lengths = jnp.sum(out_mask.astype(jnp.int32), axis=1)
    teacher_logits = None   # training-only branch not executed in eval
    return log_probs, lengths, logits, teacher_logits


# ----------------------------------------------------------------------------
if __name__ == "__main__":
    key = jax.random.PRNGKey(0)
    k_param, k_audio = jax.random.split(key)

    params = init_params(k_param)

    B = 2
    Traw = CFG["win"] * 16          # 2560 samples -> 16 frames -> 8 conformer steps
    raw_audio = jax.random.normal(k_audio, (B, Traw, 1), jnp.float32)
    raw_audio_len = jnp.array([Traw, 2000], dtype=jnp.int32)

    log_probs, lengths, logits, teacher_logits = forward(params, raw_audio, raw_audio_len)
    jax.block_until_ready((log_probs, lengths, logits))

    assert log_probs.shape == (B, 8, CFG["vocab"])
    assert logits.shape == (B, 8, CFG["vocab"])
    assert lengths.shape == (B,)
    assert teacher_logits is None
    print("KERNEL_OK")
</pallas_src>

<mosaic_0001>
module attributes {stable_mosaic.version = 11 : i64} {
  func.func @_logmel_kernel(%arg0: i32, %arg1: memref<1x16x160xf32, #tpu.memory_space<vmem>>, %arg2: memref<160x256xbf16, #tpu.memory_space<vmem>>, %arg3: memref<128x64xbf16, #tpu.memory_space<vmem>>, %arg4: memref<1x16x64xf32, #tpu.memory_space<vmem>>) attributes {dimension_semantics = [#tpu.dimension_semantics<parallel>], iteration_bounds = array<i64: 2>, scalar_prefetch = 0 : i64, scratch_operands = 0 : i64, tpu.core_type = #tpu.core_type<tc>, window_params = [{transform_indices = @transform_0, window_bounds = array<i64: 1, 16, 160>}, {pipeline_mode = #tpu.pipeline_mode<synchronous>, transform_indices = @transform_1, window_bounds = array<i64: 160, 256>}, {pipeline_mode = #tpu.pipeline_mode<synchronous>, transform_indices = @transform_2, window_bounds = array<i64: 128, 64>}, {transform_indices = @transform_3, window_bounds = array<i64: 1, 16, 64>}]} {
    %c0 = arith.constant 0 : index
    %c0_0 = arith.constant 0 : index
    %c0_1 = arith.constant 0 : index
    %0 = vector.load %arg1[%c0, %c0_0, %c0_1] : memref<1x16x160xf32, #tpu.memory_space<vmem>>, vector<1x16x160xf32>
    %1 = vector.shape_cast %0 : vector<1x16x160xf32> to vector<16x160xf32>
    %2 = arith.truncf %1 : vector<16x160xf32> to vector<16x160xbf16>
    %c0_2 = arith.constant 0 : index
    %c0_3 = arith.constant 0 : index
    %3 = vector.load %arg2[%c0_2, %c0_3] : memref<160x256xbf16, #tpu.memory_space<vmem>>, vector<160x256xbf16>
    %cst = arith.constant dense<0.000000e+00> : vector<16x256xf32>
    %4 = tpu.matmul %2, %3, %cst {dimension_numbers = #tpu.dot_dimension_numbers<[1], [0], [0], [1], [0, 0, 1, 1], [], []>} : vector<16x160xbf16>, vector<160x256xbf16>, vector<16x256xf32> -> vector<16x256xf32>
    %5 = vector.extract_strided_slice %4 {offsets = [0, 0], sizes = [16, 128], strides = [1, 1]} : vector<16x256xf32> to vector<16x128xf32>
    %6 = vector.extract_strided_slice %4 {offsets = [0, 128], sizes = [16, 128], strides = [1, 1]} : vector<16x256xf32> to vector<16x128xf32>
    %7 = arith.mulf %5, %5 : vector<16x128xf32>
    %8 = arith.mulf %6, %6 : vector<16x128xf32>
    %9 = arith.addf %7, %8 : vector<16x128xf32>
    %10 = arith.truncf %9 : vector<16x128xf32> to vector<16x128xbf16>
    %c0_4 = arith.constant 0 : index
    %c0_5 = arith.constant 0 : index
    %11 = vector.load %arg3[%c0_4, %c0_5] : memref<128x64xbf16, #tpu.memory_space<vmem>>, vector<128x64xbf16>
    %cst_6 = arith.constant dense<0.000000e+00> : vector<16x64xf32>
    %12 = tpu.matmul %10, %11, %cst_6 {dimension_numbers = #tpu.dot_dimension_numbers<[1], [0], [0], [1], [0, 0, 1, 1], [], []>} : vector<16x128xbf16>, vector<128x64xbf16>, vector<16x64xf32> -> vector<16x64xf32>
    %cst_7 = arith.constant 1.000000e-10 : f32
    %13 = vector.broadcast %cst_7 : f32 to vector<16x64xf32>
    %14 = arith.addf %12, %13 : vector<16x64xf32>
    %15 = math.log %14 : vector<16x64xf32>
    %c0_8 = arith.constant 0 : index
    %c0_9 = arith.constant 0 : index
    %c0_10 = arith.constant 0 : index
    %16 = vector.load %arg4[%c0_8, %c0_9, %c0_10] : memref<1x16x64xf32, #tpu.memory_space<vmem>>, vector<1x16x64xf32>
    %17 = vector.shape_cast %16 : vector<1x16x64xf32> to vector<16x64xf32>
    %18 = vector.shape_cast %15 : vector<16x64xf32> to vector<1x16x64xf32>
    tpu.vector_store %arg4[%c0_8, %c0_9, %c0_10], %18 {strides = array<i32>} : memref<1x16x64xf32, #tpu.memory_space<vmem>>, vector<1x16x64xf32>,
    return
  }
  func.func @transform_0(%arg0: i32) -> (i32, i32, i32) {
    %c0_i32 = arith.constant 0 : i32
    %c0_i32_0 = arith.constant 0 : i32
    %c0_i32_1 = arith.constant 0 : i32
    return %arg0, %c0_i32, %c0_i32_0 : i32, i32, i32
  }
  func.func @transform_1(%arg0: i32) -> (i32, i32) {
    %c0_i32 = arith.constant 0 : i32
    %c0_i32_0 = arith.constant 0 : i32
    %c0_i32_1 = arith.constant 0 : i32
    return %c0_i32, %c0_i32_0 : i32, i32
  }
  func.func @transform_2(%arg0: i32) -> (i32, i32) {
    %c0_i32 = arith.constant 0 : i32
    %c0_i32_0 = arith.constant 0 : i32
    %c0_i32_1 = arith.constant 0 : i32
    return %c0_i32, %c0_i32_0 : i32, i32
  }
  func.func @transform_3(%arg0: i32) -> (i32, i32, i32) {
    %c0_i32 = arith.constant 0 : i32
    %c0_i32_0 = arith.constant 0 : i32
    %c0_i32_1 = arith.constant 0 : i32
    return %arg0, %c0_i32, %c0_i32_0 : i32, i32, i32
  }
}

module attributes {stable_mosaic.version = 11 : i64} {
  func.func @_frontend_kernel(%arg0: i32, %arg1: memref<16x128xf32, #tpu.memory_space<vmem>>, %arg2: memref<128x128xbf16, #tpu.memory_space<vmem>>, %arg3: memref<1x128xf32, #tpu.memory_space<vmem>>, %arg4: memref<16x128xf32, #tpu.memory_space<vmem>>) attributes {dimension_semantics = [#tpu.dimension_semantics<parallel>], iteration_bounds = array<i64: 1>, scalar_prefetch = 0 : i64, scratch_operands = 0 : i64, tpu.core_type = #tpu.core_type<tc>, window_params = [{transform_indices = @transform_0, window_bounds = array<i64: 16, 128>}, {pipeline_mode = #tpu.pipeline_mode<synchronous>, transform_indices = @transform_1, window_bounds = array<i64: 128, 128>}, {pipeline_mode = #tpu.pipeline_mode<synchronous>, transform_indices = @transform_2, window_bounds = array<i64: 1, 128>}, {transform_indices = @transform_3, window_bounds = array<i64: 16, 128>}]} {
    %c0 = arith.constant 0 : index
    %c0_0 = arith.constant 0 : index
    %0 = vector.load %arg1[%c0, %c0_0] : memref<16x128xf32, #tpu.memory_space<vmem>>, vector<16x128xf32>
    %1 = arith.truncf %0 : vector<16x128xf32> to vector<16x128xbf16>
    %c0_1 = arith.constant 0 : index
    %c0_2 = arith.constant 0 : index
    %2 = vector.load %arg2[%c0_1, %c0_2] : memref<128x128xbf16, #tpu.memory_space<vmem>>, vector<128x128xbf16>
    %cst = arith.constant dense<0.000000e+00> : vector<16x128xf32>
    %3 = tpu.matmul %1, %2, %cst {dimension_numbers = #tpu.dot_dimension_numbers<[1], [0], [0], [1], [0, 0, 1, 1], [], []>} : vector<16x128xbf16>, vector<128x128xbf16>, vector<16x128xf32> -> vector<16x128xf32>
    %c0_3 = arith.constant 0 : index
    %c0_4 = arith.constant 0 : index
    %4 = vector.load %arg3[%c0_3, %c0_4] : memref<1x128xf32, #tpu.memory_space<vmem>>, vector<1x128xf32>
    %5 = vector.broadcast %4 : vector<1x128xf32> to vector<16x128xf32>
    %6 = arith.addf %3, %5 : vector<16x128xf32>
    %cst_5 = arith.constant 0.000000e+00 : f32
    %7 = vector.broadcast %cst_5 : f32 to vector<16x128xf32>
    %8 = arith.maximumf %6, %7 : vector<16x128xf32>
    %c0_6 = arith.constant 0 : index
    %c0_7 = arith.constant 0 : index
    %9 = vector.load %arg4[%c0_6, %c0_7] : memref<16x128xf32, #tpu.memory_space<vmem>>, vector<16x128xf32>
    tpu.vector_store %arg4[%c0_6, %c0_7], %8 {strides = array<i32>} : memref<16x128xf32, #tpu.memory_space<vmem>>, vector<16x128xf32>,
    return
  }
  func.func @transform_0(%arg0: i32) -> (i32, i32) {
    %c0_i32 = arith.constant 0 : i32
    %c0_i32_0 = arith.constant 0 : i32
    return %arg0, %c0_i32 : i32, i32
  }
  func.func @transform_1(%arg0: i32) -> (i32, i32) {
    %c0_i32 = arith.constant 0 : i32
    %c0_i32_0 = arith.constant 0 : i32
    %c0_i32_1 = arith.constant 0 : i32
    return %c0_i32, %c0_i32_0 : i32, i32
  }
  func.func @transform_2(%arg0: i32) -> (i32, i32) {
    %c0_i32 = arith.constant 0 : i32
    %c0_i32_0 = arith.constant 0 : i32
    %c0_i32_1 = arith.constant 0 : i32
    return %c0_i32, %c0_i32_0 : i32, i32
  }
  func.func @transform_3(%arg0: i32) -> (i32, i32) {
    %c0_i32 = arith.constant 0 : i32
    %c0_i32_0 = arith.constant 0 : i32
    return %arg0, %c0_i32 : i32, i32
  }
}

module attributes {stable_mosaic.version = 11 : i64} {
  func.func @_conformer_block_kernel(%arg0: i32, %arg1: memref<1x8x128xf32, #tpu.memory_space<vmem>>, %arg2: memref<1x8x1xf32, #tpu.memory_space<vmem>>, %arg3: memref<1x1x8xf32, #tpu.memory_space<vmem>>, %arg4: memref<1x128xf32, #tpu.memory_space<vmem>>, %arg5: memref<1x128xf32, #tpu.memory_space<vmem>>, %arg6: memref<128x256xbf16, #tpu.memory_space<vmem>>, %arg7: memref<1x256xf32, #tpu.memory_space<vmem>>, %arg8: memref<256x128xbf16, #tpu.memory_space<vmem>>, %arg9: memref<1x128xf32, #tpu.memory_space<vmem>>, %arg10: memref<1x128xf32, #tpu.memory_space<vmem>>, %arg11: memref<1x128xf32, #tpu.memory_space<vmem>>, %arg12: memref<128x384xbf16, #tpu.memory_space<vmem>>, %arg13: memref<1x384xf32, #tpu.memory_space<vmem>>, %arg14: memref<128x128xbf16, #tpu.memory_space<vmem>>, %arg15: memref<1x128xf32, #tpu.memory_space<vmem>>, %arg16: memref<1x128xf32, #tpu.memory_space<vmem>>, %arg17: memref<1x128xf32, #tpu.memory_space<vmem>>, %arg18: memref<128x256xbf16, #tpu.memory_space<vmem>>, %arg19: memref<1x256xf32, #tpu.memory_space<vmem>>, %arg20: memref<8x128xf32, #tpu.memory_space<vmem>>, %arg21: memref<1x128xf32, #tpu.memory_space<vmem>>, %arg22: memref<1x128xf32, #tpu.memory_space<vmem>>, %arg23: memref<1x128xf32, #tpu.memory_space<vmem>>, %arg24: memref<128x128xbf16, #tpu.memory_space<vmem>>, %arg25: memref<1x128xf32, #tpu.memory_space<vmem>>, %arg26: memref<1x128xf32, #tpu.memory_space<vmem>>, %arg27: memref<1x128xf32, #tpu.memory_space<vmem>>, %arg28: memref<128x256xbf16, #tpu.memory_space<vmem>>, %arg29: memref<1x256xf32, #tpu.memory_space<vmem>>, %arg30: memref<256x128xbf16, #tpu.memory_space<vmem>>, %arg31: memref<1x128xf32, #tpu.memory_space<vmem>>, %arg32: memref<1x128xf32, #tpu.memory_space<vmem>>, %arg33: memref<1x128xf32, #tpu.memory_space<vmem>>, %arg34: memref<1x8x128xf32, #tpu.memory_space<vmem>>) attributes {dimension_semantics = [#tpu.dimension_semantics<parallel>], iteration_bounds = array<i64: 2>, scalar_prefetch = 0 : i64, scratch_operands = 0 : i64, tpu.core_type = #tpu.core_type<tc>, window_params = [{transform_indices = @transform_0, window_bounds = array<i64: 1, 8, 128>}, {transform_indices = @transform_1, window_bounds = array<i64: 1, 8, 1>}, {transform_indices = @transform_2, window_bounds = array<i64: 1, 1, 8>}, {pipeline_mode = #tpu.pipeline_mode<synchronous>, transform_indices = @transform_3, window_bounds = array<i64: 1, 128>}, {pipeline_mode = #tpu.pipeline_mode<synchronous>, transform_indices = @transform_4, window_bounds = array<i64: 1, 128>}, {pipeline_mode = #tpu.pipeline_mode<synchronous>, transform_indices = @transform_5, window_bounds = array<i64: 128, 256>}, {pipeline_mode = #tpu.pipeline_mode<synchronous>, transform_indices = @transform_6, window_bounds = array<i64: 1, 256>}, {pipeline_mode = #tpu.pipeline_mode<synchronous>, transform_indices = @transform_7, window_bounds = array<i64: 256, 128>}, {pipeline_mode = #tpu.pipeline_mode<synchronous>, transform_indices = @transform_8, window_bounds = array<i64: 1, 128>}, {pipeline_mode = #tpu.pipeline_mode<synchronous>, transform_indices = @transform_9, window_bounds = array<i64: 1, 128>}, {pipeline_mode = #tpu.pipeline_mode<synchronous>, transform_indices = @transform_10, window_bounds = array<i64: 1, 128>}, {pipeline_mode = #tpu.pipeline_mode<synchronous>, transform_indices = @transform_11, window_bounds = array<i64: 128, 384>}, {pipeline_mode = #tpu.pipeline_mode<synchronous>, transform_indices = @transform_12, window_bounds = array<i64: 1, 384>}, {pipeline_mode = #tpu.pipeline_mode<synchronous>, transform_indices = @transform_13, window_bounds = array<i64: 128, 128>}, {pipeline_mode = #tpu.pipeline_mode<synchronous>, transform_indices = @transform_14, window_bounds = array<i64: 1, 128>}, {pipeline_mode = #tpu.pipeline_mode<synchronous>, transform_indices = @transform_15, window_bounds = array<i64: 1, 128>}, {pipeline_mode = #tpu.pipeline_mode<synchronous>, transform_indices = @transform_16, window_bounds = array<i64: 1, 128>}, {pipeline_mode = #tpu.pipeline_mode<synchronous>, transform_indices = @transform_17, window_bounds = array<i64: 128, 256>}, {pipeline_mode = #tpu.pipeline_mode<synchronous>, transform_indices = @transform_18, window_bounds = array<i64: 1, 256>}, {pipeline_mode = #tpu.pipeline_mode<synchronous>, transform_indices = @transform_19, window_bounds = array<i64: 8, 128>}, {pipeline_mode = #tpu.pipeline_mode<synchronous>, transform_indices = @transform_20, window_bounds = array<i64: 1, 128>}, {pipeline_mode = #tpu.pipeline_mode<synchronous>, transform_indices = @transform_21, window_bounds = array<i64: 1, 128>}, {pipeline_mode = #tpu.pipeline_mode<synchronous>, transform_indices = @transform_22, window_bounds = array<i64: 1, 128>}, {pipeline_mode = #tpu.pipeline_mode<synchronous>, transform_indices = @transform_23, window_bounds = array<i64: 128, 128>}, {pipeline_mode = #tpu.pipeline_mode<synchronous>, transform_indices = @transform_24, window_bounds = array<i64: 1, 128>}, {pipeline_mode = #tpu.pipeline_mode<synchronous>, transform_indices = @transform_25, window_bounds = array<i64: 1, 128>}, {pipeline_mode = #tpu.pipeline_mode<synchronous>, transform_indices = @transform_26, window_bounds = array<i64: 1, 128>}, {pipeline_mode = #tpu.pipeline_mode<synchronous>, transform_indices = @transform_27, window_bounds = array<i64: 128, 256>}, {pipeline_mode = #tpu.pipeline_mode<synchronous>, transform_indices = @transform_28, window_bounds = array<i64: 1, 256>}, {pipeline_mode = #tpu.pipeline_mode<synchronous>, transform_indices = @transform_29, window_bounds = array<i64: 256, 128>}, {pipeline_mode = #tpu.pipeline_mode<synchronous>, transform_indices = @transform_30, window_bounds = array<i64: 1, 128>}, {pipeline_mode = #tpu.pipeline_mode<synchronous>, transform_indices = @transform_31, window_bounds = array<i64: 1, 128>}, {pipeline_mode = #tpu.pipeline_mode<synchronous>, transform_indices = @transform_32, window_bounds = array<i64: 1, 128>}, {transform_indices = @transform_33, window_bounds = array<i64: 1, 8, 128>}]} {
    %c0 = arith.constant 0 : index
    %c0_0 = arith.constant 0 : index
    %c0_1 = arith.constant 0 : index
    %0 = vector.load %arg1[%c0, %c0_0, %c0_1] : memref<1x8x128xf32, #tpu.memory_space<vmem>>, vector<1x8x128xf32>
    %1 = vector.shape_cast %0 : vector<1x8x128xf32> to vector<8x128xf32>
    %c0_2 = arith.constant 0 : index
    %c0_3 = arith.constant 0 : index
    %c0_4 = arith.constant 0 : index
    %2 = vector.load %arg2[%c0_2, %c0_3, %c0_4] : memref<1x8x1xf32, #tpu.memory_space<vmem>>, vector<1x8x1xf32>
    %3 = vector.shape_cast %2 : vector<1x8x1xf32> to vector<8x1xf32>
    %c0_5 = arith.constant 0 : index
    %c0_6 = arith.constant 0 : index
    %c0_7 = arith.constant 0 : index
    %4 = vector.load %arg3[%c0_5, %c0_6, %c0_7] : memref<1x1x8xf32, #tpu.memory_space<vmem>>, vector<1x1x8xf32>
    %5 = vector.shape_cast %4 : vector<1x1x8xf32> to vector<1x8xf32>
    %cst = arith.constant dense<0.000000e+00> : vector<8xf32>
    %6 = vector.multi_reduction <add>, %1, %cst [1] : vector<8x128xf32> to vector<8xf32>
    %7 = vector.shape_cast %6 : vector<8xf32> to vector<8x1xf32>
    %cst_8 = arith.constant 1.280000e+02 : f32
    %8 = vector.broadcast %cst_8 : f32 to vector<8x1xf32>
    %9 = arith.divf %7, %8 : vector<8x1xf32>
    %10 = vector.broadcast %9 : vector<8x1xf32> to vector<8x128xf32>
    %11 = arith.subf %1, %10 : vector<8x128xf32>
    %12 = arith.mulf %11, %11 : vector<8x128xf32>
    %cst_9 = arith.constant dense<0.000000e+00> : vector<8xf32>
    %13 = vector.multi_reduction <add>, %12, %cst_9 [1] : vector<8x128xf32> to vector<8xf32>
    %14 = vector.shape_cast %13 : vector<8xf32> to vector<8x1xf32>
    %cst_10 = arith.constant 1.280000e+02 : f32
    %15 = vector.broadcast %cst_10 : f32 to vector<8x1xf32>
    %16 = arith.divf %14, %15 : vector<8x1xf32>
    %cst_11 = arith.constant 9.99999974E-6 : f32
    %17 = vector.broadcast %cst_11 : f32 to vector<8x1xf32>
    %18 = arith.addf %16, %17 : vector<8x1xf32>
    %19 = math.rsqrt %18 : vector<8x1xf32>
    %20 = vector.broadcast %19 : vector<8x1xf32> to vector<8x128xf32>
    %21 = arith.mulf %11, %20 : vector<8x128xf32>
    %c0_12 = arith.constant 0 : index
    %c0_13 = arith.constant 0 : index
    %22 = vector.load %arg4[%c0_12, %c0_13] : memref<1x128xf32, #tpu.memory_space<vmem>>, vector<1x128xf32>
    %23 = vector.broadcast %22 : vector<1x128xf32> to vector<8x128xf32>
    %24 = arith.mulf %21, %23 : vector<8x128xf32>
    %c0_14 = arith.constant 0 : index
    %c0_15 = arith.constant 0 : index
    %25 = vector.load %arg5[%c0_14, %c0_15] : memref<1x128xf32, #tpu.memory_space<vmem>>, vector<1x128xf32>
    %26 = vector.broadcast %25 : vector<1x128xf32> to vector<8x128xf32>
    %27 = arith.addf %24, %26 : vector<8x128xf32>
    %28 = arith.truncf %27 : vector<8x128xf32> to vector<8x128xbf16>
    %c0_16 = arith.constant 0 : index
    %c0_17 = arith.constant 0 : index
    %29 = vector.load %arg6[%c0_16, %c0_17] : memref<128x256xbf16, #tpu.memory_space<vmem>>, vector<128x256xbf16>
    %cst_18 = arith.constant dense<0.000000e+00> : vector<8x256xf32>
    %30 = tpu.matmul %28, %29, %cst_18 {dimension_numbers = #tpu.dot_dimension_numbers<[1], [0], [0], [1], [0, 0, 1, 1], [], []>} : vector<8x128xbf16>, vector<128x256xbf16>, vector<8x256xf32> -> vector<8x256xf32>
    %c0_19 = arith.constant 0 : index
    %c0_20 = arith.constant 0 : index
    %31 = vector.load %arg7[%c0_19, %c0_20] : memref<1x256xf32, #tpu.memory_space<vmem>>, vector<1x256xf32>
    %32 = vector.broadcast %31 : vector<1x256xf32> to vector<8x256xf32>
    %33 = arith.addf %30, %32 : vector<8x256xf32>
    %34 = arith.negf %33 : vector<8x256xf32>
    %35 = math.exp %34 : vector<8x256xf32>
    %cst_21 = arith.constant 1.000000e+00 : f32
    %36 = vector.broadcast %cst_21 : f32 to vector<8x256xf32>
    %37 = arith.addf %36, %35 : vector<8x256xf32>
    %38 = arith.divf %36, %37 : vector<8x256xf32>
    %39 = arith.mulf %33, %38 : vector<8x256xf32>
    %40 = arith.truncf %39 : vector<8x256xf32> to vector<8x256xbf16>
    %c0_22 = arith.constant 0 : index
    %c0_23 = arith.constant 0 : index
    %41 = vector.load %arg8[%c0_22, %c0_23] : memref<256x128xbf16, #tpu.memory_space<vmem>>, vector<256x128xbf16>
    %cst_24 = arith.constant dense<0.000000e+00> : vector<8x128xf32>
    %42 = tpu.matmul %40, %41, %cst_24 {dimension_numbers = #tpu.dot_dimension_numbers<[1], [0], [0], [1], [0, 0, 1, 1], [], []>} : vector<8x256xbf16>, vector<256x128xbf16>, vector<8x128xf32> -> vector<8x128xf32>
    %c0_25 = arith.constant 0 : index
    %c0_26 = arith.constant 0 : index
    %43 = vector.load %arg9[%c0_25, %c0_26] : memref<1x128xf32, #tpu.memory_space<vmem>>, vector<1x128xf32>
    %44 = vector.broadcast %43 : vector<1x128xf32> to vector<8x128xf32>
    %45 = arith.addf %42, %44 : vector<8x128xf32>
    %cst_27 = arith.constant 5.000000e-01 : f32
    %46 = vector.broadcast %cst_27 : f32 to vector<8x128xf32>
    %47 = arith.mulf %46, %45 : vector<8x128xf32>
    %48 = arith.addf %1, %47 : vector<8x128xf32>
    %cst_28 = arith.constant dense<0.000000e+00> : vector<8xf32>
    %49 = vector.multi_reduction <add>, %48, %cst_28 [1] : vector<8x128xf32> to vector<8xf32>
    %50 = vector.shape_cast %49 : vector<8xf32> to vector<8x1xf32>
    %cst_29 = arith.constant 1.280000e+02 : f32
    %51 = vector.broadcast %cst_29 : f32 to vector<8x1xf32>
    %52 = arith.divf %50, %51 : vector<8x1xf32>
    %53 = vector.broadcast %52 : vector<8x1xf32> to vector<8x128xf32>
    %54 = arith.subf %48, %53 : vector<8x128xf32>
    %55 = arith.mulf %54, %54 : vector<8x128xf32>
    %cst_30 = arith.constant dense<0.000000e+00> : vector<8xf32>
    %56 = vector.multi_reduction <add>, %55, %cst_30 [1] : vector<8x128xf32> to vector<8xf32>
    %57 = vector.shape_cast %56 : vector<8xf32> to vector<8x1xf32>
    %cst_31 = arith.constant 1.280000e+02 : f32
    %58 = vector.broadcast %cst_31 : f32 to vector<8x1xf32>
    %59 = arith.divf %57, %58 : vector<8x1xf32>
    %cst_32 = arith.constant 9.99999974E-6 : f32
    %60 = vector.broadcast %cst_32 : f32 to vector<8x1xf32>
    %61 = arith.addf %59, %60 : vector<8x1xf32>
    %62 = math.rsqrt %61 : vector<8x1xf32>
    %63 = vector.broadcast %62 : vector<8x1xf32> to vector<8x128xf32>
    %64 = arith.mulf %54, %63 : vector<8x128xf32>
    %c0_33 = arith.constant 0 : index
    %c0_34 = arith.constant 0 : index
    %65 = vector.load %arg10[%c0_33, %c0_34] : memref<1x128xf32, #tpu.memory_space<vmem>>, vector<1x128xf32>
    %66 = vector.broadcast %65 : vector<1x128xf32> to vector<8x128xf32>
    %67 = arith.mulf %64, %66 : vector<8x128xf32>
    %c0_35 = arith.constant 0 : index
    %c0_36 = arith.constant 0 : index
    %68 = vector.load %arg11[%c0_35, %c0_36] : memref<1x128xf32, #tpu.memory_space<vmem>>, vector<1x128xf32>
    %69 = vector.broadcast %68 : vector<1x128xf32> to vector<8x128xf32>
    %70 = arith.addf %67, %69 : vector<8x128xf32>
    %71 = arith.truncf %70 : vector<8x128xf32> to vector<8x128xbf16>
    %c0_37 = arith.constant 0 : index
    %c0_38 = arith.constant 0 : index
    %72 = vector.load %arg12[%c0_37, %c0_38] : memref<128x384xbf16, #tpu.memory_space<vmem>>, vector<128x384xbf16>
    %cst_39 = arith.constant dense<0.000000e+00> : vector<8x384xf32>
    %73 = tpu.matmul %71, %72, %cst_39 {dimension_numbers = #tpu.dot_dimension_numbers<[1], [0], [0], [1], [0, 0, 1, 1], [], []>} : vector<8x128xbf16>, vector<128x384xbf16>, vector<8x384xf32> -> vector<8x384xf32>
    %c0_40 = arith.constant 0 : index
    %c0_41 = arith.constant 0 : index
    %74 = vector.load %arg13[%c0_40, %c0_41] : memref<1x384xf32, #tpu.memory_space<vmem>>, vector<1x384xf32>
    %75 = vector.broadcast %74 : vector<1x384xf32> to vector<8x384xf32>
    %76 = arith.addf %73, %75 : vector<8x384xf32>
    %77 = vector.extract_strided_slice %76 {offsets = [0, 0], sizes = [8, 128], strides = [1, 1]} : vector<8x384xf32> to vector<8x128xf32>
    %78 = vector.extract_strided_slice %76 {offsets = [0, 128], sizes = [8, 128], strides = [1, 1]} : vector<8x384xf32> to vector<8x128xf32>
    %79 = vector.extract_strided_slice %76 {offsets = [0, 256], sizes = [8, 128], strides = [1, 1]} : vector<8x384xf32> to vector<8x128xf32>
    %80 = tpu.iota {dimensions = array<i32: 1>} : vector<1x128xi32>
    %81 = arith.truncf %77 : vector<8x128xf32> to vector<8x128xbf16>
    %cst_42 = arith.constant 0.000000e+00 : f32
    %82 = vector.broadcast %cst_42 : f32 to vector<8x128xf32>
    %c0_i32 = arith.constant 0 : i32
    %83 = vector.broadcast %c0_i32 : i32 to vector<1x128xi32>
    %84 = arith.cmpi sge, %80, %83 : vector<1x128xi32>
    %c32_i32 = arith.constant 32 : i32
    %85 = vector.broadcast %c32_i32 : i32 to vector<1x128xi32>
    %86 = arith.cmpi slt, %80, %85 : vector<1x128xi32>
    %87 = arith.andi %84, %86 : vector<1x128xi1>
    %cst_43 = arith.constant 1.000000e+00 : f32
    %cst_44 = arith.constant 0.000000e+00 : f32
    %88 = vector.broadcast %cst_43 : f32 to vector<1x128xf32>
    %89 = vector.broadcast %cst_44 : f32 to vector<1x128xf32>
    %90 = arith.select %87, %88, %89 : vector<1x128xi1>, vector<1x128xf32>
    %91 = vector.broadcast %90 : vector<1x128xf32> to vector<8x128xf32>
    %92 = arith.mulf %78, %91 : vector<8x128xf32>
    %93 = arith.truncf %92 : vector<8x128xf32> to vector<8x128xbf16>
    %cst_45 = arith.constant dense<0.000000e+00> : vector<8x8xf32>
    %94 = tpu.matmul %81, %93, %cst_45 {dimension_numbers = #tpu.dot_dimension_numbers<[1], [1], [0], [0], [0, 0, 1, 0], [], []>} : vector<8x128xbf16>, vector<8x128xbf16>, vector<8x8xf32> -> vector<8x8xf32>
    %cst_46 = arith.constant 0.176776692 : f32
    %95 = vector.broadcast %cst_46 : f32 to vector<8x8xf32>
    %96 = arith.mulf %94, %95 : vector<8x8xf32>
    %cst_47 = arith.constant 5.000000e-01 : f32
    %97 = vector.broadcast %cst_47 : f32 to vector<1x8xf32>
    %98 = arith.cmpf ogt, %5, %97 : vector<1x8xf32>
    %cst_48 = arith.constant -1.000000e+30 : f32
    %99 = vector.shape_cast %98 : vector<1x8xi1> to vector<1x8xi1>
    %100 = vector.broadcast %99 : vector<1x8xi1> to vector<8x8xi1>
    %101 = vector.broadcast %cst_48 : f32 to vector<8x8xf32>
    %102 = arith.select %100, %96, %101 : vector<8x8xi1>, vector<8x8xf32>
    %cst_49 = arith.constant dense<0xFF800000> : vector<8xf32>
    %103 = vector.multi_reduction <maximumf>, %102, %cst_49 [1] : vector<8x8xf32> to vector<8xf32>
    %104 = vector.shape_cast %103 : vector<8xf32> to vector<8x1xf32>
    %105 = vector.broadcast %104 : vector<8x1xf32> to vector<8x8xf32>
    %106 = arith.subf %102, %105 : vector<8x8xf32>
    %107 = math.exp %106 : vector<8x8xf32>
    %cst_50 = arith.constant dense<0.000000e+00> : vector<8xf32>
    %108 = vector.multi_reduction <add>, %107, %cst_50 [1] : vector<8x8xf32> to vector<8xf32>
    %109 = vector.shape_cast %108 : vector<8xf32> to vector<8x1xf32>
    %110 = tpu.reciprocal %109 {approx = true} : vector<8x1xf32> -> vector<8x1xf32>
    %111 = vector.broadcast %110 : vector<8x1xf32> to vector<8x8xf32>
    %112 = arith.mulf %107, %111 : vector<8x8xf32>
    %113 = vector.broadcast %90 : vector<1x128xf32> to vector<8x128xf32>
    %114 = arith.mulf %79, %113 : vector<8x128xf32>
    %115 = arith.truncf %114 : vector<8x128xf32> to vector<8x128xbf16>
    %116 = arith.truncf %112 : vector<8x8xf32> to vector<8x8xbf16>
    %cst_51 = arith.constant dense<0.000000e+00> : vector<8x128xf32>
    %117 = tpu.matmul %116, %115, %cst_51 {dimension_numbers = #tpu.dot_dimension_numbers<[1], [0], [0], [1], [0, 0, 1, 1], [], []>} : vector<8x8xbf16>, vector<8x128xbf16>, vector<8x128xf32> -> vector<8x128xf32>
    %118 = arith.addf %82, %117 : vector<8x128xf32>
    %c32_i32_52 = arith.constant 32 : i32
    %119 = vector.broadcast %c32_i32_52 : i32 to vector<1x128xi32>
    %120 = arith.cmpi sge, %80, %119 : vector<1x128xi32>
    %c64_i32 = arith.constant 64 : i32
    %121 = vector.broadcast %c64_i32 : i32 to vector<1x128xi32>
    %122 = arith.cmpi slt, %80, %121 : vector<1x128xi32>
    %123 = arith.andi %120, %122 : vector<1x128xi1>
    %cst_53 = arith.constant 1.000000e+00 : f32
    %cst_54 = arith.constant 0.000000e+00 : f32
    %124 = vector.broadcast %cst_53 : f32 to vector<1x128xf32>
    %125 = vector.broadcast %cst_54 : f32 to vector<1x128xf32>
    %126 = arith.select %123, %124, %125 : vector<1x128xi1>, vector<1x128xf32>
    %127 = vector.broadcast %126 : vector<1x128xf32> to vector<8x128xf32>
    %128 = arith.mulf %78, %127 : vector<8x128xf32>
    %129 = arith.truncf %128 : vector<8x128xf32> to vector<8x128xbf16>
    %cst_55 = arith.constant dense<0.000000e+00> : vector<8x8xf32>
    %130 = tpu.matmul %81, %129, %cst_55 {dimension_numbers = #tpu.dot_dimension_numbers<[1], [1], [0], [0], [0, 0, 1, 0], [], []>} : vector<8x128xbf16>, vector<8x128xbf16>, vector<8x8xf32> -> vector<8x8xf32>
    %cst_56 = arith.constant 0.176776692 : f32
    %131 = vector.broadcast %cst_56 : f32 to vector<8x8xf32>
    %132 = arith.mulf %130, %131 : vector<8x8xf32>
    %cst_57 = arith.constant 5.000000e-01 : f32
    %133 = vector.broadcast %cst_57 : f32 to vector<1x8xf32>
    %134 = arith.cmpf ogt, %5, %133 : vector<1x8xf32>
    %cst_58 = arith.constant -1.000000e+30 : f32
    %135 = vector.shape_cast %134 : vector<1x8xi1> to vector<1x8xi1>
    %136 = vector.broadcast %135 : vector<1x8xi1> to vector<8x8xi1>
    %137 = vector.broadcast %cst_58 : f32 to vector<8x8xf32>
    %138 = arith.select %136, %132, %137 : vector<8x8xi1>, vector<8x8xf32>
    %cst_59 = arith.constant dense<0xFF800000> : vector<8xf32>
    %139 = vector.multi_reduction <maximumf>, %138, %cst_59 [1] : vector<8x8xf32> to vector<8xf32>
    %140 = vector.shape_cast %139 : vector<8xf32> to vector<8x1xf32>
    %141 = vector.broadcast %140 : vector<8x1xf32> to vector<8x8xf32>
    %142 = arith.subf %138, %141 : vector<8x8xf32>
    %143 = math.exp %142 : vector<8x8xf32>
    %cst_60 = arith.constant dense<0.000000e+00> : vector<8xf32>
    %144 = vector.multi_reduction <add>, %143, %cst_60 [1] : vector<8x8xf32> to vector<8xf32>
    %145 = vector.shape_cast %144 : vector<8xf32> to vector<8x1xf32>
    %146 = tpu.reciprocal %145 {approx = true} : vector<8x1xf32> -> vector<8x1xf32>
    %147 = vector.broadcast %146 : vector<8x1xf32> to vector<8x8xf32>
    %148 = arith.mulf %143, %147 : vector<8x8xf32>
    %149 = vector.broadcast %126 : vector<1x128xf32> to vector<8x128xf32>
    %150 = arith.mulf %79, %149 : vector<8x128xf32>
    %151 = arith.truncf %150 : vector<8x128xf32> to vector<8x128xbf16>
    %152 = arith.truncf %148 : vector<8x8xf32> to vector<8x8xbf16>
    %cst_61 = arith.constant dense<0.000000e+00> : vector<8x128xf32>
    %153 = tpu.matmul %152, %151, %cst_61 {dimension_numbers = #tpu.dot_dimension_numbers<[1], [0], [0], [1], [0, 0, 1, 1], [], []>} : vector<8x8xbf16>, vector<8x128xbf16>, vector<8x128xf32> -> vector<8x128xf32>
    %154 = arith.addf %118, %153 : vector<8x128xf32>
    %c64_i32_62 = arith.constant 64 : i32
    %155 = vector.broadcast %c64_i32_62 : i32 to vector<1x128xi32>
    %156 = arith.cmpi sge, %80, %155 : vector<1x128xi32>
    %c96_i32 = arith.constant 96 : i32
    %157 = vector.broadcast %c96_i32 : i32 to vector<1x128xi32>
    %158 = arith.cmpi slt, %80, %157 : vector<1x128xi32>
    %159 = arith.andi %156, %158 : vector<1x128xi1>
    %cst_63 = arith.constant 1.000000e+00 : f32
    %cst_64 = arith.constant 0.000000e+00 : f32
    %160 = vector.broadcast %cst_63 : f32 to vector<1x128xf32>
    %161 = vector.broadcast %cst_64 : f32 to vector<1x128xf32>
    %162 = arith.select %159, %160, %161 : vector<1x128xi1>, vector<1x128xf32>
    %163 = vector.broadcast %162 : vector<1x128xf32> to vector<8x128xf32>
    %164 = arith.mulf %78, %163 : vector<8x128xf32>
    %165 = arith.truncf %164 : vector<8x128xf32> to vector<8x128xbf16>
    %cst_65 = arith.constant dense<0.000000e+00> : vector<8x8xf32>
    %166 = tpu.matmul %81, %165, %cst_65 {dimension_numbers = #tpu.dot_dimension_numbers<[1], [1], [0], [0], [0, 0, 1, 0], [], []>} : vector<8x128xbf16>, vector<8x128xbf16>, vector<8x8xf32> -> vector<8x8xf32>
    %cst_66 = arith.constant 0.176776692 : f32
    %167 = vector.broadcast %cst_66 : f32 to vector<8x8xf32>
    %168 = arith.mulf %166, %167 : vector<8x8xf32>
    %cst_67 = arith.constant 5.000000e-01 : f32
    %169 = vector.broadcast %cst_67 : f32 to vector<1x8xf32>
    %170 = arith.cmpf ogt, %5, %169 : vector<1x8xf32>
    %cst_68 = arith.constant -1.000000e+30 : f32
    %171 = vector.shape_cast %170 : vector<1x8xi1> to vector<1x8xi1>
    %172 = vector.broadcast %171 : vector<1x8xi1> to vector<8x8xi1>
    %173 = vector.broadcast %cst_68 : f32 to vector<8x8xf32>
    %174 = arith.select %172, %168, %173 : vector<8x8xi1>, vector<8x8xf32>
    %cst_69 = arith.constant dense<0xFF800000> : vector<8xf32>
    %175 = vector.multi_reduction <maximumf>, %174, %cst_69 [1] : vector<8x8xf32> to vector<8xf32>
    %176 = vector.shape_cast %175 : vector<8xf32> to vector<8x1xf32>
    %177 = vector.broadcast %176 : vector<8x1xf32> to vector<8x8xf32>
    %178 = arith.subf %174, %177 : vector<8x8xf32>
    %179 = math.exp %178 : vector<8x8xf32>
    %cst_70 = arith.constant dense<0.000000e+00> : vector<8xf32>
    %180 = vector.multi_reduction <add>, %179, %cst_70 [1] : vector<8x8xf32> to vector<8xf32>
    %181 = vector.shape_cast %180 : vector<8xf32> to vector<8x1xf32>
    %182 = tpu.reciprocal %181 {approx = true} : vector<8x1xf32> -> vector<8x1xf32>
    %183 = vector.broadcast %182 : vector<8x1xf32> to vector<8x8xf32>
    %184 = arith.mulf %179, %183 : vector<8x8xf32>
    %185 = vector.broadcast %162 : vector<1x128xf32> to vector<8x128xf32>
    %186 = arith.mulf %79, %185 : vector<8x128xf32>
    %187 = arith.truncf %186 : vector<8x128xf32> to vector<8x128xbf16>
    %188 = arith.truncf %184 : vector<8x8xf32> to vector<8x8xbf16>
    %cst_71 = arith.constant dense<0.000000e+00> : vector<8x128xf32>
    %189 = tpu.matmul %188, %187, %cst_71 {dimension_numbers = #tpu.dot_dimension_numbers<[1], [0], [0], [1], [0, 0, 1, 1], [], []>} : vector<8x8xbf16>, vector<8x128xbf16>, vector<8x128xf32> -> vector<8x128xf32>
    %190 = arith.addf %154, %189 : vector<8x128xf32>
    %c96_i32_72 = arith.constant 96 : i32
    %191 = vector.broadcast %c96_i32_72 : i32 to vector<1x128xi32>
    %192 = arith.cmpi sge, %80, %191 : vector<1x128xi32>
    %c128_i32 = arith.constant 128 : i32
    %193 = vector.broadcast %c128_i32 : i32 to vector<1x128xi32>
    %194 = arith.cmpi slt, %80, %193 : vector<1x128xi32>
    %195 = arith.andi %192, %194 : vector<1x128xi1>
    %cst_73 = arith.constant 1.000000e+00 : f32
    %cst_74 = arith.constant 0.000000e+00 : f32
    %196 = vector.broadcast %cst_73 : f32 to vector<1x128xf32>
    %197 = vector.broadcast %cst_74 : f32 to vector<1x128xf32>
    %198 = arith.select %195, %196, %197 : vector<1x128xi1>, vector<1x128xf32>
    %199 = vector.broadcast %198 : vector<1x128xf32> to vector<8x128xf32>
    %200 = arith.mulf %78, %199 : vector<8x128xf32>
    %201 = arith.truncf %200 : vector<8x128xf32> to vector<8x128xbf16>
    %cst_75 = arith.constant dense<0.000000e+00> : vector<8x8xf32>
    %202 = tpu.matmul %81, %201, %cst_75 {dimension_numbers = #tpu.dot_dimension_numbers<[1], [1], [0], [0], [0, 0, 1, 0], [], []>} : vector<8x128xbf16>, vector<8x128xbf16>, vector<8x8xf32> -> vector<8x8xf32>
    %cst_76 = arith.constant 0.176776692 : f32
    %203 = vector.broadcast %cst_76 : f32 to vector<8x8xf32>
    %204 = arith.mulf %202, %203 : vector<8x8xf32>
    %cst_77 = arith.constant 5.000000e-01 : f32
    %205 = vector.broadcast %cst_77 : f32 to vector<1x8xf32>
    %206 = arith.cmpf ogt, %5, %205 : vector<1x8xf32>
    %cst_78 = arith.constant -1.000000e+30 : f32
    %207 = vector.shape_cast %206 : vector<1x8xi1> to vector<1x8xi1>
    %208 = vector.broadcast %207 : vector<1x8xi1> to vector<8x8xi1>
    %209 = vector.broadcast %cst_78 : f32 to vector<8x8xf32>
    %210 = arith.select %208, %204, %209 : vector<8x8xi1>, vector<8x8xf32>
    %cst_79 = arith.constant dense<0xFF800000> : vector<8xf32>
    %211 = vector.multi_reduction <maximumf>, %210, %cst_79 [1] : vector<8x8xf32> to vector<8xf32>
    %212 = vector.shape_cast %211 : vector<8xf32> to vector<8x1xf32>
    %213 = vector.broadcast %212 : vector<8x1xf32> to vector<8x8xf32>
    %214 = arith.subf %210, %213 : vector<8x8xf32>
    %215 = math.exp %214 : vector<8x8xf32>
    %cst_80 = arith.constant dense<0.000000e+00> : vector<8xf32>
    %216 = vector.multi_reduction <add>, %215, %cst_80 [1] : vector<8x8xf32> to vector<8xf32>
    %217 = vector.shape_cast %216 : vector<8xf32> to vector<8x1xf32>
    %218 = tpu.reciprocal %217 {approx = true} : vector<8x1xf32> -> vector<8x1xf32>
    %219 = vector.broadcast %218 : vector<8x1xf32> to vector<8x8xf32>
    %220 = arith.mulf %215, %219 : vector<8x8xf32>
    %221 = vector.broadcast %198 : vector<1x128xf32> to vector<8x128xf32>
    %222 = arith.mulf %79, %221 : vector<8x128xf32>
    %223 = arith.truncf %222 : vector<8x128xf32> to vector<8x128xbf16>
    %224 = arith.truncf %220 : vector<8x8xf32> to vector<8x8xbf16>
    %cst_81 = arith.constant dense<0.000000e+00> : vector<8x128xf32>
    %225 = tpu.matmul %224, %223, %cst_81 {dimension_numbers = #tpu.dot_dimension_numbers<[1], [0], [0], [1], [0, 0, 1, 1], [], []>} : vector<8x8xbf16>, vector<8x128xbf16>, vector<8x128xf32> -> vector<8x128xf32>
    %226 = arith.addf %190, %225 : vector<8x128xf32>
    %227 = arith.truncf %226 : vector<8x128xf32> to vector<8x128xbf16>
    %c0_82 = arith.constant 0 : index
    %c0_83 = arith.constant 0 : index
    %228 = vector.load %arg14[%c0_82, %c0_83] : memref<128x128xbf16, #tpu.memory_space<vmem>>, vector<128x128xbf16>
    %cst_84 = arith.constant dense<0.000000e+00> : vector<8x128xf32>
    %229 = tpu.matmul %227, %228, %cst_84 {dimension_numbers = #tpu.dot_dimension_numbers<[1], [0], [0], [1], [0, 0, 1, 1], [], []>} : vector<8x128xbf16>, vector<128x128xbf16>, vector<8x128xf32> -> vector<8x128xf32>
    %c0_85 = arith.constant 0 : index
    %c0_86 = arith.constant 0 : index
    %230 = vector.load %arg15[%c0_85, %c0_86] : memref<1x128xf32, #tpu.memory_space<vmem>>, vector<1x128xf32>
    %231 = vector.broadcast %230 : vector<1x128xf32> to vector<8x128xf32>
    %232 = arith.addf %229, %231 : vector<8x128xf32>
    %233 = vector.broadcast %3 : vector<8x1xf32> to vector<8x128xf32>
    %234 = arith.mulf %232, %233 : vector<8x128xf32>
    %235 = arith.addf %48, %234 : vector<8x128xf32>
    %cst_87 = arith.constant dense<0.000000e+00> : vector<8xf32>
    %236 = vector.multi_reduction <add>, %235, %cst_87 [1] : vector<8x128xf32> to vector<8xf32>
    %237 = vector.shape_cast %236 : vector<8xf32> to vector<8x1xf32>
    %cst_88 = arith.constant 1.280000e+02 : f32
    %238 = vector.broadcast %cst_88 : f32 to vector<8x1xf32>
    %239 = arith.divf %237, %238 : vector<8x1xf32>
    %240 = vector.broadcast %239 : vector<8x1xf32> to vector<8x128xf32>
    %241 = arith.subf %235, %240 : vector<8x128xf32>
    %242 = arith.mulf %241, %241 : vector<8x128xf32>
    %cst_89 = arith.constant dense<0.000000e+00> : vector<8xf32>
    %243 = vector.multi_reduction <add>, %242, %cst_89 [1] : vector<8x128xf32> to vector<8xf32>
    %244 = vector.shape_cast %243 : vector<8xf32> to vector<8x1xf32>
    %cst_90 = arith.constant 1.280000e+02 : f32
    %245 = vector.broadcast %cst_90 : f32 to vector<8x1xf32>
    %246 = arith.divf %244, %245 : vector<8x1xf32>
    %cst_91 = arith.constant 9.99999974E-6 : f32
    %247 = vector.broadcast %cst_91 : f32 to vector<8x1xf32>
    %248 = arith.addf %246, %247 : vector<8x1xf32>
    %249 = math.rsqrt %248 : vector<8x1xf32>
    %250 = vector.broadcast %249 : vector<8x1xf32> to vector<8x128xf32>
    %251 = arith.mulf %241, %250 : vector<8x128xf32>
    %c0_92 = arith.constant 0 : index
    %c0_93 = arith.constant 0 : index
    %252 = vector.load %arg16[%c0_92, %c0_93] : memref<1x128xf32, #tpu.memory_space<vmem>>, vector<1x128xf32>
    %253 = vector.broadcast %252 : vector<1x128xf32> to vector<8x128xf32>
    %254 = arith.mulf %251, %253 : vector<8x128xf32>
    %c0_94 = arith.constant 0 : index
    %c0_95 = arith.constant 0 : index
    %255 = vector.load %arg17[%c0_94, %c0_95] : memref<1x128xf32, #tpu.memory_space<vmem>>, vector<1x128xf32>
    %256 = vector.broadcast %255 : vector<1x128xf32> to vector<8x128xf32>
    %257 = arith.addf %254, %256 : vector<8x128xf32>
    %258 = arith.truncf %257 : vector<8x128xf32> to vector<8x128xbf16>
    %c0_96 = arith.constant 0 : index
    %c0_97 = arith.constant 0 : index
    %259 = vector.load %arg18[%c0_96, %c0_97] : memref<128x256xbf16, #tpu.memory_space<vmem>>, vector<128x256xbf16>
    %cst_98 = arith.constant dense<0.000000e+00> : vector<8x256xf32>
    %260 = tpu.matmul %258, %259, %cst_98 {dimension_numbers = #tpu.dot_dimension_numbers<[1], [0], [0], [1], [0, 0, 1, 1], [], []>} : vector<8x128xbf16>, vector<128x256xbf16>, vector<8x256xf32> -> vector<8x256xf32>
    %c0_99 = arith.constant 0 : index
    %c0_100 = arith.constant 0 : index
    %261 = vector.load %arg19[%c0_99, %c0_100] : memref<1x256xf32, #tpu.memory_space<vmem>>, vector<1x256xf32>
    %262 = vector.broadcast %261 : vector<1x256xf32> to vector<8x256xf32>
    %263 = arith.addf %260, %262 : vector<8x256xf32>
    %264 = vector.extract_strided_slice %263 {offsets = [0, 0], sizes = [8, 128], strides = [1, 1]} : vector<8x256xf32> to vector<8x128xf32>
    %265 = vector.extract_strided_slice %263 {offsets = [0, 128], sizes = [8, 128], strides = [1, 1]} : vector<8x256xf32> to vector<8x128xf32>
    %266 = arith.negf %265 : vector<8x128xf32>
    %267 = math.exp %266 : vector<8x128xf32>
    %cst_101 = arith.constant 1.000000e+00 : f32
    %268 = vector.broadcast %cst_101 : f32 to vector<8x128xf32>
    %269 = arith.addf %268, %267 : vector<8x128xf32>
    %270 = arith.divf %268, %269 : vector<8x128xf32>
    %271 = arith.mulf %264, %270 : vector<8x128xf32>
    %272 = vector.broadcast %3 : vector<8x1xf32> to vector<8x128xf32>
    %273 = arith.mulf %271, %272 : vector<8x128xf32>
    %cst_102 = arith.constant 0.000000e+00 : f32
    %274 = vector.broadcast %cst_102 : f32 to vector<3x128xf32>
    %275 = tpu.concatenate %274, %273, %274 in 0 : vector<3x128xf32>, vector<8x128xf32>, vector<3x128xf32> -> vector<14x128xf32>
    %c0_103 = arith.constant 0 : index
    %c0_104 = arith.constant 0 : index
    %276 = vector.load %arg20[%c0_103, %c0_104] : memref<8x128xf32, #tpu.memory_space<vmem>>, vector<8x128xf32>
    %cst_105 = arith.constant 0.000000e+00 : f32
    %277 = vector.broadcast %cst_105 : f32 to vector<8x128xf32>
    %c0_106 = arith.constant 0 : index
    %c0_107 = arith.constant 0 : index
    %278 = vector.load %arg21[%c0_106, %c0_107] : memref<1x128xf32, #tpu.memory_space<vmem>>, vector<1x128xf32>
    %279 = vector.broadcast %278 : vector<1x128xf32> to vector<8x128xf32>
    %280 = arith.addf %277, %279 : vector<8x128xf32>
    %281 = vector.extract_strided_slice %275 {offsets = [0, 0], sizes = [8, 128], strides = [1, 1]} : vector<14x128xf32> to vector<8x128xf32>
    %282 = vector.extract_strided_slice %276 {offsets = [0, 0], sizes = [1, 128], strides = [1, 1]} : vector<8x128xf32> to vector<1x128xf32>
    %283 = vector.broadcast %282 : vector<1x128xf32> to vector<8x128xf32>
    %284 = arith.mulf %281, %283 : vector<8x128xf32>
    %285 = arith.addf %280, %284 : vector<8x128xf32>
    %286 = vector.extract_strided_slice %275 {offsets = [1, 0], sizes = [8, 128], strides = [1, 1]} : vector<14x128xf32> to vector<8x128xf32>
    %287 = vector.extract_strided_slice %276 {offsets = [1, 0], sizes = [1, 128], strides = [1, 1]} : vector<8x128xf32> to vector<1x128xf32>
    %288 = vector.broadcast %287 : vector<1x128xf32> to vector<8x128xf32>
    %289 = arith.mulf %286, %288 : vector<8x128xf32>
    %290 = arith.addf %285, %289 : vector<8x128xf32>
    %291 = vector.extract_strided_slice %275 {offsets = [2, 0], sizes = [8, 128], strides = [1, 1]} : vector<14x128xf32> to vector<8x128xf32>
    %292 = vector.extract_strided_slice %276 {offsets = [2, 0], sizes = [1, 128], strides = [1, 1]} : vector<8x128xf32> to vector<1x128xf32>
    %293 = vector.broadcast %292 : vector<1x128xf32> to vector<8x128xf32>
    %294 = arith.mulf %291, %293 : vector<8x128xf32>
    %295 = arith.addf %290, %294 : vector<8x128xf32>
    %296 = vector.extract_strided_slice %275 {offsets = [3, 0], sizes = [8, 128], strides = [1, 1]} : vector<14x128xf32> to vector<8x128xf32>
    %297 = vector.extract_strided_slice %276 {offsets = [3, 0], sizes = [1, 128], strides = [1, 1]} : vector<8x128xf32> to vector<1x128xf32>
    %298 = vector.broadcast %297 : vector<1x128xf32> to vector<8x128xf32>
    %299 = arith.mulf %296, %298 : vector<8x128xf32>
    %300 = arith.addf %295, %299 : vector<8x128xf32>
    %301 = vector.extract_strided_slice %275 {offsets = [4, 0], sizes = [8, 128], strides = [1, 1]} : vector<14x128xf32> to vector<8x128xf32>
    %302 = vector.extract_strided_slice %276 {offsets = [4, 0], sizes = [1, 128], strides = [1, 1]} : vector<8x128xf32> to vector<1x128xf32>
    %303 = vector.broadcast %302 : vector<1x128xf32> to vector<8x128xf32>
    %304 = arith.mulf %301, %303 : vector<8x128xf32>
    %305 = arith.addf %300, %304 : vector<8x128xf32>
    %306 = vector.extract_strided_slice %275 {offsets = [5, 0], sizes = [8, 128], strides = [1, 1]} : vector<14x128xf32> to vector<8x128xf32>
    %307 = vector.extract_strided_slice %276 {offsets = [5, 0], sizes = [1, 128], strides = [1, 1]} : vector<8x128xf32> to vector<1x128xf32>
    %308 = vector.broadcast %307 : vector<1x128xf32> to vector<8x128xf32>
    %309 = arith.mulf %306, %308 : vector<8x128xf32>
    %310 = arith.addf %305, %309 : vector<8x128xf32>
    %311 = vector.extract_strided_slice %275 {offsets = [6, 0], sizes = [8, 128], strides = [1, 1]} : vector<14x128xf32> to vector<8x128xf32>
    %312 = vector.extract_strided_slice %276 {offsets = [6, 0], sizes = [1, 128], strides = [1, 1]} : vector<8x128xf32> to vector<1x128xf32>
    %313 = vector.broadcast %312 : vector<1x128xf32> to vector<8x128xf32>
    %314 = arith.mulf %311, %313 : vector<8x128xf32>
    %315 = arith.addf %310, %314 : vector<8x128xf32>
    %cst_108 = arith.constant dense<0.000000e+00> : vector<8xf32>
    %316 = vector.multi_reduction <add>, %315, %cst_108 [1] : vector<8x128xf32> to vector<8xf32>
    %317 = vector.shape_cast %316 : vector<8xf32> to vector<8x1xf32>
    %cst_109 = arith.constant 1.280000e+02 : f32
    %318 = vector.broadcast %cst_109 : f32 to vector<8x1xf32>
    %319 = arith.divf %317, %318 : vector<8x1xf32>
    %320 = vector.broadcast %319 : vector<8x1xf32> to vector<8x128xf32>
    %321 = arith.subf %315, %320 : vector<8x128xf32>
    %322 = arith.mulf %321, %321 : vector<8x128xf32>
    %cst_110 = arith.constant dense<0.000000e+00> : vector<8xf32>
    %323 = vector.multi_reduction <add>, %322, %cst_110 [1] : vector<8x128xf32> to vector<8xf32>
    %324 = vector.shape_cast %323 : vector<8xf32> to vector<8x1xf32>
    %cst_111 = arith.constant 1.280000e+02 : f32
    %325 = vector.broadcast %cst_111 : f32 to vector<8x1xf32>
    %326 = arith.divf %324, %325 : vector<8x1xf32>
    %cst_112 = arith.constant 9.99999974E-6 : f32
    %327 = vector.broadcast %cst_112 : f32 to vector<8x1xf32>
    %328 = arith.addf %326, %327 : vector<8x1xf32>
    %329 = math.rsqrt %328 : vector<8x1xf32>
    %330 = vector.broadcast %329 : vector<8x1xf32> to vector<8x128xf32>
    %331 = arith.mulf %321, %330 : vector<8x128xf32>
    %c0_113 = arith.constant 0 : index
    %c0_114 = arith.constant 0 : index
    %332 = vector.load %arg22[%c0_113, %c0_114] : memref<1x128xf32, #tpu.memory_space<vmem>>, vector<1x128xf32>
    %333 = vector.broadcast %332 : vector<1x128xf32> to vector<8x128xf32>
    %334 = arith.mulf %331, %333 : vector<8x128xf32>
    %c0_115 = arith.constant 0 : index
    %c0_116 = arith.constant 0 : index
    %335 = vector.load %arg23[%c0_115, %c0_116] : memref<1x128xf32, #tpu.memory_space<vmem>>, vector<1x128xf32>
    %336 = vector.broadcast %335 : vector<1x128xf32> to vector<8x128xf32>
    %337 = arith.addf %334, %336 : vector<8x128xf32>
    %338 = arith.negf %337 : vector<8x128xf32>
    %339 = math.exp %338 : vector<8x128xf32>
    %cst_117 = arith.constant 1.000000e+00 : f32
    %340 = vector.broadcast %cst_117 : f32 to vector<8x128xf32>
    %341 = arith.addf %340, %339 : vector<8x128xf32>
    %342 = arith.divf %340, %341 : vector<8x128xf32>
    %343 = arith.mulf %337, %342 : vector<8x128xf32>
    %344 = arith.truncf %343 : vector<8x128xf32> to vector<8x128xbf16>
    %c0_118 = arith.constant 0 : index
    %c0_119 = arith.constant 0 : index
    %345 = vector.load %arg24[%c0_118, %c0_119] : memref<128x128xbf16, #tpu.memory_space<vmem>>, vector<128x128xbf16>
    %cst_120 = arith.constant dense<0.000000e+00> : vector<8x128xf32>
    %346 = tpu.matmul %344, %345, %cst_120 {dimension_numbers = #tpu.dot_dimension_numbers<[1], [0], [0], [1], [0, 0, 1, 1], [], []>} : vector<8x128xbf16>, vector<128x128xbf16>, vector<8x128xf32> -> vector<8x128xf32>
    %c0_121 = arith.constant 0 : index
    %c0_122 = arith.constant 0 : index
    %347 = vector.load %arg25[%c0_121, %c0_122] : memref<1x128xf32, #tpu.memory_space<vmem>>, vector<1x128xf32>
    %348 = vector.broadcast %347 : vector<1x128xf32> to vector<8x128xf32>
    %349 = arith.addf %346, %348 : vector<8x128xf32>
    %350 = arith.addf %235, %349 : vector<8x128xf32>
    %cst_123 = arith.constant dense<0.000000e+00> : vector<8xf32>
    %351 = vector.multi_reduction <add>, %350, %cst_123 [1] : vector<8x128xf32> to vector<8xf32>
    %352 = vector.shape_cast %351 : vector<8xf32> to vector<8x1xf32>
    %cst_124 = arith.constant 1.280000e+02 : f32
    %353 = vector.broadcast %cst_124 : f32 to vector<8x1xf32>
    %354 = arith.divf %352, %353 : vector<8x1xf32>
    %355 = vector.broadcast %354 : vector<8x1xf32> to vector<8x128xf32>
    %356 = arith.subf %350, %355 : vector<8x128xf32>
    %357 = arith.mulf %356, %356 : vector<8x128xf32>
    %cst_125 = arith.constant dense<0.000000e+00> : vector<8xf32>
    %358 = vector.multi_reduction <add>, %357, %cst_125 [1] : vector<8x128xf32> to vector<8xf32>
    %359 = vector.shape_cast %358 : vector<8xf32> to vector<8x1xf32>
    %cst_126 = arith.constant 1.280000e+02 : f32
    %360 = vector.broadcast %cst_126 : f32 to vector<8x1xf32>
    %361 = arith.divf %359, %360 : vector<8x1xf32>
    %cst_127 = arith.constant 9.99999974E-6 : f32
    %362 = vector.broadcast %cst_127 : f32 to vector<8x1xf32>
    %363 = arith.addf %361, %362 : vector<8x1xf32>
    %364 = math.rsqrt %363 : vector<8x1xf32>
    %365 = vector.broadcast %364 : vector<8x1xf32> to vector<8x128xf32>
    %366 = arith.mulf %356, %365 : vector<8x128xf32>
    %c0_128 = arith.constant 0 : index
    %c0_129 = arith.constant 0 : index
    %367 = vector.load %arg26[%c0_128, %c0_129] : memref<1x128xf32, #tpu.memory_space<vmem>>, vector<1x128xf32>
    %368 = vector.broadcast %367 : vector<1x128xf32> to vector<8x128xf32>
    %369 = arith.mulf %366, %368 : vector<8x128xf32>
    %c0_130 = arith.constant 0 : index
    %c0_131 = arith.constant 0 : index
    %370 = vector.load %arg27[%c0_130, %c0_131] : memref<1x128xf32, #tpu.memory_space<vmem>>, vector<1x128xf32>
    %371 = vector.broadcast %370 : vector<1x128xf32> to vector<8x128xf32>
    %372 = arith.addf %369, %371 : vector<8x128xf32>
    %373 = arith.truncf %372 : vector<8x128xf32> to vector<8x128xbf16>
    %c0_132 = arith.constant 0 : index
    %c0_133 = arith.constant 0 : index
    %374 = vector.load %arg28[%c0_132, %c0_133] : memref<128x256xbf16, #tpu.memory_space<vmem>>, vector<128x256xbf16>
    %cst_134 = arith.constant dense<0.000000e+00> : vector<8x256xf32>
    %375 = tpu.matmul %373, %374, %cst_134 {dimension_numbers = #tpu.dot_dimension_numbers<[1], [0], [0], [1], [0, 0, 1, 1], [], []>} : vector<8x128xbf16>, vector<128x256xbf16>, vector<8x256xf32> -> vector<8x256xf32>
    %c0_135 = arith.constant 0 : index
    %c0_136 = arith.constant 0 : index
    %376 = vector.load %arg29[%c0_135, %c0_136] : memref<1x256xf32, #tpu.memory_space<vmem>>, vector<1x256xf32>
    %377 = vector.broadcast %376 : vector<1x256xf32> to vector<8x256xf32>
    %378 = arith.addf %375, %377 : vector<8x256xf32>
    %379 = arith.negf %378 : vector<8x256xf32>
    %380 = math.exp %379 : vector<8x256xf32>
    %cst_137 = arith.constant 1.000000e+00 : f32
    %381 = vector.broadcast %cst_137 : f32 to vector<8x256xf32>
    %382 = arith.addf %381, %380 : vector<8x256xf32>
    %383 = arith.divf %381, %382 : vector<8x256xf32>
    %384 = arith.mulf %378, %383 : vector<8x256xf32>
    %385 = arith.truncf %384 : vector<8x256xf32> to vector<8x256xbf16>
    %c0_138 = arith.constant 0 : index
    %c0_139 = arith.constant 0 : index
    %386 = vector.load %arg30[%c0_138, %c0_139] : memref<256x128xbf16, #tpu.memory_space<vmem>>, vector<256x128xbf16>
    %cst_140 = arith.constant dense<0.000000e+00> : vector<8x128xf32>
    %387 = tpu.matmul %385, %386, %cst_140 {dimension_numbers = #tpu.dot_dimension_numbers<[1], [0], [0], [1], [0, 0, 1, 1], [], []>} : vector<8x256xbf16>, vector<256x128xbf16>, vector<8x128xf32> -> vector<8x128xf32>
    %c0_141 = arith.constant 0 : index
    %c0_142 = arith.constant 0 : index
    %388 = vector.load %arg31[%c0_141, %c0_142] : memref<1x128xf32, #tpu.memory_space<vmem>>, vector<1x128xf32>
    %389 = vector.broadcast %388 : vector<1x128xf32> to vector<8x128xf32>
    %390 = arith.addf %387, %389 : vector<8x128xf32>
    %cst_143 = arith.constant 5.000000e-01 : f32
    %391 = vector.broadcast %cst_143 : f32 to vector<8x128xf32>
    %392 = arith.mulf %391, %390 : vector<8x128xf32>
    %393 = arith.addf %350, %392 : vector<8x128xf32>
    %cst_144 = arith.constant dense<0.000000e+00> : vector<8xf32>
    %394 = vector.multi_reduction <add>, %393, %cst_144 [1] : vector<8x128xf32> to vector<8xf32>
    %395 = vector.shape_cast %394 : vector<8xf32> to vector<8x1xf32>
    %cst_145 = arith.constant 1.280000e+02 : f32
    %396 = vector.broadcast %cst_145 : f32 to vector<8x1xf32>
    %397 = arith.divf %395, %396 : vector<8x1xf32>
    %398 = vector.broadcast %397 : vector<8x1xf32> to vector<8x128xf32>
    %399 = arith.subf %393, %398 : vector<8x128xf32>
    %400 = arith.mulf %399, %399 : vector<8x128xf32>
    %cst_146 = arith.constant dense<0.000000e+00> : vector<8xf32>
    %401 = vector.multi_reduction <add>, %400, %cst_146 [1] : vector<8x128xf32> to vector<8xf32>
    %402 = vector.shape_cast %401 : vector<8xf32> to vector<8x1xf32>
    %cst_147 = arith.constant 1.280000e+02 : f32
    %403 = vector.broadcast %cst_147 : f32 to vector<8x1xf32>
    %404 = arith.divf %402, %403 : vector<8x1xf32>
    %cst_148 = arith.constant 9.99999974E-6 : f32
    %405 = vector.broadcast %cst_148 : f32 to vector<8x1xf32>
    %406 = arith.addf %404, %405 : vector<8x1xf32>
    %407 = math.rsqrt %406 : vector<8x1xf32>
    %408 = vector.broadcast %407 : vector<8x1xf32> to vector<8x128xf32>
    %409 = arith.mulf %399, %408 : vector<8x128xf32>
    %c0_149 = arith.constant 0 : index
    %c0_150 = arith.constant 0 : index
    %410 = vector.load %arg32[%c0_149, %c0_150] : memref<1x128xf32, #tpu.memory_space<vmem>>, vector<1x128xf32>
    %411 = vector.broadcast %410 : vector<1x128xf32> to vector<8x128xf32>
    %412 = arith.mulf %409, %411 : vector<8x128xf32>
    %c0_151 = arith.constant 0 : index
    %c0_152 = arith.constant 0 : index
    %413 = vector.load %arg33[%c0_151, %c0_152] : memref<1x128xf32, #tpu.memory_space<vmem>>, vector<1x128xf32>
    %414 = vector.broadcast %413 : vector<1x128xf32> to vector<8x128xf32>
    %415 = arith.addf %412, %414 : vector<8x128xf32>
    %c0_153 = arith.constant 0 : index
    %c0_154 = arith.constant 0 : index
    %c0_155 = arith.constant 0 : index
    %416 = vector.load %arg34[%c0_153, %c0_154, %c0_155] : memref<1x8x128xf32, #tpu.memory_space<vmem>>, vector<1x8x128xf32>
    %417 = vector.shape_cast %416 : vector<1x8x128xf32> to vector<8x128xf32>
    %418 = vector.shape_cast %415 : vector<8x128xf32> to vector<1x8x128xf32>
    tpu.vector_store %arg34[%c0_153, %c0_154, %c0_155], %418 {strides = array<i32>} : memref<1x8x128xf32, #tpu.memory_space<vmem>>, vector<1x8x128xf32>,
    return
  }
  func.func @transform_0(%arg0: i32) -> (i32, i32, i32) {
    %c0_i32 = arith.constant 0 : i32
    %c0_i32_0 = arith.constant 0 : i32
    %c0_i32_1 = arith.constant 0 : i32
    return %arg0, %c0_i32, %c0_i32_0 : i32, i32, i32
  }
  func.func @transform_1(%arg0: i32) -> (i32, i32, i32) {
    %c0_i32 = arith.constant 0 : i32
    %c0_i32_0 = arith.constant 0 : i32
    %c0_i32_1 = arith.constant 0 : i32
    return %arg0, %c0_i32, %c0_i32_0 : i32, i32, i32
  }
  func.func @transform_2(%arg0: i32) -> (i32, i32, i32) {
    %c0_i32 = arith.constant 0 : i32
    %c0_i32_0 = arith.constant 0 : i32
    %c0_i32_1 = arith.constant 0 : i32
    return %arg0, %c0_i32, %c0_i32_0 : i32, i32, i32
  }
  func.func @transform_3(%arg0: i32) -> (i32, i32) {
    %c0_i32 = arith.constant 0 : i32
    %c0_i32_0 = arith.constant 0 : i32
    %c0_i32_1 = arith.constant 0 : i32
    return %c0_i32, %c0_i32_0 : i32, i32
  }
  func.func @transform_4(%arg0: i32) -> (i32, i32) {
    %c0_i32 = arith.constant 0 : i32
    %c0_i32_0 = arith.constant 0 : i32
    %c0_i32_1 = arith.constant 0 : i32
    return %c0_i32, %c0_i32_0 : i32, i32
  }
  func.func @transform_5(%arg0: i32) -> (i32, i32) {
    %c0_i32 = arith.constant 0 : i32
    %c0_i32_0 = arith.constant 0 : i32
    %c0_i32_1 = arith.constant 0 : i32
    return %c0_i32, %c0_i32_0 : i32, i32
  }
  func.func @transform_6(%arg0: i32) -> (i32, i32) {
    %c0_i32 = arith.constant 0 : i32
    %c0_i32_0 = arith.constant 0 : i32
    %c0_i32_1 = arith.constant 0 : i32
    return %c0_i32, %c0_i32_0 : i32, i32
  }
  func.func @transform_7(%arg0: i32) -> (i32, i32) {
    %c0_i32 = arith.constant 0 : i32
    %c0_i32_0 = arith.constant 0 : i32
    %c0_i32_1 = arith.constant 0 : i32
    return %c0_i32, %c0_i32_0 : i32, i32
  }
  func.func @transform_8(%arg0: i32) -> (i32, i32) {
    %c0_i32 = arith.constant 0 : i32
    %c0_i32_0 = arith.constant 0 : i32
    %c0_i32_1 = arith.constant 0 : i32
    return %c0_i32, %c0_i32_0 : i32, i32
  }
  func.func @transform_9(%arg0: i32) -> (i32, i32) {
    %c0_i32 = arith.constant 0 : i32
    %c0_i32_0 = arith.constant 0 : i32
    %c0_i32_1 = arith.constant 0 : i32
    return %c0_i32, %c0_i32_0 : i32, i32
  }
  func.func @transform_10(%arg0: i32) -> (i32, i32) {
    %c0_i32 = arith.constant 0 : i32
    %c0_i32_0 = arith.constant 0 : i32
    %c0_i32_1 = arith.constant 0 : i32
    return %c0_i32, %c0_i32_0 : i32, i32
  }
  func.func @transform_11(%arg0: i32) -> (i32, i32) {
    %c0_i32 = arith.constant 0 : i32
    %c0_i32_0 = arith.constant 0 : i32
    %c0_i32_1 = arith.constant 0 : i32
    return %c0_i32, %c0_i32_0 : i32, i32
  }
  func.func @transform_12(%arg0: i32) -> (i32, i32) {
    %c0_i32 = arith.constant 0 : i32
    %c0_i32_0 = arith.constant 0 : i32
    %c0_i32_1 = arith.constant 0 : i32
    return %c0_i32, %c0_i32_0 : i32, i32
  }
  func.func @transform_13(%arg0: i32) -> (i32, i32) {
    %c0_i32 = arith.constant 0 : i32
    %c0_i32_0 = arith.constant 0 : i32
    %c0_i32_1 = arith.constant 0 : i32
    return %c0_i32, %c0_i32_0 : i32, i32
  }
  func.func @transform_14(%arg0: i32) -> (i32, i32) {
    %c0_i32 = arith.constant 0 : i32
    %c0_i32_0 = arith.constant 0 : i32
    %c0_i32_1 = arith.constant 0 : i32
    return %c0_i32, %c0_i32_0 : i32, i32
  }
  func.func @transform_15(%arg0: i32) -> (i32, i32) {
    %c0_i32 = arith.constant 0 : i32
    %c0_i32_0 = arith.constant 0 : i32
    %c0_i32_1 = arith.constant 0 : i32
    return %c0_i32, %c0_i32_0 : i32, i32
  }
  func.func @transform_16(%arg0: i32) -> (i32, i32) {
    %c0_i32 = arith.constant 0 : i32
    %c0_i32_0 = arith.constant 0 : i32
    %c0_i32_1 = arith.constant 0 : i32
    return %c0_i32, %c0_i32_0 : i32, i32
  }
  func.func @transform_17(%arg0: i32) -> (i32, i32) {
    %c0_i32 = arith.constant 0 : i32
    %c0_i32_0 = arith.constant 0 : i32
    %c0_i32_1 = arith.constant 0 : i32
    return %c0_i32, %c0_i32_0 : i32, i32
  }
  func.func @transform_18(%arg0: i32) -> (i32, i32) {
    %c0_i32 = arith.constant 0 : i32
    %c0_i32_0 = arith.constant 0 : i32
    %c0_i32_1 = arith.constant 0 : i32
    return %c0_i32, %c0_i32_0 : i32, i32
  }
  func.func @transform_19(%arg0: i32) -> (i32, i32) {
    %c0_i32 = arith.constant 0 : i32
    %c0_i32_0 = arith.constant 0 : i32
    %c0_i32_1 = arith.constant 0 : i32
    return %c0_i32, %c0_i32_0 : i32, i32
  }
  func.func @transform_20(%arg0: i32) -> (i32, i32) {
    %c0_i32 = arith.constant 0 : i32
    %c0_i32_0 = arith.constant 0 : i32
    %c0_i32_1 = arith.constant 0 : i32
    return %c0_i32, %c0_i32_0 : i32, i32
  }
  func.func @transform_21(%arg0: i32) -> (i32, i32) {
    %c0_i32 = arith.constant 0 : i32
    %c0_i32_0 = arith.constant 0 : i32
    %c0_i32_1 = arith.constant 0 : i32
    return %c0_i32, %c0_i32_0 : i32, i32
  }
  func.func @transform_22(%arg0: i32) -> (i32, i32) {
    %c0_i32 = arith.constant 0 : i32
    %c0_i32_0 = arith.constant 0 : i32
    %c0_i32_1 = arith.constant 0 : i32
    return %c0_i32, %c0_i32_0 : i32, i32
  }
  func.func @transform_23(%arg0: i32) -> (i32, i32) {
    %c0_i32 = arith.constant 0 : i32
    %c0_i32_0 = arith.constant 0 : i32
    %c0_i32_1 = arith.constant 0 : i32
    return %c0_i32, %c0_i32_0 : i32, i32
  }
  func.func @transform_24(%arg0: i32) -> (i32, i32) {
    %c0_i32 = arith.constant 0 : i32
    %c0_i32_0 = arith.constant 0 : i32
    %c0_i32_1 = arith.constant 0 : i32
    return %c0_i32, %c0_i32_0 : i32, i32
  }
  func.func @transform_25(%arg0: i32) -> (i32, i32) {
    %c0_i32 = arith.constant 0 : i32
    %c0_i32_0 = arith.constant 0 : i32
    %c0_i32_1 = arith.constant 0 : i32
    return %c0_i32, %c0_i32_0 : i32, i32
  }
  func.func @transform_26(%arg0: i32) -> (i32, i32) {
    %c0_i32 = arith.constant 0 : i32
    %c0_i32_0 = arith.constant 0 : i32
    %c0_i32_1 = arith.constant 0 : i32
    return %c0_i32, %c0_i32_0 : i32, i32
  }
  func.func @transform_27(%arg0: i32) -> (i32, i32) {
    %c0_i32 = arith.constant 0 : i32
    %c0_i32_0 = arith.constant 0 : i32
    %c0_i32_1 = arith.constant 0 : i32
    return %c0_i32, %c0_i32_0 : i32, i32
  }
  func.func @transform_28(%arg0: i32) -> (i32, i32) {
    %c0_i32 = arith.constant 0 : i32
    %c0_i32_0 = arith.constant 0 : i32
    %c0_i32_1 = arith.constant 0 : i32
    return %c0_i32, %c0_i32_0 : i32, i32
  }
  func.func @transform_29(%arg0: i32) -> (i32, i32) {
    %c0_i32 = arith.constant 0 : i32
    %c0_i32_0 = arith.constant 0 : i32
    %c0_i32_1 = arith.constant 0 : i32
    return %c0_i32, %c0_i32_0 : i32, i32
  }
  func.func @transform_30(%arg0: i32) -> (i32, i32) {
    %c0_i32 = arith.constant 0 : i32
    %c0_i32_0 = arith.constant 0 : i32
    %c0_i32_1 = arith.constant 0 : i32
    return %c0_i32, %c0_i32_0 : i32, i32
  }
  func.func @transform_31(%arg0: i32) -> (i32, i32) {
    %c0_i32 = arith.constant 0 : i32
    %c0_i32_0 = arith.constant 0 : i32
    %c0_i32_1 = arith.constant 0 : i32
    return %c0_i32, %c0_i32_0 : i32, i32
  }
  func.func @transform_32(%arg0: i32) -> (i32, i32) {
    %c0_i32 = arith.constant 0 : i32
    %c0_i32_0 = arith.constant 0 : i32
    %c0_i32_1 = arith.constant 0 : i32
    return %c0_i32, %c0_i32_0 : i32, i32
  }
  func.func @transform_33(%arg0: i32) -> (i32, i32, i32) {
    %c0_i32 = arith.constant 0 : i32
    %c0_i32_0 = arith.constant 0 : i32
    %c0_i32_1 = arith.constant 0 : i32
    return %arg0, %c0_i32, %c0_i32_0 : i32, i32, i32
  }
}

module attributes {stable_mosaic.version = 11 : i64} {
  func.func @_conformer_block_kernel(%arg0: i32, %arg1: memref<1x8x128xf32, #tpu.memory_space<vmem>>, %arg2: memref<1x8x1xf32, #tpu.memory_space<vmem>>, %arg3: memref<1x1x8xf32, #tpu.memory_space<vmem>>, %arg4: memref<1x128xf32, #tpu.memory_space<vmem>>, %arg5: memref<1x128xf32, #tpu.memory_space<vmem>>, %arg6: memref<128x256xbf16, #tpu.memory_space<vmem>>, %arg7: memref<1x256xf32, #tpu.memory_space<vmem>>, %arg8: memref<256x128xbf16, #tpu.memory_space<vmem>>, %arg9: memref<1x128xf32, #tpu.memory_space<vmem>>, %arg10: memref<1x128xf32, #tpu.memory_space<vmem>>, %arg11: memref<1x128xf32, #tpu.memory_space<vmem>>, %arg12: memref<128x384xbf16, #tpu.memory_space<vmem>>, %arg13: memref<1x384xf32, #tpu.memory_space<vmem>>, %arg14: memref<128x128xbf16, #tpu.memory_space<vmem>>, %arg15: memref<1x128xf32, #tpu.memory_space<vmem>>, %arg16: memref<1x128xf32, #tpu.memory_space<vmem>>, %arg17: memref<1x128xf32, #tpu.memory_space<vmem>>, %arg18: memref<128x256xbf16, #tpu.memory_space<vmem>>, %arg19: memref<1x256xf32, #tpu.memory_space<vmem>>, %arg20: memref<8x128xf32, #tpu.memory_space<vmem>>, %arg21: memref<1x128xf32, #tpu.memory_space<vmem>>, %arg22: memref<1x128xf32, #tpu.memory_space<vmem>>, %arg23: memref<1x128xf32, #tpu.memory_space<vmem>>, %arg24: memref<128x128xbf16, #tpu.memory_space<vmem>>, %arg25: memref<1x128xf32, #tpu.memory_space<vmem>>, %arg26: memref<1x128xf32, #tpu.memory_space<vmem>>, %arg27: memref<1x128xf32, #tpu.memory_space<vmem>>, %arg28: memref<128x256xbf16, #tpu.memory_space<vmem>>, %arg29: memref<1x256xf32, #tpu.memory_space<vmem>>, %arg30: memref<256x128xbf16, #tpu.memory_space<vmem>>, %arg31: memref<1x128xf32, #tpu.memory_space<vmem>>, %arg32: memref<1x128xf32, #tpu.memory_space<vmem>>, %arg33: memref<1x128xf32, #tpu.memory_space<vmem>>, %arg34: memref<1x8x128xf32, #tpu.memory_space<vmem>>) attributes {dimension_semantics = [#tpu.dimension_semantics<parallel>], iteration_bounds = array<i64: 2>, scalar_prefetch = 0 : i64, scratch_operands = 0 : i64, tpu.core_type = #tpu.core_type<tc>, window_params = [{transform_indices = @transform_0, window_bounds = array<i64: 1, 8, 128>}, {transform_indices = @transform_1, window_bounds = array<i64: 1, 8, 1>}, {transform_indices = @transform_2, window_bounds = array<i64: 1, 1, 8>}, {pipeline_mode = #tpu.pipeline_mode<synchronous>, transform_indices = @transform_3, window_bounds = array<i64: 1, 128>}, {pipeline_mode = #tpu.pipeline_mode<synchronous>, transform_indices = @transform_4, window_bounds = array<i64: 1, 128>}, {pipeline_mode = #tpu.pipeline_mode<synchronous>, transform_indices = @transform_5, window_bounds = array<i64: 128, 256>}, {pipeline_mode = #tpu.pipeline_mode<synchronous>, transform_indices = @transform_6, window_bounds = array<i64: 1, 256>}, {pipeline_mode = #tpu.pipeline_mode<synchronous>, transform_indices = @transform_7, window_bounds = array<i64: 256, 128>}, {pipeline_mode = #tpu.pipeline_mode<synchronous>, transform_indices = @transform_8, window_bounds = array<i64: 1, 128>}, {pipeline_mode = #tpu.pipeline_mode<synchronous>, transform_indices = @transform_9, window_bounds = array<i64: 1, 128>}, {pipeline_mode = #tpu.pipeline_mode<synchronous>, transform_indices = @transform_10, window_bounds = array<i64: 1, 128>}, {pipeline_mode = #tpu.pipeline_mode<synchronous>, transform_indices = @transform_11, window_bounds = array<i64: 128, 384>}, {pipeline_mode = #tpu.pipeline_mode<synchronous>, transform_indices = @transform_12, window_bounds = array<i64: 1, 384>}, {pipeline_mode = #tpu.pipeline_mode<synchronous>, transform_indices = @transform_13, window_bounds = array<i64: 128, 128>}, {pipeline_mode = #tpu.pipeline_mode<synchronous>, transform_indices = @transform_14, window_bounds = array<i64: 1, 128>}, {pipeline_mode = #tpu.pipeline_mode<synchronous>, transform_indices = @transform_15, window_bounds = array<i64: 1, 128>}, {pipeline_mode = #tpu.pipeline_mode<synchronous>, transform_indices = @transform_16, window_bounds = array<i64: 1, 128>}, {pipeline_mode = #tpu.pipeline_mode<synchronous>, transform_indices = @transform_17, window_bounds = array<i64: 128, 256>}, {pipeline_mode = #tpu.pipeline_mode<synchronous>, transform_indices = @transform_18, window_bounds = array<i64: 1, 256>}, {pipeline_mode = #tpu.pipeline_mode<synchronous>, transform_indices = @transform_19, window_bounds = array<i64: 8, 128>}, {pipeline_mode = #tpu.pipeline_mode<synchronous>, transform_indices = @transform_20, window_bounds = array<i64: 1, 128>}, {pipeline_mode = #tpu.pipeline_mode<synchronous>, transform_indices = @transform_21, window_bounds = array<i64: 1, 128>}, {pipeline_mode = #tpu.pipeline_mode<synchronous>, transform_indices = @transform_22, window_bounds = array<i64: 1, 128>}, {pipeline_mode = #tpu.pipeline_mode<synchronous>, transform_indices = @transform_23, window_bounds = array<i64: 128, 128>}, {pipeline_mode = #tpu.pipeline_mode<synchronous>, transform_indices = @transform_24, window_bounds = array<i64: 1, 128>}, {pipeline_mode = #tpu.pipeline_mode<synchronous>, transform_indices = @transform_25, window_bounds = array<i64: 1, 128>}, {pipeline_mode = #tpu.pipeline_mode<synchronous>, transform_indices = @transform_26, window_bounds = array<i64: 1, 128>}, {pipeline_mode = #tpu.pipeline_mode<synchronous>, transform_indices = @transform_27, window_bounds = array<i64: 128, 256>}, {pipeline_mode = #tpu.pipeline_mode<synchronous>, transform_indices = @transform_28, window_bounds = array<i64: 1, 256>}, {pipeline_mode = #tpu.pipeline_mode<synchronous>, transform_indices = @transform_29, window_bounds = array<i64: 256, 128>}, {pipeline_mode = #tpu.pipeline_mode<synchronous>, transform_indices = @transform_30, window_bounds = array<i64: 1, 128>}, {pipeline_mode = #tpu.pipeline_mode<synchronous>, transform_indices = @transform_31, window_bounds = array<i64: 1, 128>}, {pipeline_mode = #tpu.pipeline_mode<synchronous>, transform_indices = @transform_32, window_bounds = array<i64: 1, 128>}, {transform_indices = @transform_33, window_bounds = array<i64: 1, 8, 128>}]} {
    %c0 = arith.constant 0 : index
    %c0_0 = arith.constant 0 : index
    %c0_1 = arith.constant 0 : index
    %0 = vector.load %arg1[%c0, %c0_0, %c0_1] : memref<1x8x128xf32, #tpu.memory_space<vmem>>, vector<1x8x128xf32>
    %1 = vector.shape_cast %0 : vector<1x8x128xf32> to vector<8x128xf32>
    %c0_2 = arith.constant 0 : index
    %c0_3 = arith.constant 0 : index
    %c0_4 = arith.constant 0 : index
    %2 = vector.load %arg2[%c0_2, %c0_3, %c0_4] : memref<1x8x1xf32, #tpu.memory_space<vmem>>, vector<1x8x1xf32>
    %3 = vector.shape_cast %2 : vector<1x8x1xf32> to vector<8x1xf32>
    %c0_5 = arith.constant 0 : index
    %c0_6 = arith.constant 0 : index
    %c0_7 = arith.constant 0 : index
    %4 = vector.load %arg3[%c0_5, %c0_6, %c0_7] : memref<1x1x8xf32, #tpu.memory_space<vmem>>, vector<1x1x8xf32>
    %5 = vector.shape_cast %4 : vector<1x1x8xf32> to vector<1x8xf32>
    %cst = arith.constant dense<0.000000e+00> : vector<8xf32>
    %6 = vector.multi_reduction <add>, %1, %cst [1] : vector<8x128xf32> to vector<8xf32>
    %7 = vector.shape_cast %6 : vector<8xf32> to vector<8x1xf32>
    %cst_8 = arith.constant 1.280000e+02 : f32
    %8 = vector.broadcast %cst_8 : f32 to vector<8x1xf32>
    %9 = arith.divf %7, %8 : vector<8x1xf32>
    %10 = vector.broadcast %9 : vector<8x1xf32> to vector<8x128xf32>
    %11 = arith.subf %1, %10 : vector<8x128xf32>
    %12 = arith.mulf %11, %11 : vector<8x128xf32>
    %cst_9 = arith.constant dense<0.000000e+00> : vector<8xf32>
    %13 = vector.multi_reduction <add>, %12, %cst_9 [1] : vector<8x128xf32> to vector<8xf32>
    %14 = vector.shape_cast %13 : vector<8xf32> to vector<8x1xf32>
    %cst_10 = arith.constant 1.280000e+02 : f32
    %15 = vector.broadcast %cst_10 : f32 to vector<8x1xf32>
    %16 = arith.divf %14, %15 : vector<8x1xf32>
    %cst_11 = arith.constant 9.99999974E-6 : f32
    %17 = vector.broadcast %cst_11 : f32 to vector<8x1xf32>
    %18 = arith.addf %16, %17 : vector<8x1xf32>
    %19 = math.rsqrt %18 : vector<8x1xf32>
    %20 = vector.broadcast %19 : vector<8x1xf32> to vector<8x128xf32>
    %21 = arith.mulf %11, %20 : vector<8x128xf32>
    %c0_12 = arith.constant 0 : index
    %c0_13 = arith.constant 0 : index
    %22 = vector.load %arg4[%c0_12, %c0_13] : memref<1x128xf32, #tpu.memory_space<vmem>>, vector<1x128xf32>
    %23 = vector.broadcast %22 : vector<1x128xf32> to vector<8x128xf32>
    %24 = arith.mulf %21, %23 : vector<8x128xf32>
    %c0_14 = arith.constant 0 : index
    %c0_15 = arith.constant 0 : index
    %25 = vector.load %arg5[%c0_14, %c0_15] : memref<1x128xf32, #tpu.memory_space<vmem>>, vector<1x128xf32>
    %26 = vector.broadcast %25 : vector<1x128xf32> to vector<8x128xf32>
    %27 = arith.addf %24, %26 : vector<8x128xf32>
    %28 = arith.truncf %27 : vector<8x128xf32> to vector<8x128xbf16>
    %c0_16 = arith.constant 0 : index
    %c0_17 = arith.constant 0 : index
    %29 = vector.load %arg6[%c0_16, %c0_17] : memref<128x256xbf16, #tpu.memory_space<vmem>>, vector<128x256xbf16>
    %cst_18 = arith.constant dense<0.000000e+00> : vector<8x256xf32>
    %30 = tpu.matmul %28, %29, %cst_18 {dimension_numbers = #tpu.dot_dimension_numbers<[1], [0], [0], [1], [0, 0, 1, 1], [], []>} : vector<8x128xbf16>, vector<128x256xbf16>, vector<8x256xf32> -> vector<8x256xf32>
    %c0_19 = arith.constant 0 : index
    %c0_20 = arith.constant 0 : index
    %31 = vector.load %arg7[%c0_19, %c0_20] : memref<1x256xf32, #tpu.memory_space<vmem>>, vector<1x256xf32>
    %32 = vector.broadcast %31 : vector<1x256xf32> to vector<8x256xf32>
    %33 = arith.addf %30, %32 : vector<8x256xf32>
    %34 = arith.negf %33 : vector<8x256xf32>
    %35 = math.exp %34 : vector<8x256xf32>
    %cst_21 = arith.constant 1.000000e+00 : f32
    %36 = vector.broadcast %cst_21 : f32 to vector<8x256xf32>
    %37 = arith.addf %36, %35 : vector<8x256xf32>
    %38 = arith.divf %36, %37 : vector<8x256xf32>
    %39 = arith.mulf %33, %38 : vector<8x256xf32>
    %40 = arith.truncf %39 : vector<8x256xf32> to vector<8x256xbf16>
    %c0_22 = arith.constant 0 : index
    %c0_23 = arith.constant 0 : index
    %41 = vector.load %arg8[%c0_22, %c0_23] : memref<256x128xbf16, #tpu.memory_space<vmem>>, vector<256x128xbf16>
    %cst_24 = arith.constant dense<0.000000e+00> : vector<8x128xf32>
    %42 = tpu.matmul %40, %41, %cst_24 {dimension_numbers = #tpu.dot_dimension_numbers<[1], [0], [0], [1], [0, 0, 1, 1], [], []>} : vector<8x256xbf16>, vector<256x128xbf16>, vector<8x128xf32> -> vector<8x128xf32>
    %c0_25 = arith.constant 0 : index
    %c0_26 = arith.constant 0 : index
    %43 = vector.load %arg9[%c0_25, %c0_26] : memref<1x128xf32, #tpu.memory_space<vmem>>, vector<1x128xf32>
    %44 = vector.broadcast %43 : vector<1x128xf32> to vector<8x128xf32>
    %45 = arith.addf %42, %44 : vector<8x128xf32>
    %cst_27 = arith.constant 5.000000e-01 : f32
    %46 = vector.broadcast %cst_27 : f32 to vector<8x128xf32>
    %47 = arith.mulf %46, %45 : vector<8x128xf32>
    %48 = arith.addf %1, %47 : vector<8x128xf32>
    %cst_28 = arith.constant dense<0.000000e+00> : vector<8xf32>
    %49 = vector.multi_reduction <add>, %48, %cst_28 [1] : vector<8x128xf32> to vector<8xf32>
    %50 = vector.shape_cast %49 : vector<8xf32> to vector<8x1xf32>
    %cst_29 = arith.constant 1.280000e+02 : f32
    %51 = vector.broadcast %cst_29 : f32 to vector<8x1xf32>
    %52 = arith.divf %50, %51 : vector<8x1xf32>
    %53 = vector.broadcast %52 : vector<8x1xf32> to vector<8x128xf32>
    %54 = arith.subf %48, %53 : vector<8x128xf32>
    %55 = arith.mulf %54, %54 : vector<8x128xf32>
    %cst_30 = arith.constant dense<0.000000e+00> : vector<8xf32>
    %56 = vector.multi_reduction <add>, %55, %cst_30 [1] : vector<8x128xf32> to vector<8xf32>
    %57 = vector.shape_cast %56 : vector<8xf32> to vector<8x1xf32>
    %cst_31 = arith.constant 1.280000e+02 : f32
    %58 = vector.broadcast %cst_31 : f32 to vector<8x1xf32>
    %59 = arith.divf %57, %58 : vector<8x1xf32>
    %cst_32 = arith.constant 9.99999974E-6 : f32
    %60 = vector.broadcast %cst_32 : f32 to vector<8x1xf32>
    %61 = arith.addf %59, %60 : vector<8x1xf32>
    %62 = math.rsqrt %61 : vector<8x1xf32>
    %63 = vector.broadcast %62 : vector<8x1xf32> to vector<8x128xf32>
    %64 = arith.mulf %54, %63 : vector<8x128xf32>
    %c0_33 = arith.constant 0 : index
    %c0_34 = arith.constant 0 : index
    %65 = vector.load %arg10[%c0_33, %c0_34] : memref<1x128xf32, #tpu.memory_space<vmem>>, vector<1x128xf32>
    %66 = vector.broadcast %65 : vector<1x128xf32> to vector<8x128xf32>
    %67 = arith.mulf %64, %66 : vector<8x128xf32>
    %c0_35 = arith.constant 0 : index
    %c0_36 = arith.constant 0 : index
    %68 = vector.load %arg11[%c0_35, %c0_36] : memref<1x128xf32, #tpu.memory_space<vmem>>, vector<1x128xf32>
    %69 = vector.broadcast %68 : vector<1x128xf32> to vector<8x128xf32>
    %70 = arith.addf %67, %69 : vector<8x128xf32>
    %71 = arith.truncf %70 : vector<8x128xf32> to vector<8x128xbf16>
    %c0_37 = arith.constant 0 : index
    %c0_38 = arith.constant 0 : index
    %72 = vector.load %arg12[%c0_37, %c0_38] : memref<128x384xbf16, #tpu.memory_space<vmem>>, vector<128x384xbf16>
    %cst_39 = arith.constant dense<0.000000e+00> : vector<8x384xf32>
    %73 = tpu.matmul %71, %72, %cst_39 {dimension_numbers = #tpu.dot_dimension_numbers<[1], [0], [0], [1], [0, 0, 1, 1], [], []>} : vector<8x128xbf16>, vector<128x384xbf16>, vector<8x384xf32> -> vector<8x384xf32>
    %c0_40 = arith.constant 0 : index
    %c0_41 = arith.constant 0 : index
    %74 = vector.load %arg13[%c0_40, %c0_41] : memref<1x384xf32, #tpu.memory_space<vmem>>, vector<1x384xf32>
    %75 = vector.broadcast %74 : vector<1x384xf32> to vector<8x384xf32>
    %76 = arith.addf %73, %75 : vector<8x384xf32>
    %77 = vector.extract_strided_slice %76 {offsets = [0, 0], sizes = [8, 128], strides = [1, 1]} : vector<8x384xf32> to vector<8x128xf32>
    %78 = vector.extract_strided_slice %76 {offsets = [0, 128], sizes = [8, 128], strides = [1, 1]} : vector<8x384xf32> to vector<8x128xf32>
    %79 = vector.extract_strided_slice %76 {offsets = [0, 256], sizes = [8, 128], strides = [1, 1]} : vector<8x384xf32> to vector<8x128xf32>
    %80 = tpu.iota {dimensions = array<i32: 1>} : vector<1x128xi32>
    %81 = arith.truncf %77 : vector<8x128xf32> to vector<8x128xbf16>
    %cst_42 = arith.constant 0.000000e+00 : f32
    %82 = vector.broadcast %cst_42 : f32 to vector<8x128xf32>
    %c0_i32 = arith.constant 0 : i32
    %83 = vector.broadcast %c0_i32 : i32 to vector<1x128xi32>
    %84 = arith.cmpi sge, %80, %83 : vector<1x128xi32>
    %c32_i32 = arith.constant 32 : i32
    %85 = vector.broadcast %c32_i32 : i32 to vector<1x128xi32>
    %86 = arith.cmpi slt, %80, %85 : vector<1x128xi32>
    %87 = arith.andi %84, %86 : vector<1x128xi1>
    %cst_43 = arith.constant 1.000000e+00 : f32
    %cst_44 = arith.constant 0.000000e+00 : f32
    %88 = vector.broadcast %cst_43 : f32 to vector<1x128xf32>
    %89 = vector.broadcast %cst_44 : f32 to vector<1x128xf32>
    %90 = arith.select %87, %88, %89 : vector<1x128xi1>, vector<1x128xf32>
    %91 = vector.broadcast %90 : vector<1x128xf32> to vector<8x128xf32>
    %92 = arith.mulf %78, %91 : vector<8x128xf32>
    %93 = arith.truncf %92 : vector<8x128xf32> to vector<8x128xbf16>
    %cst_45 = arith.constant dense<0.000000e+00> : vector<8x8xf32>
    %94 = tpu.matmul %81, %93, %cst_45 {dimension_numbers = #tpu.dot_dimension_numbers<[1], [1], [0], [0], [0, 0, 1, 0], [], []>} : vector<8x128xbf16>, vector<8x128xbf16>, vector<8x8xf32> -> vector<8x8xf32>
    %cst_46 = arith.constant 0.176776692 : f32
    %95 = vector.broadcast %cst_46 : f32 to vector<8x8xf32>
    %96 = arith.mulf %94, %95 : vector<8x8xf32>
    %cst_47 = arith.constant 5.000000e-01 : f32
    %97 = vector.broadcast %cst_47 : f32 to vector<1x8xf32>
    %98 = arith.cmpf ogt, %5, %97 : vector<1x8xf32>
    %cst_48 = arith.constant -1.000000e+30 : f32
    %99 = vector.shape_cast %98 : vector<1x8xi1> to vector<1x8xi1>
    %100 = vector.broadcast %99 : vector<1x8xi1> to vector<8x8xi1>
    %101 = vector.broadcast %cst_48 : f32 to vector<8x8xf32>
    %102 = arith.select %100, %96, %101 : vector<8x8xi1>, vector<8x8xf32>
    %cst_49 = arith.constant dense<0xFF800000> : vector<8xf32>
    %103 = vector.multi_reduction <maximumf>, %102, %cst_49 [1] : vector<8x8xf32> to vector<8xf32>
    %104 = vector.shape_cast %103 : vector<8xf32> to vector<8x1xf32>
    %105 = vector.broadcast %104 : vector<8x1xf32> to vector<8x8xf32>
    %106 = arith.subf %102, %105 : vector<8x8xf32>
    %107 = math.exp %106 : vector<8x8xf32>
    %cst_50 = arith.constant dense<0.000000e+00> : vector<8xf32>
    %108 = vector.multi_reduction <add>, %107, %cst_50 [1] : vector<8x8xf32> to vector<8xf32>
    %109 = vector.shape_cast %108 : vector<8xf32> to vector<8x1xf32>
    %110 = tpu.reciprocal %109 {approx = true} : vector<8x1xf32> -> vector<8x1xf32>
    %111 = vector.broadcast %110 : vector<8x1xf32> to vector<8x8xf32>
    %112 = arith.mulf %107, %111 : vector<8x8xf32>
    %113 = vector.broadcast %90 : vector<1x128xf32> to vector<8x128xf32>
    %114 = arith.mulf %79, %113 : vector<8x128xf32>
    %115 = arith.truncf %114 : vector<8x128xf32> to vector<8x128xbf16>
    %116 = arith.truncf %112 : vector<8x8xf32> to vector<8x8xbf16>
    %cst_51 = arith.constant dense<0.000000e+00> : vector<8x128xf32>
    %117 = tpu.matmul %116, %115, %cst_51 {dimension_numbers = #tpu.dot_dimension_numbers<[1], [0], [0], [1], [0, 0, 1, 1], [], []>} : vector<8x8xbf16>, vector<8x128xbf16>, vector<8x128xf32> -> vector<8x128xf32>
    %118 = arith.addf %82, %117 : vector<8x128xf32>
    %c32_i32_52 = arith.constant 32 : i32
    %119 = vector.broadcast %c32_i32_52 : i32 to vector<1x128xi32>
    %120 = arith.cmpi sge, %80, %119 : vector<1x128xi32>
    %c64_i32 = arith.constant 64 : i32
    %121 = vector.broadcast %c64_i32 : i32 to vector<1x128xi32>
    %122 = arith.cmpi slt, %80, %121 : vector<1x128xi32>
    %123 = arith.andi %120, %122 : vector<1x128xi1>
    %cst_53 = arith.constant 1.000000e+00 : f32
    %cst_54 = arith.constant 0.000000e+00 : f32
    %124 = vector.broadcast %cst_53 : f32 to vector<1x128xf32>
    %125 = vector.broadcast %cst_54 : f32 to vector<1x128xf32>
    %126 = arith.select %123, %124, %125 : vector<1x128xi1>, vector<1x128xf32>
    %127 = vector.broadcast %126 : vector<1x128xf32> to vector<8x128xf32>
    %128 = arith.mulf %78, %127 : vector<8x128xf32>
    %129 = arith.truncf %128 : vector<8x128xf32> to vector<8x128xbf16>
    %cst_55 = arith.constant dense<0.000000e+00> : vector<8x8xf32>
    %130 = tpu.matmul %81, %129, %cst_55 {dimension_numbers = #tpu.dot_dimension_numbers<[1], [1], [0], [0], [0, 0, 1, 0], [], []>} : vector<8x128xbf16>, vector<8x128xbf16>, vector<8x8xf32> -> vector<8x8xf32>
    %cst_56 = arith.constant 0.176776692 : f32
    %131 = vector.broadcast %cst_56 : f32 to vector<8x8xf32>
    %132 = arith.mulf %130, %131 : vector<8x8xf32>
    %cst_57 = arith.constant 5.000000e-01 : f32
    %133 = vector.broadcast %cst_57 : f32 to vector<1x8xf32>
    %134 = arith.cmpf ogt, %5, %133 : vector<1x8xf32>
    %cst_58 = arith.constant -1.000000e+30 : f32
    %135 = vector.shape_cast %134 : vector<1x8xi1> to vector<1x8xi1>
    %136 = vector.broadcast %135 : vector<1x8xi1> to vector<8x8xi1>
    %137 = vector.broadcast %cst_58 : f32 to vector<8x8xf32>
    %138 = arith.select %136, %132, %137 : vector<8x8xi1>, vector<8x8xf32>
    %cst_59 = arith.constant dense<0xFF800000> : vector<8xf32>
    %139 = vector.multi_reduction <maximumf>, %138, %cst_59 [1] : vector<8x8xf32> to vector<8xf32>
    %140 = vector.shape_cast %139 : vector<8xf32> to vector<8x1xf32>
    %141 = vector.broadcast %140 : vector<8x1xf32> to vector<8x8xf32>
    %142 = arith.subf %138, %141 : vector<8x8xf32>
    %143 = math.exp %142 : vector<8x8xf32>
    %cst_60 = arith.constant dense<0.000000e+00> : vector<8xf32>
    %144 = vector.multi_reduction <add>, %143, %cst_60 [1] : vector<8x8xf32> to vector<8xf32>
    %145 = vector.shape_cast %144 : vector<8xf32> to vector<8x1xf32>
    %146 = tpu.reciprocal %145 {approx = true} : vector<8x1xf32> -> vector<8x1xf32>
    %147 = vector.broadcast %146 : vector<8x1xf32> to vector<8x8xf32>
    %148 = arith.mulf %143, %147 : vector<8x8xf32>
    %149 = vector.broadcast %126 : vector<1x128xf32> to vector<8x128xf32>
    %150 = arith.mulf %79, %149 : vector<8x128xf32>
    %151 = arith.truncf %150 : vector<8x128xf32> to vector<8x128xbf16>
    %152 = arith.truncf %148 : vector<8x8xf32> to vector<8x8xbf16>
    %cst_61 = arith.constant dense<0.000000e+00> : vector<8x128xf32>
    %153 = tpu.matmul %152, %151, %cst_61 {dimension_numbers = #tpu.dot_dimension_numbers<[1], [0], [0], [1], [0, 0, 1, 1], [], []>} : vector<8x8xbf16>, vector<8x128xbf16>, vector<8x128xf32> -> vector<8x128xf32>
    %154 = arith.addf %118, %153 : vector<8x128xf32>
    %c64_i32_62 = arith.constant 64 : i32
    %155 = vector.broadcast %c64_i32_62 : i32 to vector<1x128xi32>
    %156 = arith.cmpi sge, %80, %155 : vector<1x128xi32>
    %c96_i32 = arith.constant 96 : i32
    %157 = vector.broadcast %c96_i32 : i32 to vector<1x128xi32>
    %158 = arith.cmpi slt, %80, %157 : vector<1x128xi32>
    %159 = arith.andi %156, %158 : vector<1x128xi1>
    %cst_63 = arith.constant 1.000000e+00 : f32
    %cst_64 = arith.constant 0.000000e+00 : f32
    %160 = vector.broadcast %cst_63 : f32 to vector<1x128xf32>
    %161 = vector.broadcast %cst_64 : f32 to vector<1x128xf32>
    %162 = arith.select %159, %160, %161 : vector<1x128xi1>, vector<1x128xf32>
    %163 = vector.broadcast %162 : vector<1x128xf32> to vector<8x128xf32>
    %164 = arith.mulf %78, %163 : vector<8x128xf32>
    %165 = arith.truncf %164 : vector<8x128xf32> to vector<8x128xbf16>
    %cst_65 = arith.constant dense<0.000000e+00> : vector<8x8xf32>
    %166 = tpu.matmul %81, %165, %cst_65 {dimension_numbers = #tpu.dot_dimension_numbers<[1], [1], [0], [0], [0, 0, 1, 0], [], []>} : vector<8x128xbf16>, vector<8x128xbf16>, vector<8x8xf32> -> vector<8x8xf32>
    %cst_66 = arith.constant 0.176776692 : f32
    %167 = vector.broadcast %cst_66 : f32 to vector<8x8xf32>
    %168 = arith.mulf %166, %167 : vector<8x8xf32>
    %cst_67 = arith.constant 5.000000e-01 : f32
    %169 = vector.broadcast %cst_67 : f32 to vector<1x8xf32>
    %170 = arith.cmpf ogt, %5, %169 : vector<1x8xf32>
    %cst_68 = arith.constant -1.000000e+30 : f32
    %171 = vector.shape_cast %170 : vector<1x8xi1> to vector<1x8xi1>
    %172 = vector.broadcast %171 : vector<1x8xi1> to vector<8x8xi1>
    %173 = vector.broadcast %cst_68 : f32 to vector<8x8xf32>
    %174 = arith.select %172, %168, %173 : vector<8x8xi1>, vector<8x8xf32>
    %cst_69 = arith.constant dense<0xFF800000> : vector<8xf32>
    %175 = vector.multi_reduction <maximumf>, %174, %cst_69 [1] : vector<8x8xf32> to vector<8xf32>
    %176 = vector.shape_cast %175 : vector<8xf32> to vector<8x1xf32>
    %177 = vector.broadcast %176 : vector<8x1xf32> to vector<8x8xf32>
    %178 = arith.subf %174, %177 : vector<8x8xf32>
    %179 = math.exp %178 : vector<8x8xf32>
    %cst_70 = arith.constant dense<0.000000e+00> : vector<8xf32>
    %180 = vector.multi_reduction <add>, %179, %cst_70 [1] : vector<8x8xf32> to vector<8xf32>
    %181 = vector.shape_cast %180 : vector<8xf32> to vector<8x1xf32>
    %182 = tpu.reciprocal %181 {approx = true} : vector<8x1xf32> -> vector<8x1xf32>
    %183 = vector.broadcast %182 : vector<8x1xf32> to vector<8x8xf32>
    %184 = arith.mulf %179, %183 : vector<8x8xf32>
    %185 = vector.broadcast %162 : vector<1x128xf32> to vector<8x128xf32>
    %186 = arith.mulf %79, %185 : vector<8x128xf32>
    %187 = arith.truncf %186 : vector<8x128xf32> to vector<8x128xbf16>
    %188 = arith.truncf %184 : vector<8x8xf32> to vector<8x8xbf16>
    %cst_71 = arith.constant dense<0.000000e+00> : vector<8x128xf32>
    %189 = tpu.matmul %188, %187, %cst_71 {dimension_numbers = #tpu.dot_dimension_numbers<[1], [0], [0], [1], [0, 0, 1, 1], [], []>} : vector<8x8xbf16>, vector<8x128xbf16>, vector<8x128xf32> -> vector<8x128xf32>
    %190 = arith.addf %154, %189 : vector<8x128xf32>
    %c96_i32_72 = arith.constant 96 : i32
    %191 = vector.broadcast %c96_i32_72 : i32 to vector<1x128xi32>
    %192 = arith.cmpi sge, %80, %191 : vector<1x128xi32>
    %c128_i32 = arith.constant 128 : i32
    %193 = vector.broadcast %c128_i32 : i32 to vector<1x128xi32>
    %194 = arith.cmpi slt, %80, %193 : vector<1x128xi32>
    %195 = arith.andi %192, %194 : vector<1x128xi1>
    %cst_73 = arith.constant 1.000000e+00 : f32
    %cst_74 = arith.constant 0.000000e+00 : f32
    %196 = vector.broadcast %cst_73 : f32 to vector<1x128xf32>
    %197 = vector.broadcast %cst_74 : f32 to vector<1x128xf32>
    %198 = arith.select %195, %196, %197 : vector<1x128xi1>, vector<1x128xf32>
    %199 = vector.broadcast %198 : vector<1x128xf32> to vector<8x128xf32>
    %200 = arith.mulf %78, %199 : vector<8x128xf32>
    %201 = arith.truncf %200 : vector<8x128xf32> to vector<8x128xbf16>
    %cst_75 = arith.constant dense<0.000000e+00> : vector<8x8xf32>
    %202 = tpu.matmul %81, %201, %cst_75 {dimension_numbers = #tpu.dot_dimension_numbers<[1], [1], [0], [0], [0, 0, 1, 0], [], []>} : vector<8x128xbf16>, vector<8x128xbf16>, vector<8x8xf32> -> vector<8x8xf32>
    %cst_76 = arith.constant 0.176776692 : f32
    %203 = vector.broadcast %cst_76 : f32 to vector<8x8xf32>
    %204 = arith.mulf %202, %203 : vector<8x8xf32>
    %cst_77 = arith.constant 5.000000e-01 : f32
    %205 = vector.broadcast %cst_77 : f32 to vector<1x8xf32>
    %206 = arith.cmpf ogt, %5, %205 : vector<1x8xf32>
    %cst_78 = arith.constant -1.000000e+30 : f32
    %207 = vector.shape_cast %206 : vector<1x8xi1> to vector<1x8xi1>
    %208 = vector.broadcast %207 : vector<1x8xi1> to vector<8x8xi1>
    %209 = vector.broadcast %cst_78 : f32 to vector<8x8xf32>
    %210 = arith.select %208, %204, %209 : vector<8x8xi1>, vector<8x8xf32>
    %cst_79 = arith.constant dense<0xFF800000> : vector<8xf32>
    %211 = vector.multi_reduction <maximumf>, %210, %cst_79 [1] : vector<8x8xf32> to vector<8xf32>
    %212 = vector.shape_cast %211 : vector<8xf32> to vector<8x1xf32>
    %213 = vector.broadcast %212 : vector<8x1xf32> to vector<8x8xf32>
    %214 = arith.subf %210, %213 : vector<8x8xf32>
    %215 = math.exp %214 : vector<8x8xf32>
    %cst_80 = arith.constant dense<0.000000e+00> : vector<8xf32>
    %216 = vector.multi_reduction <add>, %215, %cst_80 [1] : vector<8x8xf32> to vector<8xf32>
    %217 = vector.shape_cast %216 : vector<8xf32> to vector<8x1xf32>
    %218 = tpu.reciprocal %217 {approx = true} : vector<8x1xf32> -> vector<8x1xf32>
    %219 = vector.broadcast %218 : vector<8x1xf32> to vector<8x8xf32>
    %220 = arith.mulf %215, %219 : vector<8x8xf32>
    %221 = vector.broadcast %198 : vector<1x128xf32> to vector<8x128xf32>
    %222 = arith.mulf %79, %221 : vector<8x128xf32>
    %223 = arith.truncf %222 : vector<8x128xf32> to vector<8x128xbf16>
    %224 = arith.truncf %220 : vector<8x8xf32> to vector<8x8xbf16>
    %cst_81 = arith.constant dense<0.000000e+00> : vector<8x128xf32>
    %225 = tpu.matmul %224, %223, %cst_81 {dimension_numbers = #tpu.dot_dimension_numbers<[1], [0], [0], [1], [0, 0, 1, 1], [], []>} : vector<8x8xbf16>, vector<8x128xbf16>, vector<8x128xf32> -> vector<8x128xf32>
    %226 = arith.addf %190, %225 : vector<8x128xf32>
    %227 = arith.truncf %226 : vector<8x128xf32> to vector<8x128xbf16>
    %c0_82 = arith.constant 0 : index
    %c0_83 = arith.constant 0 : index
    %228 = vector.load %arg14[%c0_82, %c0_83] : memref<128x128xbf16, #tpu.memory_space<vmem>>, vector<128x128xbf16>
    %cst_84 = arith.constant dense<0.000000e+00> : vector<8x128xf32>
    %229 = tpu.matmul %227, %228, %cst_84 {dimension_numbers = #tpu.dot_dimension_numbers<[1], [0], [0], [1], [0, 0, 1, 1], [], []>} : vector<8x128xbf16>, vector<128x128xbf16>, vector<8x128xf32> -> vector<8x128xf32>
    %c0_85 = arith.constant 0 : index
    %c0_86 = arith.constant 0 : index
    %230 = vector.load %arg15[%c0_85, %c0_86] : memref<1x128xf32, #tpu.memory_space<vmem>>, vector<1x128xf32>
    %231 = vector.broadcast %230 : vector<1x128xf32> to vector<8x128xf32>
    %232 = arith.addf %229, %231 : vector<8x128xf32>
    %233 = vector.broadcast %3 : vector<8x1xf32> to vector<8x128xf32>
    %234 = arith.mulf %232, %233 : vector<8x128xf32>
    %235 = arith.addf %48, %234 : vector<8x128xf32>
    %cst_87 = arith.constant dense<0.000000e+00> : vector<8xf32>
    %236 = vector.multi_reduction <add>, %235, %cst_87 [1] : vector<8x128xf32> to vector<8xf32>
    %237 = vector.shape_cast %236 : vector<8xf32> to vector<8x1xf32>
    %cst_88 = arith.constant 1.280000e+02 : f32
    %238 = vector.broadcast %cst_88 : f32 to vector<8x1xf32>
    %239 = arith.divf %237, %238 : vector<8x1xf32>
    %240 = vector.broadcast %239 : vector<8x1xf32> to vector<8x128xf32>
    %241 = arith.subf %235, %240 : vector<8x128xf32>
    %242 = arith.mulf %241, %241 : vector<8x128xf32>
    %cst_89 = arith.constant dense<0.000000e+00> : vector<8xf32>
    %243 = vector.multi_reduction <add>, %242, %cst_89 [1] : vector<8x128xf32> to vector<8xf32>
    %244 = vector.shape_cast %243 : vector<8xf32> to vector<8x1xf32>
    %cst_90 = arith.constant 1.280000e+02 : f32
    %245 = vector.broadcast %cst_90 : f32 to vector<8x1xf32>
    %246 = arith.divf %244, %245 : vector<8x1xf32>
    %cst_91 = arith.constant 9.99999974E-6 : f32
    %247 = vector.broadcast %cst_91 : f32 to vector<8x1xf32>
    %248 = arith.addf %246, %247 : vector<8x1xf32>
    %249 = math.rsqrt %248 : vector<8x1xf32>
    %250 = vector.broadcast %249 : vector<8x1xf32> to vector<8x128xf32>
    %251 = arith.mulf %241, %250 : vector<8x128xf32>
    %c0_92 = arith.constant 0 : index
    %c0_93 = arith.constant 0 : index
    %252 = vector.load %arg16[%c0_92, %c0_93] : memref<1x128xf32, #tpu.memory_space<vmem>>, vector<1x128xf32>
    %253 = vector.broadcast %252 : vector<1x128xf32> to vector<8x128xf32>
    %254 = arith.mulf %251, %253 : vector<8x128xf32>
    %c0_94 = arith.constant 0 : index
    %c0_95 = arith.constant 0 : index
    %255 = vector.load %arg17[%c0_94, %c0_95] : memref<1x128xf32, #tpu.memory_space<vmem>>, vector<1x128xf32>
    %256 = vector.broadcast %255 : vector<1x128xf32> to vector<8x128xf32>
    %257 = arith.addf %254, %256 : vector<8x128xf32>
    %258 = arith.truncf %257 : vector<8x128xf32> to vector<8x128xbf16>
    %c0_96 = arith.constant 0 : index
    %c0_97 = arith.constant 0 : index
    %259 = vector.load %arg18[%c0_96, %c0_97] : memref<128x256xbf16, #tpu.memory_space<vmem>>, vector<128x256xbf16>
    %cst_98 = arith.constant dense<0.000000e+00> : vector<8x256xf32>
    %260 = tpu.matmul %258, %259, %cst_98 {dimension_numbers = #tpu.dot_dimension_numbers<[1], [0], [0], [1], [0, 0, 1, 1], [], []>} : vector<8x128xbf16>, vector<128x256xbf16>, vector<8x256xf32> -> vector<8x256xf32>
    %c0_99 = arith.constant 0 : index
    %c0_100 = arith.constant 0 : index
    %261 = vector.load %arg19[%c0_99, %c0_100] : memref<1x256xf32, #tpu.memory_space<vmem>>, vector<1x256xf32>
    %262 = vector.broadcast %261 : vector<1x256xf32> to vector<8x256xf32>
    %263 = arith.addf %260, %262 : vector<8x256xf32>
    %264 = vector.extract_strided_slice %263 {offsets = [0, 0], sizes = [8, 128], strides = [1, 1]} : vector<8x256xf32> to vector<8x128xf32>
    %265 = vector.extract_strided_slice %263 {offsets = [0, 128], sizes = [8, 128], strides = [1, 1]} : vector<8x256xf32> to vector<8x128xf32>
    %266 = arith.negf %265 : vector<8x128xf32>
    %267 = math.exp %266 : vector<8x128xf32>
    %cst_101 = arith.constant 1.000000e+00 : f32
    %268 = vector.broadcast %cst_101 : f32 to vector<8x128xf32>
    %269 = arith.addf %268, %267 : vector<8x128xf32>
    %270 = arith.divf %268, %269 : vector<8x128xf32>
    %271 = arith.mulf %264, %270 : vector<8x128xf32>
    %272 = vector.broadcast %3 : vector<8x1xf32> to vector<8x128xf32>
    %273 = arith.mulf %271, %272 : vector<8x128xf32>
    %cst_102 = arith.constant 0.000000e+00 : f32
    %274 = vector.broadcast %cst_102 : f32 to vector<3x128xf32>
    %275 = tpu.concatenate %274, %273, %274 in 0 : vector<3x128xf32>, vector<8x128xf32>, vector<3x128xf32> -> vector<14x128xf32>
    %c0_103 = arith.constant 0 : index
    %c0_104 = arith.constant 0 : index
    %276 = vector.load %arg20[%c0_103, %c0_104] : memref<8x128xf32, #tpu.memory_space<vmem>>, vector<8x128xf32>
    %cst_105 = arith.constant 0.000000e+00 : f32
    %277 = vector.broadcast %cst_105 : f32 to vector<8x128xf32>
    %c0_106 = arith.constant 0 : index
    %c0_107 = arith.constant 0 : index
    %278 = vector.load %arg21[%c0_106, %c0_107] : memref<1x128xf32, #tpu.memory_space<vmem>>, vector<1x128xf32>
    %279 = vector.broadcast %278 : vector<1x128xf32> to vector<8x128xf32>
    %280 = arith.addf %277, %279 : vector<8x128xf32>
    %281 = vector.extract_strided_slice %275 {offsets = [0, 0], sizes = [8, 128], strides = [1, 1]} : vector<14x128xf32> to vector<8x128xf32>
    %282 = vector.extract_strided_slice %276 {offsets = [0, 0], sizes = [1, 128], strides = [1, 1]} : vector<8x128xf32> to vector<1x128xf32>
    %283 = vector.broadcast %282 : vector<1x128xf32> to vector<8x128xf32>
    %284 = arith.mulf %281, %283 : vector<8x128xf32>
    %285 = arith.addf %280, %284 : vector<8x128xf32>
    %286 = vector.extract_strided_slice %275 {offsets = [1, 0], sizes = [8, 128], strides = [1, 1]} : vector<14x128xf32> to vector<8x128xf32>
    %287 = vector.extract_strided_slice %276 {offsets = [1, 0], sizes = [1, 128], strides = [1, 1]} : vector<8x128xf32> to vector<1x128xf32>
    %288 = vector.broadcast %287 : vector<1x128xf32> to vector<8x128xf32>
    %289 = arith.mulf %286, %288 : vector<8x128xf32>
    %290 = arith.addf %285, %289 : vector<8x128xf32>
    %291 = vector.extract_strided_slice %275 {offsets = [2, 0], sizes = [8, 128], strides = [1, 1]} : vector<14x128xf32> to vector<8x128xf32>
    %292 = vector.extract_strided_slice %276 {offsets = [2, 0], sizes = [1, 128], strides = [1, 1]} : vector<8x128xf32> to vector<1x128xf32>
    %293 = vector.broadcast %292 : vector<1x128xf32> to vector<8x128xf32>
    %294 = arith.mulf %291, %293 : vector<8x128xf32>
    %295 = arith.addf %290, %294 : vector<8x128xf32>
    %296 = vector.extract_strided_slice %275 {offsets = [3, 0], sizes = [8, 128], strides = [1, 1]} : vector<14x128xf32> to vector<8x128xf32>
    %297 = vector.extract_strided_slice %276 {offsets = [3, 0], sizes = [1, 128], strides = [1, 1]} : vector<8x128xf32> to vector<1x128xf32>
    %298 = vector.broadcast %297 : vector<1x128xf32> to vector<8x128xf32>
    %299 = arith.mulf %296, %298 : vector<8x128xf32>
    %300 = arith.addf %295, %299 : vector<8x128xf32>
    %301 = vector.extract_strided_slice %275 {offsets = [4, 0], sizes = [8, 128], strides = [1, 1]} : vector<14x128xf32> to vector<8x128xf32>
    %302 = vector.extract_strided_slice %276 {offsets = [4, 0], sizes = [1, 128], strides = [1, 1]} : vector<8x128xf32> to vector<1x128xf32>
    %303 = vector.broadcast %302 : vector<1x128xf32> to vector<8x128xf32>
    %304 = arith.mulf %301, %303 : vector<8x128xf32>
    %305 = arith.addf %300, %304 : vector<8x128xf32>
    %306 = vector.extract_strided_slice %275 {offsets = [5, 0], sizes = [8, 128], strides = [1, 1]} : vector<14x128xf32> to vector<8x128xf32>
    %307 = vector.extract_strided_slice %276 {offsets = [5, 0], sizes = [1, 128], strides = [1, 1]} : vector<8x128xf32> to vector<1x128xf32>
    %308 = vector.broadcast %307 : vector<1x128xf32> to vector<8x128xf32>
    %309 = arith.mulf %306, %308 : vector<8x128xf32>
    %310 = arith.addf %305, %309 : vector<8x128xf32>
    %311 = vector.extract_strided_slice %275 {offsets = [6, 0], sizes = [8, 128], strides = [1, 1]} : vector<14x128xf32> to vector<8x128xf32>
    %312 = vector.extract_strided_slice %276 {offsets = [6, 0], sizes = [1, 128], strides = [1, 1]} : vector<8x128xf32> to vector<1x128xf32>
    %313 = vector.broadcast %312 : vector<1x128xf32> to vector<8x128xf32>
    %314 = arith.mulf %311, %313 : vector<8x128xf32>
    %315 = arith.addf %310, %314 : vector<8x128xf32>
    %cst_108 = arith.constant dense<0.000000e+00> : vector<8xf32>
    %316 = vector.multi_reduction <add>, %315, %cst_108 [1] : vector<8x128xf32> to vector<8xf32>
    %317 = vector.shape_cast %316 : vector<8xf32> to vector<8x1xf32>
    %cst_109 = arith.constant 1.280000e+02 : f32
    %318 = vector.broadcast %cst_109 : f32 to vector<8x1xf32>
    %319 = arith.divf %317, %318 : vector<8x1xf32>
    %320 = vector.broadcast %319 : vector<8x1xf32> to vector<8x128xf32>
    %321 = arith.subf %315, %320 : vector<8x128xf32>
    %322 = arith.mulf %321, %321 : vector<8x128xf32>
    %cst_110 = arith.constant dense<0.000000e+00> : vector<8xf32>
    %323 = vector.multi_reduction <add>, %322, %cst_110 [1] : vector<8x128xf32> to vector<8xf32>
    %324 = vector.shape_cast %323 : vector<8xf32> to vector<8x1xf32>
    %cst_111 = arith.constant 1.280000e+02 : f32
    %325 = vector.broadcast %cst_111 : f32 to vector<8x1xf32>
    %326 = arith.divf %324, %325 : vector<8x1xf32>
    %cst_112 = arith.constant 9.99999974E-6 : f32
    %327 = vector.broadcast %cst_112 : f32 to vector<8x1xf32>
    %328 = arith.addf %326, %327 : vector<8x1xf32>
    %329 = math.rsqrt %328 : vector<8x1xf32>
    %330 = vector.broadcast %329 : vector<8x1xf32> to vector<8x128xf32>
    %331 = arith.mulf %321, %330 : vector<8x128xf32>
    %c0_113 = arith.constant 0 : index
    %c0_114 = arith.constant 0 : index
    %332 = vector.load %arg22[%c0_113, %c0_114] : memref<1x128xf32, #tpu.memory_space<vmem>>, vector<1x128xf32>
    %333 = vector.broadcast %332 : vector<1x128xf32> to vector<8x128xf32>
    %334 = arith.mulf %331, %333 : vector<8x128xf32>
    %c0_115 = arith.constant 0 : index
    %c0_116 = arith.constant 0 : index
    %335 = vector.load %arg23[%c0_115, %c0_116] : memref<1x128xf32, #tpu.memory_space<vmem>>, vector<1x128xf32>
    %336 = vector.broadcast %335 : vector<1x128xf32> to vector<8x128xf32>
    %337 = arith.addf %334, %336 : vector<8x128xf32>
    %338 = arith.negf %337 : vector<8x128xf32>
    %339 = math.exp %338 : vector<8x128xf32>
    %cst_117 = arith.constant 1.000000e+00 : f32
    %340 = vector.broadcast %cst_117 : f32 to vector<8x128xf32>
    %341 = arith.addf %340, %339 : vector<8x128xf32>
    %342 = arith.divf %340, %341 : vector<8x128xf32>
    %343 = arith.mulf %337, %342 : vector<8x128xf32>
    %344 = arith.truncf %343 : vector<8x128xf32> to vector<8x128xbf16>
    %c0_118 = arith.constant 0 : index
    %c0_119 = arith.constant 0 : index
    %345 = vector.load %arg24[%c0_118, %c0_119] : memref<128x128xbf16, #tpu.memory_space<vmem>>, vector<128x128xbf16>
    %cst_120 = arith.constant dense<0.000000e+00> : vector<8x128xf32>
    %346 = tpu.matmul %344, %345, %cst_120 {dimension_numbers = #tpu.dot_dimension_numbers<[1], [0], [0], [1], [0, 0, 1, 1], [], []>} : vector<8x128xbf16>, vector<128x128xbf16>, vector<8x128xf32> -> vector<8x128xf32>
    %c0_121 = arith.constant 0 : index
    %c0_122 = arith.constant 0 : index
    %347 = vector.load %arg25[%c0_121, %c0_122] : memref<1x128xf32, #tpu.memory_space<vmem>>, vector<1x128xf32>
    %348 = vector.broadcast %347 : vector<1x128xf32> to vector<8x128xf32>
    %349 = arith.addf %346, %348 : vector<8x128xf32>
    %350 = arith.addf %235, %349 : vector<8x128xf32>
    %cst_123 = arith.constant dense<0.000000e+00> : vector<8xf32>
    %351 = vector.multi_reduction <add>, %350, %cst_123 [1] : vector<8x128xf32> to vector<8xf32>
    %352 = vector.shape_cast %351 : vector<8xf32> to vector<8x1xf32>
    %cst_124 = arith.constant 1.280000e+02 : f32
    %353 = vector.broadcast %cst_124 : f32 to vector<8x1xf32>
    %354 = arith.divf %352, %353 : vector<8x1xf32>
    %355 = vector.broadcast %354 : vector<8x1xf32> to vector<8x128xf32>
    %356 = arith.subf %350, %355 : vector<8x128xf32>
    %357 = arith.mulf %356, %356 : vector<8x128xf32>
    %cst_125 = arith.constant dense<0.000000e+00> : vector<8xf32>
    %358 = vector.multi_reduction <add>, %357, %cst_125 [1] : vector<8x128xf32> to vector<8xf32>
    %359 = vector.shape_cast %358 : vector<8xf32> to vector<8x1xf32>
    %cst_126 = arith.constant 1.280000e+02 : f32
    %360 = vector.broadcast %cst_126 : f32 to vector<8x1xf32>
    %361 = arith.divf %359, %360 : vector<8x1xf32>
    %cst_127 = arith.constant 9.99999974E-6 : f32
    %362 = vector.broadcast %cst_127 : f32 to vector<8x1xf32>
    %363 = arith.addf %361, %362 : vector<8x1xf32>
    %364 = math.rsqrt %363 : vector<8x1xf32>
    %365 = vector.broadcast %364 : vector<8x1xf32> to vector<8x128xf32>
    %366 = arith.mulf %356, %365 : vector<8x128xf32>
    %c0_128 = arith.constant 0 : index
    %c0_129 = arith.constant 0 : index
    %367 = vector.load %arg26[%c0_128, %c0_129] : memref<1x128xf32, #tpu.memory_space<vmem>>, vector<1x128xf32>
    %368 = vector.broadcast %367 : vector<1x128xf32> to vector<8x128xf32>
    %369 = arith.mulf %366, %368 : vector<8x128xf32>
    %c0_130 = arith.constant 0 : index
    %c0_131 = arith.constant 0 : index
    %370 = vector.load %arg27[%c0_130, %c0_131] : memref<1x128xf32, #tpu.memory_space<vmem>>, vector<1x128xf32>
    %371 = vector.broadcast %370 : vector<1x128xf32> to vector<8x128xf32>
    %372 = arith.addf %369, %371 : vector<8x128xf32>
    %373 = arith.truncf %372 : vector<8x128xf32> to vector<8x128xbf16>
    %c0_132 = arith.constant 0 : index
    %c0_133 = arith.constant 0 : index
    %374 = vector.load %arg28[%c0_132, %c0_133] : memref<128x256xbf16, #tpu.memory_space<vmem>>, vector<128x256xbf16>
    %cst_134 = arith.constant dense<0.000000e+00> : vector<8x256xf32>
    %375 = tpu.matmul %373, %374, %cst_134 {dimension_numbers = #tpu.dot_dimension_numbers<[1], [0], [0], [1], [0, 0, 1, 1], [], []>} : vector<8x128xbf16>, vector<128x256xbf16>, vector<8x256xf32> -> vector<8x256xf32>
    %c0_135 = arith.constant 0 : index
    %c0_136 = arith.constant 0 : index
    %376 = vector.load %arg29[%c0_135, %c0_136] : memref<1x256xf32, #tpu.memory_space<vmem>>, vector<1x256xf32>
    %377 = vector.broadcast %376 : vector<1x256xf32> to vector<8x256xf32>
    %378 = arith.addf %375, %377 : vector<8x256xf32>
    %379 = arith.negf %378 : vector<8x256xf32>
    %380 = math.exp %379 : vector<8x256xf32>
    %cst_137 = arith.constant 1.000000e+00 : f32
    %381 = vector.broadcast %cst_137 : f32 to vector<8x256xf32>
    %382 = arith.addf %381, %380 : vector<8x256xf32>
    %383 = arith.divf %381, %382 : vector<8x256xf32>
    %384 = arith.mulf %378, %383 : vector<8x256xf32>
    %385 = arith.truncf %384 : vector<8x256xf32> to vector<8x256xbf16>
    %c0_138 = arith.constant 0 : index
    %c0_139 = arith.constant 0 : index
    %386 = vector.load %arg30[%c0_138, %c0_139] : memref<256x128xbf16, #tpu.memory_space<vmem>>, vector<256x128xbf16>
    %cst_140 = arith.constant dense<0.000000e+00> : vector<8x128xf32>
    %387 = tpu.matmul %385, %386, %cst_140 {dimension_numbers = #tpu.dot_dimension_numbers<[1], [0], [0], [1], [0, 0, 1, 1], [], []>} : vector<8x256xbf16>, vector<256x128xbf16>, vector<8x128xf32> -> vector<8x128xf32>
    %c0_141 = arith.constant 0 : index
    %c0_142 = arith.constant 0 : index
    %388 = vector.load %arg31[%c0_141, %c0_142] : memref<1x128xf32, #tpu.memory_space<vmem>>, vector<1x128xf32>
    %389 = vector.broadcast %388 : vector<1x128xf32> to vector<8x128xf32>
    %390 = arith.addf %387, %389 : vector<8x128xf32>
    %cst_143 = arith.constant 5.000000e-01 : f32
    %391 = vector.broadcast %cst_143 : f32 to vector<8x128xf32>
    %392 = arith.mulf %391, %390 : vector<8x128xf32>
    %393 = arith.addf %350, %392 : vector<8x128xf32>
    %cst_144 = arith.constant dense<0.000000e+00> : vector<8xf32>
    %394 = vector.multi_reduction <add>, %393, %cst_144 [1] : vector<8x128xf32> to vector<8xf32>
    %395 = vector.shape_cast %394 : vector<8xf32> to vector<8x1xf32>
    %cst_145 = arith.constant 1.280000e+02 : f32
    %396 = vector.broadcast %cst_145 : f32 to vector<8x1xf32>
    %397 = arith.divf %395, %396 : vector<8x1xf32>
    %398 = vector.broadcast %397 : vector<8x1xf32> to vector<8x128xf32>
    %399 = arith.subf %393, %398 : vector<8x128xf32>
    %400 = arith.mulf %399, %399 : vector<8x128xf32>
    %cst_146 = arith.constant dense<0.000000e+00> : vector<8xf32>
    %401 = vector.multi_reduction <add>, %400, %cst_146 [1] : vector<8x128xf32> to vector<8xf32>
    %402 = vector.shape_cast %401 : vector<8xf32> to vector<8x1xf32>
    %cst_147 = arith.constant 1.280000e+02 : f32
    %403 = vector.broadcast %cst_147 : f32 to vector<8x1xf32>
    %404 = arith.divf %402, %403 : vector<8x1xf32>
    %cst_148 = arith.constant 9.99999974E-6 : f32
    %405 = vector.broadcast %cst_148 : f32 to vector<8x1xf32>
    %406 = arith.addf %404, %405 : vector<8x1xf32>
    %407 = math.rsqrt %406 : vector<8x1xf32>
    %408 = vector.broadcast %407 : vector<8x1xf32> to vector<8x128xf32>
    %409 = arith.mulf %399, %408 : vector<8x128xf32>
    %c0_149 = arith.constant 0 : index
    %c0_150 = arith.constant 0 : index
    %410 = vector.load %arg32[%c0_149, %c0_150] : memref<1x128xf32, #tpu.memory_space<vmem>>, vector<1x128xf32>
    %411 = vector.broadcast %410 : vector<1x128xf32> to vector<8x128xf32>
    %412 = arith.mulf %409, %411 : vector<8x128xf32>
    %c0_151 = arith.constant 0 : index
    %c0_152 = arith.constant 0 : index
    %413 = vector.load %arg33[%c0_151, %c0_152] : memref<1x128xf32, #tpu.memory_space<vmem>>, vector<1x128xf32>
    %414 = vector.broadcast %413 : vector<1x128xf32> to vector<8x128xf32>
    %415 = arith.addf %412, %414 : vector<8x128xf32>
    %c0_153 = arith.constant 0 : index
    %c0_154 = arith.constant 0 : index
    %c0_155 = arith.constant 0 : index
    %416 = vector.load %arg34[%c0_153, %c0_154, %c0_155] : memref<1x8x128xf32, #tpu.memory_space<vmem>>, vector<1x8x128xf32>
    %417 = vector.shape_cast %416 : vector<1x8x128xf32> to vector<8x128xf32>
    %418 = vector.shape_cast %415 : vector<8x128xf32> to vector<1x8x128xf32>
    tpu.vector_store %arg34[%c0_153, %c0_154, %c0_155], %418 {strides = array<i32>} : memref<1x8x128xf32, #tpu.memory_space<vmem>>, vector<1x8x128xf32>,
    return
  }
  func.func @transform_0(%arg0: i32) -> (i32, i32, i32) {
    %c0_i32 = arith.constant 0 : i32
    %c0_i32_0 = arith.constant 0 : i32
    %c0_i32_1 = arith.constant 0 : i32
    return %arg0, %c0_i32, %c0_i32_0 : i32, i32, i32
  }
  func.func @transform_1(%arg0: i32) -> (i32, i32, i32) {
    %c0_i32 = arith.constant 0 : i32
    %c0_i32_0 = arith.constant 0 : i32
    %c0_i32_1 = arith.constant 0 : i32
    return %arg0, %c0_i32, %c0_i32_0 : i32, i32, i32
  }
  func.func @transform_2(%arg0: i32) -> (i32, i32, i32) {
    %c0_i32 = arith.constant 0 : i32
    %c0_i32_0 = arith.constant 0 : i32
    %c0_i32_1 = arith.constant 0 : i32
    return %arg0, %c0_i32, %c0_i32_0 : i32, i32, i32
  }
  func.func @transform_3(%arg0: i32) -> (i32, i32) {
    %c0_i32 = arith.constant 0 : i32
    %c0_i32_0 = arith.constant 0 : i32
    %c0_i32_1 = arith.constant 0 : i32
    return %c0_i32, %c0_i32_0 : i32, i32
  }
  func.func @transform_4(%arg0: i32) -> (i32, i32) {
    %c0_i32 = arith.constant 0 : i32
    %c0_i32_0 = arith.constant 0 : i32
    %c0_i32_1 = arith.constant 0 : i32
    return %c0_i32, %c0_i32_0 : i32, i32
  }
  func.func @transform_5(%arg0: i32) -> (i32, i32) {
    %c0_i32 = arith.constant 0 : i32
    %c0_i32_0 = arith.constant 0 : i32
    %c0_i32_1 = arith.constant 0 : i32
    return %c0_i32, %c0_i32_0 : i32, i32
  }
  func.func @transform_6(%arg0: i32) -> (i32, i32) {
    %c0_i32 = arith.constant 0 : i32
    %c0_i32_0 = arith.constant 0 : i32
    %c0_i32_1 = arith.constant 0 : i32
    return %c0_i32, %c0_i32_0 : i32, i32
  }
  func.func @transform_7(%arg0: i32) -> (i32, i32) {
    %c0_i32 = arith.constant 0 : i32
    %c0_i32_0 = arith.constant 0 : i32
    %c0_i32_1 = arith.constant 0 : i32
    return %c0_i32, %c0_i32_0 : i32, i32
  }
  func.func @transform_8(%arg0: i32) -> (i32, i32) {
    %c0_i32 = arith.constant 0 : i32
    %c0_i32_0 = arith.constant 0 : i32
    %c0_i32_1 = arith.constant 0 : i32
    return %c0_i32, %c0_i32_0 : i32, i32
  }
  func.func @transform_9(%arg0: i32) -> (i32, i32) {
    %c0_i32 = arith.constant 0 : i32
    %c0_i32_0 = arith.constant 0 : i32
    %c0_i32_1 = arith.constant 0 : i32
    return %c0_i32, %c0_i32_0 : i32, i32
  }
  func.func @transform_10(%arg0: i32) -> (i32, i32) {
    %c0_i32 = arith.constant 0 : i32
    %c0_i32_0 = arith.constant 0 : i32
    %c0_i32_1 = arith.constant 0 : i32
    return %c0_i32, %c0_i32_0 : i32, i32
  }
  func.func @transform_11(%arg0: i32) -> (i32, i32) {
    %c0_i32 = arith.constant 0 : i32
    %c0_i32_0 = arith.constant 0 : i32
    %c0_i32_1 = arith.constant 0 : i32
    return %c0_i32, %c0_i32_0 : i32, i32
  }
  func.func @transform_12(%arg0: i32) -> (i32, i32) {
    %c0_i32 = arith.constant 0 : i32
    %c0_i32_0 = arith.constant 0 : i32
    %c0_i32_1 = arith.constant 0 : i32
    return %c0_i32, %c0_i32_0 : i32, i32
  }
  func.func @transform_13(%arg0: i32) -> (i32, i32) {
    %c0_i32 = arith.constant 0 : i32
    %c0_i32_0 = arith.constant 0 : i32
    %c0_i32_1 = arith.constant 0 : i32
    return %c0_i32, %c0_i32_0 : i32, i32
  }
  func.func @transform_14(%arg0: i32) -> (i32, i32) {
    %c0_i32 = arith.constant 0 : i32
    %c0_i32_0 = arith.constant 0 : i32
    %c0_i32_1 = arith.constant 0 : i32
    return %c0_i32, %c0_i32_0 : i32, i32
  }
  func.func @transform_15(%arg0: i32) -> (i32, i32) {
    %c0_i32 = arith.constant 0 : i32
    %c0_i32_0 = arith.constant 0 : i32
    %c0_i32_1 = arith.constant 0 : i32
    return %c0_i32, %c0_i32_0 : i32, i32
  }
  func.func @transform_16(%arg0: i32) -> (i32, i32) {
    %c0_i32 = arith.constant 0 : i32
    %c0_i32_0 = arith.constant 0 : i32
    %c0_i32_1 = arith.constant 0 : i32
    return %c0_i32, %c0_i32_0 : i32, i32
  }
  func.func @transform_17(%arg0: i32) -> (i32, i32) {
    %c0_i32 = arith.constant 0 : i32
    %c0_i32_0 = arith.constant 0 : i32
    %c0_i32_1 = arith.constant 0 : i32
    return %c0_i32, %c0_i32_0 : i32, i32
  }
  func.func @transform_18(%arg0: i32) -> (i32, i32) {
    %c0_i32 = arith.constant 0 : i32
    %c0_i32_0 = arith.constant 0 : i32
    %c0_i32_1 = arith.constant 0 : i32
    return %c0_i32, %c0_i32_0 : i32, i32
  }
  func.func @transform_19(%arg0: i32) -> (i32, i32) {
    %c0_i32 = arith.constant 0 : i32
    %c0_i32_0 = arith.constant 0 : i32
    %c0_i32_1 = arith.constant 0 : i32
    return %c0_i32, %c0_i32_0 : i32, i32
  }
  func.func @transform_20(%arg0: i32) -> (i32, i32) {
    %c0_i32 = arith.constant 0 : i32
    %c0_i32_0 = arith.constant 0 : i32
    %c0_i32_1 = arith.constant 0 : i32
    return %c0_i32, %c0_i32_0 : i32, i32
  }
  func.func @transform_21(%arg0: i32) -> (i32, i32) {
    %c0_i32 = arith.constant 0 : i32
    %c0_i32_0 = arith.constant 0 : i32
    %c0_i32_1 = arith.constant 0 : i32
    return %c0_i32, %c0_i32_0 : i32, i32
  }
  func.func @transform_22(%arg0: i32) -> (i32, i32) {
    %c0_i32 = arith.constant 0 : i32
    %c0_i32_0 = arith.constant 0 : i32
    %c0_i32_1 = arith.constant 0 : i32
    return %c0_i32, %c0_i32_0 : i32, i32
  }
  func.func @transform_23(%arg0: i32) -> (i32, i32) {
    %c0_i32 = arith.constant 0 : i32
    %c0_i32_0 = arith.constant 0 : i32
    %c0_i32_1 = arith.constant 0 : i32
    return %c0_i32, %c0_i32_0 : i32, i32
  }
  func.func @transform_24(%arg0: i32) -> (i32, i32) {
    %c0_i32 = arith.constant 0 : i32
    %c0_i32_0 = arith.constant 0 : i32
    %c0_i32_1 = arith.constant 0 : i32
    return %c0_i32, %c0_i32_0 : i32, i32
  }
  func.func @transform_25(%arg0: i32) -> (i32, i32) {
    %c0_i32 = arith.constant 0 : i32
    %c0_i32_0 = arith.constant 0 : i32
    %c0_i32_1 = arith.constant 0 : i32
    return %c0_i32, %c0_i32_0 : i32, i32
  }
  func.func @transform_26(%arg0: i32) -> (i32, i32) {
    %c0_i32 = arith.constant 0 : i32
    %c0_i32_0 = arith.constant 0 : i32
    %c0_i32_1 = arith.constant 0 : i32
    return %c0_i32, %c0_i32_0 : i32, i32
  }
  func.func @transform_27(%arg0: i32) -> (i32, i32) {
    %c0_i32 = arith.constant 0 : i32
    %c0_i32_0 = arith.constant 0 : i32
    %c0_i32_1 = arith.constant 0 : i32
    return %c0_i32, %c0_i32_0 : i32, i32
  }
  func.func @transform_28(%arg0: i32) -> (i32, i32) {
    %c0_i32 = arith.constant 0 : i32
    %c0_i32_0 = arith.constant 0 : i32
    %c0_i32_1 = arith.constant 0 : i32
    return %c0_i32, %c0_i32_0 : i32, i32
  }
  func.func @transform_29(%arg0: i32) -> (i32, i32) {
    %c0_i32 = arith.constant 0 : i32
    %c0_i32_0 = arith.constant 0 : i32
    %c0_i32_1 = arith.constant 0 : i32
    return %c0_i32, %c0_i32_0 : i32, i32
  }
  func.func @transform_30(%arg0: i32) -> (i32, i32) {
    %c0_i32 = arith.constant 0 : i32
    %c0_i32_0 = arith.constant 0 : i32
    %c0_i32_1 = arith.constant 0 : i32
    return %c0_i32, %c0_i32_0 : i32, i32
  }
  func.func @transform_31(%arg0: i32) -> (i32, i32) {
    %c0_i32 = arith.constant 0 : i32
    %c0_i32_0 = arith.constant 0 : i32
    %c0_i32_1 = arith.constant 0 : i32
    return %c0_i32, %c0_i32_0 : i32, i32
  }
  func.func @transform_32(%arg0: i32) -> (i32, i32) {
    %c0_i32 = arith.constant 0 : i32
    %c0_i32_0 = arith.constant 0 : i32
    %c0_i32_1 = arith.constant 0 : i32
    return %c0_i32, %c0_i32_0 : i32, i32
  }
  func.func @transform_33(%arg0: i32) -> (i32, i32, i32) {
    %c0_i32 = arith.constant 0 : i32
    %c0_i32_0 = arith.constant 0 : i32
    %c0_i32_1 = arith.constant 0 : i32
    return %arg0, %c0_i32, %c0_i32_0 : i32, i32, i32
  }
}

module attributes {stable_mosaic.version = 11 : i64} {
  func.func @_output_kernel(%arg0: i32, %arg1: memref<16x128xf32, #tpu.memory_space<vmem>>, %arg2: memref<128x128xbf16, #tpu.memory_space<vmem>>, %arg3: memref<1x128xf32, #tpu.memory_space<vmem>>, %arg4: memref<16x128xf32, #tpu.memory_space<vmem>>, %arg5: memref<16x128xf32, #tpu.memory_space<vmem>>) attributes {dimension_semantics = [#tpu.dimension_semantics<parallel>], iteration_bounds = array<i64: 1>, scalar_prefetch = 0 : i64, scratch_operands = 0 : i64, tpu.core_type = #tpu.core_type<tc>, window_params = [{transform_indices = @transform_0, window_bounds = array<i64: 16, 128>}, {pipeline_mode = #tpu.pipeline_mode<synchronous>, transform_indices = @transform_1, window_bounds = array<i64: 128, 128>}, {pipeline_mode = #tpu.pipeline_mode<synchronous>, transform_indices = @transform_2, window_bounds = array<i64: 1, 128>}, {transform_indices = @transform_3, window_bounds = array<i64: 16, 128>}, {transform_indices = @transform_4, window_bounds = array<i64: 16, 128>}]} {
    %c0 = arith.constant 0 : index
    %c0_0 = arith.constant 0 : index
    %0 = vector.load %arg1[%c0, %c0_0] : memref<16x128xf32, #tpu.memory_space<vmem>>, vector<16x128xf32>
    %1 = arith.truncf %0 : vector<16x128xf32> to vector<16x128xbf16>
    %c0_1 = arith.constant 0 : index
    %c0_2 = arith.constant 0 : index
    %2 = vector.load %arg2[%c0_1, %c0_2] : memref<128x128xbf16, #tpu.memory_space<vmem>>, vector<128x128xbf16>
    %cst = arith.constant dense<0.000000e+00> : vector<16x128xf32>
    %3 = tpu.matmul %1, %2, %cst {dimension_numbers = #tpu.dot_dimension_numbers<[1], [0], [0], [1], [0, 0, 1, 1], [], []>} : vector<16x128xbf16>, vector<128x128xbf16>, vector<16x128xf32> -> vector<16x128xf32>
    %c0_3 = arith.constant 0 : index
    %c0_4 = arith.constant 0 : index
    %4 = vector.load %arg3[%c0_3, %c0_4] : memref<1x128xf32, #tpu.memory_space<vmem>>, vector<1x128xf32>
    %5 = vector.broadcast %4 : vector<1x128xf32> to vector<16x128xf32>
    %6 = arith.addf %3, %5 : vector<16x128xf32>
    %c0_5 = arith.constant 0 : index
    %c0_6 = arith.constant 0 : index
    %7 = vector.load %arg4[%c0_5, %c0_6] : memref<16x128xf32, #tpu.memory_space<vmem>>, vector<16x128xf32>
    tpu.vector_store %arg4[%c0_5, %c0_6], %6 {strides = array<i32>} : memref<16x128xf32, #tpu.memory_space<vmem>>, vector<16x128xf32>,
    %cst_7 = arith.constant dense<0xFF800000> : vector<16xf32>
    %8 = vector.multi_reduction <maximumf>, %6, %cst_7 [1] : vector<16x128xf32> to vector<16xf32>
    %9 = vector.shape_cast %8 : vector<16xf32> to vector<16x1xf32>
    %10 = vector.broadcast %9 : vector<16x1xf32> to vector<16x128xf32>
    %11 = arith.subf %6, %10 : vector<16x128xf32>
    %12 = math.exp %11 : vector<16x128xf32>
    %cst_8 = arith.constant dense<0.000000e+00> : vector<16xf32>
    %13 = vector.multi_reduction <add>, %12, %cst_8 [1] : vector<16x128xf32> to vector<16xf32>
    %14 = vector.shape_cast %13 : vector<16xf32> to vector<16x1xf32>
    %15 = math.log %14 : vector<16x1xf32>
    %16 = vector.broadcast %15 : vector<16x1xf32> to vector<16x128xf32>
    %17 = arith.subf %11, %16 : vector<16x128xf32>
    %c0_9 = arith.constant 0 : index
    %c0_10 = arith.constant 0 : index
    %18 = vector.load %arg5[%c0_9, %c0_10] : memref<16x128xf32, #tpu.memory_space<vmem>>, vector<16x128xf32>
    tpu.vector_store %arg5[%c0_9, %c0_10], %17 {strides = array<i32>} : memref<16x128xf32, #tpu.memory_space<vmem>>, vector<16x128xf32>,
    return
  }
  func.func @transform_0(%arg0: i32) -> (i32, i32) {
    %c0_i32 = arith.constant 0 : i32
    %c0_i32_0 = arith.constant 0 : i32
    return %arg0, %c0_i32 : i32, i32
  }
  func.func @transform_1(%arg0: i32) -> (i32, i32) {
    %c0_i32 = arith.constant 0 : i32
    %c0_i32_0 = arith.constant 0 : i32
    %c0_i32_1 = arith.constant 0 : i32
    return %c0_i32, %c0_i32_0 : i32, i32
  }
  func.func @transform_2(%arg0: i32) -> (i32, i32) {
    %c0_i32 = arith.constant 0 : i32
    %c0_i32_0 = arith.constant 0 : i32
    %c0_i32_1 = arith.constant 0 : i32
    return %c0_i32, %c0_i32_0 : i32, i32
  }
  func.func @transform_3(%arg0: i32) -> (i32, i32) {
    %c0_i32 = arith.constant 0 : i32
    %c0_i32_0 = arith.constant 0 : i32
    return %arg0, %c0_i32 : i32, i32
  }
  func.func @transform_4(%arg0: i32) -> (i32, i32) {
    %c0_i32 = arith.constant 0 : i32
    %c0_i32_0 = arith.constant 0 : i32
    return %arg0, %c0_i32 : i32, i32
  }
}

</mosaic_0001>

<llo_original>
// kernel: squeeze.1
$region0: #{squeeze.1}
  %s0 = inlined_call_operand.vmem [shape: f32[2,2560], index: 0, kind: input, shape index: {}]
  %s1 = inlined_call_operand.vmem [shape: f32[2,16,160], index: 1, kind: output, shape index: {}]
  $region1: #{squeeze.1} parent=0
    #allocation0 [shape = 'u8[81920]{0}', space=vmem, size = 0x14000, scoped, tag = 'scoped mem for input reshape']
    %s3 = sshllo.u32 0, 2
    %s4 = smul.addr 2, 19
    %s5 = scalar_lea.vmem %s0, %s4
    %v6 = vld [vmem:[%s5] sm:%s3]
    %s7 = scalar_lea.vmem [#allocation0], 152
    %8 = vst [vmem:[%s7] sm:%s3] %v6
    %s9 = smul.addr 2, 18
    %s10 = scalar_lea.vmem %s0, %s9
    %v11 = vld [vmem:[%s10] sm:%s3]
    %s12 = scalar_lea.vmem [#allocation0], 144
    %13 = vst [vmem:[%s12] sm:%s3] %v11
    %s14 = smul.addr 2, 17
    %s15 = scalar_lea.vmem %s0, %s14
    %v16 = vld [vmem:[%s15] sm:%s3]
    %s17 = scalar_lea.vmem [#allocation0], 136
    %18 = vst [vmem:[%s17] sm:%s3] %v16
    %s19 = smul.addr 2, 16
    %s20 = scalar_lea.vmem %s0, %s19
    %v21 = vld [vmem:[%s20] sm:%s3]
    %s22 = scalar_lea.vmem [#allocation0], 128
    %23 = vst [vmem:[%s22] sm:%s3] %v21
    %s24 = smul.addr 2, 15
    %s25 = scalar_lea.vmem %s0, %s24
    %v26 = vld [vmem:[%s25] sm:%s3]
    %s27 = scalar_lea.vmem [#allocation0], 120
    %28 = vst [vmem:[%s27] sm:%s3] %v26
    %s29 = smul.addr 2, 14
    %s30 = scalar_lea.vmem %s0, %s29
    %v31 = vld [vmem:[%s30] sm:%s3]
    %s32 = scalar_lea.vmem [#allocation0], 112
    %33 = vst [vmem:[%s32] sm:%s3] %v31
    %s34 = smul.addr 2, 13
    %s35 = scalar_lea.vmem %s0, %s34
    %v36 = vld [vmem:[%s35] sm:%s3]
    %s37 = scalar_lea.vmem [#allocation0], 104
    %38 = vst [vmem:[%s37] sm:%s3] %v36
    %s39 = smul.addr 2, 12
    %s40 = scalar_lea.vmem %s0, %s39
    %v41 = vld [vmem:[%s40] sm:%s3]
    %s42 = scalar_lea.vmem [#allocation0], 96
    %43 = vst [vmem:[%s42] sm:%s3] %v41
    %s44 = smul.addr 2, 11
    %s45 = scalar_lea.vmem %s0, %s44
    %v46 = vld [vmem:[%s45] sm:%s3]
    %s47 = scalar_lea.vmem [#allocation0], 88
    %48 = vst [vmem:[%s47] sm:%s3] %v46
    %s49 = smul.addr 2, 10
    %s50 = scalar_lea.vmem %s0, %s49
    %v51 = vld [vmem:[%s50] sm:%s3]
    %s52 = scalar_lea.vmem [#allocation0], 80
    %53 = vst [vmem:[%s52] sm:%s3] %v51
    %s54 = smul.addr 2, 9
    %s55 = scalar_lea.vmem %s0, %s54
    %v56 = vld [vmem:[%s55] sm:%s3]
    %s57 = scalar_lea.vmem [#allocation0], 72
    %58 = vst [vmem:[%s57] sm:%s3] %v56
    %s59 = smul.addr 2, 8
    %s60 = scalar_lea.vmem %s0, %s59
    %v61 = vld [vmem:[%s60] sm:%s3]
    %s62 = scalar_lea.vmem [#allocation0], 64
    %63 = vst [vmem:[%s62] sm:%s3] %v61
    %s64 = smul.addr 2, 7
    %s65 = scalar_lea.vmem %s0, %s64
    %v66 = vld [vmem:[%s65] sm:%s3]
    %s67 = scalar_lea.vmem [#allocation0], 56
    %68 = vst [vmem:[%s67] sm:%s3] %v66
    %s69 = smul.addr 2, 6
    %s70 = scalar_lea.vmem %s0, %s69
    %v71 = vld [vmem:[%s70] sm:%s3]
    %s72 = scalar_lea.vmem [#allocation0], 48
    %73 = vst [vmem:[%s72] sm:%s3] %v71
    %s74 = smul.addr 2, 5
    %s75 = scalar_lea.vmem %s0, %s74
    %v76 = vld [vmem:[%s75] sm:%s3]
    %s77 = scalar_lea.vmem [#allocation0], 40
    %78 = vst [vmem:[%s77] sm:%s3] %v76
    %s79 = smul.addr 2, 4
    %s80 = scalar_lea.vmem %s0, %s79
    %v81 = vld [vmem:[%s80] sm:%s3]
    %s82 = scalar_lea.vmem [#allocation0], 32
    %83 = vst [vmem:[%s82] sm:%s3] %v81
    %s84 = smul.addr 2, 3
    %s85 = scalar_lea.vmem %s0, %s84
    %v86 = vld [vmem:[%s85] sm:%s3]
    %s87 = scalar_lea.vmem [#allocation0], 24
    %88 = vst [vmem:[%s87] sm:%s3] %v86
    %s89 = smul.addr 2, 2
    %s90 = scalar_lea.vmem %s0, %s89
    %v91 = vld [vmem:[%s90] sm:%s3]
    %s92 = scalar_lea.vmem [#allocation0], 16
    %93 = vst [vmem:[%s92] sm:%s3] %v91
    %s94 = scalar_lea.vmem %s0, 2
    %v95 = vld [vmem:[%s94] sm:%s3]
    %s96 = scalar_lea.vmem [#allocation0], 8
    %97 = vst [vmem:[%s96] sm:%s3] %v95
    %v98 = vld [vmem:[%s0] sm:%s3]
    %99 = vst [vmem:[#allocation0] sm:%s3] %v98
    %s100 = scalar_lea.vmem [#allocation0], 8
    %v101 = vld [vmem:[%s100] sm:$0x3]
    %vm102 = vcmask 261120
    %s103 = scalar_lea.vmem %s1, 8
    %104 = vst.msk [vmem:[%s103] sm:$0x1] %vm102, %v101
    %s105 = scalar_lea.vmem %s1, 39
    %106 = vst.msk [vmem:[%s105] sm:$0x2] %vm102, %v101
    %s107 = scalar_lea.vmem [#allocation0], 48
    %v108 = vld [vmem:[%s107] sm:$0x3]
    %vm109 = vcmask 261120
    %s110 = scalar_lea.vmem %s1, 12
    %111 = vst.msk [vmem:[%s110] sm:$0x1] %vm109, %v108
    %s112 = scalar_lea.vmem %s1, 43
    %113 = vst.msk [vmem:[%s112] sm:$0x2] %vm109, %v108
    %s114 = scalar_lea.vmem [#allocation0], 88
    %v115 = vld [vmem:[%s114] sm:$0x3]
    %vm116 = vcmask 261120
    %s117 = scalar_lea.vmem %s1, 24
    %118 = vst.msk [vmem:[%s117] sm:$0x1] %vm116, %v115
    %s119 = scalar_lea.vmem %s1, 55
    %120 = vst.msk [vmem:[%s119] sm:$0x2] %vm116, %v115
    %s121 = scalar_lea.vmem [#allocation0], 128
    %v122 = vld [vmem:[%s121] sm:$0x3]
    %vm123 = vcmask 261120
    %s124 = scalar_lea.vmem %s1, 28
    %125 = vst.msk [vmem:[%s124] sm:$0x1] %vm123, %v122
    %s126 = scalar_lea.vmem %s1, 59
    %127 = vst.msk [vmem:[%s126] sm:$0x2] %vm123, %v122
    %v128 = vld [vmem:[#allocation0] sm:$0x3]
    %129 = vst [vmem:[%s1] sm:$0x1] %v128
    %s130 = scalar_lea.vmem %s1, 31
    %131 = vst [vmem:[%s130] sm:$0x2] %v128
    %s132 = scalar_lea.vmem [#allocation0], 40
    %v133 = vld [vmem:[%s132] sm:$0x3]
    %s134 = scalar_lea.vmem %s1, 4
    %135 = vst [vmem:[%s134] sm:$0x1] %v133
    %s136 = scalar_lea.vmem %s1, 35
    %137 = vst [vmem:[%s136] sm:$0x2] %v133
    %s138 = scalar_lea.vmem [#allocation0], 80
    %v139 = vld [vmem:[%s138] sm:$0x3]
    %s140 = scalar_lea.vmem %s1, 16
    %141 = vst [vmem:[%s140] sm:$0x1] %v139
    %s142 = scalar_lea.vmem %s1, 47
    %143 = vst [vmem:[%s142] sm:$0x2] %v139
    %s144 = scalar_lea.vmem [#allocation0], 120
    %v145 = vld [vmem:[%s144] sm:$0x3]
    %s146 = scalar_lea.vmem %s1, 20
    %147 = vst [vmem:[%s146] sm:$0x1] %v145
    %s148 = scalar_lea.vmem %s1, 51
    %149 = vst [vmem:[%s148] sm:$0x2] %v145
    %s150 = scalar_lea.vmem [#allocation0], 16
    %v151 = vld [vmem:[%s150] ss:$40 sm:$0xf]
    %s152 = scalar_lea.vmem [#allocation0], 4294967153
    %v153 = vld [vmem:[%s152] ss:$40 sm:$0xf0]
    %vm154 = vcmask 1047556
    %v155 = vsel %vm154, %v153, %v151
    %s156 = scalar_lea.vmem [#allocation0], 16
    %v157 = vld [vmem:[%s156] ss:$40 sm:$0xf]
    %s158 = scalar_lea.vmem [#allocation0], 4294967153
    %v159 = vld [vmem:[%s158] ss:$40 sm:$0xf0]
    %vm160 = vcmask 1047556
    %v161 = vsel %vm160, %v159, %v157
    %vm162 = vcmask 261120
    %v163 = vsel %vm162, %v161, %v155
    %164 = vrot.lane.b32.xlu0 %v163, 96
    %v165 = vpop.permute.xlu0 %164
    %vm166 = vcmask 261120
    %s167 = scalar_lea.vmem %s1, 9
    %168 = vst.msk [vmem:[%s167] ss:$4 sm:$0x3] %vm166, %v165
    %s169 = scalar_lea.vmem %s1, 17
    %170 = vst.msk [vmem:[%s169] ss:$4 sm:$0xc] %vm166, %v165
    %s171 = scalar_lea.vmem %s1, 25
    %172 = vst.msk [vmem:[%s171] ss:$4 sm:$0x30] %vm166, %v165
    %s173 = scalar_lea.vmem %s1, 33
    %174 = vst.msk [vmem:[%s173] ss:$4 sm:$0xc0] %vm166, %v165
    %vm175 = vcmask 1048320
    %s176 = scalar_lea.vmem %s1, 1
    %177 = vst.msk [vmem:[%s176] ss:$4 sm:$0x3] %vm175, %v165
    %s178 = scalar_lea.vmem %s1, 9
    %179 = vst.msk [vmem:[%s178] ss:$4 sm:$0xc] %vm175, %v165
    %s180 = scalar_lea.vmem %s1, 17
    %181 = vst.msk [vmem:[%s180] ss:$4 sm:$0x30] %vm175, %v165
    %s182 = scalar_lea.vmem %s1, 25
    %183 = vst.msk [vmem:[%s182] ss:$4 sm:$0xc0] %vm175, %v165
    %s184 = scalar_lea.vmem [#allocation0], 8
    %v185 = vld [vmem:[%s184] ss:$40 sm:$0xf]
    %s186 = scalar_lea.vmem [#allocation0], 4294967145
    %v187 = vld [vmem:[%s186] ss:$40 sm:$0xf0]
    %vm188 = vcmask 1047556
    %v189 = vsel %vm188, %v187, %v185
    %190 = vrot.lane.b32.xlu0 %v189, 96
    %v191 = vpop.permute.xlu0 %190
    %vm192 = vcmask 785408
    %s193 = scalar_lea.vmem %s1, 1
    %194 = vst.msk [vmem:[%s193] ss:$4 sm:$0x3] %vm192, %v191
    %s195 = scalar_lea.vmem %s1, 9
    %196 = vst.msk [vmem:[%s195] ss:$4 sm:$0xc] %vm192, %v191
    %s197 = scalar_lea.vmem %s1, 17
    %198 = vst.msk [vmem:[%s197] ss:$4 sm:$0x30] %vm192, %v191
    %s199 = scalar_lea.vmem %s1, 25
    %200 = vst.msk [vmem:[%s199] ss:$4 sm:$0xc0] %vm192, %v191
    %s201 = scalar_lea.vmem [#allocation0], 24
    %v202 = vld [vmem:[%s201] ss:$40 sm:$0xf]
    %s203 = scalar_lea.vmem [#allocation0], 4294967161
    %v204 = vld [vmem:[%s203] ss:$40 sm:$0xf0]
    %vm205 = vcmask 1047556
    %v206 = vsel %vm205, %v204, %v202
    %s207 = scalar_lea.vmem [#allocation0], 24
    %v208 = vld [vmem:[%s207] ss:$40 sm:$0xf]
    %s209 = scalar_lea.vmem [#allocation0], 4294967161
    %v210 = vld [vmem:[%s209] ss:$40 sm:$0xf0]
    %vm211 = vcmask 1047556
    %v212 = vsel %vm211, %v210, %v208
    %vm213 = vcmask 523264
    %v214 = vsel %vm213, %v212, %v206
    %215 = vrot.lane.b32.xlu0 %v214, 64
    %v216 = vpop.permute.xlu0 %215
    %vm217 = vcmask 261120
    %s218 = scalar_lea.vmem %s1, 10
    %219 = vst.msk [vmem:[%s218] ss:$4 sm:$0x3] %vm217, %v216
    %s220 = scalar_lea.vmem %s1, 18
    %221 = vst.msk [vmem:[%s220] ss:$4 sm:$0xc] %vm217, %v216
    %s222 = scalar_lea.vmem %s1, 26
    %223 = vst.msk [vmem:[%s222] ss:$4 sm:$0x30] %vm217, %v216
    %s224 = scalar_lea.vmem %s1, 34
    %225 = vst.msk [vmem:[%s224] ss:$4 sm:$0xc0] %vm217, %v216
    %vm226 = vcmask 1048064
    %s227 = scalar_lea.vmem %s1, 2
    %228 = vst.msk [vmem:[%s227] ss:$4 sm:$0x3] %vm226, %v216
    %s229 = scalar_lea.vmem %s1, 10
    %230 = vst.msk [vmem:[%s229] ss:$4 sm:$0xc] %vm226, %v216
    %s231 = scalar_lea.vmem %s1, 18
    %232 = vst.msk [vmem:[%s231] ss:$4 sm:$0x30] %vm226, %v216
    %s233 = scalar_lea.vmem %s1, 26
    %234 = vst.msk [vmem:[%s233] ss:$4 sm:$0xc0] %vm226, %v216
    %s235 = scalar_lea.vmem [#allocation0], 16
    %v236 = vld [vmem:[%s235] ss:$40 sm:$0xf]
    %s237 = scalar_lea.vmem [#allocation0], 4294967153
    %v238 = vld [vmem:[%s237] ss:$40 sm:$0xf0]
    %vm239 = vcmask 1047556
    %v240 = vsel %vm239, %v238, %v236
    %241 = vrot.lane.b32.xlu0 %v240, 64
    %v242 = vpop.permute.xlu0 %241
    %vm243 = vcmask 523264
    %s244 = scalar_lea.vmem %s1, 2
    %245 = vst.msk [vmem:[%s244] ss:$4 sm:$0x3] %vm243, %v242
    %s246 = scalar_lea.vmem %s1, 10
    %247 = vst.msk [vmem:[%s246] ss:$4 sm:$0xc] %vm243, %v242
    %s248 = scalar_lea.vmem %s1, 18
    %249 = vst.msk [vmem:[%s248] ss:$4 sm:$0x30] %vm243, %v242
    %s250 = scalar_lea.vmem %s1, 26
    %251 = vst.msk [vmem:[%s250] ss:$4 sm:$0xc0] %vm243, %v242
    %s252 = scalar_lea.vmem [#allocation0], 24
    %s253 = smov 3
    %v254 = vld [vmem:[%s252] ss:$40 sm:%s253]
    %s255 = scalar_lea.vmem [#allocation0], 4294967248
    %s256 = smov 12
    %v257 = vld [vmem:[%s255] ss:$40 sm:%s256]
    %vm258 = vcmask 1043458
    %v259 = vsel %vm258, %v257, %v254
    %s260 = scalar_lea.vmem [#allocation0], 4294967240
    %s261 = smov 48
    %v262 = vld [vmem:[%s260] ss:$40 sm:%s261]
    %vm263 = vcmask 1045508
    %v264 = vsel %vm263, %v262, %v259
    %s265 = scalar_lea.vmem [#allocation0], 4294967168
    %s266 = smov 192
    %v267 = vld [vmem:[%s265] ss:$40 sm:%s266]
    %vm268 = vcmask 1047558
    %v269 = vsel %vm268, %v267, %v264
    %s270 = scalar_lea.vmem [#allocation0], 32
    %v271 = vld [vmem:[%s270] ss:$40 sm:$0xf]
    %s272 = scalar_lea.vmem [#allocation0], 4294967169
    %v273 = vld [vmem:[%s272] ss:$40 sm:$0xf0]
    %vm274 = vcmask 1047556
    %v275 = vsel %vm274, %v273, %v271
    %vm276 = vcmask 785408
    %v277 = vsel %vm276, %v275, %v269
    %278 = vrot.lane.b32.xlu0 %v277, 32
    %v279 = vpop.permute.xlu0 %278
    %vm280 = vcmask 261120
    %s281 = scalar_lea.vmem %s1, 3
    %282 = vst.msk [vmem:[%s281] ss:$4 sm:$0xff] %vm280, %v279
    %vm283 = vcmask 1047808
    %s284 = scalar_lea.vmem %s1, 3
    %285 = vst.msk [vmem:[%s284] ss:$4 sm:$0x3] %vm283, %v279
    %s286 = scalar_lea.vmem %s1, 11
    %287 = vst.msk [vmem:[%s286] ss:$4 sm:$0xc] %vm283, %v279
    %s288 = scalar_lea.vmem %s1, 19
    %289 = vst.msk [vmem:[%s288] ss:$4 sm:$0x30] %vm283, %v279
    %s290 = scalar_lea.vmem %s1, 27
    %291 = vst.msk [vmem:[%s290] ss:$4 sm:$0xc0] %vm283, %v279
    %s292 = scalar_lea.vmem [#allocation0], 25
    %s293 = smov 3
    %v294 = vld [vmem:[%s292] ss:$40 sm:%s293]
    %s295 = scalar_lea.vmem [#allocation0], 4294967249
    %s296 = smov 12
    %v297 = vld [vmem:[%s295] ss:$40 sm:%s296]
    %vm298 = vcmask 1043458
    %v299 = vsel %vm298, %v297, %v294
    %s300 = scalar_lea.vmem [#allocation0], 4294967241
    %s301 = smov 48
    %v302 = vld [vmem:[%s300] ss:$40 sm:%s301]
    %vm303 = vcmask 1045508
    %v304 = vsel %vm303, %v302, %v299
    %s305 = scalar_lea.vmem [#allocation0], 4294967169
    %s306 = smov 192
    %v307 = vld [vmem:[%s305] ss:$40 sm:%s306]
    %vm308 = vcmask 1047558
    %v309 = vsel %vm308, %v307, %v304
    %310 = vrot.lane.b32.xlu0 %v309, 32
    %v311 = vpop.permute.xlu0 %310
    %vm312 = vcmask 261120
    %s313 = scalar_lea.vmem %s1, 35
    %314 = vst.msk [vmem:[%s313] ss:$4 sm:$0xff] %vm312, %v311

// kernel: forward.5
$region0: #{forward.5}
  #allocation0 [shape = 'u32[]', space=smem, size = 0x4, offset = 0x4, fixed_abs, tag = 'smem constant byte address 0x4 - core index']
  #allocation1 [shape = 'u32[144,128]{1,0:T(1,128)}', space=vmem, size = 0x12000, scoped, tag = 'internal scratch']
  %s0 = inlined_call_operand.vmem [shape: f32[2,16,160], index: 0, kind: input, shape index: {}]
  %s1 = inlined_call_operand.vmem [shape: bf16[160,256], index: 1, kind: input, shape index: {}]
  %s2 = inlined_call_operand.vmem [shape: bf16[128,64], index: 2, kind: input, shape index: {}]
  %s3 = inlined_call_operand.vmem [shape: f32[2,16,64], index: 3, kind: output, shape index: {}]
  %s4 = sld [smem:[#allocation0]]
  $region45: #{forward.5} parent=0
    _
  %s6 = ssub.s32 1, %s4
  %s7 = scalar_select 0, %s6, %s4
  loop: start=0, step=1, limit=4
  $region2: #{forward.5} parent=0 // loop_pre_header
    _
  $region3: #{forward.5} parent=0 // loop_header
    %s9 = sphi 0, %s13
    %p10 = scmp.ge.s32.totalorder %s9, 4
    %s19 = sphi 0, %s21
    %s22 = sphi 0, %s19
    %s23 = sphi 0, %s22
    %s39 = sphi 0, %s23
    %s43 = sphi 0, %s43
    %s45 = sphi 0, %s43
    %s46 = sphi 0, %s45
    %s60 = sphi 0, %s46
    %s64 = sphi 0, %s64
    %s66 = sphi 0, %s64
    %s67 = sphi 0, %s66
    %s81 = sphi 0, %s67
    %s87 = sphi 0, %s89
    %s90 = sphi 0, %s87
    %s91 = sphi 0, %s90
    %s107 = sphi 0, %s91
  $region4: #{forward.5} parent=0 // loop_header_branch
    %12 = sbr.rel (%p10) target = $region8
  $region5: #{forward.5} parent=0 // loop_body
    %s14 = ssub.s32 %s9, 1
    %s15 = ssub.s32 %s9, 2
    %s16 = sadd.s32 %s9, 1
    %s17 = ssub.s32 %s9, %s16
    %p18 = scmp.eq.s32.totalorder %s17, 0
    %s20 = sadd.s32 %s19, 1
    %s21 = scalar_select %p18, %s19, %s20
    %p24 = pneg %p18
    %p25 = scmp.eq.s32.totalorder %s9, 1
    %p26 = por %p24, %p25
    %p27 = scmp.ne.s32.totalorder %s19, %s22
    %p28 = scmp.eq.s32.totalorder %s9, 0
    %p29 = por %p27, %p28
    %p30 = scmp.ne.s32.totalorder %s19, %s22
    %p31 = scmp.eq.s32.totalorder %s14, 1
    %p32 = por %p30, %p31
    %p33 = scmp.ne.s32.totalorder %s22, %s23
    %p34 = scmp.eq.s32.totalorder %s14, 0
    %p35 = por %p33, %p34
    %p36 = scmp.ne.s32.totalorder %s22, %s23
    %p37 = scmp.eq.s32.totalorder %s15, 1
    %p38 = por %p36, %p37
    %p40 = scmp.ne.s32.totalorder %s23, %s39
    %p41 = scmp.eq.s32.totalorder %s15, 0
    %p42 = por %p40, %p41
    %s44 = sadd.s32 %s43, 1
    %p47 = scmp.eq.s32.totalorder %s9, 1
    %p48 = scmp.ne.s32.totalorder %s43, %s45
    %p49 = scmp.eq.s32.totalorder %s9, 0
    %p50 = por %p48, %p49
    %p51 = scmp.ne.s32.totalorder %s43, %s45
    %p52 = scmp.eq.s32.totalorder %s14, 1
    %p53 = por %p51, %p52
    %p54 = scmp.ne.s32.totalorder %s45, %s46
    %p55 = scmp.eq.s32.totalorder %s14, 0
    %p56 = por %p54, %p55
    %p57 = scmp.ne.s32.totalorder %s45, %s46
    %p58 = scmp.eq.s32.totalorder %s15, 1
    %p59 = por %p57, %p58
    %p61 = scmp.ne.s32.totalorder %s46, %s60
    %p62 = scmp.eq.s32.totalorder %s15, 0
    %p63 = por %p61, %p62
    %s65 = sadd.s32 %s64, 1
    %p68 = scmp.eq.s32.totalorder %s9, 1
    %p69 = scmp.ne.s32.totalorder %s64, %s66
    %p70 = scmp.eq.s32.totalorder %s9, 0
    %p71 = por %p69, %p70
    %p72 = scmp.ne.s32.totalorder %s64, %s66
    %p73 = scmp.eq.s32.totalorder %s14, 1
    %p74 = por %p72, %p73
    %p75 = scmp.ne.s32.totalorder %s66, %s67
    %p76 = scmp.eq.s32.totalorder %s14, 0
    %p77 = por %p75, %p76
    %p78 = scmp.ne.s32.totalorder %s66, %s67
    %p79 = scmp.eq.s32.totalorder %s15, 1
    %p80 = por %p78, %p79
    %p82 = scmp.ne.s32.totalorder %s67, %s81
    %p83 = scmp.eq.s32.totalorder %s15, 0
    %p84 = por %p82, %p83
    %s85 = ssub.s32 %s9, %s16
    %p86 = scmp.eq.s32.totalorder %s85, 0
    %s88 = sadd.s32 %s87, 1
    %s89 = scalar_select %p86, %s87, %s88
    %p92 = pneg %p86
    %p93 = scmp.eq.s32.totalorder %s9, 1
    %p94 = por %p92, %p93
    %p95 = scmp.ne.s32.totalorder %s87, %s90
    %p96 = scmp.eq.s32.totalorder %s9, 0
    %p97 = por %p95, %p96
    %p98 = scmp.ne.s32.totalorder %s87, %s90
    %p99 = scmp.eq.s32.totalorder %s14, 1
    %p100 = por %p98, %p99
    %p101 = scmp.ne.s32.totalorder %s90, %s91
    %p102 = scmp.eq.s32.totalorder %s14, 0
    %p103 = por %p101, %p102
    %p104 = scmp.ne.s32.totalorder %s90, %s91
    %p105 = scmp.eq.s32.totalorder %s15, 1
    %p106 = por %p104, %p105
    %p108 = scmp.ne.s32.totalorder %s91, %s107
    %p109 = scmp.eq.s32.totalorder %s15, 0
    %p110 = por %p108, %p109
    %p111 = scmp.le.s32.totalorder 1, %s9
    %p112 = scmp.lt.s32.totalorder %s9, 3
    %p113 = pnand %p111, %p112
    %p114 = pneg %p113
    // Predicated region
    $region9: #{forward.5} parent=5 // pred_check
      _
    $region10: #{forward.5} parent=5 // pred_check_branch
      %116 = sbr.rel (%p113) target = $region12
    $region11: #{forward.5} parent=5 // pred_region
      %s117 = ssub.s32 %s9, 1
      // Predicated region
      $region13: #{forward.5} parent=11 // pred_check
        %p118 = pneg %p56
      $region14: #{forward.5} parent=11 // pred_check_branch
        %120 = sbr.rel (%p118) target = $region16
      $region15: #{forward.5} parent=11 // pred_region
        _
      $region16: #{forward.5} parent=11 // pred_fallthru
        _
      // Predicated region
      $region17: #{forward.5} parent=11 // pred_check
        %p121 = pneg %p77
      $region18: #{forward.5} parent=11 // pred_check_branch
        %123 = sbr.rel (%p121) target = $region20
      $region19: #{forward.5} parent=11 // pred_region
        _
      $region20: #{forward.5} parent=11 // pred_fallthru
        _
    $region12: #{forward.5} parent=5 // pred_fallthru
      _
    %p124 = scmp.lt.s32.totalorder %s9, 2
    // Predicated region
    $region21: #{forward.5} parent=5 // pred_check
      %p125 = pneg %p124
    $region22: #{forward.5} parent=5 // pred_check_branch
      %127 = sbr.rel (%p125) target = $region24
    $region23: #{forward.5} parent=5 // pred_region
      // Predicated region
      $region25: #{forward.5} parent=23 // pred_check
        %p128 = pneg %p29
      $region26: #{forward.5} parent=23 // pred_check_branch
        %130 = sbr.rel (%p128) target = $region28
      $region27: #{forward.5} parent=23 // pred_region
        %p131 = scmp.lt.s32.totalorder %s9, 1
        %s132 = scalar_select %p131, %s9, 1
        %s133 = smul.addr %s132, 4
        %s134 = smul.addr %s133, 8
        %s135 = scalar_lea.vmem %s0, %s134
      $region28: #{forward.5} parent=23 // pred_fallthru
        _
    $region24: #{forward.5} parent=5 // pred_fallthru
      _
    %p136 = scmp.le.s32.totalorder 1, %s9
    %p137 = scmp.lt.s32.totalorder %s9, 3
    %p138 = pnand %p136, %p137
    %p139 = pneg %p138
    // Predicated region
    $region29: #{forward.5} parent=5 // pred_check
      _
    $region30: #{forward.5} parent=5 // pred_check_branch
      %141 = sbr.rel (%p138) target = $region32
    $region31: #{forward.5} parent=5 // pred_region
      %s142 = ssub.s32 %s9, 1
      %p143 = scmp.lt.s32.totalorder %s14, 1
      %s144 = scalar_select %p143, %s14, 1
      %s145 = smul.addr %s144, 4
      %s146 = smul.addr %s145, 8
      %s147 = scalar_lea.vmem %s0, %s146
      %p148 = pneg %p35
      %p149 = pneg %p32
      %p150 = pneg %p56
      %p151 = pneg %p53
      %p152 = pneg %p77
      %p153 = pneg %p74
      %p154 = pneg %p103
      %p155 = pneg %p100
      %p156 = scmp.lt.s32.totalorder %s14, 1
      %s157 = scalar_select %p156, %s14, 1
      %s158 = smul.addr %s157, 2
      %s159 = smul.addr %s158, 8
      %s160 = scalar_lea.vmem %s3, %s159
      %p161 = scmp.lt.s32.totalorder %s14, 1
      %s162 = scalar_select %p161, %s14, 1
      %s163 = smul.addr %s162, 4
      %s164 = smul.addr %s163, 8
      %s165 = scalar_lea.vmem %s0, %s164
      %p166 = scmp.lt.s32.totalorder %s14, 1
      %s167 = scalar_select %p166, %s14, 1
      %s168 = smul.addr %s167, 2
      %s169 = smul.addr %s168, 8
      %s170 = scalar_lea.vmem %s3, %s169
      %v172 = vld [vmem:[%s165] sm:$0xff]
      %v173 = vld [vmem:[%s165 + $0x8] sm:$0xff]
      %v174 = vld [vmem:[%s165 + $0x10] sm:$0xff]
      %v175 = vld [vmem:[%s165 + $0x18] sm:$0xff]
      %v176 = vpack.c.bf16 %v174, %v172
      %v177 = vpack.c.bf16 %v175, %v173
      %v178 = vld [vmem:[%s1] sm:$0xff]
      %v179 = vld [vmem:[%s1 + $0x8] sm:$0xff]
      %v180 = vld [vmem:[%s1 + $0x10] sm:$0xff]
      %v181 = vld [vmem:[%s1 + $0x18] sm:$0xff]
      %v182 = vld [vmem:[%s1 + $0x20] sm:$0xff]
      %v183 = vld [vmem:[%s1 + $0x28] sm:$0xff]
      %v184 = vld [vmem:[%s1 + $0x30] sm:$0xff]
      %v185 = vld [vmem:[%s1 + $0x38] sm:$0xff]
      %v186 = vld [vmem:[%s1 + $0x40] sm:$0xff]
      %v187 = vld [vmem:[%s1 + $0x48] sm:$0xff]
      %v188 = vld [vmem:[%s1 + $0x50] sm:$0xff]
      %v189 = vld [vmem:[%s1 + $0x58] sm:$0xff]
      %v190 = vld [vmem:[%s1 + $0x60] sm:$0xff]
      %v191 = vld [vmem:[%s1 + $0x68] sm:$0xff]
      %v192 = vld [vmem:[%s1 + $0x70] sm:$0xff]
      %v193 = vld [vmem:[%s1 + $0x78] sm:$0xff]
      %v194 = vld [vmem:[%s1 + $0x80] sm:$0xff]
      %v195 = vld [vmem:[%s1 + $0x88] sm:$0xff]
      %v196 = vld [vmem:[%s1 + $0x90] sm:$0xff]
      %v197 = vld [vmem:[%s1 + $0x98] sm:$0xff]
      %v218 = vunpack.c.l.b16 %v178
      %v219 = vunpack.c.h.b16 %v178
      %v220 = vunpack.c.l.b16 %v179
      %v221 = vunpack.c.h.b16 %v179
      %v222 = vunpack.c.l.b16 %v180
      %v223 = vunpack.c.h.b16 %v180
      %v224 = vunpack.c.l.b16 %v181
      %v225 = vunpack.c.h.b16 %v181
      %v226 = vunpack.c.l.b16 %v182
      %v227 = vunpack.c.h.b16 %v182
      %v228 = vunpack.c.l.b16 %v183
      %v229 = vunpack.c.h.b16 %v183
      %v230 = vunpack.c.l.b16 %v184
      %v231 = vunpack.c.h.b16 %v184
      %v232 = vunpack.c.l.b16 %v185
      %v233 = vunpack.c.h.b16 %v185
      %v234 = vunpack.c.l.b16 %v186
      %v235 = vunpack.c.h.b16 %v186
      %v236 = vunpack.c.l.b16 %v187
      %v237 = vunpack.c.h.b16 %v187
      %v238 = vunpack.c.l.b16 %v188
      %v239 = vunpack.c.h.b16 %v188
      %v240 = vunpack.c.l.b16 %v189
      %v241 = vunpack.c.h.b16 %v189
      %v242 = vunpack.c.l.b16 %v190
      %v243 = vunpack.c.h.b16 %v190
      %v244 = vunpack.c.l.b16 %v191
      %v245 = vunpack.c.h.b16 %v191
      %v246 = vunpack.c.l.b16 %v192
      %v247 = vunpack.c.h.b16 %v192
      %v248 = vunpack.c.l.b16 %v193
      %v249 = vunpack.c.h.b16 %v193
      %v250 = vunpack.c.l.b16 %v194
      %v251 = vunpack.c.h.b16 %v194
      %v252 = vunpack.c.l.b16 %v195
      %v253 = vunpack.c.h.b16 %v195
      %v254 = vunpack.c.l.b16 %v196
      %v255 = vunpack.c.h.b16 %v196
      %v256 = vunpack.c.l.b16 %v197
      %v257 = vunpack.c.h.b16 %v197
      %v258 = vpack.c.b16 %v220, %v218
      %v259 = vpack.c.b16 %v221, %v219
      %v260 = vpack.c.b16 %v224, %v222
      %v261 = vpack.c.b16 %v225, %v223
      %v262 = vpack.c.b16 %v228, %v226
      %v263 = vpack.c.b16 %v229, %v227
      %v264 = vpack.c.b16 %v232, %v230
      %v265 = vpack.c.b16 %v233, %v231
      %v266 = vpack.c.b16 %v236, %v234
      %v267 = vpack.c.b16 %v237, %v235
      %v268 = vpack.c.b16 %v240, %v238
      %v269 = vpack.c.b16 %v241, %v239
      %v270 = vpack.c.b16 %v244, %v242
      %v271 = vpack.c.b16 %v245, %v243
      %v272 = vpack.c.b16 %v248, %v246
      %v273 = vpack.c.b16 %v249, %v247
      %v274 = vpack.c.b16 %v252, %v250
      %v275 = vpack.c.b16 %v253, %v251
      %v276 = vpack.c.b16 %v256, %v254
      %v277 = vpack.c.b16 %v257, %v255
      %vm298 = vcmask 261120
      %v300 = vsel %vm298, %v177, 0
      %302 = vmatprep.subr.bf16.mxu0 %v259
      %303 = vmatpush1.bf16.msra.mxu0 %v258
      %304 = vmatprep.subr.bf16.mxu0 %v261
      %305 = vmatpush1.bf16.msra.mxu0 %v260
      %306 = vmatprep.subr.bf16.mxu0 %v263
      %307 = vmatpush1.bf16.msra.mxu0 %v262
      %308 = vmatprep.subr.bf16.mxu0 %v265
      %309 = vmatpush1.bf16.msra.mxu0 %v264
      %310 = vmatprep.subr.bf16.mxu0 %v267
      %311 = vmatpush1.bf16.msra.mxu0 %v266
      %312 = vmatprep.subr.bf16.mxu0 %v269
      %313 = vmatpush1.bf16.msra.mxu0 %v268
      %314 = vmatprep.subr.bf16.mxu0 %v271
      %315 = vmatpush1.bf16.msra.mxu0 %v270
      %316 = vmatprep.subr.bf16.mxu0 %v273
      %317 = vmatpush1.bf16.msra.mxu0 %v272
      %318 = vmatprep.subr.bf16.mxu0 %v275
      %319 = vmatpush1.bf16.msra.mxu0 %v274
      %320 = vmatprep.subr.bf16.mxu0 %v277
      %321 = vmatpush1.bf16.msra.mxu0 %v276
      %322 = vmatprep.subr.bf16.mxu0 0
      %323 = vmatpush1.bf16.msra.mxu0 0
      %324 = vmatprep.subr.bf16.mxu0 0
      %325 = vmatpush1.bf16.msra.mxu0 0
      %326 = vmatprep.subr.bf16.mxu0 0
      %327 = vmatpush1.bf16.msra.mxu0 0
      %328 = vmatprep.subr.bf16.mxu0 0
      %329 = vmatpush1.bf16.msra.mxu0 0
      %330 = vmatprep.subr.bf16.mxu0 0
      %331 = vmatpush1.bf16.msra.mxu0 0
      %332 = vmatprep.subr.bf16.mxu0 0
      %333 = vmatpush1.bf16.msra.mxu0 0
      %334 = vmatprep.mubr.bf16.mxu0 %v300
      %335 = vmatmul.mubr.bf16.gmra.mrb[0].mxu0 %v176
      %v336 = vpop.f32.mrb[0].mxu0
      %v337 = vadd.f32 0.0, %v336
      %v338 = vpop.f32.mrb[0].mxu0
      %v339 = vadd.f32 0.0, %v338
      %v340 = vpop.f32.mrb[0].mxu0
      %v341 = vadd.f32 0.0, %v340
      %v342 = vpop.f32.mrb[0].mxu0
      %v343 = vadd.f32 0.0, %v342
      %344 = vdwg.mxu0
      %v345 = vmul.f32 %v337, %v337
      %v346 = vmul.f32 %v341, %v341
      %v347 = vmul.f32 %v339, %v339
      %v348 = vmul.f32 %v343, %v343
      %v349 = vadd.f32 %v345, %v347
      %v350 = vadd.f32 %v346, %v348
      %v351 = vpack.c.bf16 %v350, %v349
      %v352 = vld [vmem:[%s2] sm:$0xf]
      %v353 = vld [vmem:[%s2 + $0x4] sm:$0xf]
      %v354 = vld [vmem:[%s2 + $0x8] sm:$0xf]
      %v355 = vld [vmem:[%s2 + $0xc] sm:$0xf]
      %v356 = vld [vmem:[%s2 + $0x10] sm:$0xf]
      %v357 = vld [vmem:[%s2 + $0x14] sm:$0xf]
      %v358 = vld [vmem:[%s2 + $0x18] sm:$0xf]
      %v359 = vld [vmem:[%s2 + $0x1c] sm:$0xf]
      %v360 = vld [vmem:[%s2 + $0x20] sm:$0xf]
      %v361 = vld [vmem:[%s2 + $0x24] sm:$0xf]
      %v362 = vld [vmem:[%s2 + $0x28] sm:$0xf]
      %v363 = vld [vmem:[%s2 + $0x2c] sm:$0xf]
      %v364 = vld [vmem:[%s2 + $0x30] sm:$0xf]
      %v365 = vld [vmem:[%s2 + $0x34] sm:$0xf]
      %v366 = vld [vmem:[%s2 + $0x38] sm:$0xf]
      %v367 = vld [vmem:[%s2 + $0x3c] sm:$0xf]
      %v384 = vunpack.c.l.b16 %v352
      %v385 = vunpack.c.l.b16 %v353
      %v386 = vunpack.c.l.b16 %v354
      %v387 = vunpack.c.l.b16 %v355
      %v388 = vunpack.c.l.b16 %v356
      %v389 = vunpack.c.l.b16 %v357
      %v390 = vunpack.c.l.b16 %v358
      %v391 = vunpack.c.l.b16 %v359
      %v392 = vunpack.c.l.b16 %v360
      %v393 = vunpack.c.l.b16 %v361
      %v394 = vunpack.c.l.b16 %v362
      %v395 = vunpack.c.l.b16 %v363
      %v396 = vunpack.c.l.b16 %v364
      %v397 = vunpack.c.l.b16 %v365
      %v398 = vunpack.c.l.b16 %v366
      %v399 = vunpack.c.l.b16 %v367
      %v400 = vpack.c.b16 %v385, %v384
      %v401 = vpack.c.b16 %v387, %v386
      %v402 = vpack.c.b16 %v389, %v388
      %v403 = vpack.c.b16 %v391, %v390
      %v404 = vpack.c.b16 %v393, %v392
      %v405 = vpack.c.b16 %v395, %v394
      %v406 = vpack.c.b16 %v397, %v396
      %v407 = vpack.c.b16 %v399, %v398
      %416 = vmatprep.subr.bf16.mxu0 0
      %417 = vmatpush1.bf16.msra.mxu0 %v400
      %418 = vmatprep.subr.bf16.mxu0 0
      %419 = vmatpush1.bf16.msra.mxu0 %v401
      %420 = vmatprep.subr.bf16.mxu0 0
      %421 = vmatpush1.bf16.msra.mxu0 %v402
      %422 = vmatprep.subr.bf16.mxu0 0
      %423 = vmatpush1.bf16.msra.mxu0 %v403
      %424 = vmatprep.subr.bf16.mxu0 0
      %425 = vmatpush1.bf16.msra.mxu0 %v404
      %426 = vmatprep.subr.bf16.mxu0 0
      %427 = vmatpush1.bf16.msra.mxu0 %v405
      %428 = vmatprep.subr.bf16.mxu0 0
      %429 = vmatpush1.bf16.msra.mxu0 %v406
      %430 = vmatprep.subr.bf16.mxu0 0
      %431 = vmatpush1.bf16.msra.mxu0 %v407
      %432 = vmatprep.subr.bf16.mxu0 0
      %433 = vmatpush1.bf16.msra.mxu0 0
      %434 = vmatprep.subr.bf16.mxu0 0
      %435 = vmatpush1.bf16.msra.mxu0 0
      %436 = vmatprep.subr.bf16.mxu0 0
      %437 = vmatpush1.bf16.msra.mxu0 0
      %438 = vmatprep.subr.bf16.mxu0 0
      %439 = vmatpush1.bf16.msra.mxu0 0
      %440 = vmatprep.subr.bf16.mxu0 0
      %441 = vmatpush1.bf16.msra.mxu0 0
      %442 = vmatprep.subr.bf16.mxu0 0
      %443 = vmatpush1.bf16.msra.mxu0 0
      %444 = vmatprep.subr.bf16.mxu0 0
      %445 = vmatpush1.bf16.msra.mxu0 0
      %446 = vmatprep.subr.bf16.mxu0 0
      %447 = vmatpush1.bf16.msra.mxu0 0
      %448 = vmatprep.mubr.bf16.mxu0 0
      %449 = vmatmul.mubr.bf16.gmra.mrb[0].mxu0 %v351
      %v450 = vpop.f32.mrb[0].mxu0
      %v451 = vadd.f32 1e-10, %v450
      %v452 = vpop.f32.mrb[0].mxu0
      %v453 = vpop.f32.mrb[0].mxu0
      %v454 = vadd.f32 1e-10, %v453
      %v455 = vpop.f32.mrb[0].mxu0
      %456 = vdwg.mxu0
      %v457 = vlog2.pop %v451
      %v458 = vmul.f32 %v457, 0.6931472
      %v459 = vlog2.pop %v454
      %v460 = vmul.f32 %v459, 0.6931472
      %vm461 = vcmask 523264
      %462 = vst.msk [vmem:[%s170] sm:$0xff] %vm461, %v458
      %463 = vst.msk [vmem:[%s170 + $0x8] sm:$0xff] %vm461, %v460
      %p464 = scmp.lt.s32.totalorder %s14, 1
      %s465 = scalar_select %p464, %s14, 1
      %s466 = smul.addr %s465, 2
      %s467 = smul.addr %s466, 8
      %s468 = scalar_lea.vmem %s3, %s467
      // Predicated region
      $region33: #{forward.5} parent=31 // pred_check
        %p469 = pneg %p100
      $region34: #{forward.5} parent=31 // pred_check_branch
        %471 = sbr.rel (%p469) target = $region36
      $region35: #{forward.5} parent=31 // pred_region
        _
      $region36: #{forward.5} parent=31 // pred_fallthru
        _
    $region32: #{forward.5} parent=5 // pred_fallthru
      _
    %p472 = scmp.le.s32.totalorder 2, %s9
    // Predicated region
    $region37: #{forward.5} parent=5 // pred_check
      %p473 = pneg %p472
    $region38: #{forward.5} parent=5 // pred_check_branch
      %475 = sbr.rel (%p473) target = $region40
    $region39: #{forward.5} parent=5 // pred_region
      %s476 = ssub.s32 %s9, 2
      // Predicated region
      $region41: #{forward.5} parent=39 // pred_check
        %p477 = pneg %p106
      $region42: #{forward.5} parent=39 // pred_check_branch
        %479 = sbr.rel (%p477) target = $region44
      $region43: #{forward.5} parent=39 // pred_region
        %p480 = scmp.lt.s32.totalorder %s15, 1
        %s481 = scalar_select %p480, %s15, 1
        %s482 = smul.addr %s481, 2
        %s483 = smul.addr %s482, 8
        %s484 = scalar_lea.vmem %s3, %s483
      $region44: #{forward.5} parent=39 // pred_fallthru
        _
    $region40: #{forward.5} parent=5 // pred_fallthru
      _
  $region6: #{forward.5} parent=0 // loop_footer
    %s13 = sadd.s32 1, %s9
  $region7: #{forward.5} parent=0 // loop_footer_branch
    %8 = sbr.rel target = $region3
  $region8: #{forward.5} parent=0 // loop_exit
    _

// kernel: forward.6
$region0: #{forward.6}
  #allocation0 [shape = 'u32[]', space=smem, size = 0x4, offset = 0x4, fixed_abs, tag = 'smem constant byte address 0x4 - core index']
  #allocation1 [shape = 'u32[144,128]{1,0:T(1,128)}', space=vmem, size = 0x12000, scoped, tag = 'internal scratch']
  %s0 = inlined_call_operand.vmem [shape: f32[16,128], index: 0, kind: input, shape index: {}]
  %s1 = inlined_call_operand.vmem [shape: bf16[128,128], index: 1, kind: input, shape index: {}]
  %s2 = inlined_call_operand.vmem [shape: f32[1,128], index: 2, kind: input, shape index: {}]
  %s3 = inlined_call_operand.vmem [shape: f32[16,128], index: 3, kind: output, shape index: {}]
  %s4 = sld [smem:[#allocation0]]
  $region22: #{forward.6} parent=0
    _
  %s6 = ssub.s32 1, %s4
  %s7 = scalar_select 0, %s6, %s4
  // Predicated region
  $region2: #{forward.6} parent=0 // pred_check
    _
  $region3: #{forward.6} parent=0 // pred_check_branch
    %9 = sbr.rel (0) target = $region5
  $region4: #{forward.6} parent=0 // pred_region
    _
  $region5: #{forward.6} parent=0 // pred_fallthru
    _
  // Predicated region
  $region6: #{forward.6} parent=0 // pred_check
    _
  $region7: #{forward.6} parent=0 // pred_check_branch
    %11 = sbr.rel (0) target = $region9
  $region8: #{forward.6} parent=0 // pred_region
    _
  $region9: #{forward.6} parent=0 // pred_fallthru
    _
  // Predicated region
  $region10: #{forward.6} parent=0 // pred_check
    _
  $region11: #{forward.6} parent=0 // pred_check_branch
    %13 = sbr.rel (0) target = $region13
  $region12: #{forward.6} parent=0 // pred_region
    _
  $region13: #{forward.6} parent=0 // pred_fallthru
    _
  %v15 = vld [vmem:[%s0] sm:$0xff]
  %v16 = vld [vmem:[%s0 + $0x8] sm:$0xff]
  %v17 = vpack.c.bf16 %v16, %v15
  %v18 = vld [vmem:[%s1] sm:$0xf]
  %v19 = vld [vmem:[%s1 + $0x4] sm:$0xf]
  %v20 = vld [vmem:[%s1 + $0x8] sm:$0xf]
  %v21 = vld [vmem:[%s1 + $0xc] sm:$0xf]
  %v22 = vld [vmem:[%s1 + $0x10] sm:$0xf]
  %v23 = vld [vmem:[%s1 + $0x14] sm:$0xf]
  %v24 = vld [vmem:[%s1 + $0x18] sm:$0xf]
  %v25 = vld [vmem:[%s1 + $0x1c] sm:$0xf]
  %v26 = vld [vmem:[%s1 + $0x20] sm:$0xf]
  %v27 = vld [vmem:[%s1 + $0x24] sm:$0xf]
  %v28 = vld [vmem:[%s1 + $0x28] sm:$0xf]
  %v29 = vld [vmem:[%s1 + $0x2c] sm:$0xf]
  %v30 = vld [vmem:[%s1 + $0x30] sm:$0xf]
  %v31 = vld [vmem:[%s1 + $0x34] sm:$0xf]
  %v32 = vld [vmem:[%s1 + $0x38] sm:$0xf]
  %v33 = vld [vmem:[%s1 + $0x3c] sm:$0xf]
  %v34 = vld [vmem:[%s2] sm:$0x1]
  %v36 = vlaneseq
  %v37 = vshrl.u32 %v36, 7
  %v38 = vsub.s32 0, %v37
  %v39 = vrot.slane %v34, %v38
  %v57 = vunpack.c.l.b16 %v18
  %v58 = vunpack.c.l.b16 %v19
  %v59 = vunpack.c.l.b16 %v20
  %v60 = vunpack.c.l.b16 %v21
  %v61 = vunpack.c.l.b16 %v22
  %v62 = vunpack.c.l.b16 %v23
  %v63 = vunpack.c.l.b16 %v24
  %v64 = vunpack.c.l.b16 %v25
  %v65 = vunpack.c.l.b16 %v26
  %v66 = vunpack.c.l.b16 %v27
  %v67 = vunpack.c.l.b16 %v28
  %v68 = vunpack.c.l.b16 %v29
  %v69 = vunpack.c.l.b16 %v30
  %v70 = vunpack.c.l.b16 %v31
  %v71 = vunpack.c.l.b16 %v32
  %v72 = vunpack.c.l.b16 %v33
  %v73 = vpack.c.b16 %v58, %v57
  %v74 = vpack.c.b16 %v60, %v59
  %v75 = vpack.c.b16 %v62, %v61
  %v76 = vpack.c.b16 %v64, %v63
  %v77 = vpack.c.b16 %v66, %v65
  %v78 = vpack.c.b16 %v68, %v67
  %v79 = vpack.c.b16 %v70, %v69
  %v80 = vpack.c.b16 %v72, %v71
  %89 = vmatprep.subr.bf16.mxu0 0
  %90 = vmatpush1.bf16.msra.mxu0 %v73
  %91 = vmatprep.subr.bf16.mxu0 0
  %92 = vmatpush1.bf16.msra.mxu0 %v74
  %93 = vmatprep.subr.bf16.mxu0 0
  %94 = vmatpush1.bf16.msra.mxu0 %v75
  %95 = vmatprep.subr.bf16.mxu0 0
  %96 = vmatpush1.bf16.msra.mxu0 %v76
  %97 = vmatprep.subr.bf16.mxu0 0
  %98 = vmatpush1.bf16.msra.mxu0 %v77
  %99 = vmatprep.subr.bf16.mxu0 0
  %100 = vmatpush1.bf16.msra.mxu0 %v78
  %101 = vmatprep.subr.bf16.mxu0 0
  %102 = vmatpush1.bf16.msra.mxu0 %v79
  %103 = vmatprep.subr.bf16.mxu0 0
  %104 = vmatpush1.bf16.msra.mxu0 %v80
  %105 = vmatprep.subr.bf16.mxu0 0
  %106 = vmatpush1.bf16.msra.mxu0 0
  %107 = vmatprep.subr.bf16.mxu0 0
  %108 = vmatpush1.bf16.msra.mxu0 0
  %109 = vmatprep.subr.bf16.mxu0 0
  %110 = vmatpush1.bf16.msra.mxu0 0
  %111 = vmatprep.subr.bf16.mxu0 0
  %112 = vmatpush1.bf16.msra.mxu0 0
  %113 = vmatprep.subr.bf16.mxu0 0
  %114 = vmatpush1.bf16.msra.mxu0 0
  %115 = vmatprep.subr.bf16.mxu0 0
  %116 = vmatpush1.bf16.msra.mxu0 0
  %117 = vmatprep.subr.bf16.mxu0 0
  %118 = vmatpush1.bf16.msra.mxu0 0
  %119 = vmatprep.subr.bf16.mxu0 0
  %120 = vmatpush1.bf16.msra.mxu0 0
  %121 = vmatprep.mubr.bf16.mxu0 0
  %122 = vmatmul.mubr.bf16.gmra.mrb[0].mxu0 %v17
  %v123 = vpop.f32.mrb[0].mxu0
  %v124 = vadd.f32 %v39, %v123
  %v125 = vpop.f32.mrb[0].mxu0
  %v126 = vpop.f32.mrb[0].mxu0
  %v127 = vadd.f32 %v39, %v126
  %v128 = vpop.f32.mrb[0].mxu0
  %129 = vdwg.mxu0
  %v130 = vmax.f32 %v124, 0.0
  %v131 = vmax.f32 %v127, 0.0
  %132 = vst [vmem:[%s3] sm:$0xff] %v130
  %133 = vst [vmem:[%s3 + $0x8] sm:$0xff] %v131
  // Predicated region
  $region14: #{forward.6} parent=0 // pred_check
    _
  $region15: #{forward.6} parent=0 // pred_check_branch
    %135 = sbr.rel (0) target = $region17
  $region16: #{forward.6} parent=0 // pred_region
    _
  $region17: #{forward.6} parent=0 // pred_fallthru
    _
  // Predicated region
  $region18: #{forward.6} parent=0 // pred_check
    _
  $region19: #{forward.6} parent=0 // pred_check_branch
    %137 = sbr.rel (0) target = $region21
  $region20: #{forward.6} parent=0 // pred_region
    _
  $region21: #{forward.6} parent=0 // pred_fallthru
    _

// kernel: forward.9
$region0: #{forward.9}
  #allocation0 [shape = 'u32[]', space=smem, size = 0x4, offset = 0x4, fixed_abs, tag = 'smem constant byte address 0x4 - core index']
  #allocation1 [shape = 'u32[144,128]{1,0:T(1,128)}', space=vmem, size = 0x12000, scoped, tag = 'internal scratch']
  %s0 = inlined_call_operand.vmem [shape: f32[16,128], index: 0, kind: input, shape index: {}]
  %s1 = inlined_call_operand.vmem [shape: bf16[128,128], index: 1, kind: input, shape index: {}]
  %s2 = inlined_call_operand.vmem [shape: f32[1,128], index: 2, kind: input, shape index: {}]
  %s3 = inlined_call_operand.hbm [shape: f32[16,128], index: 3, kind: output, shape index: {0}]
  %s4 = inlined_call_operand.hbm [shape: f32[16,128], index: 4, kind: output, shape index: {1}]
  %5 = xla_tuple %s3, %s4
  %s6 = sld [smem:[#allocation0]]
  $region30: #{forward.9} parent=0
    _
  %s8 = ssub.s32 1, %s6
  %s9 = scalar_select 0, %s8, %s6
  $region1: #{forward.9} parent=0
    #allocation2 [shape = 'u8[8192]{0}', space=vmem, size = 0x2000, scoped, tag = 'output window, operand 0, single buffered']
    #allocation3 [shape = 's32[1]{0}', space=sflag, size = 0x4, scoped, tag = 'scoped memory for forward.9']
    #allocation4 [shape = 'u8[8192]{0}', space=vmem, size = 0x2000, scoped, tag = 'output window, operand 1, single buffered']
    #allocation5 [shape = 's32[1]{0}', space=sflag, size = 0x4, scoped, tag = 'scoped memory for forward.9']
    %10 = vsyncpa [#allocation3], 0
    %11 = vsyncpa [#allocation5], 0
    // Predicated region
    $region2: #{forward.9} parent=1 // pred_check
      _
    $region3: #{forward.9} parent=1 // pred_check_branch
      %13 = sbr.rel (0) target = $region5
    $region4: #{forward.9} parent=1 // pred_region
      _
    $region5: #{forward.9} parent=1 // pred_fallthru
      _
    // Predicated region
    $region6: #{forward.9} parent=1 // pred_check
      _
    $region7: #{forward.9} parent=1 // pred_check_branch
      %15 = sbr.rel (0) target = $region9
    $region8: #{forward.9} parent=1 // pred_region
      _
    $region9: #{forward.9} parent=1 // pred_fallthru
      _
    // Predicated region
    $region10: #{forward.9} parent=1 // pred_check
      _
    $region11: #{forward.9} parent=1 // pred_check_branch
      %17 = sbr.rel (0) target = $region13
    $region12: #{forward.9} parent=1 // pred_region
      _
    $region13: #{forward.9} parent=1 // pred_fallthru
      _
    %v19 = vld [vmem:[%s0] sm:$0xff]
    %v20 = vld [vmem:[%s0 + $0x8] sm:$0xff]
    %v21 = vpack.c.bf16 %v20, %v19
    %v22 = vld [vmem:[%s1] sm:$0xf]
    %v23 = vld [vmem:[%s1 + $0x4] sm:$0xf]
    %v24 = vld [vmem:[%s1 + $0x8] sm:$0xf]
    %v25 = vld [vmem:[%s1 + $0xc] sm:$0xf]
    %v26 = vld [vmem:[%s1 + $0x10] sm:$0xf]
    %v27 = vld [vmem:[%s1 + $0x14] sm:$0xf]
    %v28 = vld [vmem:[%s1 + $0x18] sm:$0xf]
    %v29 = vld [vmem:[%s1 + $0x1c] sm:$0xf]
    %v30 = vld [vmem:[%s1 + $0x20] sm:$0xf]
    %v31 = vld [vmem:[%s1 + $0x24] sm:$0xf]
    %v32 = vld [vmem:[%s1 + $0x28] sm:$0xf]
    %v33 = vld [vmem:[%s1 + $0x2c] sm:$0xf]
    %v34 = vld [vmem:[%s1 + $0x30] sm:$0xf]
    %v35 = vld [vmem:[%s1 + $0x34] sm:$0xf]
    %v36 = vld [vmem:[%s1 + $0x38] sm:$0xf]
    %v37 = vld [vmem:[%s1 + $0x3c] sm:$0xf]
    %v38 = vld [vmem:[%s2] sm:$0x1]
    %v40 = vlaneseq
    %v41 = vshrl.u32 %v40, 7
    %v42 = vsub.s32 0, %v41
    %v43 = vrot.slane %v38, %v42
    %v61 = vunpack.c.l.b16 %v22
    %v62 = vunpack.c.l.b16 %v23
    %v63 = vunpack.c.l.b16 %v24
    %v64 = vunpack.c.l.b16 %v25
    %v65 = vunpack.c.l.b16 %v26
    %v66 = vunpack.c.l.b16 %v27
    %v67 = vunpack.c.l.b16 %v28
    %v68 = vunpack.c.l.b16 %v29
    %v69 = vunpack.c.l.b16 %v30
    %v70 = vunpack.c.l.b16 %v31
    %v71 = vunpack.c.l.b16 %v32
    %v72 = vunpack.c.l.b16 %v33
    %v73 = vunpack.c.l.b16 %v34
    %v74 = vunpack.c.l.b16 %v35
    %v75 = vunpack.c.l.b16 %v36
    %v76 = vunpack.c.l.b16 %v37
    %v77 = vpack.c.b16 %v62, %v61
    %v78 = vpack.c.b16 %v64, %v63
    %v79 = vpack.c.b16 %v66, %v65
    %v80 = vpack.c.b16 %v68, %v67
    %v81 = vpack.c.b16 %v70, %v69
    %v82 = vpack.c.b16 %v72, %v71
    %v83 = vpack.c.b16 %v74, %v73
    %v84 = vpack.c.b16 %v76, %v75
    %93 = vmatprep.subr.bf16.mxu0 0
    %94 = vmatpush1.bf16.msra.mxu0 %v77
    %95 = vmatprep.subr.bf16.mxu0 0
    %96 = vmatpush1.bf16.msra.mxu0 %v78
    %97 = vmatprep.subr.bf16.mxu0 0
    %98 = vmatpush1.bf16.msra.mxu0 %v79
    %99 = vmatprep.subr.bf16.mxu0 0
    %100 = vmatpush1.bf16.msra.mxu0 %v80
    %101 = vmatprep.subr.bf16.mxu0 0
    %102 = vmatpush1.bf16.msra.mxu0 %v81
    %103 = vmatprep.subr.bf16.mxu0 0
    %104 = vmatpush1.bf16.msra.mxu0 %v82
    %105 = vmatprep.subr.bf16.mxu0 0
    %106 = vmatpush1.bf16.msra.mxu0 %v83
    %107 = vmatprep.subr.bf16.mxu0 0
    %108 = vmatpush1.bf16.msra.mxu0 %v84
    %109 = vmatprep.subr.bf16.mxu0 0
    %110 = vmatpush1.bf16.msra.mxu0 0
    %111 = vmatprep.subr.bf16.mxu0 0
    %112 = vmatpush1.bf16.msra.mxu0 0
    %113 = vmatprep.subr.bf16.mxu0 0
    %114 = vmatpush1.bf16.msra.mxu0 0
    %115 = vmatprep.subr.bf16.mxu0 0
    %116 = vmatpush1.bf16.msra.mxu0 0
    %117 = vmatprep.subr.bf16.mxu0 0
    %118 = vmatpush1.bf16.msra.mxu0 0
    %119 = vmatprep.subr.bf16.mxu0 0
    %120 = vmatpush1.bf16.msra.mxu0 0
    %121 = vmatprep.subr.bf16.mxu0 0
    %122 = vmatpush1.bf16.msra.mxu0 0
    %123 = vmatprep.subr.bf16.mxu0 0
    %124 = vmatpush1.bf16.msra.mxu0 0
    %125 = vmatprep.mubr.bf16.mxu0 0
    %126 = vmatmul.mubr.bf16.gmra.mrb[0].mxu0 %v21
    %v127 = vpop.f32.mrb[0].mxu0
    %v128 = vadd.f32 %v43, %v127
    %v129 = vpop.f32.mrb[0].mxu0
    %v130 = vpop.f32.mrb[0].mxu0
    %v131 = vadd.f32 %v43, %v130
    %v132 = vpop.f32.mrb[0].mxu0
    %133 = vdwg.mxu0
    %134 = vst [vmem:[#allocation2] sm:$0xff] %v128
    %135 = vst [vmem:[#allocation2 + $0x8] sm:$0xff] %v131
    %136 = vmax.xlane.f32.xlu0 %v128
    %v137 = vpop.xlane.xlu0 %136
    %138 = vmax.xlane.f32.xlu0 %v131
    %v139 = vpop.xlane.xlu0 %138
    %v140 = vsub.f32 %v128, %v137
    %v141 = vsub.f32 %v131, %v139
    %v142 = vmul.f32 %v140, 1.442695
    %v143 = vpow.pop %v142
    %v144 = vmul.f32 %v141, 1.442695
    %v145 = vpow.pop %v144
    %146 = vadd.xlane.f32.xlu0 %v143
    %v147 = vpop.xlane.xlu0 %146
    %148 = vadd.xlane.f32.xlu0 %v145
    %v149 = vpop.xlane.xlu0 %148
    %v150 = vlog2.pop %v147
    %v151 = vmul.f32 %v150, 0.6931472
    %v152 = vlog2.pop %v149
    %v153 = vmul.f32 %v152, 0.6931472
    %v154 = vsub.f32 %v140, %v151
    %v155 = vsub.f32 %v141, %v153
    %156 = vst [vmem:[#allocation4] sm:$0xff] %v154
    %157 = vst [vmem:[#allocation4 + $0x8] sm:$0xff] %v155
    // Predicated region
    $region14: #{forward.9} parent=1 // pred_check
      _
    $region15: #{forward.9} parent=1 // pred_check_branch
      %159 = sbr.rel (0) target = $region17
    $region16: #{forward.9} parent=1 // pred_region
      %s161 = ssub.s32 256, 256
      %162 = vsyncadd [#allocation3], %s161
      %s163 = sshll.u32 [#allocation2], 4
      %s164 = int_to_ptr.vmem [resolvable:$true] %s163
      %169 = dma.vmem_to_hbm [thread:$0]  %s164, 256, %s3, [#allocation3], 128, 128, 8
    $region17: #{forward.9} parent=1 // pred_fallthru
      _
    // Predicated region
    $region18: #{forward.9} parent=1 // pred_check
      _
    $region19: #{forward.9} parent=1 // pred_check_branch
      %171 = sbr.rel (0) target = $region21
    $region20: #{forward.9} parent=1 // pred_region
      %s173 = ssub.s32 256, 256
      %174 = vsyncadd [#allocation5], %s173
      %s175 = sshll.u32 [#allocation4], 4
      %s176 = int_to_ptr.vmem [resolvable:$true] %s175
      %181 = dma.vmem_to_hbm [thread:$0]  %s176, 256, %s4, [#allocation5], 128, 128, 8
    $region21: #{forward.9} parent=1 // pred_fallthru
      _
    // Predicated region
    $region22: #{forward.9} parent=1 // pred_check
      _
    $region23: #{forward.9} parent=1 // pred_check_branch
      %183 = sbr.rel (0) target = $region25
    $region24: #{forward.9} parent=1 // pred_region
      %184 = dma.done [#allocation3], 256
    $region25: #{forward.9} parent=1 // pred_fallthru
      _
    // Predicated region
    $region26: #{forward.9} parent=1 // pred_check
      _
    $region27: #{forward.9} parent=1 // pred_check_branch
      %186 = sbr.rel (0) target = $region29
    $region28: #{forward.9} parent=1 // pred_region
      %187 = dma.done [#allocation5], 256
    $region29: #{forward.9} parent=1 // pred_fallthru
      _
    %188 = vsyncpa [#allocation3], 1
    %189 = vsyncpa [#allocation5], 1

// kernel: forward.7
$region0: #{forward.7}
  #allocation0 [shape = 'u32[]', space=smem, size = 0x4, offset = 0x4, fixed_abs, tag = 'smem constant byte address 0x4 - core index']
  #allocation1 [shape = 'u32[144,128]{1,0:T(1,128)}', space=vmem, size = 0x12000, scoped, tag = 'internal scratch']
  %s0 = inlined_call_operand.smem [shape: u32[34], index: -1, kind: input, shape index: {}]
  %s1 = sld [smem:[%s0]]
  %s2 = scalar_lea.smem %s0, 1
  %s3 = sld [smem:[%s2]]
  %s4 = scalar_lea.smem %s0, 2
  %s5 = sld [smem:[%s4]]
  %s6 = scalar_lea.smem %s0, 3
  %s7 = sld [smem:[%s6]]
  %s8 = scalar_lea.smem %s0, 4
  %s9 = sld [smem:[%s8]]
  %s10 = scalar_lea.smem %s0, 5
  %s11 = sld [smem:[%s10]]
  %s12 = scalar_lea.smem %s0, 6
  %s13 = sld [smem:[%s12]]
  %s14 = scalar_lea.smem %s0, 7
  %s15 = sld [smem:[%s14]]
  %s16 = scalar_lea.smem %s0, 8
  %s17 = sld [smem:[%s16]]
  %s18 = scalar_lea.smem %s0, 9
  %s19 = sld [smem:[%s18]]
  %s20 = scalar_lea.smem %s0, 10
  %s21 = sld [smem:[%s20]]
  %s22 = scalar_lea.smem %s0, 11
  %s23 = sld [smem:[%s22]]
  %s24 = scalar_lea.smem %s0, 12
  %s25 = sld [smem:[%s24]]
  %s26 = scalar_lea.smem %s0, 13
  %s27 = sld [smem:[%s26]]
  %s28 = scalar_lea.smem %s0, 14
  %s29 = sld [smem:[%s28]]
  %s30 = scalar_lea.smem %s0, 15
  %s31 = sld [smem:[%s30]]
  %s32 = scalar_lea.smem %s0, 16
  %s33 = sld [smem:[%s32]]
  %s34 = scalar_lea.smem %s0, 17
  %s35 = sld [smem:[%s34]]
  %s36 = scalar_lea.smem %s0, 18
  %s37 = sld [smem:[%s36]]
  %s38 = scalar_lea.smem %s0, 19
  %s39 = sld [smem:[%s38]]
  %s40 = scalar_lea.smem %s0, 20
  %s41 = sld [smem:[%s40]]
  %s42 = scalar_lea.smem %s0, 21
  %s43 = sld [smem:[%s42]]
  %s44 = scalar_lea.smem %s0, 22
  %s45 = sld [smem:[%s44]]
  %s46 = scalar_lea.smem %s0, 23
  %s47 = sld [smem:[%s46]]
  %s48 = scalar_lea.smem %s0, 24
  %s49 = sld [smem:[%s48]]
  %s50 = scalar_lea.smem %s0, 25
  %s51 = sld [smem:[%s50]]
  %s52 = scalar_lea.smem %s0, 26
  %s53 = sld [smem:[%s52]]
  %s54 = scalar_lea.smem %s0, 27
  %s55 = sld [smem:[%s54]]
  %s56 = scalar_lea.smem %s0, 28
  %s57 = sld [smem:[%s56]]
  %s58 = scalar_lea.smem %s0, 29
  %s59 = sld [smem:[%s58]]
  %s60 = scalar_lea.smem %s0, 30
  %s61 = sld [smem:[%s60]]
  %s62 = scalar_lea.smem %s0, 31
  %s63 = sld [smem:[%s62]]
  %s64 = scalar_lea.smem %s0, 32
  %s65 = sld [smem:[%s64]]
  %s66 = scalar_lea.smem %s0, 33
  %s67 = sld [smem:[%s66]]
  %s68 = sld [smem:[#allocation0]]
  $region261: #{forward.7} parent=0
    _
  %s70 = ssub.s32 1, %s68
  %s71 = scalar_select 0, %s70, %s68
  $region1: #{forward.7} parent=0
    #allocation2 [shape = 'u8[512]{0}', space=vmem, size = 0x400, scoped, tag = 'input window, operand 3, single buffered']
    #allocation3 [shape = 's32[2]{0}', space=sflag, size = 0x8, scoped, tag = 'scoped memory for forward.7']
    #allocation4 [shape = 'u8[512]{0}', space=vmem, size = 0x400, scoped, tag = 'input window, operand 4, single buffered']
    #allocation5 [shape = 's32[1]{0}', space=sflag, size = 0x4, scoped, tag = 'scoped memory for forward.7']
    #allocation6 [shape = 'u8[1024]{0}', space=vmem, size = 0x400, scoped, tag = 'input window, operand 6, single buffered']
    #allocation7 [shape = 'u8[512]{0}', space=vmem, size = 0x400, scoped, tag = 'input window, operand 8, single buffered']
    #allocation8 [shape = 's32[1]{0}', space=sflag, size = 0x4, scoped, tag = 'scoped memory for forward.7']
    #allocation9 [shape = 'u8[512]{0}', space=vmem, size = 0x400, scoped, tag = 'input window, operand 9, single buffered']
    #allocation10 [shape = 'u8[512]{0}', space=vmem, size = 0x400, scoped, tag = 'input window, operand 10, single buffered']
    #allocation11 [shape = 's32[1]{0}', space=sflag, size = 0x4, scoped, tag = 'scoped memory for forward.7']
    #allocation12 [shape = 'u8[1536]{0}', space=vmem, size = 0x800, scoped, tag = 'input window, operand 12, single buffered']
    #allocation13 [shape = 'u8[512]{0}', space=vmem, size = 0x400, scoped, tag = 'input window, operand 14, single buffered']
    #allocation14 [shape = 's32[1]{0}', space=sflag, size = 0x4, scoped, tag = 'scoped memory for forward.7']
    #allocation15 [shape = 'u8[512]{0}', space=vmem, size = 0x400, scoped, tag = 'input window, operand 15, single buffered']
    #allocation16 [shape = 'u8[512]{0}', space=vmem, size = 0x400, scoped, tag = 'input window, operand 16, single buffered']
    #allocation17 [shape = 's32[1]{0}', space=sflag, size = 0x4, scoped, tag = 'scoped memory for forward.7']
    #allocation18 [shape = 'u8[1024]{0}', space=vmem, size = 0x400, scoped, tag = 'input window, operand 18, single buffered']
    #allocation19 [shape = 'u8[4096]{0}', space=vmem, size = 0x1000, scoped, tag = 'input window, operand 19, single buffered']
    #allocation20 [shape = 's32[1]{0}', space=sflag, size = 0x4, scoped, tag = 'scoped memory for forward.7']
    #allocation21 [shape = 'u8[512]{0}', space=vmem, size = 0x400, scoped, tag = 'input window, operand 20, single buffered']
    #allocation22 [shape = 'u8[512]{0}', space=vmem, size = 0x400, scoped, tag = 'input window, operand 21, single buffered']
    #allocation23 [shape = 's32[1]{0}', space=sflag, size = 0x4, scoped, tag = 'scoped memory for forward.7']
    #allocation24 [shape = 'u8[512]{0}', space=vmem, size = 0x400, scoped, tag = 'input window, operand 22, single buffered']
    #allocation25 [shape = 'u8[32768]{0}', space=vmem, size = 0x8000, scoped, tag = 'input window, operand 23, single buffered']
    #allocation26 [shape = 's32[1]{0}', space=sflag, size = 0x4, scoped, tag = 'scoped memory for forward.7']
    #allocation27 [shape = 'u8[512]{0}', space=vmem, size = 0x400, scoped, tag = 'input window, operand 24, single buffered']
    #allocation28 [shape = 'u8[512]{0}', space=vmem, size = 0x400, scoped, tag = 'input window, operand 25, single buffered']
    #allocation29 [shape = 's32[1]{0}', space=sflag, size = 0x4, scoped, tag = 'scoped memory for forward.7']
    #allocation30 [shape = 'u8[512]{0}', space=vmem, size = 0x400, scoped, tag = 'input window, operand 26, single buffered']
    #allocation31 [shape = 'u8[1024]{0}', space=vmem, size = 0x400, scoped, tag = 'input window, operand 28, single buffered']
    #allocation32 [shape = 's32[1]{0}', space=sflag, size = 0x4, scoped, tag = 'scoped memory for forward.7']
    #allocation33 [shape = 'u8[65536]{0}', space=vmem, size = 0x10000, scoped, tag = 'input window, operand 29, single buffered']
    #allocation34 [shape = 'u8[512]{0}', space=vmem, size = 0x400, scoped, tag = 'input window, operand 30, single buffered']
    #allocation35 [shape = 's32[1]{0}', space=sflag, size = 0x4, scoped, tag = 'scoped memory for forward.7']
    #allocation36 [shape = 'u8[512]{0}', space=vmem, size = 0x400, scoped, tag = 'input window, operand 31, single buffered']
    #allocation37 [shape = 'u8[512]{0}', space=vmem, size = 0x400, scoped, tag = 'input window, operand 32, single buffered']
    #allocation38 [shape = 's32[1]{0}', space=sflag, size = 0x4, scoped, tag = 'scoped memory for forward.7']
    %72 = vsyncpa [#allocation3], 0
    %73 = vsyncpa [#allocation5], 0
    %74 = vsyncpa [#allocation8], 0
    %75 = vsyncpa [#allocation11], 0
    %76 = vsyncpa [#allocation14], 0
    %77 = vsyncpa [#allocation17], 0
    %78 = vsyncpa [#allocation20], 0
    %79 = vsyncpa [#allocation23], 0
    %80 = vsyncpa [#allocation26], 0
    %81 = vsyncpa [#allocation29], 0
    %82 = vsyncpa [#allocation32], 0
    %83 = vsyncpa [#allocation35], 0
    %84 = vsyncpa [#allocation38], 0
    loop: start=0, step=1, limit=4
    $region2: #{forward.7} parent=1 // loop_pre_header
      _
    $region3: #{forward.7} parent=1 // loop_header
      %s86 = sphi 0, %s90
      %p87 = scmp.ge.s32.totalorder %s86, 4
      %s96 = sphi 0, %s98
      %s99 = sphi 0, %s96
      %s100 = sphi 0, %s99
      %s116 = sphi 0, %s100
      %s122 = sphi 0, %s124
      %s125 = sphi 0, %s122
      %s126 = sphi 0, %s125
      %s142 = sphi 0, %s126
      %s148 = sphi 0, %s150
      %s151 = sphi 0, %s148
      %s152 = sphi 0, %s151
      %s168 = sphi 0, %s152
      %s172 = sphi 0, %s172
      %s174 = sphi 0, %s172
      %s175 = sphi 0, %s174
      %s189 = sphi 0, %s175
      %s193 = sphi 0, %s193
      %s195 = sphi 0, %s193
      %s196 = sphi 0, %s195
      %s210 = sphi 0, %s196
      %s214 = sphi 0, %s214
      %s216 = sphi 0, %s214
      %s217 = sphi 0, %s216
      %s231 = sphi 0, %s217
      %s235 = sphi 0, %s235
      %s237 = sphi 0, %s235
      %s238 = sphi 0, %s237
      %s252 = sphi 0, %s238
      %s256 = sphi 0, %s256
      %s258 = sphi 0, %s256
      %s259 = sphi 0, %s258
      %s273 = sphi 0, %s259
      %s277 = sphi 0, %s277
      %s279 = sphi 0, %s277
      %s280 = sphi 0, %s279
      %s294 = sphi 0, %s280
      %s298 = sphi 0, %s298
      %s300 = sphi 0, %s298
      %s301 = sphi 0, %s300
      %s315 = sphi 0, %s301
      %s319 = sphi 0, %s319
      %s321 = sphi 0, %s319
      %s322 = sphi 0, %s321
      %s336 = sphi 0, %s322
      %s340 = sphi 0, %s340
      %s342 = sphi 0, %s340
      %s343 = sphi 0, %s342
      %s357 = sphi 0, %s343
      %s361 = sphi 0, %s361
      %s363 = sphi 0, %s361
      %s364 = sphi 0, %s363
      %s378 = sphi 0, %s364
      %s382 = sphi 0, %s382
      %s384 = sphi 0, %s382
      %s385 = sphi 0, %s384
      %s399 = sphi 0, %s385
      %s403 = sphi 0, %s403
      %s405 = sphi 0, %s403
      %s406 = sphi 0, %s405
      %s420 = sphi 0, %s406
      %s424 = sphi 0, %s424
      %s426 = sphi 0, %s424
      %s427 = sphi 0, %s426
      %s441 = sphi 0, %s427
      %s445 = sphi 0, %s445
      %s447 = sphi 0, %s445
      %s448 = sphi 0, %s447
      %s462 = sphi 0, %s448
      %s466 = sphi 0, %s466
      %s468 = sphi 0, %s466
      %s469 = sphi 0, %s468
      %s483 = sphi 0, %s469
      %s487 = sphi 0, %s487
      %s489 = sphi 0, %s487
      %s490 = sphi 0, %s489
      %s504 = sphi 0, %s490
      %s508 = sphi 0, %s508
      %s510 = sphi 0, %s508
      %s511 = sphi 0, %s510
      %s525 = sphi 0, %s511
      %s529 = sphi 0, %s529
      %s531 = sphi 0, %s529
      %s532 = sphi 0, %s531
      %s546 = sphi 0, %s532
      %s550 = sphi 0, %s550
      %s552 = sphi 0, %s550
      %s553 = sphi 0, %s552
      %s567 = sphi 0, %s553
      %s571 = sphi 0, %s571
      %s573 = sphi 0, %s571
      %s574 = sphi 0, %s573
      %s588 = sphi 0, %s574
      %s592 = sphi 0, %s592
      %s594 = sphi 0, %s592
      %s595 = sphi 0, %s594
      %s609 = sphi 0, %s595
      %s613 = sphi 0, %s613
      %s615 = sphi 0, %s613
      %s616 = sphi 0, %s615
      %s630 = sphi 0, %s616
      %s634 = sphi 0, %s634
      %s636 = sphi 0, %s634
      %s637 = sphi 0, %s636
      %s651 = sphi 0, %s637
      %s655 = sphi 0, %s655
      %s657 = sphi 0, %s655
      %s658 = sphi 0, %s657
      %s672 = sphi 0, %s658
      %s676 = sphi 0, %s676
      %s678 = sphi 0, %s676
      %s679 = sphi 0, %s678
      %s693 = sphi 0, %s679
      %s697 = sphi 0, %s697
      %s699 = sphi 0, %s697
      %s700 = sphi 0, %s699
      %s714 = sphi 0, %s700
      %s718 = sphi 0, %s718
      %s720 = sphi 0, %s718
      %s721 = sphi 0, %s720
      %s735 = sphi 0, %s721
      %s739 = sphi 0, %s739
      %s741 = sphi 0, %s739
      %s742 = sphi 0, %s741
      %s756 = sphi 0, %s742
      %s760 = sphi 0, %s760
      %s762 = sphi 0, %s760
      %s763 = sphi 0, %s762
      %s777 = sphi 0, %s763
      %s781 = sphi 0, %s781
      %s783 = sphi 0, %s781
      %s784 = sphi 0, %s783
      %s798 = sphi 0, %s784
      %s804 = sphi 0, %s806
      %s807 = sphi 0, %s804
      %s808 = sphi 0, %s807
      %s824 = sphi 0, %s808
    $region4: #{forward.7} parent=1 // loop_header_branch
      %89 = sbr.rel (%p87) target = $region8
    $region5: #{forward.7} parent=1 // loop_body
      %s91 = ssub.s32 %s86, 1
      %s92 = ssub.s32 %s86, 2
      %s93 = sadd.s32 %s86, 1
      %s94 = ssub.s32 %s86, %s93
      %p95 = scmp.eq.s32.totalorder %s94, 0
      %s97 = sadd.s32 %s96, 1
      %s98 = scalar_select %p95, %s96, %s97
      %p101 = pneg %p95
      %p102 = scmp.eq.s32.totalorder %s86, 1
      %p103 = por %p101, %p102
      %p104 = scmp.ne.s32.totalorder %s96, %s99
      %p105 = scmp.eq.s32.totalorder %s86, 0
      %p106 = por %p104, %p105
      %p107 = scmp.ne.s32.totalorder %s96, %s99
      %p108 = scmp.eq.s32.totalorder %s91, 1
      %p109 = por %p107, %p108
      %p110 = scmp.ne.s32.totalorder %s99, %s100
      %p111 = scmp.eq.s32.totalorder %s91, 0
      %p112 = por %p110, %p111
      %p113 = scmp.ne.s32.totalorder %s99, %s100
      %p114 = scmp.eq.s32.totalorder %s92, 1
      %p115 = por %p113, %p114
      %p117 = scmp.ne.s32.totalorder %s100, %s116
      %p118 = scmp.eq.s32.totalorder %s92, 0
      %p119 = por %p117, %p118
      %s120 = ssub.s32 %s86, %s93
      %p121 = scmp.eq.s32.totalorder %s120, 0
      %s123 = sadd.s32 %s122, 1
      %s124 = scalar_select %p121, %s122, %s123
      %p127 = pneg %p121
      %p128 = scmp.eq.s32.totalorder %s86, 1
      %p129 = por %p127, %p128
      %p130 = scmp.ne.s32.totalorder %s122, %s125
      %p131 = scmp.eq.s32.totalorder %s86, 0
      %p132 = por %p130, %p131
      %p133 = scmp.ne.s32.totalorder %s122, %s125
      %p134 = scmp.eq.s32.totalorder %s91, 1
      %p135 = por %p133, %p134
      %p136 = scmp.ne.s32.totalorder %s125, %s126
      %p137 = scmp.eq.s32.totalorder %s91, 0
      %p138 = por %p136, %p137
      %p139 = scmp.ne.s32.totalorder %s125, %s126
      %p140 = scmp.eq.s32.totalorder %s92, 1
      %p141 = por %p139, %p140
      %p143 = scmp.ne.s32.totalorder %s126, %s142
      %p144 = scmp.eq.s32.totalorder %s92, 0
      %p145 = por %p143, %p144
      %s146 = ssub.s32 %s86, %s93
      %p147 = scmp.eq.s32.totalorder %s146, 0
      %s149 = sadd.s32 %s148, 1
      %s150 = scalar_select %p147, %s148, %s149
      %p153 = pneg %p147
      %p154 = scmp.eq.s32.totalorder %s86, 1
      %p155 = por %p153, %p154
      %p156 = scmp.ne.s32.totalorder %s148, %s151
      %p157 = scmp.eq.s32.totalorder %s86, 0
      %p158 = por %p156, %p157
      %p159 = scmp.ne.s32.totalorder %s148, %s151
      %p160 = scmp.eq.s32.totalorder %s91, 1
      %p161 = por %p159, %p160
      %p162 = scmp.ne.s32.totalorder %s151, %s152
      %p163 = scmp.eq.s32.totalorder %s91, 0
      %p164 = por %p162, %p163
      %p165 = scmp.ne.s32.totalorder %s151, %s152
      %p166 = scmp.eq.s32.totalorder %s92, 1
      %p167 = por %p165, %p166
      %p169 = scmp.ne.s32.totalorder %s152, %s168
      %p170 = scmp.eq.s32.totalorder %s92, 0
      %p171 = por %p169, %p170
      %s173 = sadd.s32 %s172, 1
      %p176 = scmp.eq.s32.totalorder %s86, 1
      %p177 = scmp.ne.s32.totalorder %s172, %s174
      %p178 = scmp.eq.s32.totalorder %s86, 0
      %p179 = por %p177, %p178
      %p180 = scmp.ne.s32.totalorder %s172, %s174
      %p181 = scmp.eq.s32.totalorder %s91, 1
      %p182 = por %p180, %p181
      %p183 = scmp.ne.s32.totalorder %s174, %s175
      %p184 = scmp.eq.s32.totalorder %s91, 0
      %p185 = por %p183, %p184
      %p186 = scmp.ne.s32.totalorder %s174, %s175
      %p187 = scmp.eq.s32.totalorder %s92, 1
      %p188 = por %p186, %p187
      %p190 = scmp.ne.s32.totalorder %s175, %s189
      %p191 = scmp.eq.s32.totalorder %s92, 0
      %p192 = por %p190, %p191
      %s194 = sadd.s32 %s193, 1
      %p197 = scmp.eq.s32.totalorder %s86, 1
      %p198 = scmp.ne.s32.totalorder %s193, %s195
      %p199 = scmp.eq.s32.totalorder %s86, 0
      %p200 = por %p198, %p199
      %p201 = scmp.ne.s32.totalorder %s193, %s195
      %p202 = scmp.eq.s32.totalorder %s91, 1
      %p203 = por %p201, %p202
      %p204 = scmp.ne.s32.totalorder %s195, %s196
      %p205 = scmp.eq.s32.totalorder %s91, 0
      %p206 = por %p204, %p205
      %p207 = scmp.ne.s32.totalorder %s195, %s196
      %p208 = scmp.eq.s32.totalorder %s92, 1
      %p209 = por %p207, %p208
      %p211 = scmp.ne.s32.totalorder %s196, %s210
      %p212 = scmp.eq.s32.totalorder %s92, 0
      %p213 = por %p211, %p212
      %s215 = sadd.s32 %s214, 1
      %p218 = scmp.eq.s32.totalorder %s86, 1
      %p219 = scmp.ne.s32.totalorder %s214, %s216
      %p220 = scmp.eq.s32.totalorder %s86, 0
      %p221 = por %p219, %p220
      %p222 = scmp.ne.s32.totalorder %s214, %s216
      %p223 = scmp.eq.s32.totalorder %s91, 1
      %p224 = por %p222, %p223
      %p225 = scmp.ne.s32.totalorder %s216, %s217
      %p226 = scmp.eq.s32.totalorder %s91, 0
      %p227 = por %p225, %p226
      %p228 = scmp.ne.s32.totalorder %s216, %s217
      %p229 = scmp.eq.s32.totalorder %s92, 1
      %p230 = por %p228, %p229
      %p232 = scmp.ne.s32.totalorder %s217, %s231
      %p233 = scmp.eq.s32.totalorder %s92, 0
      %p234 = por %p232, %p233
      %s236 = sadd.s32 %s235, 1
      %p239 = scmp.eq.s32.totalorder %s86, 1
      %p240 = scmp.ne.s32.totalorder %s235, %s237
      %p241 = scmp.eq.s32.totalorder %s86, 0
      %p242 = por %p240, %p241
      %p243 = scmp.ne.s32.totalorder %s235, %s237
      %p244 = scmp.eq.s32.totalorder %s91, 1
      %p245 = por %p243, %p244
      %p246 = scmp.ne.s32.totalorder %s237, %s238
      %p247 = scmp.eq.s32.totalorder %s91, 0
      %p248 = por %p246, %p247
      %p249 = scmp.ne.s32.totalorder %s237, %s238
      %p250 = scmp.eq.s32.totalorder %s92, 1
      %p251 = por %p249, %p250
      %p253 = scmp.ne.s32.totalorder %s238, %s252
      %p254 = scmp.eq.s32.totalorder %s92, 0
      %p255 = por %p253, %p254
      %s257 = sadd.s32 %s256, 1
      %p260 = scmp.eq.s32.totalorder %s86, 1
      %p261 = scmp.ne.s32.totalorder %s256, %s258
      %p262 = scmp.eq.s32.totalorder %s86, 0
      %p263 = por %p261, %p262
      %p264 = scmp.ne.s32.totalorder %s256, %s258
      %p265 = scmp.eq.s32.totalorder %s91, 1
      %p266 = por %p264, %p265
      %p267 = scmp.ne.s32.totalorder %s258, %s259
      %p268 = scmp.eq.s32.totalorder %s91, 0
      %p269 = por %p267, %p268
      %p270 = scmp.ne.s32.totalorder %s258, %s259
      %p271 = scmp.eq.s32.totalorder %s92, 1
      %p272 = por %p270, %p271
      %p274 = scmp.ne.s32.totalorder %s259, %s273
      %p275 = scmp.eq.s32.totalorder %s92, 0
      %p276 = por %p274, %p275
      %s278 = sadd.s32 %s277, 1
      %p281 = scmp.eq.s32.totalorder %s86, 1
      %p282 = scmp.ne.s32.totalorder %s277, %s279
      %p283 = scmp.eq.s32.totalorder %s86, 0
      %p284 = por %p282, %p283
      %p285 = scmp.ne.s32.totalorder %s277, %s279
      %p286 = scmp.eq.s32.totalorder %s91, 1
      %p287 = por %p285, %p286
      %p288 = scmp.ne.s32.totalorder %s279, %s280
      %p289 = scmp.eq.s32.totalorder %s91, 0
      %p290 = por %p288, %p289
      %p291 = scmp.ne.s32.totalorder %s279, %s280
      %p292 = scmp.eq.s32.totalorder %s92, 1
      %p293 = por %p291, %p292
      %p295 = scmp.ne.s32.totalorder %s280, %s294
      %p296 = scmp.eq.s32.totalorder %s92, 0
      %p297 = por %p295, %p296
      %s299 = sadd.s32 %s298, 1
      %p302 = scmp.eq.s32.totalorder %s86, 1
      %p303 = scmp.ne.s32.totalorder %s298, %s300
      %p304 = scmp.eq.s32.totalorder %s86, 0
      %p305 = por %p303, %p304
      %p306 = scmp.ne.s32.totalorder %s298, %s300
      %p307 = scmp.eq.s32.totalorder %s91, 1
      %p308 = por %p306, %p307
      %p309 = scmp.ne.s32.totalorder %s300, %s301
      %p310 = scmp.eq.s32.totalorder %s91, 0
      %p311 = por %p309, %p310
      %p312 = scmp.ne.s32.totalorder %s300, %s301
      %p313 = scmp.eq.s32.totalorder %s92, 1
      %p314 = por %p312, %p313
      %p316 = scmp.ne.s32.totalorder %s301, %s315
      %p317 = scmp.eq.s32.totalorder %s92, 0
      %p318 = por %p316, %p317
      %s320 = sadd.s32 %s319, 1
      %p323 = scmp.eq.s32.totalorder %s86, 1
      %p324 = scmp.ne.s32.totalorder %s319, %s321
      %p325 = scmp.eq.s32.totalorder %s86, 0
      %p326 = por %p324, %p325
      %p327 = scmp.ne.s32.totalorder %s319, %s321
      %p328 = scmp.eq.s32.totalorder %s91, 1
      %p329 = por %p327, %p328
      %p330 = scmp.ne.s32.totalorder %s321, %s322
      %p331 = scmp.eq.s32.totalorder %s91, 0
      %p332 = por %p330, %p331
      %p333 = scmp.ne.s32.totalorder %s321, %s322
      %p334 = scmp.eq.s32.totalorder %s92, 1
      %p335 = por %p333, %p334
      %p337 = scmp.ne.s32.totalorder %s322, %s336
      %p338 = scmp.eq.s32.totalorder %s92, 0
      %p339 = por %p337, %p338
      %s341 = sadd.s32 %s340, 1
      %p344 = scmp.eq.s32.totalorder %s86, 1
      %p345 = scmp.ne.s32.totalorder %s340, %s342
      %p346 = scmp.eq.s32.totalorder %s86, 0
      %p347 = por %p345, %p346
      %p348 = scmp.ne.s32.totalorder %s340, %s342
      %p349 = scmp.eq.s32.totalorder %s91, 1
      %p350 = por %p348, %p349
      %p351 = scmp.ne.s32.totalorder %s342, %s343
      %p352 = scmp.eq.s32.totalorder %s91, 0
      %p353 = por %p351, %p352
      %p354 = scmp.ne.s32.totalorder %s342, %s343
      %p355 = scmp.eq.s32.totalorder %s92, 1
      %p356 = por %p354, %p355
      %p358 = scmp.ne.s32.totalorder %s343, %s357
      %p359 = scmp.eq.s32.totalorder %s92, 0
      %p360 = por %p358, %p359
      %s362 = sadd.s32 %s361, 1
      %p365 = scmp.eq.s32.totalorder %s86, 1
      %p366 = scmp.ne.s32.totalorder %s361, %s363
      %p367 = scmp.eq.s32.totalorder %s86, 0
      %p368 = por %p366, %p367
      %p369 = scmp.ne.s32.totalorder %s361, %s363
      %p370 = scmp.eq.s32.totalorder %s91, 1
      %p371 = por %p369, %p370
      %p372 = scmp.ne.s32.totalorder %s363, %s364
      %p373 = scmp.eq.s32.totalorder %s91, 0
      %p374 = por %p372, %p373
      %p375 = scmp.ne.s32.totalorder %s363, %s364
      %p376 = scmp.eq.s32.totalorder %s92, 1
      %p377 = por %p375, %p376
      %p379 = scmp.ne.s32.totalorder %s364, %s378
      %p380 = scmp.eq.s32.totalorder %s92, 0
      %p381 = por %p379, %p380
      %s383 = sadd.s32 %s382, 1
      %p386 = scmp.eq.s32.totalorder %s86, 1
      %p387 = scmp.ne.s32.totalorder %s382, %s384
      %p388 = scmp.eq.s32.totalorder %s86, 0
      %p389 = por %p387, %p388
      %p390 = scmp.ne.s32.totalorder %s382, %s384
      %p391 = scmp.eq.s32.totalorder %s91, 1
      %p392 = por %p390, %p391
      %p393 = scmp.ne.s32.totalorder %s384, %s385
      %p394 = scmp.eq.s32.totalorder %s91, 0
      %p395 = por %p393, %p394
      %p396 = scmp.ne.s32.totalorder %s384, %s385
      %p397 = scmp.eq.s32.totalorder %s92, 1
      %p398 = por %p396, %p397
      %p400 = scmp.ne.s32.totalorder %s385, %s399
      %p401 = scmp.eq.s32.totalorder %s92, 0
      %p402 = por %p400, %p401
      %s404 = sadd.s32 %s403, 1
      %p407 = scmp.eq.s32.totalorder %s86, 1
      %p408 = scmp.ne.s32.totalorder %s403, %s405
      %p409 = scmp.eq.s32.totalorder %s86, 0
      %p410 = por %p408, %p409
      %p411 = scmp.ne.s32.totalorder %s403, %s405
      %p412 = scmp.eq.s32.totalorder %s91, 1
      %p413 = por %p411, %p412
      %p414 = scmp.ne.s32.totalorder %s405, %s406
      %p415 = scmp.eq.s32.totalorder %s91, 0
      %p416 = por %p414, %p415
      %p417 = scmp.ne.s32.totalorder %s405, %s406
      %p418 = scmp.eq.s32.totalorder %s92, 1
      %p419 = por %p417, %p418
      %p421 = scmp.ne.s32.totalorder %s406, %s420
      %p422 = scmp.eq.s32.totalorder %s92, 0
      %p423 = por %p421, %p422
      %s425 = sadd.s32 %s424, 1
      %p428 = scmp.eq.s32.totalorder %s86, 1
      %p429 = scmp.ne.s32.totalorder %s424, %s426
      %p430 = scmp.eq.s32.totalorder %s86, 0
      %p431 = por %p429, %p430
      %p432 = scmp.ne.s32.totalorder %s424, %s426
      %p433 = scmp.eq.s32.totalorder %s91, 1
      %p434 = por %p432, %p433
      %p435 = scmp.ne.s32.totalorder %s426, %s427
      %p436 = scmp.eq.s32.totalorder %s91, 0
      %p437 = por %p435, %p436
      %p438 = scmp.ne.s32.totalorder %s426, %s427
      %p439 = scmp.eq.s32.totalorder %s92, 1
      %p440 = por %p438, %p439
      %p442 = scmp.ne.s32.totalorder %s427, %s441
      %p443 = scmp.eq.s32.totalorder %s92, 0
      %p444 = por %p442, %p443
      %s446 = sadd.s32 %s445, 1
      %p449 = scmp.eq.s32.totalorder %s86, 1
      %p450 = scmp.ne.s32.totalorder %s445, %s447
      %p451 = scmp.eq.s32.totalorder %s86, 0
      %p452 = por %p450, %p451
      %p453 = scmp.ne.s32.totalorder %s445, %s447
      %p454 = scmp.eq.s32.totalorder %s91, 1
      %p455 = por %p453, %p454
      %p456 = scmp.ne.s32.totalorder %s447, %s448
      %p457 = scmp.eq.s32.totalorder %s91, 0
      %p458 = por %p456, %p457
      %p459 = scmp.ne.s32.totalorder %s447, %s448
      %p460 = scmp.eq.s32.totalorder %s92, 1
      %p461 = por %p459, %p460
      %p463 = scmp.ne.s32.totalorder %s448, %s462
      %p464 = scmp.eq.s32.totalorder %s92, 0
      %p465 = por %p463, %p464
      %s467 = sadd.s32 %s466, 1
      %p470 = scmp.eq.s32.totalorder %s86, 1
      %p471 = scmp.ne.s32.totalorder %s466, %s468
      %p472 = scmp.eq.s32.totalorder %s86, 0
      %p473 = por %p471, %p472
      %p474 = scmp.ne.s32.totalorder %s466, %s468
      %p475 = scmp.eq.s32.totalorder %s91, 1
      %p476 = por %p474, %p475
      %p477 = scmp.ne.s32.totalorder %s468, %s469
      %p478 = scmp.eq.s32.totalorder %s91, 0
      %p479 = por %p477, %p478
      %p480 = scmp.ne.s32.totalorder %s468, %s469
      %p481 = scmp.eq.s32.totalorder %s92, 1
      %p482 = por %p480, %p481
      %p484 = scmp.ne.s32.totalorder %s469, %s483
      %p485 = scmp.eq.s32.totalorder %s92, 0
      %p486 = por %p484, %p485
      %s488 = sadd.s32 %s487, 1
      %p491 = scmp.eq.s32.totalorder %s86, 1
      %p492 = scmp.ne.s32.totalorder %s487, %s489
      %p493 = scmp.eq.s32.totalorder %s86, 0
      %p494 = por %p492, %p493
      %p495 = scmp.ne.s32.totalorder %s487, %s489
      %p496 = scmp.eq.s32.totalorder %s91, 1
      %p497 = por %p495, %p496
      %p498 = scmp.ne.s32.totalorder %s489, %s490
      %p499 = scmp.eq.s32.totalorder %s91, 0
      %p500 = por %p498, %p499
      %p501 = scmp.ne.s32.totalorder %s489, %s490
      %p502 = scmp.eq.s32.totalorder %s92, 1
      %p503 = por %p501, %p502
      %p505 = scmp.ne.s32.totalorder %s490, %s504
      %p506 = scmp.eq.s32.totalorder %s92, 0
      %p507 = por %p505, %p506
      %s509 = sadd.s32 %s508, 1
      %p512 = scmp.eq.s32.totalorder %s86, 1
      %p513 = scmp.ne.s32.totalorder %s508, %s510
      %p514 = scmp.eq.s32.totalorder %s86, 0
      %p515 = por %p513, %p514
      %p516 = scmp.ne.s32.totalorder %s508, %s510
      %p517 = scmp.eq.s32.totalorder %s91, 1
      %p518 = por %p516, %p517
      %p519 = scmp.ne.s32.totalorder %s510, %s511
      %p520 = scmp.eq.s32.totalorder %s91, 0
      %p521 = por %p519, %p520
      %p522 = scmp.ne.s32.totalorder %s510, %s511
      %p523 = scmp.eq.s32.totalorder %s92, 1
      %p524 = por %p522, %p523
      %p526 = scmp.ne.s32.totalorder %s511, %s525
      %p527 = scmp.eq.s32.totalorder %s92, 0
      %p528 = por %p526, %p527
      %s530 = sadd.s32 %s529, 1
      %p533 = scmp.eq.s32.totalorder %s86, 1
      %p534 = scmp.ne.s32.totalorder %s529, %s531
      %p535 = scmp.eq.s32.totalorder %s86, 0
      %p536 = por %p534, %p535
      %p537 = scmp.ne.s32.totalorder %s529, %s531
      %p538 = scmp.eq.s32.totalorder %s91, 1
      %p539 = por %p537, %p538
      %p540 = scmp.ne.s32.totalorder %s531, %s532
      %p541 = scmp.eq.s32.totalorder %s91, 0
      %p542 = por %p540, %p541
      %p543 = scmp.ne.s32.totalorder %s531, %s532
      %p544 = scmp.eq.s32.totalorder %s92, 1
      %p545 = por %p543, %p544
      %p547 = scmp.ne.s32.totalorder %s532, %s546
      %p548 = scmp.eq.s32.totalorder %s92, 0
      %p549 = por %p547, %p548
      %s551 = sadd.s32 %s550, 1
      %p554 = scmp.eq.s32.totalorder %s86, 1
      %p555 = scmp.ne.s32.totalorder %s550, %s552
      %p556 = scmp.eq.s32.totalorder %s86, 0
      %p557 = por %p555, %p556
      %p558 = scmp.ne.s32.totalorder %s550, %s552
      %p559 = scmp.eq.s32.totalorder %s91, 1
      %p560 = por %p558, %p559
      %p561 = scmp.ne.s32.totalorder %s552, %s553
      %p562 = scmp.eq.s32.totalorder %s91, 0
      %p563 = por %p561, %p562
      %p564 = scmp.ne.s32.totalorder %s552, %s553
      %p565 = scmp.eq.s32.totalorder %s92, 1
      %p566 = por %p564, %p565
      %p568 = scmp.ne.s32.totalorder %s553, %s567
      %p569 = scmp.eq.s32.totalorder %s92, 0
      %p570 = por %p568, %p569
      %s572 = sadd.s32 %s571, 1
      %p575 = scmp.eq.s32.totalorder %s86, 1
      %p576 = scmp.ne.s32.totalorder %s571, %s573
      %p577 = scmp.eq.s32.totalorder %s86, 0
      %p578 = por %p576, %p577
      %p579 = scmp.ne.s32.totalorder %s571, %s573
      %p580 = scmp.eq.s32.totalorder %s91, 1
      %p581 = por %p579, %p580
      %p582 = scmp.ne.s32.totalorder %s573, %s574
      %p583 = scmp.eq.s32.totalorder %s91, 0
      %p584 = por %p582, %p583
      %p585 = scmp.ne.s32.totalorder %s573, %s574
      %p586 = scmp.eq.s32.totalorder %s92, 1
      %p587 = por %p585, %p586
      %p589 = scmp.ne.s32.totalorder %s574, %s588
      %p590 = scmp.eq.s32.totalorder %s92, 0
      %p591 = por %p589, %p590
      %s593 = sadd.s32 %s592, 1
      %p596 = scmp.eq.s32.totalorder %s86, 1
      %p597 = scmp.ne.s32.totalorder %s592, %s594
      %p598 = scmp.eq.s32.totalorder %s86, 0
      %p599 = por %p597, %p598
      %p600 = scmp.ne.s32.totalorder %s592, %s594
      %p601 = scmp.eq.s32.totalorder %s91, 1
      %p602 = por %p600, %p601
      %p603 = scmp.ne.s32.totalorder %s594, %s595
      %p604 = scmp.eq.s32.totalorder %s91, 0
      %p605 = por %p603, %p604
      %p606 = scmp.ne.s32.totalorder %s594, %s595
      %p607 = scmp.eq.s32.totalorder %s92, 1
      %p608 = por %p606, %p607
      %p610 = scmp.ne.s32.totalorder %s595, %s609
      %p611 = scmp.eq.s32.totalorder %s92, 0
      %p612 = por %p610, %p611
      %s614 = sadd.s32 %s613, 1
      %p617 = scmp.eq.s32.totalorder %s86, 1
      %p618 = scmp.ne.s32.totalorder %s613, %s615
      %p619 = scmp.eq.s32.totalorder %s86, 0
      %p620 = por %p618, %p619
      %p621 = scmp.ne.s32.totalorder %s613, %s615
      %p622 = scmp.eq.s32.totalorder %s91, 1
      %p623 = por %p621, %p622
      %p624 = scmp.ne.s32.totalorder %s615, %s616
      %p625 = scmp.eq.s32.totalorder %s91, 0
      %p626 = por %p624, %p625
      %p627 = scmp.ne.s32.totalorder %s615, %s616
      %p628 = scmp.eq.s32.totalorder %s92, 1
      %p629 = por %p627, %p628
      %p631 = scmp.ne.s32.totalorder %s616, %s630
      %p632 = scmp.eq.s32.totalorder %s92, 0
      %p633 = por %p631, %p632
      %s635 = sadd.s32 %s634, 1
      %p638 = scmp.eq.s32.totalorder %s86, 1
      %p639 = scmp.ne.s32.totalorder %s634, %s636
      %p640 = scmp.eq.s32.totalorder %s86, 0
      %p641 = por %p639, %p640
      %p642 = scmp.ne.s32.totalorder %s634, %s636
      %p643 = scmp.eq.s32.totalorder %s91, 1
      %p644 = por %p642, %p643
      %p645 = scmp.ne.s32.totalorder %s636, %s637
      %p646 = scmp.eq.s32.totalorder %s91, 0
      %p647 = por %p645, %p646
      %p648 = scmp.ne.s32.totalorder %s636, %s637
      %p649 = scmp.eq.s32.totalorder %s92, 1
      %p650 = por %p648, %p649
      %p652 = scmp.ne.s32.totalorder %s637, %s651
      %p653 = scmp.eq.s32.totalorder %s92, 0
      %p654 = por %p652, %p653
      %s656 = sadd.s32 %s655, 1
      %p659 = scmp.eq.s32.totalorder %s86, 1
      %p660 = scmp.ne.s32.totalorder %s655, %s657
      %p661 = scmp.eq.s32.totalorder %s86, 0
      %p662 = por %p660, %p661
      %p663 = scmp.ne.s32.totalorder %s655, %s657
      %p664 = scmp.eq.s32.totalorder %s91, 1
      %p665 = por %p663, %p664
      %p666 = scmp.ne.s32.totalorder %s657, %s658
      %p667 = scmp.eq.s32.totalorder %s91, 0
      %p668 = por %p666, %p667
      %p669 = scmp.ne.s32.totalorder %s657, %s658
      %p670 = scmp.eq.s32.totalorder %s92, 1
      %p671 = por %p669, %p670
      %p673 = scmp.ne.s32.totalorder %s658, %s672
      %p674 = scmp.eq.s32.totalorder %s92, 0
      %p675 = por %p673, %p674
      %s677 = sadd.s32 %s676, 1
      %p680 = scmp.eq.s32.totalorder %s86, 1
      %p681 = scmp.ne.s32.totalorder %s676, %s678
      %p682 = scmp.eq.s32.totalorder %s86, 0
      %p683 = por %p681, %p682
      %p684 = scmp.ne.s32.totalorder %s676, %s678
      %p685 = scmp.eq.s32.totalorder %s91, 1
      %p686 = por %p684, %p685
      %p687 = scmp.ne.s32.totalorder %s678, %s679
      %p688 = scmp.eq.s32.totalorder %s91, 0
      %p689 = por %p687, %p688
      %p690 = scmp.ne.s32.totalorder %s678, %s679
      %p691 = scmp.eq.s32.totalorder %s92, 1
      %p692 = por %p690, %p691
      %p694 = scmp.ne.s32.totalorder %s679, %s693
      %p695 = scmp.eq.s32.totalorder %s92, 0
      %p696 = por %p694, %p695
      %s698 = sadd.s32 %s697, 1
      %p701 = scmp.eq.s32.totalorder %s86, 1
      %p702 = scmp.ne.s32.totalorder %s697, %s699
      %p703 = scmp.eq.s32.totalorder %s86, 0
      %p704 = por %p702, %p703
      %p705 = scmp.ne.s32.totalorder %s697, %s699
      %p706 = scmp.eq.s32.totalorder %s91, 1
      %p707 = por %p705, %p706
      %p708 = scmp.ne.s32.totalorder %s699, %s700
      %p709 = scmp.eq.s32.totalorder %s91, 0
      %p710 = por %p708, %p709
      %p711 = scmp.ne.s32.totalorder %s699, %s700
      %p712 = scmp.eq.s32.totalorder %s92, 1
      %p713 = por %p711, %p712
      %p715 = scmp.ne.s32.totalorder %s700, %s714
      %p716 = scmp.eq.s32.totalorder %s92, 0
      %p717 = por %p715, %p716
      %s719 = sadd.s32 %s718, 1
      %p722 = scmp.eq.s32.totalorder %s86, 1
      %p723 = scmp.ne.s32.totalorder %s718, %s720
      %p724 = scmp.eq.s32.totalorder %s86, 0
      %p725 = por %p723, %p724
      %p726 = scmp.ne.s32.totalorder %s718, %s720
      %p727 = scmp.eq.s32.totalorder %s91, 1
      %p728 = por %p726, %p727
      %p729 = scmp.ne.s32.totalorder %s720, %s721
      %p730 = scmp.eq.s32.totalorder %s91, 0
      %p731 = por %p729, %p730
      %p732 = scmp.ne.s32.totalorder %s720, %s721
      %p733 = scmp.eq.s32.totalorder %s92, 1
      %p734 = por %p732, %p733
      %p736 = scmp.ne.s32.totalorder %s721, %s735
      %p737 = scmp.eq.s32.totalorder %s92, 0
      %p738 = por %p736, %p737
      %s740 = sadd.s32 %s739, 1
      %p743 = scmp.eq.s32.totalorder %s86, 1
      %p744 = scmp.ne.s32.totalorder %s739, %s741
      %p745 = scmp.eq.s32.totalorder %s86, 0
      %p746 = por %p744, %p745
      %p747 = scmp.ne.s32.totalorder %s739, %s741
      %p748 = scmp.eq.s32.totalorder %s91, 1
      %p749 = por %p747, %p748
      %p750 = scmp.ne.s32.totalorder %s741, %s742
      %p751 = scmp.eq.s32.totalorder %s91, 0
      %p752 = por %p750, %p751
      %p753 = scmp.ne.s32.totalorder %s741, %s742
      %p754 = scmp.eq.s32.totalorder %s92, 1
      %p755 = por %p753, %p754
      %p757 = scmp.ne.s32.totalorder %s742, %s756
      %p758 = scmp.eq.s32.totalorder %s92, 0
      %p759 = por %p757, %p758
      %s761 = sadd.s32 %s760, 1
      %p764 = scmp.eq.s32.totalorder %s86, 1
      %p765 = scmp.ne.s32.totalorder %s760, %s762
      %p766 = scmp.eq.s32.totalorder %s86, 0
      %p767 = por %p765, %p766
      %p768 = scmp.ne.s32.totalorder %s760, %s762
      %p769 = scmp.eq.s32.totalorder %s91, 1
      %p770 = por %p768, %p769
      %p771 = scmp.ne.s32.totalorder %s762, %s763
      %p772 = scmp.eq.s32.totalorder %s91, 0
      %p773 = por %p771, %p772
      %p774 = scmp.ne.s32.totalorder %s762, %s763
      %p775 = scmp.eq.s32.totalorder %s92, 1
      %p776 = por %p774, %p775
      %p778 = scmp.ne.s32.totalorder %s763, %s777
      %p779 = scmp.eq.s32.totalorder %s92, 0
      %p780 = por %p778, %p779
      %s782 = sadd.s32 %s781, 1
      %p785 = scmp.eq.s32.totalorder %s86, 1
      %p786 = scmp.ne.s32.totalorder %s781, %s783
      %p787 = scmp.eq.s32.totalorder %s86, 0
      %p788 = por %p786, %p787
      %p789 = scmp.ne.s32.totalorder %s781, %s783
      %p790 = scmp.eq.s32.totalorder %s91, 1
      %p791 = por %p789, %p790
      %p792 = scmp.ne.s32.totalorder %s783, %s784
      %p793 = scmp.eq.s32.totalorder %s91, 0
      %p794 = por %p792, %p793
      %p795 = scmp.ne.s32.totalorder %s783, %s784
      %p796 = scmp.eq.s32.totalorder %s92, 1
      %p797 = por %p795, %p796
      %p799 = scmp.ne.s32.totalorder %s784, %s798
      %p800 = scmp.eq.s32.totalorder %s92, 0
      %p801 = por %p799, %p800
      %s802 = ssub.s32 %s86, %s93
      %p803 = scmp.eq.s32.totalorder %s802, 0
      %s805 = sadd.s32 %s804, 1
      %s806 = scalar_select %p803, %s804, %s805
      %p809 = pneg %p803
      %p810 = scmp.eq.s32.totalorder %s86, 1
      %p811 = por %p809, %p810
      %p812 = scmp.ne.s32.totalorder %s804, %s807
      %p813 = scmp.eq.s32.totalorder %s86, 0
      %p814 = por %p812, %p813
      %p815 = scmp.ne.s32.totalorder %s804, %s807
      %p816 = scmp.eq.s32.totalorder %s91, 1
      %p817 = por %p815, %p816
      %p818 = scmp.ne.s32.totalorder %s807, %s808
      %p819 = scmp.eq.s32.totalorder %s91, 0
      %p820 = por %p818, %p819
      %p821 = scmp.ne.s32.totalorder %s807, %s808
      %p822 = scmp.eq.s32.totalorder %s92, 1
      %p823 = por %p821, %p822
      %p825 = scmp.ne.s32.totalorder %s808, %s824
      %p826 = scmp.eq.s32.totalorder %s92, 0
      %p827 = por %p825, %p826
      %p828 = scmp.le.s32.totalorder 1, %s86
      %p829 = scmp.lt.s32.totalorder %s86, 3
      %p830 = pnand %p828, %p829
      %p831 = pneg %p830
      // Predicated region
      $region9: #{forward.7} parent=5 // pred_check
        _
      $region10: #{forward.7} parent=5 // pred_check_branch
        %833 = sbr.rel (%p830) target = $region12
      $region11: #{forward.7} parent=5 // pred_region
        %s834 = ssub.s32 %s86, 1
        // Predicated region
        $region13: #{forward.7} parent=11 // pred_check
          %p835 = pneg %p185
        $region14: #{forward.7} parent=11 // pred_check_branch
          %837 = sbr.rel (%p835) target = $region16
        $region15: #{forward.7} parent=11 // pred_region
          %s839 = ssub.s32 16, 16
          %840 = vsyncadd [#allocation3], %s839
          %s842 = sshll.u32 [#allocation2], 4
          %s843 = int_to_ptr.vmem [resolvable:$true] %s842
          %845 = dma.hbm_to_vmem [thread:$0]  %s7, 16, %s843, [#allocation3]
        $region16: #{forward.7} parent=11 // pred_fallthru
          _
        // Predicated region
        $region17: #{forward.7} parent=11 // pred_check
          %p846 = pneg %p206
        $region18: #{forward.7} parent=11 // pred_check_branch
          %848 = sbr.rel (%p846) target = $region20
        $region19: #{forward.7} parent=11 // pred_region
          %s850 = ssub.s32 16, 16
          %851 = vsyncadd [#allocation5], %s850
          %s853 = sshll.u32 [#allocation4], 4
          %s854 = int_to_ptr.vmem [resolvable:$true] %s853
          %856 = dma.hbm_to_vmem [thread:$0]  %s9, 16, %s854, [#allocation5]
        $region20: #{forward.7} parent=11 // pred_fallthru
          _
        // Predicated region
        $region21: #{forward.7} parent=11 // pred_check
          %p857 = pneg %p227
        $region22: #{forward.7} parent=11 // pred_check_branch
          %859 = sbr.rel (%p857) target = $region24
        $region23: #{forward.7} parent=11 // pred_region
          _
        $region24: #{forward.7} parent=11 // pred_fallthru
          _
        // Predicated region
        $region25: #{forward.7} parent=11 // pred_check
          %p860 = pneg %p248
        $region26: #{forward.7} parent=11 // pred_check_branch
          %862 = sbr.rel (%p860) target = $region28
        $region27: #{forward.7} parent=11 // pred_region
          %s864 = ssub.s32 32, 32
          %865 = vsyncadd [#allocation5], %s864
          %s867 = sshll.u32 [#allocation6], 4
          %s868 = int_to_ptr.vmem [resolvable:$true] %s867
          %870 = dma.hbm_to_vmem [thread:$0]  %s13, 32, %s868, [#allocation5]
        $region28: #{forward.7} parent=11 // pred_fallthru
          _
        // Predicated region
        $region29: #{forward.7} parent=11 // pred_check
          %p871 = pneg %p269
        $region30: #{forward.7} parent=11 // pred_check_branch
          %873 = sbr.rel (%p871) target = $region32
        $region31: #{forward.7} parent=11 // pred_region
          _
        $region32: #{forward.7} parent=11 // pred_fallthru
          _
        // Predicated region
        $region33: #{forward.7} parent=11 // pred_check
          %p874 = pneg %p290
        $region34: #{forward.7} parent=11 // pred_check_branch
          %876 = sbr.rel (%p874) target = $region36
        $region35: #{forward.7} parent=11 // pred_region
          %s878 = ssub.s32 16, 16
          %879 = vsyncadd [#allocation8], %s878
          %s881 = sshll.u32 [#allocation7], 4
          %s882 = int_to_ptr.vmem [resolvable:$true] %s881
          %884 = dma.hbm_to_vmem [thread:$0]  %s17, 16, %s882, [#allocation8]
        $region36: #{forward.7} parent=11 // pred_fallthru
          _
        // Predicated region
        $region37: #{forward.7} parent=11 // pred_check
          %p885 = pneg %p311
        $region38: #{forward.7} parent=11 // pred_check_branch
          %887 = sbr.rel (%p885) target = $region40
        $region39: #{forward.7} parent=11 // pred_region
          %s889 = ssub.s32 16, 16
          %890 = vsyncadd [#allocation8], %s889
          %s892 = sshll.u32 [#allocation9], 4
          %s893 = int_to_ptr.vmem [resolvable:$true] %s892
          %895 = dma.hbm_to_vmem [thread:$0]  %s19, 16, %s893, [#allocation8]
        $region40: #{forward.7} parent=11 // pred_fallthru
          _
        // Predicated region
        $region41: #{forward.7} parent=11 // pred_check
          %p896 = pneg %p332
        $region42: #{forward.7} parent=11 // pred_check_branch
          %898 = sbr.rel (%p896) target = $region44
        $region43: #{forward.7} parent=11 // pred_region
          %s900 = ssub.s32 16, 16
          %901 = vsyncadd [#allocation11], %s900
          %s903 = sshll.u32 [#allocation10], 4
          %s904 = int_to_ptr.vmem [resolvable:$true] %s903
          %906 = dma.hbm_to_vmem [thread:$0]  %s21, 16, %s904, [#allocation11]
        $region44: #{forward.7} parent=11 // pred_fallthru
          _
        // Predicated region
        $region45: #{forward.7} parent=11 // pred_check
          %p907 = pneg %p353
        $region46: #{forward.7} parent=11 // pred_check_branch
          %909 = sbr.rel (%p907) target = $region48
        $region47: #{forward.7} parent=11 // pred_region
          _
        $region48: #{forward.7} parent=11 // pred_fallthru
          _
        // Predicated region
        $region49: #{forward.7} parent=11 // pred_check
          %p910 = pneg %p374
        $region50: #{forward.7} parent=11 // pred_check_branch
          %912 = sbr.rel (%p910) target = $region52
        $region51: #{forward.7} parent=11 // pred_region
          %s914 = ssub.s32 48, 48
          %915 = vsyncadd [#allocation11], %s914
          %s917 = sshll.u32 [#allocation12], 4
          %s918 = int_to_ptr.vmem [resolvable:$true] %s917
          %920 = dma.hbm_to_vmem [thread:$0]  %s25, 48, %s918, [#allocation11]
        $region52: #{forward.7} parent=11 // pred_fallthru
          _
        // Predicated region
        $region53: #{forward.7} parent=11 // pred_check
          %p921 = pneg %p395
        $region54: #{forward.7} parent=11 // pred_check_branch
          %923 = sbr.rel (%p921) target = $region56
        $region55: #{forward.7} parent=11 // pred_region
          _
        $region56: #{forward.7} parent=11 // pred_fallthru
          _
        // Predicated region
        $region57: #{forward.7} parent=11 // pred_check
          %p924 = pneg %p416
        $region58: #{forward.7} parent=11 // pred_check_branch
          %926 = sbr.rel (%p924) target = $region60
        $region59: #{forward.7} parent=11 // pred_region
          %s928 = ssub.s32 16, 16
          %929 = vsyncadd [#allocation14], %s928
          %s931 = sshll.u32 [#allocation13], 4
          %s932 = int_to_ptr.vmem [resolvable:$true] %s931
          %934 = dma.hbm_to_vmem [thread:$0]  %s29, 16, %s932, [#allocation14]
        $region60: #{forward.7} parent=11 // pred_fallthru
          _
        // Predicated region
        $region61: #{forward.7} parent=11 // pred_check
          %p935 = pneg %p437
        $region62: #{forward.7} parent=11 // pred_check_branch
          %937 = sbr.rel (%p935) target = $region64
        $region63: #{forward.7} parent=11 // pred_region
          %s939 = ssub.s32 16, 16
          %940 = vsyncadd [#allocation14], %s939
          %s942 = sshll.u32 [#allocation15], 4
          %s943 = int_to_ptr.vmem [resolvable:$true] %s942
          %945 = dma.hbm_to_vmem [thread:$0]  %s31, 16, %s943, [#allocation14]
        $region64: #{forward.7} parent=11 // pred_fallthru
          _
        // Predicated region
        $region65: #{forward.7} parent=11 // pred_check
          %p946 = pneg %p458
        $region66: #{forward.7} parent=11 // pred_check_branch
          %948 = sbr.rel (%p946) target = $region68
        $region67: #{forward.7} parent=11 // pred_region
          %s950 = ssub.s32 16, 16
          %951 = vsyncadd [#allocation17], %s950
          %s953 = sshll.u32 [#allocation16], 4
          %s954 = int_to_ptr.vmem [resolvable:$true] %s953
          %956 = dma.hbm_to_vmem [thread:$0]  %s33, 16, %s954, [#allocation17]
        $region68: #{forward.7} parent=11 // pred_fallthru
          _
        // Predicated region
        $region69: #{forward.7} parent=11 // pred_check
          %p957 = pneg %p479
        $region70: #{forward.7} parent=11 // pred_check_branch
          %959 = sbr.rel (%p957) target = $region72
        $region71: #{forward.7} parent=11 // pred_region
          _
        $region72: #{forward.7} parent=11 // pred_fallthru
          _
        // Predicated region
        $region73: #{forward.7} parent=11 // pred_check
          %p960 = pneg %p500
        $region74: #{forward.7} parent=11 // pred_check_branch
          %962 = sbr.rel (%p960) target = $region76
        $region75: #{forward.7} parent=11 // pred_region
          %s964 = ssub.s32 32, 32
          %965 = vsyncadd [#allocation17], %s964
          %s967 = sshll.u32 [#allocation18], 4
          %s968 = int_to_ptr.vmem [resolvable:$true] %s967
          %970 = dma.hbm_to_vmem [thread:$0]  %s37, 32, %s968, [#allocation17]
        $region76: #{forward.7} parent=11 // pred_fallthru
          _
        // Predicated region
        $region77: #{forward.7} parent=11 // pred_check
          %p971 = pneg %p521
        $region78: #{forward.7} parent=11 // pred_check_branch
          %973 = sbr.rel (%p971) target = $region80
        $region79: #{forward.7} parent=11 // pred_region
          %s975 = ssub.s32 128, 128
          %976 = vsyncadd [#allocation20], %s975
          %s978 = sshll.u32 [#allocation19], 4
          %s979 = int_to_ptr.vmem [resolvable:$true] %s978
          %981 = dma.hbm_to_vmem [thread:$0]  %s39, 128, %s979, [#allocation20]
        $region80: #{forward.7} parent=11 // pred_fallthru
          _
        // Predicated region
        $region81: #{forward.7} parent=11 // pred_check
          %p982 = pneg %p542
        $region82: #{forward.7} parent=11 // pred_check_branch
          %984 = sbr.rel (%p982) target = $region84
        $region83: #{forward.7} parent=11 // pred_region
          %s986 = ssub.s32 16, 16
          %987 = vsyncadd [#allocation20], %s986
          %s989 = sshll.u32 [#allocation21], 4
          %s990 = int_to_ptr.vmem [resolvable:$true] %s989
          %992 = dma.hbm_to_vmem [thread:$0]  %s41, 16, %s990, [#allocation20]
        $region84: #{forward.7} parent=11 // pred_fallthru
          _
        // Predicated region
        $region85: #{forward.7} parent=11 // pred_check
          %p993 = pneg %p563
        $region86: #{forward.7} parent=11 // pred_check_branch
          %995 = sbr.rel (%p993) target = $region88
        $region87: #{forward.7} parent=11 // pred_region
          %s997 = ssub.s32 16, 16
          %998 = vsyncadd [#allocation23], %s997
          %s1000 = sshll.u32 [#allocation22], 4
          %s1001 = int_to_ptr.vmem [resolvable:$true] %s1000
          %1003 = dma.hbm_to_vmem [thread:$0]  %s43, 16, %s1001, [#allocation23]
        $region88: #{forward.7} parent=11 // pred_fallthru
          _
        // Predicated region
        $region89: #{forward.7} parent=11 // pred_check
          %p1004 = pneg %p584
        $region90: #{forward.7} parent=11 // pred_check_branch
          %1006 = sbr.rel (%p1004) target = $region92
        $region91: #{forward.7} parent=11 // pred_region
          %s1008 = ssub.s32 16, 16
          %1009 = vsyncadd [#allocation23], %s1008
          %s1011 = sshll.u32 [#allocation24], 4
          %s1012 = int_to_ptr.vmem [resolvable:$true] %s1011
          %1014 = dma.hbm_to_vmem [thread:$0]  %s45, 16, %s1012, [#allocation23]
        $region92: #{forward.7} parent=11 // pred_fallthru
          _
        // Predicated region
        $region93: #{forward.7} parent=11 // pred_check
          %p1015 = pneg %p605
        $region94: #{forward.7} parent=11 // pred_check_branch
          %1017 = sbr.rel (%p1015) target = $region96
        $region95: #{forward.7} parent=11 // pred_region
          %s1019 = ssub.s32 1024, 1024
          %1020 = vsyncadd [#allocation26], %s1019
          %s1021 = sshll.u32 [#allocation25], 4
          %s1022 = int_to_ptr.vmem [resolvable:$true] %s1021
          %1027 = dma.hbm_to_vmem [thread:$0]  %s47, 1024, %s1022, [#allocation26], 64, 64, 4
        $region96: #{forward.7} parent=11 // pred_fallthru
          _
        // Predicated region
        $region97: #{forward.7} parent=11 // pred_check
          %p1028 = pneg %p626
        $region98: #{forward.7} parent=11 // pred_check_branch
          %1030 = sbr.rel (%p1028) target = $region100
        $region99: #{forward.7} parent=11 // pred_region
          %s1032 = ssub.s32 16, 16
          %1033 = vsyncadd [#allocation26], %s1032
          %s1035 = sshll.u32 [#allocation27], 4
          %s1036 = int_to_ptr.vmem [resolvable:$true] %s1035
          %1038 = dma.hbm_to_vmem [thread:$0]  %s49, 16, %s1036, [#allocation26]
        $region100: #{forward.7} parent=11 // pred_fallthru
          _
        // Predicated region
        $region101: #{forward.7} parent=11 // pred_check
          %p1039 = pneg %p647
        $region102: #{forward.7} parent=11 // pred_check_branch
          %1041 = sbr.rel (%p1039) target = $region104
        $region103: #{forward.7} parent=11 // pred_region
          %s1043 = ssub.s32 16, 16
          %1044 = vsyncadd [#allocation29], %s1043
          %s1046 = sshll.u32 [#allocation28], 4
          %s1047 = int_to_ptr.vmem [resolvable:$true] %s1046
          %1049 = dma.hbm_to_vmem [thread:$0]  %s51, 16, %s1047, [#allocation29]
        $region104: #{forward.7} parent=11 // pred_fallthru
          _
        // Predicated region
        $region105: #{forward.7} parent=11 // pred_check
          %p1050 = pneg %p668
        $region106: #{forward.7} parent=11 // pred_check_branch
          %1052 = sbr.rel (%p1050) target = $region108
        $region107: #{forward.7} parent=11 // pred_region
          %s1054 = ssub.s32 16, 16
          %1055 = vsyncadd [#allocation29], %s1054
          %s1057 = sshll.u32 [#allocation30], 4
          %s1058 = int_to_ptr.vmem [resolvable:$true] %s1057
          %1060 = dma.hbm_to_vmem [thread:$0]  %s53, 16, %s1058, [#allocation29]
        $region108: #{forward.7} parent=11 // pred_fallthru
          _
        // Predicated region
        $region109: #{forward.7} parent=11 // pred_check
          %p1061 = pneg %p689
        $region110: #{forward.7} parent=11 // pred_check_branch
          %1063 = sbr.rel (%p1061) target = $region112
        $region111: #{forward.7} parent=11 // pred_region
          _
        $region112: #{forward.7} parent=11 // pred_fallthru
          _
        // Predicated region
        $region113: #{forward.7} parent=11 // pred_check
          %p1064 = pneg %p710
        $region114: #{forward.7} parent=11 // pred_check_branch
          %1066 = sbr.rel (%p1064) target = $region116
        $region115: #{forward.7} parent=11 // pred_region
          %s1068 = ssub.s32 32, 32
          %1069 = vsyncadd [#allocation32], %s1068
          %s1071 = sshll.u32 [#allocation31], 4
          %s1072 = int_to_ptr.vmem [resolvable:$true] %s1071
          %1074 = dma.hbm_to_vmem [thread:$0]  %s57, 32, %s1072, [#allocation32]
        $region116: #{forward.7} parent=11 // pred_fallthru
          _
        // Predicated region
        $region117: #{forward.7} parent=11 // pred_check
          %p1075 = pneg %p731
        $region118: #{forward.7} parent=11 // pred_check_branch
          %1077 = sbr.rel (%p1075) target = $region120
        $region119: #{forward.7} parent=11 // pred_region
          %s1079 = ssub.s32 2048, 2048
          %1080 = vsyncadd [#allocation32], %s1079
          %s1081 = sshll.u32 [#allocation33], 4
          %s1082 = int_to_ptr.vmem [resolvable:$true] %s1081
          %1087 = dma.hbm_to_vmem [thread:$0]  %s59, 2048, %s1082, [#allocation32], 64, 64, 4
        $region120: #{forward.7} parent=11 // pred_fallthru
          _
        // Predicated region
        $region121: #{forward.7} parent=11 // pred_check
          %p1088 = pneg %p752
        $region122: #{forward.7} parent=11 // pred_check_branch
          %1090 = sbr.rel (%p1088) target = $region124
        $region123: #{forward.7} parent=11 // pred_region
          %s1092 = ssub.s32 16, 16
          %1093 = vsyncadd [#allocation35], %s1092
          %s1095 = sshll.u32 [#allocation34], 4
          %s1096 = int_to_ptr.vmem [resolvable:$true] %s1095
          %1098 = dma.hbm_to_vmem [thread:$0]  %s61, 16, %s1096, [#allocation35]
        $region124: #{forward.7} parent=11 // pred_fallthru
          _
        // Predicated region
        $region125: #{forward.7} parent=11 // pred_check
          %p1099 = pneg %p773
        $region126: #{forward.7} parent=11 // pred_check_branch
          %1101 = sbr.rel (%p1099) target = $region128
        $region127: #{forward.7} parent=11 // pred_region
          %s1103 = ssub.s32 16, 16
          %1104 = vsyncadd [#allocation35], %s1103
          %s1106 = sshll.u32 [#allocation36], 4
          %s1107 = int_to_ptr.vmem [resolvable:$true] %s1106
          %1109 = dma.hbm_to_vmem [thread:$0]  %s63, 16, %s1107, [#allocation35]
        $region128: #{forward.7} parent=11 // pred_fallthru
          _
        // Predicated region
        $region129: #{forward.7} parent=11 // pred_check
          %p1110 = pneg %p794
        $region130: #{forward.7} parent=11 // pred_check_branch
          %1112 = sbr.rel (%p1110) target = $region132
        $region131: #{forward.7} parent=11 // pred_region
          %s1114 = ssub.s32 16, 16
          %1115 = vsyncadd [#allocation38], %s1114
          %s1117 = sshll.u32 [#allocation37], 4
          %s1118 = int_to_ptr.vmem [resolvable:$true] %s1117
          %1120 = dma.hbm_to_vmem [thread:$0]  %s65, 16, %s1118, [#allocation38]
        $region132: #{forward.7} parent=11 // pred_fallthru
          _
      $region12: #{forward.7} parent=5 // pred_fallthru
        _
      %p1121 = scmp.lt.s32.totalorder %s86, 2
      // Predicated region
      $region133: #{forward.7} parent=5 // pred_check
        %p1122 = pneg %p1121
      $region134: #{forward.7} parent=5 // pred_check_branch
        %1124 = sbr.rel (%p1122) target = $region136
      $region135: #{forward.7} parent=5 // pred_region
        // Predicated region
        $region137: #{forward.7} parent=135 // pred_check
          %p1125 = pneg %p106
        $region138: #{forward.7} parent=135 // pred_check_branch
          %1127 = sbr.rel (%p1125) target = $region140
        $region139: #{forward.7} parent=135 // pred_region
          %p1128 = scmp.lt.s32.totalorder %s86, 1
          %s1129 = scalar_select %p1128, %s86, 1
          %s1130 = smul.addr %s1129, 8
          %s1131 = scalar_lea.vmem %s1, %s1130
        $region140: #{forward.7} parent=135 // pred_fallthru
          _
        // Predicated region
        $region141: #{forward.7} parent=135 // pred_check
          %p1132 = pneg %p132
        $region142: #{forward.7} parent=135 // pred_check_branch
          %1134 = sbr.rel (%p1132) target = $region144
        $region143: #{forward.7} parent=135 // pred_region
          %p1135 = scmp.lt.s32.totalorder %s86, 1
          %s1136 = scalar_select %p1135, %s86, 1
          %s1137 = smul.addr %s1136, 8
          %s1138 = scalar_lea.vmem %s3, %s1137
        $region144: #{forward.7} parent=135 // pred_fallthru
          _
        // Predicated region
        $region145: #{forward.7} parent=135 // pred_check
          %p1139 = pneg %p158
        $region146: #{forward.7} parent=135 // pred_check_branch
          %1141 = sbr.rel (%p1139) target = $region148
        $region147: #{forward.7} parent=135 // pred_region
          %p1142 = scmp.lt.s32.totalorder %s86, 1
          %s1143 = scalar_select %p1142, %s86, 1
          %s1144 = scalar_lea.vmem %s5, %s1143
        $region148: #{forward.7} parent=135 // pred_fallthru
          _
      $region136: #{forward.7} parent=5 // pred_fallthru
        _
      %p1145 = scmp.le.s32.totalorder 1, %s86
      %p1146 = scmp.lt.s32.totalorder %s86, 3
      %p1147 = pnand %p1145, %p1146
      %p1148 = pneg %p1147
      // Predicated region
      $region149: #{forward.7} parent=5 // pred_check
        _
      $region150: #{forward.7} parent=5 // pred_check_branch
        %1150 = sbr.rel (%p1147) target = $region152
      $region151: #{forward.7} parent=5 // pred_region
        %s1151 = ssub.s32 %s86, 1
        // Predicated region
        $region153: #{forward.7} parent=151 // pred_check
          %p1152 = pneg %p185
        $region154: #{forward.7} parent=151 // pred_check_branch
          %1154 = sbr.rel (%p1152) target = $region156
        $region155: #{forward.7} parent=151 // pred_region
          %1155 = dma.done [#allocation3], 16
        $region156: #{forward.7} parent=151 // pred_fallthru
          _
        // Predicated region
        $region157: #{forward.7} parent=151 // pred_check
          %p1156 = pneg %p206
        $region158: #{forward.7} parent=151 // pred_check_branch
          %1158 = sbr.rel (%p1156) target = $region160
        $region159: #{forward.7} parent=151 // pred_region
          %1159 = dma.done [#allocation5], 16
        $region160: #{forward.7} parent=151 // pred_fallthru
          _
        // Predicated region
        $region161: #{forward.7} parent=151 // pred_check
          %p1160 = pneg %p248
        $region162: #{forward.7} parent=151 // pred_check_branch
          %1162 = sbr.rel (%p1160) target = $region164
        $region163: #{forward.7} parent=151 // pred_region
          %1163 = dma.done [#allocation5], 32
        $region164: #{forward.7} parent=151 // pred_fallthru
          _
        // Predicated region
        $region165: #{forward.7} parent=151 // pred_check
          %p1164 = pneg %p290
        $region166: #{forward.7} parent=151 // pred_check_branch
          %1166 = sbr.rel (%p1164) target = $region168
        $region167: #{forward.7} parent=151 // pred_region
          %1167 = dma.done [#allocation8], 16
        $region168: #{forward.7} parent=151 // pred_fallthru
          _
        // Predicated region
        $region169: #{forward.7} parent=151 // pred_check
          %p1168 = pneg %p311
        $region170: #{forward.7} parent=151 // pred_check_branch
          %1170 = sbr.rel (%p1168) target = $region172
        $region171: #{forward.7} parent=151 // pred_region
          %1171 = dma.done [#allocation8], 16
        $region172: #{forward.7} parent=151 // pred_fallthru
          _
        // Predicated region
        $region173: #{forward.7} parent=151 // pred_check
          %p1172 = pneg %p332
        $region174: #{forward.7} parent=151 // pred_check_branch
          %1174 = sbr.rel (%p1172) target = $region176
        $region175: #{forward.7} parent=151 // pred_region
          %1175 = dma.done [#allocation11], 16
        $region176: #{forward.7} parent=151 // pred_fallthru
          _
        // Predicated region
        $region177: #{forward.7} parent=151 // pred_check
          %p1176 = pneg %p374
        $region178: #{forward.7} parent=151 // pred_check_branch
          %1178 = sbr.rel (%p1176) target = $region180
        $region179: #{forward.7} parent=151 // pred_region
          %1179 = dma.done [#allocation11], 48
        $region180: #{forward.7} parent=151 // pred_fallthru
          _
        // Predicated region
        $region181: #{forward.7} parent=151 // pred_check
          %p1180 = pneg %p416
        $region182: #{forward.7} parent=151 // pred_check_branch
          %1182 = sbr.rel (%p1180) target = $region184
        $region183: #{forward.7} parent=151 // pred_region
          %1183 = dma.done [#allocation14], 16
        $region184: #{forward.7} parent=151 // pred_fallthru
          _
        // Predicated region
        $region185: #{forward.7} parent=151 // pred_check
          %p1184 = pneg %p437
        $region186: #{forward.7} parent=151 // pred_check_branch
          %1186 = sbr.rel (%p1184) target = $region188
        $region187: #{forward.7} parent=151 // pred_region
          %1187 = dma.done [#allocation14], 16
        $region188: #{forward.7} parent=151 // pred_fallthru
          _
        // Predicated region
        $region189: #{forward.7} parent=151 // pred_check
          %p1188 = pneg %p458
        $region190: #{forward.7} parent=151 // pred_check_branch
          %1190 = sbr.rel (%p1188) target = $region192
        $region191: #{forward.7} parent=151 // pred_region
          %1191 = dma.done [#allocation17], 16
        $region192: #{forward.7} parent=151 // pred_fallthru
          _
        // Predicated region
        $region193: #{forward.7} parent=151 // pred_check
          %p1192 = pneg %p500
        $region194: #{forward.7} parent=151 // pred_check_branch
          %1194 = sbr.rel (%p1192) target = $region196
        $region195: #{forward.7} parent=151 // pred_region
          %1195 = dma.done [#allocation17], 32
        $region196: #{forward.7} parent=151 // pred_fallthru
          _
        // Predicated region
        $region197: #{forward.7} parent=151 // pred_check
          %p1196 = pneg %p521
        $region198: #{forward.7} parent=151 // pred_check_branch
          %1198 = sbr.rel (%p1196) target = $region200
        $region199: #{forward.7} parent=151 // pred_region
          %1199 = dma.done [#allocation20], 128
        $region200: #{forward.7} parent=151 // pred_fallthru
          _
        // Predicated region
        $region201: #{forward.7} parent=151 // pred_check
          %p1200 = pneg %p542
        $region202: #{forward.7} parent=151 // pred_check_branch
          %1202 = sbr.rel (%p1200) target = $region204
        $region203: #{forward.7} parent=151 // pred_region
          %1203 = dma.done [#allocation20], 16
        $region204: #{forward.7} parent=151 // pred_fallthru
          _
        // Predicated region
        $region205: #{forward.7} parent=151 // pred_check
          %p1204 = pneg %p563
        $region206: #{forward.7} parent=151 // pred_check_branch
          %1206 = sbr.rel (%p1204) target = $region208
        $region207: #{forward.7} parent=151 // pred_region
          %1207 = dma.done [#allocation23], 16
        $region208: #{forward.7} parent=151 // pred_fallthru
          _
        // Predicated region
        $region209: #{forward.7} parent=151 // pred_check
          %p1208 = pneg %p584
        $region210: #{forward.7} parent=151 // pred_check_branch
          %1210 = sbr.rel (%p1208) target = $region212
        $region211: #{forward.7} parent=151 // pred_region
          %1211 = dma.done [#allocation23], 16
        $region212: #{forward.7} parent=151 // pred_fallthru
          _
        // Predicated region
        $region213: #{forward.7} parent=151 // pred_check
          %p1212 = pneg %p605
        $region214: #{forward.7} parent=151 // pred_check_branch
          %1214 = sbr.rel (%p1212) target = $region216
        $region215: #{forward.7} parent=151 // pred_region
          %1215 = dma.done [#allocation26], 1024
        $region216: #{forward.7} parent=151 // pred_fallthru
          _
        // Predicated region
        $region217: #{forward.7} parent=151 // pred_check
          %p1216 = pneg %p626
        $region218: #{forward.7} parent=151 // pred_check_branch
          %1218 = sbr.rel (%p1216) target = $region220
        $region219: #{forward.7} parent=151 // pred_region
          %1219 = dma.done [#allocation26], 16
        $region220: #{forward.7} parent=151 // pred_fallthru
          _
        // Predicated region
        $region221: #{forward.7} parent=151 // pred_check
          %p1220 = pneg %p647
        $region222: #{forward.7} parent=151 // pred_check_branch
          %1222 = sbr.rel (%p1220) target = $region224
        $region223: #{forward.7} parent=151 // pred_region
          %1223 = dma.done [#allocation29], 16
        $region224: #{forward.7} parent=151 // pred_fallthru
          _
        // Predicated region
        $region225: #{forward.7} parent=151 // pred_check
          %p1224 = pneg %p668
        $region226: #{forward.7} parent=151 // pred_check_branch
          %1226 = sbr.rel (%p1224) target = $region228
        $region227: #{forward.7} parent=151 // pred_region
          %1227 = dma.done [#allocation29], 16
        $region228: #{forward.7} parent=151 // pred_fallthru
          _
        // Predicated region
        $region229: #{forward.7} parent=151 // pred_check
          %p1228 = pneg %p710
        $region230: #{forward.7} parent=151 // pred_check_branch
          %1230 = sbr.rel (%p1228) target = $region232
        $region231: #{forward.7} parent=151 // pred_region
          %1231 = dma.done [#allocation32], 32
        $region232: #{forward.7} parent=151 // pred_fallthru
          _
        // Predicated region
        $region233: #{forward.7} parent=151 // pred_check
          %p1232 = pneg %p731
        $region234: #{forward.7} parent=151 // pred_check_branch
          %1234 = sbr.rel (%p1232) target = $region236
        $region235: #{forward.7} parent=151 // pred_region
          %1235 = dma.done [#allocation32], 2048
        $region236: #{forward.7} parent=151 // pred_fallthru
          _
        // Predicated region
        $region237: #{forward.7} parent=151 // pred_check
          %p1236 = pneg %p752
        $region238: #{forward.7} parent=151 // pred_check_branch
          %1238 = sbr.rel (%p1236) target = $region240
        $region239: #{forward.7} parent=151 // pred_region
          %1239 = dma.done [#allocation35], 16
        $region240: #{forward.7} parent=151 // pred_fallthru
          _
        // Predicated region
        $region241: #{forward.7} parent=151 // pred_check
          %p1240 = pneg %p773
        $region242: #{forward.7} parent=151 // pred_check_branch
          %1242 = sbr.rel (%p1240) target = $region244
        $region243: #{forward.7} parent=151 // pred_region
          %1243 = dma.done [#allocation35], 16
        $region244: #{forward.7} parent=151 // pred_fallthru
          _
        // Predicated region
        $region245: #{forward.7} parent=151 // pred_check
          %p1244 = pneg %p794
        $region246: #{forward.7} parent=151 // pred_check_branch
          %1246 = sbr.rel (%p1244) target = $region248
        $region247: #{forward.7} parent=151 // pred_region
          %1247 = dma.done [#allocation38], 16
        $region248: #{forward.7} parent=151 // pred_fallthru
          _
        %p1248 = scmp.lt.s32.totalorder %s91, 1
        %s1249 = scalar_select %p1248, %s91, 1
        %s1250 = smul.addr %s1249, 8
        %s1251 = scalar_lea.vmem %s1, %s1250
        %p1252 = pneg %p112
        %p1253 = pneg %p109
        %p1254 = scmp.lt.s32.totalorder %s91, 1
        %s1255 = scalar_select %p1254, %s91, 1
        %s1256 = smul.addr %s1255, 8
        %s1257 = scalar_lea.vmem %s3, %s1256
        %p1258 = pneg %p138
        %p1259 = pneg %p135
        %p1260 = scmp.lt.s32.totalorder %s91, 1
        %s1261 = scalar_select %p1260, %s91, 1
        %s1262 = scalar_lea.vmem %s5, %s1261
        %p1263 = pneg %p164
        %p1264 = pneg %p161
        %p1265 = pneg %p185
        %p1266 = pneg %p182
        %p1267 = pneg %p206
        %p1268 = pneg %p203
        %p1269 = pneg %p227
        %p1270 = pneg %p224
        %p1271 = pneg %p248
        %p1272 = pneg %p245
        %p1273 = pneg %p269
        %p1274 = pneg %p266
        %p1275 = pneg %p290
        %p1276 = pneg %p287
        %p1277 = pneg %p311
        %p1278 = pneg %p308
        %p1279 = pneg %p332
        %p1280 = pneg %p329
        %p1281 = pneg %p353
        %p1282 = pneg %p350
        %p1283 = pneg %p374
        %p1284 = pneg %p371
        %p1285 = pneg %p395
        %p1286 = pneg %p392
        %p1287 = pneg %p416
        %p1288 = pneg %p413
        %p1289 = pneg %p437
        %p1290 = pneg %p434
        %p1291 = pneg %p458
        %p1292 = pneg %p455
        %p1293 = pneg %p479
        %p1294 = pneg %p476
        %p1295 = pneg %p500
        %p1296 = pneg %p497
        %p1297 = pneg %p521
        %p1298 = pneg %p518
        %p1299 = pneg %p542
        %p1300 = pneg %p539
        %p1301 = pneg %p563
        %p1302 = pneg %p560
        %p1303 = pneg %p584
        %p1304 = pneg %p581
        %p1305 = pneg %p605
        %p1306 = pneg %p602
        %p1307 = pneg %p626
        %p1308 = pneg %p623
        %p1309 = pneg %p647
        %p1310 = pneg %p644
        %p1311 = pneg %p668
        %p1312 = pneg %p665
        %p1313 = pneg %p689
        %p1314 = pneg %p686
        %p1315 = pneg %p710
        %p1316 = pneg %p707
        %p1317 = pneg %p731
        %p1318 = pneg %p728
        %p1319 = pneg %p752
        %p1320 = pneg %p749
        %p1321 = pneg %p773
        %p1322 = pneg %p770
        %p1323 = pneg %p794
        %p1324 = pneg %p791
        %p1325 = pneg %p820
        %p1326 = pneg %p817
        %p1327 = scmp.lt.s32.totalorder %s91, 1
        %s1328 = scalar_select %p1327, %s91, 1
        %s1329 = smul.addr %s1328, 8
        %s1330 = scalar_lea.vmem %s67, %s1329
        %p1331 = scmp.lt.s32.totalorder %s91, 1
        %s1332 = scalar_select %p1331, %s91, 1
        %s1333 = smul.addr %s1332, 8
        %s1334 = scalar_lea.vmem %s1, %s1333
        %p1335 = scmp.lt.s32.totalorder %s91, 1
        %s1336 = scalar_select %p1335, %s91, 1
        %s1337 = smul.addr %s1336, 8
        %s1338 = scalar_lea.vmem %s3, %s1337
        %p1339 = scmp.lt.s32.totalorder %s91, 1
        %s1340 = scalar_select %p1339, %s91, 1
        %s1341 = scalar_lea.vmem %s5, %s1340
        %p1342 = scmp.lt.s32.totalorder %s91, 1
        %s1343 = scalar_select %p1342, %s91, 1
        %s1344 = smul.addr %s1343, 8
        %s1345 = scalar_lea.vmem %s67, %s1344
        %v1347 = vld [vmem:[%s1334] sm:$0xff]
        %v1348 = vld [vmem:[%s1338] sm:$0xff]
        %v1349 = vld [vmem:[%s1341] sm:$0x1]
        %1350 = vadd.xlane.f32.xlu0 %v1347
        %v1351 = vpop.xlane.xlu0 %1350
        %v1352 = vrcp.pop 128.0
        %v1353 = vmul.f32 %v1351, %v1352
        %v1354 = vsub.f32 %v1347, %v1353
        %v1355 = vmul.f32 %v1354, %v1354
        %1356 = vadd.xlane.f32.xlu0 %v1355
        %v1357 = vpop.xlane.xlu0 %1356
        %v1358 = vmul.f32 %v1357, %v1352
        %v1359 = vadd.f32 %v1358, 1e-05
        %v1360 = vrsqrt.pop %v1359
        %v1361 = vmul.f32 %v1354, %v1360
        %v1362 = vld [vmem:[#allocation2] sm:$0x1]
        %v1364 = vlaneseq
        %v1365 = vshrl.u32 %v1364, 7
        %v1366 = vsub.s32 0, %v1365
        %v1367 = vrot.slane %v1362, %v1366
        %v1369 = vmul.f32 %v1361, %v1367
        %v1370 = vld [vmem:[#allocation4] sm:$0x1]
        %v1372 = vlaneseq
        %v1373 = vshrl.u32 %v1372, 7
        %v1374 = vsub.s32 0, %v1373
        %v1375 = vrot.slane %v1370, %v1374
        %v1377 = vadd.f32 %v1369, %v1375
        %v1378 = vpack.c.bf16 %v1377, %v1377
        %v1379 = vld [vmem:[%s11] sm:$0xff]
        %v1380 = vld [vmem:[%s11 + $0x8] sm:$0xff]
        %v1381 = vld [vmem:[%s11 + $0x10] sm:$0xff]
        %v1382 = vld [vmem:[%s11 + $0x18] sm:$0xff]
        %v1383 = vld [vmem:[%s11 + $0x20] sm:$0xff]
        %v1384 = vld [vmem:[%s11 + $0x28] sm:$0xff]
        %v1385 = vld [vmem:[%s11 + $0x30] sm:$0xff]
        %v1386 = vld [vmem:[%s11 + $0x38] sm:$0xff]
        %v1387 = vld [vmem:[%s11 + $0x40] sm:$0xff]
        %v1388 = vld [vmem:[%s11 + $0x48] sm:$0xff]
        %v1389 = vld [vmem:[%s11 + $0x50] sm:$0xff]
        %v1390 = vld [vmem:[%s11 + $0x58] sm:$0xff]
        %v1391 = vld [vmem:[%s11 + $0x60] sm:$0xff]
        %v1392 = vld [vmem:[%s11 + $0x68] sm:$0xff]
        %v1393 = vld [vmem:[%s11 + $0x70] sm:$0xff]
        %v1394 = vld [vmem:[%s11 + $0x78] sm:$0xff]
        %v1395 = vld [vmem:[#allocation6] sm:$0x3]
        %v1397 = vlaneseq
        %v1398 = vshrl.u32 %v1397, 7
        %v1399 = vsub.s32 0, %v1398
        %v1400 = vrot.slane %v1395, %v1399
        %v1401 = vlaneseq
        %v1402 = vshrl.u32 %v1401, 7
        %v1403 = vsub.s32 1, %v1402
        %v1404 = vrot.slane %v1395, %v1403
        %v1423 = vunpack.c.l.b16 %v1379
        %v1424 = vunpack.c.h.b16 %v1379
        %v1425 = vunpack.c.l.b16 %v1380
        %v1426 = vunpack.c.h.b16 %v1380
        %v1427 = vunpack.c.l.b16 %v1381
        %v1428 = vunpack.c.h.b16 %v1381
        %v1429 = vunpack.c.l.b16 %v1382
        %v1430 = vunpack.c.h.b16 %v1382
        %v1431 = vunpack.c.l.b16 %v1383
        %v1432 = vunpack.c.h.b16 %v1383
        %v1433 = vunpack.c.l.b16 %v1384
        %v1434 = vunpack.c.h.b16 %v1384
        %v1435 = vunpack.c.l.b16 %v1385
        %v1436 = vunpack.c.h.b16 %v1385
        %v1437 = vunpack.c.l.b16 %v1386
        %v1438 = vunpack.c.h.b16 %v1386
        %v1439 = vunpack.c.l.b16 %v1387
        %v1440 = vunpack.c.h.b16 %v1387
        %v1441 = vunpack.c.l.b16 %v1388
        %v1442 = vunpack.c.h.b16 %v1388
        %v1443 = vunpack.c.l.b16 %v1389
        %v1444 = vunpack.c.h.b16 %v1389
        %v1445 = vunpack.c.l.b16 %v1390
        %v1446 = vunpack.c.h.b16 %v1390
        %v1447 = vunpack.c.l.b16 %v1391
        %v1448 = vunpack.c.h.b16 %v1391
        %v1449 = vunpack.c.l.b16 %v1392
        %v1450 = vunpack.c.h.b16 %v1392
        %v1451 = vunpack.c.l.b16 %v1393
        %v1452 = vunpack.c.h.b16 %v1393
        %v1453 = vunpack.c.l.b16 %v1394
        %v1454 = vunpack.c.h.b16 %v1394
        %v1455 = vpack.c.b16 %v1425, %v1423
        %v1456 = vpack.c.b16 %v1426, %v1424
        %v1457 = vpack.c.b16 %v1429, %v1427
        %v1458 = vpack.c.b16 %v1430, %v1428
        %v1459 = vpack.c.b16 %v1433, %v1431
        %v1460 = vpack.c.b16 %v1434, %v1432
        %v1461 = vpack.c.b16 %v1437, %v1435
        %v1462 = vpack.c.b16 %v1438, %v1436
        %v1463 = vpack.c.b16 %v1441, %v1439
        %v1464 = vpack.c.b16 %v1442, %v1440
        %v1465 = vpack.c.b16 %v1445, %v1443
        %v1466 = vpack.c.b16 %v1446, %v1444
        %v1467 = vpack.c.b16 %v1449, %v1447
        %v1468 = vpack.c.b16 %v1450, %v1448
        %v1469 = vpack.c.b16 %v1453, %v1451
        %v1470 = vpack.c.b16 %v1454, %v1452
        %1487 = vmatprep.subr.bf16.mxu0 %v1456
        %1488 = vmatpush1.bf16.msra.mxu0 %v1455
        %1489 = vmatprep.subr.bf16.mxu0 %v1458
        %1490 = vmatpush1.bf16.msra.mxu0 %v1457
        %1491 = vmatprep.subr.bf16.mxu0 %v1460
        %1492 = vmatpush1.bf16.msra.mxu0 %v1459
        %1493 = vmatprep.subr.bf16.mxu0 %v1462
        %1494 = vmatpush1.bf16.msra.mxu0 %v1461
        %1495 = vmatprep.subr.bf16.mxu0 %v1464
        %1496 = vmatpush1.bf16.msra.mxu0 %v1463
        %1497 = vmatprep.subr.bf16.mxu0 %v1466
        %1498 = vmatpush1.bf16.msra.mxu0 %v1465
        %1499 = vmatprep.subr.bf16.mxu0 %v1468
        %1500 = vmatpush1.bf16.msra.mxu0 %v1467
        %1501 = vmatprep.subr.bf16.mxu0 %v1470
        %1502 = vmatpush1.bf16.msra.mxu0 %v1469
        %1503 = vmatprep.subr.bf16.mxu0 0
        %1504 = vmatpush1.bf16.msra.mxu0 0
        %1505 = vmatprep.subr.bf16.mxu0 0
        %1506 = vmatpush1.bf16.msra.mxu0 0
        %1507 = vmatprep.subr.bf16.mxu0 0
        %1508 = vmatpush1.bf16.msra.mxu0 0
        %1509 = vmatprep.subr.bf16.mxu0 0
        %1510 = vmatpush1.bf16.msra.mxu0 0
        %1511 = vmatprep.subr.bf16.mxu0 0
        %1512 = vmatpush1.bf16.msra.mxu0 0
        %1513 = vmatprep.subr.bf16.mxu0 0
        %1514 = vmatpush1.bf16.msra.mxu0 0
        %1515 = vmatprep.subr.bf16.mxu0 0
        %1516 = vmatpush1.bf16.msra.mxu0 0
        %1517 = vmatprep.subr.bf16.mxu0 0
        %1518 = vmatpush1.bf16.msra.mxu0 0
        %1519 = vmatprep.mubr.bf16.mxu0 0
        %1520 = vmatmul.mubr.bf16.gmra.mrb[0].mxu0 %v1378
        %v1521 = vpop.f32.mrb[0].mxu0
        %v1522 = vadd.f32 %v1400, %v1521
        %v1523 = vpop.f32.mrb[0].mxu0
        %v1524 = vadd.f32 %v1404, %v1523
        %v1525 = vpop.f32.mrb[0].mxu0
        %v1526 = vpop.f32.mrb[0].mxu0
        %1527 = vdwg.mxu0
        %v1528 = vxor.u32 %v1522, 2147483648
        %v1529 = vxor.u32 %v1524, 2147483648
        %v1530 = vmul.f32 %v1528, 1.442695
        %v1531 = vpow.pop %v1530
        %v1532 = vmul.f32 %v1529, 1.442695
        %v1533 = vpow.pop %v1532
        %v1534 = vadd.f32 %v1531, 1.0
        %v1535 = vadd.f32 %v1533, 1.0
        %v1536 = vrcp.pop %v1534
        %v1537 = vmul.f32 1.0, %v1536
        %v1538 = vrcp.pop %v1535
        %v1539 = vmul.f32 1.0, %v1538
        %v1540 = vmul.f32 %v1522, %v1537
        %v1541 = vmul.f32 %v1524, %v1539
        %v1542 = vpack.c.bf16 %v1540, %v1540
        %v1543 = vpack.c.bf16 %v1541, %v1541
        %v1544 = vld [vmem:[%s15] sm:$0xf]
        %v1545 = vld [vmem:[%s15 + $0x4] sm:$0xf]
        %v1546 = vld [vmem:[%s15 + $0x8] sm:$0xf]
        %v1547 = vld [vmem:[%s15 + $0xc] sm:$0xf]
        %v1548 = vld [vmem:[%s15 + $0x10] sm:$0xf]
        %v1549 = vld [vmem:[%s15 + $0x14] sm:$0xf]
        %v1550 = vld [vmem:[%s15 + $0x18] sm:$0xf]
        %v1551 = vld [vmem:[%s15 + $0x1c] sm:$0xf]
        %v1552 = vld [vmem:[%s15 + $0x20] sm:$0xf]
        %v1553 = vld [vmem:[%s15 + $0x24] sm:$0xf]
        %v1554 = vld [vmem:[%s15 + $0x28] sm:$0xf]
        %v1555 = vld [vmem:[%s15 + $0x2c] sm:$0xf]
        %v1556 = vld [vmem:[%s15 + $0x30] sm:$0xf]
        %v1557 = vld [vmem:[%s15 + $0x34] sm:$0xf]
        %v1558 = vld [vmem:[%s15 + $0x38] sm:$0xf]
        %v1559 = vld [vmem:[%s15 + $0x3c] sm:$0xf]
        %v1560 = vld [vmem:[%s15 + $0x40] sm:$0xf]
        %v1561 = vld [vmem:[%s15 + $0x44] sm:$0xf]
        %v1562 = vld [vmem:[%s15 + $0x48] sm:$0xf]
        %v1563 = vld [vmem:[%s15 + $0x4c] sm:$0xf]
        %v1564 = vld [vmem:[%s15 + $0x50] sm:$0xf]
        %v1565 = vld [vmem:[%s15 + $0x54] sm:$0xf]
        %v1566 = vld [vmem:[%s15 + $0x58] sm:$0xf]
        %v1567 = vld [vmem:[%s15 + $0x5c] sm:$0xf]
        %v1568 = vld [vmem:[%s15 + $0x60] sm:$0xf]
        %v1569 = vld [vmem:[%s15 + $0x64] sm:$0xf]
        %v1570 = vld [vmem:[%s15 + $0x68] sm:$0xf]
        %v1571 = vld [vmem:[%s15 + $0x6c] sm:$0xf]
        %v1572 = vld [vmem:[%s15 + $0x70] sm:$0xf]
        %v1573 = vld [vmem:[%s15 + $0x74] sm:$0xf]
        %v1574 = vld [vmem:[%s15 + $0x78] sm:$0xf]
        %v1575 = vld [vmem:[%s15 + $0x7c] sm:$0xf]
        %v1576 = vld [vmem:[#allocation7] sm:$0x1]
        %v1578 = vlaneseq
        %v1579 = vshrl.u32 %v1578, 7
        %v1580 = vsub.s32 0, %v1579
        %v1581 = vrot.slane %v1576, %v1580
        %v1615 = vunpack.c.l.b16 %v1544
        %v1616 = vunpack.c.l.b16 %v1545
        %v1617 = vunpack.c.l.b16 %v1546
        %v1618 = vunpack.c.l.b16 %v1547
        %v1619 = vunpack.c.l.b16 %v1548
        %v1620 = vunpack.c.l.b16 %v1549
        %v1621 = vunpack.c.l.b16 %v1550
        %v1622 = vunpack.c.l.b16 %v1551
        %v1623 = vunpack.c.l.b16 %v1552
        %v1624 = vunpack.c.l.b16 %v1553
        %v1625 = vunpack.c.l.b16 %v1554
        %v1626 = vunpack.c.l.b16 %v1555
        %v1627 = vunpack.c.l.b16 %v1556
        %v1628 = vunpack.c.l.b16 %v1557
        %v1629 = vunpack.c.l.b16 %v1558
        %v1630 = vunpack.c.l.b16 %v1559
        %v1631 = vunpack.c.l.b16 %v1560
        %v1632 = vunpack.c.l.b16 %v1561
        %v1633 = vunpack.c.l.b16 %v1562
        %v1634 = vunpack.c.l.b16 %v1563
        %v1635 = vunpack.c.l.b16 %v1564
        %v1636 = vunpack.c.l.b16 %v1565
        %v1637 = vunpack.c.l.b16 %v1566
        %v1638 = vunpack.c.l.b16 %v1567
        %v1639 = vunpack.c.l.b16 %v1568
        %v1640 = vunpack.c.l.b16 %v1569
        %v1641 = vunpack.c.l.b16 %v1570
        %v1642 = vunpack.c.l.b16 %v1571
        %v1643 = vunpack.c.l.b16 %v1572
        %v1644 = vunpack.c.l.b16 %v1573
        %v1645 = vunpack.c.l.b16 %v1574
        %v1646 = vunpack.c.l.b16 %v1575
        %v1647 = vpack.c.b16 %v1616, %v1615
        %v1648 = vpack.c.b16 %v1618, %v1617
        %v1649 = vpack.c.b16 %v1620, %v1619
        %v1650 = vpack.c.b16 %v1622, %v1621
        %v1651 = vpack.c.b16 %v1624, %v1623
        %v1652 = vpack.c.b16 %v1626, %v1625
        %v1653 = vpack.c.b16 %v1628, %v1627
        %v1654 = vpack.c.b16 %v1630, %v1629
        %v1655 = vpack.c.b16 %v1632, %v1631
        %v1656 = vpack.c.b16 %v1634, %v1633
        %v1657 = vpack.c.b16 %v1636, %v1635
        %v1658 = vpack.c.b16 %v1638, %v1637
        %v1659 = vpack.c.b16 %v1640, %v1639
        %v1660 = vpack.c.b16 %v1642, %v1641
        %v1661 = vpack.c.b16 %v1644, %v1643
        %v1662 = vpack.c.b16 %v1646, %v1645
        %1679 = vmatprep.subr.bf16.mxu0 0
        %1680 = vmatpush1.bf16.msra.mxu0 %v1647
        %1681 = vmatprep.subr.bf16.mxu0 0
        %1682 = vmatpush1.bf16.msra.mxu0 %v1648
        %1683 = vmatprep.subr.bf16.mxu0 0
        %1684 = vmatpush1.bf16.msra.mxu0 %v1649
        %1685 = vmatprep.subr.bf16.mxu0 0
        %1686 = vmatpush1.bf16.msra.mxu0 %v1650
        %1687 = vmatprep.subr.bf16.mxu0 0
        %1688 = vmatpush1.bf16.msra.mxu0 %v1651
        %1689 = vmatprep.subr.bf16.mxu0 0
        %1690 = vmatpush1.bf16.msra.mxu0 %v1652
        %1691 = vmatprep.subr.bf16.mxu0 0
        %1692 = vmatpush1.bf16.msra.mxu0 %v1653
        %1693 = vmatprep.subr.bf16.mxu0 0
        %1694 = vmatpush1.bf16.msra.mxu0 %v1654
        %1695 = vmatprep.subr.bf16.mxu0 0
        %1696 = vmatpush1.bf16.msra.mxu0 %v1655
        %1697 = vmatprep.subr.bf16.mxu0 0
        %1698 = vmatpush1.bf16.msra.mxu0 %v1656
        %1699 = vmatprep.subr.bf16.mxu0 0
        %1700 = vmatpush1.bf16.msra.mxu0 %v1657
        %1701 = vmatprep.subr.bf16.mxu0 0
        %1702 = vmatpush1.bf16.msra.mxu0 %v1658
        %1703 = vmatprep.subr.bf16.mxu0 0
        %1704 = vmatpush1.bf16.msra.mxu0 %v1659
        %1705 = vmatprep.subr.bf16.mxu0 0
        %1706 = vmatpush1.bf16.msra.mxu0 %v1660
        %1707 = vmatprep.subr.bf16.mxu0 0
        %1708 = vmatpush1.bf16.msra.mxu0 %v1661
        %1709 = vmatprep.subr.bf16.mxu0 0
        %1710 = vmatpush1.bf16.msra.mxu0 %v1662
        %1711 = vmatprep.mubr.bf16.mxu0 %v1543
        %1712 = vmatmul.mubr.bf16.gmra.mrb[0].mxu0 %v1542
        %v1713 = vpop.f32.mrb[0].mxu0
        %v1714 = vadd.f32 %v1581, %v1713
        %v1715 = vpop.f32.mrb[0].mxu0
        %v1716 = vpop.f32.mrb[0].mxu0
        %v1717 = vpop.f32.mrb[0].mxu0
        %1718 = vdwg.mxu0
        %v1719 = vmul.f32 %v1714, 0.5
        %v1720 = vadd.f32 %v1347, %v1719
        %1721 = vadd.xlane.f32.xlu0 %v1720
        %v1722 = vpop.xlane.xlu0 %1721
        %v1723 = vmul.f32 %v1722, %v1352
        %v1724 = vsub.f32 %v1720, %v1723
        %v1725 = vmul.f32 %v1724, %v1724
        %1726 = vadd.xlane.f32.xlu0 %v1725
        %v1727 = vpop.xlane.xlu0 %1726
        %v1728 = vmul.f32 %v1727, %v1352
        %v1729 = vadd.f32 %v1728, 1e-05
        %v1730 = vrsqrt.pop %v1729
        %v1731 = vmul.f32 %v1724, %v1730
        %v1732 = vld [vmem:[#allocation9] sm:$0x1]
        %v1734 = vlaneseq
        %v1735 = vshrl.u32 %v1734, 7
        %v1736 = vsub.s32 0, %v1735
        %v1737 = vrot.slane %v1732, %v1736
        %v1739 = vmul.f32 %v1731, %v1737
        %v1740 = vld [vmem:[#allocation10] sm:$0x1]
        %v1742 = vlaneseq
        %v1743 = vshrl.u32 %v1742, 7
        %v1744 = vsub.s32 0, %v1743
        %v1745 = vrot.slane %v1740, %v1744
        %v1747 = vadd.f32 %v1739, %v1745
        %v1748 = vpack.c.bf16 %v1747, %v1747
        %v1749 = vld [vmem:[%s23] sm:$0xff]
        %v1750 = vld [vmem:[%s23 + $0x8] sm:$0xf]
        %v1751 = vld [vmem:[%s23 + $0xc] sm:$0xff]
        %v1752 = vld [vmem:[%s23 + $0x14] sm:$0xf]
        %v1753 = vld [vmem:[%s23 + $0x18] sm:$0xff]
        %v1754 = vld [vmem:[%s23 + $0x20] sm:$0xf]
        %v1755 = vld [vmem:[%s23 + $0x24] sm:$0xff]
        %v1756 = vld [vmem:[%s23 + $0x2c] sm:$0xf]
        %v1757 = vld [vmem:[%s23 + $0x30] sm:$0xff]
        %v1758 = vld [vmem:[%s23 + $0x38] sm:$0xf]
        %v1759 = vld [vmem:[%s23 + $0x3c] sm:$0xff]
        %v1760 = vld [vmem:[%s23 + $0x44] sm:$0xf]
        %v1761 = vld [vmem:[%s23 + $0x48] sm:$0xff]
        %v1762 = vld [vmem:[%s23 + $0x50] sm:$0xf]
        %v1763 = vld [vmem:[%s23 + $0x54] sm:$0xff]
        %v1764 = vld [vmem:[%s23 + $0x5c] sm:$0xf]
        %v1765 = vld [vmem:[%s23 + $0x60] sm:$0xff]
        %v1766 = vld [vmem:[%s23 + $0x68] sm:$0xf]
        %v1767 = vld [vmem:[%s23 + $0x6c] sm:$0xff]
        %v1768 = vld [vmem:[%s23 + $0x74] sm:$0xf]
        %v1769 = vld [vmem:[%s23 + $0x78] sm:$0xff]
        %v1770 = vld [vmem:[%s23 + $0x80] sm:$0xf]
        %v1771 = vld [vmem:[%s23 + $0x84] sm:$0xff]
        %v1772 = vld [vmem:[%s23 + $0x8c] sm:$0xf]
        %v1773 = vld [vmem:[%s23 + $0x90] sm:$0xff]
        %v1774 = vld [vmem:[%s23 + $0x98] sm:$0xf]
        %v1775 = vld [vmem:[%s23 + $0x9c] sm:$0xff]
        %v1776 = vld [vmem:[%s23 + $0xa4] sm:$0xf]
        %v1777 = vld [vmem:[%s23 + $0xa8] sm:$0xff]
        %v1778 = vld [vmem:[%s23 + $0xb0] sm:$0xf]
        %v1779 = vld [vmem:[%s23 + $0xb4] sm:$0xff]
        %v1780 = vld [vmem:[%s23 + $0xbc] sm:$0xf]
        %v1781 = vld [vmem:[#allocation12] sm:$0x7]
        %v1783 = vlaneseq
        %v1784 = vshrl.u32 %v1783, 7
        %v1785 = vsub.s32 0, %v1784
        %v1786 = vrot.slane %v1781, %v1785
        %v1787 = vlaneseq
        %v1788 = vshrl.u32 %v1787, 7
        %v1789 = vsub.s32 1, %v1788
        %v1790 = vrot.slane %v1781, %v1789
        %v1791 = vlaneseq
        %v1792 = vshrl.u32 %v1791, 7
        %v1793 = vsub.s32 2, %v1792
        %v1794 = vrot.slane %v1781, %v1793
        %v1830 = vunpack.c.l.b16 %v1749
        %v1831 = vunpack.c.h.b16 %v1749
        %v1832 = vunpack.c.l.b16 %v1750
        %v1833 = vunpack.c.l.b16 %v1751
        %v1834 = vunpack.c.h.b16 %v1751
        %v1835 = vunpack.c.l.b16 %v1752
        %v1836 = vunpack.c.l.b16 %v1753
        %v1837 = vunpack.c.h.b16 %v1753
        %v1838 = vunpack.c.l.b16 %v1754
        %v1839 = vunpack.c.l.b16 %v1755
        %v1840 = vunpack.c.h.b16 %v1755
        %v1841 = vunpack.c.l.b16 %v1756
        %v1842 = vunpack.c.l.b16 %v1757
        %v1843 = vunpack.c.h.b16 %v1757
        %v1844 = vunpack.c.l.b16 %v1758
        %v1845 = vunpack.c.l.b16 %v1759
        %v1846 = vunpack.c.h.b16 %v1759
        %v1847 = vunpack.c.l.b16 %v1760
        %v1848 = vunpack.c.l.b16 %v1761
        %v1849 = vunpack.c.h.b16 %v1761
        %v1850 = vunpack.c.l.b16 %v1762
        %v1851 = vunpack.c.l.b16 %v1763
        %v1852 = vunpack.c.h.b16 %v1763
        %v1853 = vunpack.c.l.b16 %v1764
        %v1854 = vunpack.c.l.b16 %v1765
        %v1855 = vunpack.c.h.b16 %v1765
        %v1856 = vunpack.c.l.b16 %v1766
        %v1857 = vunpack.c.l.b16 %v1767
        %v1858 = vunpack.c.h.b16 %v1767
        %v1859 = vunpack.c.l.b16 %v1768
        %v1860 = vunpack.c.l.b16 %v1769
        %v1861 = vunpack.c.h.b16 %v1769
        %v1862 = vunpack.c.l.b16 %v1770
        %v1863 = vunpack.c.l.b16 %v1771
        %v1864 = vunpack.c.h.b16 %v1771
        %v1865 = vunpack.c.l.b16 %v1772
        %v1866 = vunpack.c.l.b16 %v1773
        %v1867 = vunpack.c.h.b16 %v1773
        %v1868 = vunpack.c.l.b16 %v1774
        %v1869 = vunpack.c.l.b16 %v1775
        %v1870 = vunpack.c.h.b16 %v1775
        %v1871 = vunpack.c.l.b16 %v1776
        %v1872 = vunpack.c.l.b16 %v1777
        %v1873 = vunpack.c.h.b16 %v1777
        %v1874 = vunpack.c.l.b16 %v1778
        %v1875 = vunpack.c.l.b16 %v1779
        %v1876 = vunpack.c.h.b16 %v1779
        %v1877 = vunpack.c.l.b16 %v1780
        %v1878 = vpack.c.b16 %v1833, %v1830
        %v1879 = vpack.c.b16 %v1834, %v1831
        %v1880 = vpack.c.b16 %v1835, %v1832
        %v1881 = vpack.c.b16 %v1839, %v1836
        %v1882 = vpack.c.b16 %v1840, %v1837
        %v1883 = vpack.c.b16 %v1841, %v1838
        %v1884 = vpack.c.b16 %v1845, %v1842
        %v1885 = vpack.c.b16 %v1846, %v1843
        %v1886 = vpack.c.b16 %v1847, %v1844
        %v1887 = vpack.c.b16 %v1851, %v1848
        %v1888 = vpack.c.b16 %v1852, %v1849
        %v1889 = vpack.c.b16 %v1853, %v1850
        %v1890 = vpack.c.b16 %v1857, %v1854
        %v1891 = vpack.c.b16 %v1858, %v1855
        %v1892 = vpack.c.b16 %v1859, %v1856
        %v1893 = vpack.c.b16 %v1863, %v1860
        %v1894 = vpack.c.b16 %v1864, %v1861
        %v1895 = vpack.c.b16 %v1865, %v1862
        %v1896 = vpack.c.b16 %v1869, %v1866
        %v1897 = vpack.c.b16 %v1870, %v1867
        %v1898 = vpack.c.b16 %v1871, %v1868
        %v1899 = vpack.c.b16 %v1875, %v1872
        %v1900 = vpack.c.b16 %v1876, %v1873
        %v1901 = vpack.c.b16 %v1877, %v1874
        %1926 = vmatprep.subr.bf16.mxu0 %v1879
        %1927 = vmatpush1.bf16.msra.mxu0 %v1878
        %1928 = vmatprep.subr.bf16.mxu0 %v1882
        %1929 = vmatpush1.bf16.msra.mxu0 %v1881
        %1930 = vmatprep.subr.bf16.mxu0 %v1885
        %1931 = vmatpush1.bf16.msra.mxu0 %v1884
        %1932 = vmatprep.subr.bf16.mxu0 %v1888
        %1933 = vmatpush1.bf16.msra.mxu0 %v1887
        %1934 = vmatprep.subr.bf16.mxu0 %v1891
        %1935 = vmatpush1.bf16.msra.mxu0 %v1890
        %1936 = vmatprep.subr.bf16.mxu0 %v1894
        %1937 = vmatpush1.bf16.msra.mxu0 %v1893
        %1938 = vmatprep.subr.bf16.mxu0 %v1897
        %1939 = vmatpush1.bf16.msra.mxu0 %v1896
        %1940 = vmatprep.subr.bf16.mxu0 %v1900
        %1941 = vmatpush1.bf16.msra.mxu0 %v1899
        %1942 = vmatprep.subr.bf16.mxu0 0
        %1943 = vmatpush1.bf16.msra.mxu0 0
        %1944 = vmatprep.subr.bf16.mxu0 0
        %1945 = vmatpush1.bf16.msra.mxu0 0
        %1946 = vmatprep.subr.bf16.mxu0 0
        %1947 = vmatpush1.bf16.msra.mxu0 0
        %1948 = vmatprep.subr.bf16.mxu0 0
        %1949 = vmatpush1.bf16.msra.mxu0 0
        %1950 = vmatprep.subr.bf16.mxu0 0
        %1951 = vmatpush1.bf16.msra.mxu0 0
        %1952 = vmatprep.subr.bf16.mxu0 0
        %1953 = vmatpush1.bf16.msra.mxu0 0
        %1954 = vmatprep.subr.bf16.mxu0 0
        %1955 = vmatpush1.bf16.msra.mxu0 0
        %1956 = vmatprep.subr.bf16.mxu0 0
        %1957 = vmatpush1.bf16.msra.mxu0 0
        %1958 = vmatprep.mubr.bf16.mxu0 0
        %1959 = vmatmul.mubr.bf16.gmra.mrb[0].mxu0 %v1748
        %v1960 = vpop.f32.mrb[0].mxu0
        %v1961 = vadd.f32 %v1786, %v1960
        %v1962 = vpop.f32.mrb[0].mxu0
        %v1963 = vadd.f32 %v1790, %v1962
        %v1964 = vpop.f32.mrb[0].mxu0
        %v1965 = vpop.f32.mrb[0].mxu0
        %1966 = vdwg.mxu0
        %1967 = vmatprep.subr.bf16.mxu0 0
        %1968 = vmatpush1.bf16.msra.mxu0 %v1880
        %1969 = vmatprep.subr.bf16.mxu0 0
        %1970 = vmatpush1.bf16.msra.mxu0 %v1883
        %1971 = vmatprep.subr.bf16.mxu0 0
        %1972 = vmatpush1.bf16.msra.mxu0 %v1886
        %1973 = vmatprep.subr.bf16.mxu0 0
        %1974 = vmatpush1.bf16.msra.mxu0 %v1889
        %1975 = vmatprep.subr.bf16.mxu0 0
        %1976 = vmatpush1.bf16.msra.mxu0 %v1892
        %1977 = vmatprep.subr.bf16.mxu0 0
        %1978 = vmatpush1.bf16.msra.mxu0 %v1895
        %1979 = vmatprep.subr.bf16.mxu0 0
        %1980 = vmatpush1.bf16.msra.mxu0 %v1898
        %1981 = vmatprep.subr.bf16.mxu0 0
        %1982 = vmatpush1.bf16.msra.mxu0 %v1901
        %1983 = vmatprep.subr.bf16.mxu0 0
        %1984 = vmatpush1.bf16.msra.mxu0 0
        %1985 = vmatprep.subr.bf16.mxu0 0
        %1986 = vmatpush1.bf16.msra.mxu0 0
        %1987 = vmatprep.subr.bf16.mxu0 0
        %1988 = vmatpush1.bf16.msra.mxu0 0
        %1989 = vmatprep.subr.bf16.mxu0 0
        %1990 = vmatpush1.bf16.msra.mxu0 0
        %1991 = vmatprep.subr.bf16.mxu0 0
        %1992 = vmatpush1.bf16.msra.mxu0 0
        %1993 = vmatprep.subr.bf16.mxu0 0
        %1994 = vmatpush1.bf16.msra.mxu0 0
        %1995 = vmatprep.subr.bf16.mxu0 0
        %1996 = vmatpush1.bf16.msra.mxu0 0
        %1997 = vmatprep.subr.bf16.mxu0 0
        %1998 = vmatpush1.bf16.msra.mxu0 0
        %1999 = vmatprep.mubr.bf16.mxu0 0
        %2000 = vmatmul.mubr.bf16.gmra.mrb[0].mxu0 %v1748
        %v2001 = vpop.f32.mrb[0].mxu0
        %v2002 = vadd.f32 %v1794, %v2001
        %v2003 = vpop.f32.mrb[0].mxu0
        %v2004 = vpop.f32.mrb[0].mxu0
        %v2005 = vpop.f32.mrb[0].mxu0
        %2006 = vdwg.mxu0
        %v2007 = vlaneseq
        %v2008 = vand.u32 %v2007, 127
        %v2009 = vpack.c.bf16 %v1961, %v1961
        %vm2010 = vcmp.ge.s32.totalorder %v2008, 0
        %vm2011 = vcmp.lt.s32.totalorder %v2008, 32
        %vm2012 = vmand %vm2010, %vm2011
        %v2013 = vsel %vm2012, 1.0, 0.0
        %v2014 = vmul.f32 %v1963, %v2013
        %v2015 = vpack.c.bf16 %v2014, %v2014
        %2016 = vmatprep.subr.bf16.mxu0 0
        %2017 = vmatpush1.bf16.xpose.msra.mxu0 %v2015
        %2018 = vmatprep.subr.bf16.mxu0 0
        %2019 = vmatpush1.bf16.xpose.msra.mxu0 0
        %2020 = vmatprep.subr.bf16.mxu0 0
        %2021 = vmatpush1.bf16.xpose.msra.mxu0 0
        %2022 = vmatprep.subr.bf16.mxu0 0
        %2023 = vmatpush1.bf16.xpose.msra.mxu0 0
        %2024 = vmatprep.subr.bf16.mxu0 0
        %2025 = vmatpush1.bf16.xpose.msra.mxu0 0
        %2026 = vmatprep.subr.bf16.mxu0 0
        %2027 = vmatpush1.bf16.xpose.msra.mxu0 0
        %2028 = vmatprep.subr.bf16.mxu0 0
        %2029 = vmatpush1.bf16.xpose.msra.mxu0 0
        %2030 = vmatprep.subr.bf16.mxu0 0
        %2031 = vmatpush1.bf16.xpose.msra.mxu0 0
        %2032 = vmatprep.subr.bf16.mxu0 0
        %2033 = vmatpush1.bf16.xpose.msra.mxu0 0
        %2034 = vmatprep.subr.bf16.mxu0 0
        %2035 = vmatpush1.bf16.xpose.msra.mxu0 0
        %2036 = vmatprep.subr.bf16.mxu0 0
        %2037 = vmatpush1.bf16.xpose.msra.mxu0 0
        %2038 = vmatprep.subr.bf16.mxu0 0
        %2039 = vmatpush1.bf16.xpose.msra.mxu0 0
        %2040 = vmatprep.subr.bf16.mxu0 0
        %2041 = vmatpush1.bf16.xpose.msra.mxu0 0
        %2042 = vmatprep.subr.bf16.mxu0 0
        %2043 = vmatpush1.bf16.xpose.msra.mxu0 0
        %2044 = vmatprep.subr.bf16.mxu0 0
        %2045 = vmatpush1.bf16.xpose.msra.mxu0 0
        %2046 = vmatprep.subr.bf16.mxu0 0
        %2047 = vmatpush1.bf16.xpose.msra.mxu0 0
        %2048 = vmatprep.mubr.bf16.mxu0 0
        %2049 = vmatmul.mubr.bf16.gmra.mrb[0].mxu0 %v2009
        %v2050 = vpop.f32.mrb[0].mxu0
        %v2051 = vadd.f32 0.0, %v2050
        %v2052 = vpop.f32.mrb[0].mxu0
        %v2053 = vpop.f32.mrb[0].mxu0
        %v2054 = vpop.f32.mrb[0].mxu0
        %2055 = vdwg.mxu0
        %v2056 = vmul.f32 %v2051, 0.17677669
        %vm2057 = vcmp.gt.f32.partialorder %v1349, 0.5
        %v2058 = vsel %vm2057, 1, 0
        %v2059 = vlaneseq
        %v2060 = vshrl.u32 %v2059, 7
        %v2061 = vsub.s32 0, %v2060
        %v2062 = vrot.slane %v2058, %v2061
        %vm2063 = vcmp.eq.s32.totalorder %v2062, 1
        %v2064 = vsel %vm2063, %v2056, -1e+30
        %vm2065 = vcmask 64512
        %v2066 = vsel %vm2065, %v2064, -inf
        %2067 = vmax.xlane.f32.xlu0 %v2066
        %v2068 = vpop.xlane.xlu0 %2067
        %v2069 = vsub.f32 %v2064, %v2068
        %v2070 = vmul.f32 %v2069, 1.442695
        %v2071 = vpow.pop %v2070
        %v2072 = vsel %vm2065, %v2071, 0.0
        %2073 = vadd.xlane.f32.xlu0 %v2072
        %v2074 = vpop.xlane.xlu0 %2073
        %v2075 = vrcp.pop %v2074
        %v2076 = vmul.f32 %v2071, %v2075
        %v2077 = vmul.f32 %v2002, %v2013
        %v2078 = vpack.c.bf16 %v2077, %v2077
        %v2079 = vpack.c.bf16 %v2076, %v2076
        %vm2080 = vcmp.ge.s32.totalorder %v2008, 32
        %vm2081 = vcmp.lt.s32.totalorder %v2008, 64
        %vm2082 = vmand %vm2080, %vm2081
        %v2083 = vsel %vm2082, 1.0, 0.0
        %v2084 = vmul.f32 %v1963, %v2083
        %v2085 = vpack.c.bf16 %v2084, %v2084
        %2086 = vmatprep.subr.bf16.mxu0 0
        %2087 = vmatpush1.bf16.xpose.msra.mxu0 %v2085
        %2088 = vmatprep.subr.bf16.mxu0 0
        %2089 = vmatpush1.bf16.xpose.msra.mxu0 0
        %2090 = vmatprep.subr.bf16.mxu0 0
        %2091 = vmatpush1.bf16.xpose.msra.mxu0 0
        %2092 = vmatprep.subr.bf16.mxu0 0
        %2093 = vmatpush1.bf16.xpose.msra.mxu0 0
        %2094 = vmatprep.subr.bf16.mxu0 0
        %2095 = vmatpush1.bf16.xpose.msra.mxu0 0
        %2096 = vmatprep.subr.bf16.mxu0 0
        %2097 = vmatpush1.bf16.xpose.msra.mxu0 0
        %2098 = vmatprep.subr.bf16.mxu0 0
        %2099 = vmatpush1.bf16.xpose.msra.mxu0 0
        %2100 = vmatprep.subr.bf16.mxu0 0
        %2101 = vmatpush1.bf16.xpose.msra.mxu0 0
        %2102 = vmatprep.subr.bf16.mxu0 0
        %2103 = vmatpush1.bf16.xpose.msra.mxu0 0
        %2104 = vmatprep.subr.bf16.mxu0 0
        %2105 = vmatpush1.bf16.xpose.msra.mxu0 0
        %2106 = vmatprep.subr.bf16.mxu0 0
        %2107 = vmatpush1.bf16.xpose.msra.mxu0 0
        %2108 = vmatprep.subr.bf16.mxu0 0
        %2109 = vmatpush1.bf16.xpose.msra.mxu0 0
        %2110 = vmatprep.subr.bf16.mxu0 0
        %2111 = vmatpush1.bf16.xpose.msra.mxu0 0
        %2112 = vmatprep.subr.bf16.mxu0 0
        %2113 = vmatpush1.bf16.xpose.msra.mxu0 0
        %2114 = vmatprep.subr.bf16.mxu0 0
        %2115 = vmatpush1.bf16.xpose.msra.mxu0 0
        %2116 = vmatprep.subr.bf16.mxu0 0
        %2117 = vmatpush1.bf16.xpose.msra.mxu0 0
        %2118 = vmatprep.mubr.bf16.mxu0 0
        %2119 = vmatmul.mubr.bf16.gmra.mrb[0].mxu0 %v2009
        %v2120 = vpop.f32.mrb[0].mxu0
        %v2121 = vadd.f32 0.0, %v2120
        %v2122 = vpop.f32.mrb[0].mxu0
        %v2123 = vpop.f32.mrb[0].mxu0
        %v2124 = vpop.f32.mrb[0].mxu0
        %2125 = vdwg.mxu0
        %v2126 = vmul.f32 %v2121, 0.17677669
        %v2127 = vsel %vm2063, %v2126, -1e+30
        %v2128 = vsel %vm2065, %v2127, -inf
        %2129 = vmax.xlane.f32.xlu0 %v2128
        %v2130 = vpop.xlane.xlu0 %2129
        %v2131 = vsub.f32 %v2127, %v2130
        %v2132 = vmul.f32 %v2131, 1.442695
        %v2133 = vpow.pop %v2132
        %v2134 = vsel %vm2065, %v2133, 0.0
        %2135 = vadd.xlane.f32.xlu0 %v2134
        %v2136 = vpop.xlane.xlu0 %2135
        %v2137 = vrcp.pop %v2136
        %v2138 = vmul.f32 %v2133, %v2137
        %v2139 = vmul.f32 %v2002, %v2083
        %v2140 = vpack.c.bf16 %v2139, %v2139
        %v2141 = vpack.c.bf16 %v2138, %v2138
        %v2143 = vsel %vm2065, %v2141, 0
        %vm2145 = vcmask 1043456
        %v2147 = vsel %vm2145, %v2140, 0
        %2149 = vmatprep.subr.bf16.mxu0 0
        %2150 = vmatpush1.bf16.msra.mxu0 %v2147
        %2151 = vmatprep.subr.bf16.mxu0 0
        %2152 = vmatpush1.bf16.msra.mxu0 0
        %2153 = vmatprep.subr.bf16.mxu0 0
        %2154 = vmatpush1.bf16.msra.mxu0 0
        %2155 = vmatprep.subr.bf16.mxu0 0
        %2156 = vmatpush1.bf16.msra.mxu0 0
        %2157 = vmatprep.subr.bf16.mxu0 0
        %2158 = vmatpush1.bf16.msra.mxu0 0
        %2159 = vmatprep.subr.bf16.mxu0 0
        %2160 = vmatpush1.bf16.msra.mxu0 0
        %2161 = vmatprep.subr.bf16.mxu0 0
        %2162 = vmatpush1.bf16.msra.mxu0 0
        %2163 = vmatprep.subr.bf16.mxu0 0
        %2164 = vmatpush1.bf16.msra.mxu0 0
        %2165 = vmatprep.subr.bf16.mxu0 0
        %2166 = vmatpush1.bf16.msra.mxu0 0
        %2167 = vmatprep.subr.bf16.mxu0 0
        %2168 = vmatpush1.bf16.msra.mxu0 0
        %2169 = vmatprep.subr.bf16.mxu0 0
        %2170 = vmatpush1.bf16.msra.mxu0 0
        %2171 = vmatprep.subr.bf16.mxu0 0
        %2172 = vmatpush1.bf16.msra.mxu0 0
        %2173 = vmatprep.subr.bf16.mxu0 0
        %2174 = vmatpush1.bf16.msra.mxu0 0
        %2175 = vmatprep.subr.bf16.mxu0 0
        %2176 = vmatpush1.bf16.msra.mxu0 0
        %2177 = vmatprep.subr.bf16.mxu0 0
        %2178 = vmatpush1.bf16.msra.mxu0 0
        %2179 = vmatprep.subr.bf16.mxu0 0
        %2180 = vmatpush1.bf16.msra.mxu0 0
        %2181 = vmatprep.mubr.bf16.mxu0 0
        %2182 = vmatmul.mubr.bf16.gmra.mrb[0].mxu0 %v2143
        %v2183 = vpop.f32.mrb[0].mxu0
        %v2184 = vadd.f32 0.0, %v2183
        %v2185 = vpop.f32.mrb[0].mxu0
        %v2186 = vpop.f32.mrb[0].mxu0
        %v2187 = vpop.f32.mrb[0].mxu0
        %2188 = vdwg.mxu0
        %v2190 = vsel %vm2065, %v2079, 0
        %v2193 = vsel %vm2145, %v2078, 0
        %2195 = vmatprep.subr.bf16.mxu0 0
        %2196 = vmatpush1.bf16.msra.mxu0 %v2193
        %2197 = vmatprep.subr.bf16.mxu0 0
        %2198 = vmatpush1.bf16.msra.mxu0 0
        %2199 = vmatprep.subr.bf16.mxu0 0
        %2200 = vmatpush1.bf16.msra.mxu0 0
        %2201 = vmatprep.subr.bf16.mxu0 0
        %2202 = vmatpush1.bf16.msra.mxu0 0
        %2203 = vmatprep.subr.bf16.mxu0 0
        %2204 = vmatpush1.bf16.msra.mxu0 0
        %2205 = vmatprep.subr.bf16.mxu0 0
        %2206 = vmatpush1.bf16.msra.mxu0 0
        %2207 = vmatprep.subr.bf16.mxu0 0
        %2208 = vmatpush1.bf16.msra.mxu0 0
        %2209 = vmatprep.subr.bf16.mxu0 0
        %2210 = vmatpush1.bf16.msra.mxu0 0
        %2211 = vmatprep.subr.bf16.mxu0 0
        %2212 = vmatpush1.bf16.msra.mxu0 0
        %2213 = vmatprep.subr.bf16.mxu0 0
        %2214 = vmatpush1.bf16.msra.mxu0 0
        %2215 = vmatprep.subr.bf16.mxu0 0
        %2216 = vmatpush1.bf16.msra.mxu0 0
        %2217 = vmatprep.subr.bf16.mxu0 0
        %2218 = vmatpush1.bf16.msra.mxu0 0
        %2219 = vmatprep.subr.bf16.mxu0 0
        %2220 = vmatpush1.bf16.msra.mxu0 0
        %2221 = vmatprep.subr.bf16.mxu0 0
        %2222 = vmatpush1.bf16.msra.mxu0 0
        %2223 = vmatprep.subr.bf16.mxu0 0
        %2224 = vmatpush1.bf16.msra.mxu0 0
        %2225 = vmatprep.subr.bf16.mxu0 0
        %2226 = vmatpush1.bf16.msra.mxu0 0
        %2227 = vmatprep.mubr.bf16.mxu0 0
        %2228 = vmatmul.mubr.bf16.gmra.mrb[0].mxu0 %v2190
        %v2229 = vpop.f32.mrb[0].mxu0
        %v2230 = vadd.f32 %v2184, %v2229
        %v2231 = vpop.f32.mrb[0].mxu0
        %v2232 = vpop.f32.mrb[0].mxu0
        %v2233 = vpop.f32.mrb[0].mxu0
        %2234 = vdwg.mxu0
        %vm2235 = vcmp.ge.s32.totalorder %v2008, 64
        %vm2236 = vcmp.lt.s32.totalorder %v2008, 96
        %vm2237 = vmand %vm2235, %vm2236
        %v2238 = vsel %vm2237, 1.0, 0.0
        %v2239 = vmul.f32 %v1963, %v2238
        %v2240 = vpack.c.bf16 %v2239, %v2239
        %2241 = vmatprep.subr.bf16.mxu0 0
        %2242 = vmatpush1.bf16.xpose.msra.mxu0 %v2240
        %2243 = vmatprep.subr.bf16.mxu0 0
        %2244 = vmatpush1.bf16.xpose.msra.mxu0 0
        %2245 = vmatprep.subr.bf16.mxu0 0
        %2246 = vmatpush1.bf16.xpose.msra.mxu0 0
        %2247 = vmatprep.subr.bf16.mxu0 0
        %2248 = vmatpush1.bf16.xpose.msra.mxu0 0
        %2249 = vmatprep.subr.bf16.mxu0 0
        %2250 = vmatpush1.bf16.xpose.msra.mxu0 0
        %2251 = vmatprep.subr.bf16.mxu0 0
        %2252 = vmatpush1.bf16.xpose.msra.mxu0 0
        %2253 = vmatprep.subr.bf16.mxu0 0
        %2254 = vmatpush1.bf16.xpose.msra.mxu0 0
        %2255 = vmatprep.subr.bf16.mxu0 0
        %2256 = vmatpush1.bf16.xpose.msra.mxu0 0
        %2257 = vmatprep.subr.bf16.mxu0 0
        %2258 = vmatpush1.bf16.xpose.msra.mxu0 0
        %2259 = vmatprep.subr.bf16.mxu0 0
        %2260 = vmatpush1.bf16.xpose.msra.mxu0 0
        %2261 = vmatprep.subr.bf16.mxu0 0
        %2262 = vmatpush1.bf16.xpose.msra.mxu0 0
        %2263 = vmatprep.subr.bf16.mxu0 0
        %2264 = vmatpush1.bf16.xpose.msra.mxu0 0
        %2265 = vmatprep.subr.bf16.mxu0 0
        %2266 = vmatpush1.bf16.xpose.msra.mxu0 0
        %2267 = vmatprep.subr.bf16.mxu0 0
        %2268 = vmatpush1.bf16.xpose.msra.mxu0 0
        %2269 = vmatprep.subr.bf16.mxu0 0
        %2270 = vmatpush1.bf16.xpose.msra.mxu0 0
        %2271 = vmatprep.subr.bf16.mxu0 0
        %2272 = vmatpush1.bf16.xpose.msra.mxu0 0
        %2273 = vmatprep.mubr.bf16.mxu0 0
        %2274 = vmatmul.mubr.bf16.gmra.mrb[0].mxu0 %v2009
        %v2275 = vpop.f32.mrb[0].mxu0
        %v2276 = vadd.f32 0.0, %v2275
        %v2277 = vpop.f32.mrb[0].mxu0
        %v2278 = vpop.f32.mrb[0].mxu0
        %v2279 = vpop.f32.mrb[0].mxu0
        %2280 = vdwg.mxu0
        %v2281 = vmul.f32 %v2276, 0.17677669
        %v2282 = vsel %vm2063, %v2281, -1e+30
        %v2283 = vsel %vm2065, %v2282, -inf
        %2284 = vmax.xlane.f32.xlu0 %v2283
        %v2285 = vpop.xlane.xlu0 %2284
        %v2286 = vsub.f32 %v2282, %v2285
        %v2287 = vmul.f32 %v2286, 1.442695
        %v2288 = vpow.pop %v2287
        %v2289 = vsel %vm2065, %v2288, 0.0
        %2290 = vadd.xlane.f32.xlu0 %v2289
        %v2291 = vpop.xlane.xlu0 %2290
        %v2292 = vrcp.pop %v2291
        %v2293 = vmul.f32 %v2288, %v2292
        %v2294 = vmul.f32 %v2002, %v2238
        %v2295 = vpack.c.bf16 %v2294, %v2294
        %v2296 = vpack.c.bf16 %v2293, %v2293
        %v2298 = vsel %vm2065, %v2296, 0
        %v2301 = vsel %vm2145, %v2295, 0
        %2303 = vmatprep.subr.bf16.mxu0 0
        %2304 = vmatpush1.bf16.msra.mxu0 %v2301
        %2305 = vmatprep.subr.bf16.mxu0 0
        %2306 = vmatpush1.bf16.msra.mxu0 0
        %2307 = vmatprep.subr.bf16.mxu0 0
        %2308 = vmatpush1.bf16.msra.mxu0 0
        %2309 = vmatprep.subr.bf16.mxu0 0
        %2310 = vmatpush1.bf16.msra.mxu0 0
        %2311 = vmatprep.subr.bf16.mxu0 0
        %2312 = vmatpush1.bf16.msra.mxu0 0
        %2313 = vmatprep.subr.bf16.mxu0 0
        %2314 = vmatpush1.bf16.msra.mxu0 0
        %2315 = vmatprep.subr.bf16.mxu0 0
        %2316 = vmatpush1.bf16.msra.mxu0 0
        %2317 = vmatprep.subr.bf16.mxu0 0
        %2318 = vmatpush1.bf16.msra.mxu0 0
        %2319 = vmatprep.subr.bf16.mxu0 0
        %2320 = vmatpush1.bf16.msra.mxu0 0
        %2321 = vmatprep.subr.bf16.mxu0 0
        %2322 = vmatpush1.bf16.msra.mxu0 0
        %2323 = vmatprep.subr.bf16.mxu0 0
        %2324 = vmatpush1.bf16.msra.mxu0 0
        %2325 = vmatprep.subr.bf16.mxu0 0
        %2326 = vmatpush1.bf16.msra.mxu0 0
        %2327 = vmatprep.subr.bf16.mxu0 0
        %2328 = vmatpush1.bf16.msra.mxu0 0
        %2329 = vmatprep.subr.bf16.mxu0 0
        %2330 = vmatpush1.bf16.msra.mxu0 0
        %2331 = vmatprep.subr.bf16.mxu0 0
        %2332 = vmatpush1.bf16.msra.mxu0 0
        %2333 = vmatprep.subr.bf16.mxu0 0
        %2334 = vmatpush1.bf16.msra.mxu0 0
        %2335 = vmatprep.mubr.bf16.mxu0 0
        %2336 = vmatmul.mubr.bf16.gmra.mrb[0].mxu0 %v2298
        %v2337 = vpop.f32.mrb[0].mxu0
        %v2338 = vadd.f32 0.0, %v2337
        %v2339 = vpop.f32.mrb[0].mxu0
        %v2340 = vpop.f32.mrb[0].mxu0
        %v2341 = vpop.f32.mrb[0].mxu0
        %2342 = vdwg.mxu0
        %v2343 = vadd.f32 %v2230, %v2338
        %vm2344 = vcmp.ge.s32.totalorder %v2008, 96
        %vm2345 = vcmp.lt.s32.totalorder %v2008, 128
        %vm2346 = vmand %vm2344, %vm2345
        %v2347 = vsel %vm2346, 1.0, 0.0
        %v2348 = vmul.f32 %v1963, %v2347
        %v2349 = vpack.c.bf16 %v2348, %v2348
        %2350 = vmatprep.subr.bf16.mxu0 0
        %2351 = vmatpush1.bf16.xpose.msra.mxu0 %v2349
        %2352 = vmatprep.subr.bf16.mxu0 0
        %2353 = vmatpush1.bf16.xpose.msra.mxu0 0
        %2354 = vmatprep.subr.bf16.mxu0 0
        %2355 = vmatpush1.bf16.xpose.msra.mxu0 0
        %2356 = vmatprep.subr.bf16.mxu0 0
        %2357 = vmatpush1.bf16.xpose.msra.mxu0 0
        %2358 = vmatprep.subr.bf16.mxu0 0
        %2359 = vmatpush1.bf16.xpose.msra.mxu0 0
        %2360 = vmatprep.subr.bf16.mxu0 0
        %2361 = vmatpush1.bf16.xpose.msra.mxu0 0
        %2362 = vmatprep.subr.bf16.mxu0 0
        %2363 = vmatpush1.bf16.xpose.msra.mxu0 0
        %2364 = vmatprep.subr.bf16.mxu0 0
        %2365 = vmatpush1.bf16.xpose.msra.mxu0 0
        %2366 = vmatprep.subr.bf16.mxu0 0
        %2367 = vmatpush1.bf16.xpose.msra.mxu0 0
        %2368 = vmatprep.subr.bf16.mxu0 0
        %2369 = vmatpush1.bf16.xpose.msra.mxu0 0
        %2370 = vmatprep.subr.bf16.mxu0 0
        %2371 = vmatpush1.bf16.xpose.msra.mxu0 0
        %2372 = vmatprep.subr.bf16.mxu0 0
        %2373 = vmatpush1.bf16.xpose.msra.mxu0 0
        %2374 = vmatprep.subr.bf16.mxu0 0
        %2375 = vmatpush1.bf16.xpose.msra.mxu0 0
        %2376 = vmatprep.subr.bf16.mxu0 0
        %2377 = vmatpush1.bf16.xpose.msra.mxu0 0
        %2378 = vmatprep.subr.bf16.mxu0 0
        %2379 = vmatpush1.bf16.xpose.msra.mxu0 0
        %2380 = vmatprep.subr.bf16.mxu0 0
        %2381 = vmatpush1.bf16.xpose.msra.mxu0 0
        %2382 = vmatprep.mubr.bf16.mxu0 0
        %2383 = vmatmul.mubr.bf16.gmra.mrb[0].mxu0 %v2009
        %v2384 = vpop.f32.mrb[0].mxu0
        %v2385 = vadd.f32 0.0, %v2384
        %v2386 = vpop.f32.mrb[0].mxu0
        %v2387 = vpop.f32.mrb[0].mxu0
        %v2388 = vpop.f32.mrb[0].mxu0
        %2389 = vdwg.mxu0
        %v2390 = vmul.f32 %v2385, 0.17677669
        %v2391 = vsel %vm2063, %v2390, -1e+30
        %v2392 = vsel %vm2065, %v2391, -inf
        %2393 = vmax.xlane.f32.xlu0 %v2392
        %v2394 = vpop.xlane.xlu0 %2393
        %v2395 = vsub.f32 %v2391, %v2394
        %v2396 = vmul.f32 %v2395, 1.442695
        %v2397 = vpow.pop %v2396
        %v2398 = vsel %vm2065, %v2397, 0.0
        %2399 = vadd.xlane.f32.xlu0 %v2398
        %v2400 = vpop.xlane.xlu0 %2399
        %v2401 = vrcp.pop %v2400
        %v2402 = vmul.f32 %v2397, %v2401
        %v2403 = vmul.f32 %v2002, %v2347
        %v2404 = vpack.c.bf16 %v2403, %v2403
        %v2405 = vpack.c.bf16 %v2402, %v2402
        %v2407 = vsel %vm2065, %v2405, 0
        %v2410 = vsel %vm2145, %v2404, 0
        %2412 = vmatprep.subr.bf16.mxu0 0
        %2413 = vmatpush1.bf16.msra.mxu0 %v2410
        %2414 = vmatprep.subr.bf16.mxu0 0
        %2415 = vmatpush1.bf16.msra.mxu0 0
        %2416 = vmatprep.subr.bf16.mxu0 0
        %2417 = vmatpush1.bf16.msra.mxu0 0
        %2418 = vmatprep.subr.bf16.mxu0 0
        %2419 = vmatpush1.bf16.msra.mxu0 0
        %2420 = vmatprep.subr.bf16.mxu0 0
        %2421 = vmatpush1.bf16.msra.mxu0 0
        %2422 = vmatprep.subr.bf16.mxu0 0
        %2423 = vmatpush1.bf16.msra.mxu0 0
        %2424 = vmatprep.subr.bf16.mxu0 0
        %2425 = vmatpush1.bf16.msra.mxu0 0
        %2426 = vmatprep.subr.bf16.mxu0 0
        %2427 = vmatpush1.bf16.msra.mxu0 0
        %2428 = vmatprep.subr.bf16.mxu0 0
        %2429 = vmatpush1.bf16.msra.mxu0 0
        %2430 = vmatprep.subr.bf16.mxu0 0
        %2431 = vmatpush1.bf16.msra.mxu0 0
        %2432 = vmatprep.subr.bf16.mxu0 0
        %2433 = vmatpush1.bf16.msra.mxu0 0
        %2434 = vmatprep.subr.bf16.mxu0 0
        %2435 = vmatpush1.bf16.msra.mxu0 0
        %2436 = vmatprep.subr.bf16.mxu0 0
        %2437 = vmatpush1.bf16.msra.mxu0 0
        %2438 = vmatprep.subr.bf16.mxu0 0
        %2439 = vmatpush1.bf16.msra.mxu0 0
        %2440 = vmatprep.subr.bf16.mxu0 0
        %2441 = vmatpush1.bf16.msra.mxu0 0
        %2442 = vmatprep.subr.bf16.mxu0 0
        %2443 = vmatpush1.bf16.msra.mxu0 0
        %2444 = vmatprep.mubr.bf16.mxu0 0
        %2445 = vmatmul.mubr.bf16.gmra.mrb[0].mxu0 %v2407
        %v2446 = vpop.f32.mrb[0].mxu0
        %v2447 = vadd.f32 0.0, %v2446
        %v2448 = vpop.f32.mrb[0].mxu0
        %v2449 = vpop.f32.mrb[0].mxu0
        %v2450 = vpop.f32.mrb[0].mxu0
        %2451 = vdwg.mxu0
        %v2452 = vadd.f32 %v2343, %v2447
        %v2453 = vpack.c.bf16 %v2452, %v2452
        %v2454 = vld [vmem:[%s27] sm:$0xf]
        %v2455 = vld [vmem:[%s27 + $0x4] sm:$0xf]
        %v2456 = vld [vmem:[%s27 + $0x8] sm:$0xf]
        %v2457 = vld [vmem:[%s27 + $0xc] sm:$0xf]
        %v2458 = vld [vmem:[%s27 + $0x10] sm:$0xf]
        %v2459 = vld [vmem:[%s27 + $0x14] sm:$0xf]
        %v2460 = vld [vmem:[%s27 + $0x18] sm:$0xf]
        %v2461 = vld [vmem:[%s27 + $0x1c] sm:$0xf]
        %v2462 = vld [vmem:[%s27 + $0x20] sm:$0xf]
        %v2463 = vld [vmem:[%s27 + $0x24] sm:$0xf]
        %v2464 = vld [vmem:[%s27 + $0x28] sm:$0xf]
        %v2465 = vld [vmem:[%s27 + $0x2c] sm:$0xf]
        %v2466 = vld [vmem:[%s27 + $0x30] sm:$0xf]
        %v2467 = vld [vmem:[%s27 + $0x34] sm:$0xf]
        %v2468 = vld [vmem:[%s27 + $0x38] sm:$0xf]
        %v2469 = vld [vmem:[%s27 + $0x3c] sm:$0xf]
        %v2470 = vld [vmem:[#allocation13] sm:$0x1]
        %v2472 = vlaneseq
        %v2473 = vshrl.u32 %v2472, 7
        %v2474 = vsub.s32 0, %v2473
        %v2475 = vrot.slane %v2470, %v2474
        %v2493 = vunpack.c.l.b16 %v2454
        %v2494 = vunpack.c.l.b16 %v2455
        %v2495 = vunpack.c.l.b16 %v2456
        %v2496 = vunpack.c.l.b16 %v2457
        %v2497 = vunpack.c.l.b16 %v2458
        %v2498 = vunpack.c.l.b16 %v2459
        %v2499 = vunpack.c.l.b16 %v2460
        %v2500 = vunpack.c.l.b16 %v2461
        %v2501 = vunpack.c.l.b16 %v2462
        %v2502 = vunpack.c.l.b16 %v2463
        %v2503 = vunpack.c.l.b16 %v2464
        %v2504 = vunpack.c.l.b16 %v2465
        %v2505 = vunpack.c.l.b16 %v2466
        %v2506 = vunpack.c.l.b16 %v2467
        %v2507 = vunpack.c.l.b16 %v2468
        %v2508 = vunpack.c.l.b16 %v2469
        %v2509 = vpack.c.b16 %v2494, %v2493
        %v2510 = vpack.c.b16 %v2496, %v2495
        %v2511 = vpack.c.b16 %v2498, %v2497
        %v2512 = vpack.c.b16 %v2500, %v2499
        %v2513 = vpack.c.b16 %v2502, %v2501
        %v2514 = vpack.c.b16 %v2504, %v2503
        %v2515 = vpack.c.b16 %v2506, %v2505
        %v2516 = vpack.c.b16 %v2508, %v2507
        %2525 = vmatprep.subr.bf16.mxu0 0
        %2526 = vmatpush1.bf16.msra.mxu0 %v2509
        %2527 = vmatprep.subr.bf16.mxu0 0
        %2528 = vmatpush1.bf16.msra.mxu0 %v2510
        %2529 = vmatprep.subr.bf16.mxu0 0
        %2530 = vmatpush1.bf16.msra.mxu0 %v2511
        %2531 = vmatprep.subr.bf16.mxu0 0
        %2532 = vmatpush1.bf16.msra.mxu0 %v2512
        %2533 = vmatprep.subr.bf16.mxu0 0
        %2534 = vmatpush1.bf16.msra.mxu0 %v2513
        %2535 = vmatprep.subr.bf16.mxu0 0
        %2536 = vmatpush1.bf16.msra.mxu0 %v2514
        %2537 = vmatprep.subr.bf16.mxu0 0
        %2538 = vmatpush1.bf16.msra.mxu0 %v2515
        %2539 = vmatprep.subr.bf16.mxu0 0
        %2540 = vmatpush1.bf16.msra.mxu0 %v2516
        %2541 = vmatprep.subr.bf16.mxu0 0
        %2542 = vmatpush1.bf16.msra.mxu0 0
        %2543 = vmatprep.subr.bf16.mxu0 0
        %2544 = vmatpush1.bf16.msra.mxu0 0
        %2545 = vmatprep.subr.bf16.mxu0 0
        %2546 = vmatpush1.bf16.msra.mxu0 0
        %2547 = vmatprep.subr.bf16.mxu0 0
        %2548 = vmatpush1.bf16.msra.mxu0 0
        %2549 = vmatprep.subr.bf16.mxu0 0
        %2550 = vmatpush1.bf16.msra.mxu0 0
        %2551 = vmatprep.subr.bf16.mxu0 0
        %2552 = vmatpush1.bf16.msra.mxu0 0
        %2553 = vmatprep.subr.bf16.mxu0 0
        %2554 = vmatpush1.bf16.msra.mxu0 0
        %2555 = vmatprep.subr.bf16.mxu0 0
        %2556 = vmatpush1.bf16.msra.mxu0 0
        %2557 = vmatprep.mubr.bf16.mxu0 0
        %2558 = vmatmul.mubr.bf16.gmra.mrb[0].mxu0 %v2453
        %v2559 = vpop.f32.mrb[0].mxu0
        %v2560 = vadd.f32 %v2475, %v2559
        %v2561 = vpop.f32.mrb[0].mxu0
        %v2562 = vpop.f32.mrb[0].mxu0
        %v2563 = vpop.f32.mrb[0].mxu0
        %2564 = vdwg.mxu0
        %2566 = vset.pattern.permute.xlu0 0
        %2567 = vperm.xlu0 %2566, %v1348
        %v2568 = vpop.permute.xlu0 %2567
        %v2570 = vmul.f32 %v2560, %v2568
        %v2571 = vadd.f32 %v1720, %v2570
        %2572 = vadd.xlane.f32.xlu0 %v2571
        %v2573 = vpop.xlane.xlu0 %2572
        %v2574 = vmul.f32 %v2573, %v1352
        %v2575 = vsub.f32 %v2571, %v2574
        %v2576 = vmul.f32 %v2575, %v2575
        %2577 = vadd.xlane.f32.xlu0 %v2576
        %v2578 = vpop.xlane.xlu0 %2577
        %v2579 = vmul.f32 %v2578, %v1352
        %v2580 = vadd.f32 %v2579, 1e-05
        %v2581 = vrsqrt.pop %v2580
        %v2582 = vmul.f32 %v2575, %v2581
        %v2583 = vld [vmem:[#allocation15] sm:$0x1]
        %v2585 = vlaneseq
        %v2586 = vshrl.u32 %v2585, 7
        %v2587 = vsub.s32 0, %v2586
        %v2588 = vrot.slane %v2583, %v2587
        %v2590 = vmul.f32 %v2582, %v2588
        %v2591 = vld [vmem:[#allocation16] sm:$0x1]
        %v2593 = vlaneseq
        %v2594 = vshrl.u32 %v2593, 7
        %v2595 = vsub.s32 0, %v2594
        %v2596 = vrot.slane %v2591, %v2595
        %v2598 = vadd.f32 %v2590, %v2596
        %v2599 = vpack.c.bf16 %v2598, %v2598
        %v2600 = vld [vmem:[%s35] sm:$0xff]
        %v2601 = vld [vmem:[%s35 + $0x8] sm:$0xff]
        %v2602 = vld [vmem:[%s35 + $0x10] sm:$0xff]
        %v2603 = vld [vmem:[%s35 + $0x18] sm:$0xff]
        %v2604 = vld [vmem:[%s35 + $0x20] sm:$0xff]
        %v2605 = vld [vmem:[%s35 + $0x28] sm:$0xff]
        %v2606 = vld [vmem:[%s35 + $0x30] sm:$0xff]
        %v2607 = vld [vmem:[%s35 + $0x38] sm:$0xff]
        %v2608 = vld [vmem:[%s35 + $0x40] sm:$0xff]
        %v2609 = vld [vmem:[%s35 + $0x48] sm:$0xff]
        %v2610 = vld [vmem:[%s35 + $0x50] sm:$0xff]
        %v2611 = vld [vmem:[%s35 + $0x58] sm:$0xff]
        %v2612 = vld [vmem:[%s35 + $0x60] sm:$0xff]
        %v2613 = vld [vmem:[%s35 + $0x68] sm:$0xff]
        %v2614 = vld [vmem:[%s35 + $0x70] sm:$0xff]
        %v2615 = vld [vmem:[%s35 + $0x78] sm:$0xff]
        %v2616 = vld [vmem:[#allocation18] sm:$0x3]
        %v2618 = vlaneseq
        %v2619 = vshrl.u32 %v2618, 7
        %v2620 = vsub.s32 0, %v2619
        %v2621 = vrot.slane %v2616, %v2620
        %v2622 = vlaneseq
        %v2623 = vshrl.u32 %v2622, 7
        %v2624 = vsub.s32 1, %v2623
        %v2625 = vrot.slane %v2616, %v2624
        %v2644 = vunpack.c.l.b16 %v2600
        %v2645 = vunpack.c.h.b16 %v2600
        %v2646 = vunpack.c.l.b16 %v2601
        %v2647 = vunpack.c.h.b16 %v2601
        %v2648 = vunpack.c.l.b16 %v2602
        %v2649 = vunpack.c.h.b16 %v2602
        %v2650 = vunpack.c.l.b16 %v2603
        %v2651 = vunpack.c.h.b16 %v2603
        %v2652 = vunpack.c.l.b16 %v2604
        %v2653 = vunpack.c.h.b16 %v2604
        %v2654 = vunpack.c.l.b16 %v2605
        %v2655 = vunpack.c.h.b16 %v2605
        %v2656 = vunpack.c.l.b16 %v2606
        %v2657 = vunpack.c.h.b16 %v2606
        %v2658 = vunpack.c.l.b16 %v2607
        %v2659 = vunpack.c.h.b16 %v2607
        %v2660 = vunpack.c.l.b16 %v2608
        %v2661 = vunpack.c.h.b16 %v2608
        %v2662 = vunpack.c.l.b16 %v2609
        %v2663 = vunpack.c.h.b16 %v2609
        %v2664 = vunpack.c.l.b16 %v2610
        %v2665 = vunpack.c.h.b16 %v2610
        %v2666 = vunpack.c.l.b16 %v2611
        %v2667 = vunpack.c.h.b16 %v2611
        %v2668 = vunpack.c.l.b16 %v2612
        %v2669 = vunpack.c.h.b16 %v2612
        %v2670 = vunpack.c.l.b16 %v2613
        %v2671 = vunpack.c.h.b16 %v2613
        %v2672 = vunpack.c.l.b16 %v2614
        %v2673 = vunpack.c.h.b16 %v2614
        %v2674 = vunpack.c.l.b16 %v2615
        %v2675 = vunpack.c.h.b16 %v2615
        %v2676 = vpack.c.b16 %v2646, %v2644
        %v2677 = vpack.c.b16 %v2647, %v2645
        %v2678 = vpack.c.b16 %v2650, %v2648
        %v2679 = vpack.c.b16 %v2651, %v2649
        %v2680 = vpack.c.b16 %v2654, %v2652
        %v2681 = vpack.c.b16 %v2655, %v2653
        %v2682 = vpack.c.b16 %v2658, %v2656
        %v2683 = vpack.c.b16 %v2659, %v2657
        %v2684 = vpack.c.b16 %v2662, %v2660
        %v2685 = vpack.c.b16 %v2663, %v2661
        %v2686 = vpack.c.b16 %v2666, %v2664
        %v2687 = vpack.c.b16 %v2667, %v2665
        %v2688 = vpack.c.b16 %v2670, %v2668
        %v2689 = vpack.c.b16 %v2671, %v2669
        %v2690 = vpack.c.b16 %v2674, %v2672
        %v2691 = vpack.c.b16 %v2675, %v2673
        %2708 = vmatprep.subr.bf16.mxu0 %v2677
        %2709 = vmatpush1.bf16.msra.mxu0 %v2676
        %2710 = vmatprep.subr.bf16.mxu0 %v2679
        %2711 = vmatpush1.bf16.msra.mxu0 %v2678
        %2712 = vmatprep.subr.bf16.mxu0 %v2681
        %2713 = vmatpush1.bf16.msra.mxu0 %v2680
        %2714 = vmatprep.subr.bf16.mxu0 %v2683
        %2715 = vmatpush1.bf16.msra.mxu0 %v2682
        %2716 = vmatprep.subr.bf16.mxu0 %v2685
        %2717 = vmatpush1.bf16.msra.mxu0 %v2684
        %2718 = vmatprep.subr.bf16.mxu0 %v2687
        %2719 = vmatpush1.bf16.msra.mxu0 %v2686
        %2720 = vmatprep.subr.bf16.mxu0 %v2689
        %2721 = vmatpush1.bf16.msra.mxu0 %v2688
        %2722 = vmatprep.subr.bf16.mxu0 %v2691
        %2723 = vmatpush1.bf16.msra.mxu0 %v2690
        %2724 = vmatprep.subr.bf16.mxu0 0
        %2725 = vmatpush1.bf16.msra.mxu0 0
        %2726 = vmatprep.subr.bf16.mxu0 0
        %2727 = vmatpush1.bf16.msra.mxu0 0
        %2728 = vmatprep.subr.bf16.mxu0 0
        %2729 = vmatpush1.bf16.msra.mxu0 0
        %2730 = vmatprep.subr.bf16.mxu0 0
        %2731 = vmatpush1.bf16.msra.mxu0 0
        %2732 = vmatprep.subr.bf16.mxu0 0
        %2733 = vmatpush1.bf16.msra.mxu0 0
        %2734 = vmatprep.subr.bf16.mxu0 0
        %2735 = vmatpush1.bf16.msra.mxu0 0
        %2736 = vmatprep.subr.bf16.mxu0 0
        %2737 = vmatpush1.bf16.msra.mxu0 0
        %2738 = vmatprep.subr.bf16.mxu0 0
        %2739 = vmatpush1.bf16.msra.mxu0 0
        %2740 = vmatprep.mubr.bf16.mxu0 0
        %2741 = vmatmul.mubr.bf16.gmra.mrb[0].mxu0 %v2599
        %v2742 = vpop.f32.mrb[0].mxu0
        %v2743 = vadd.f32 %v2621, %v2742
        %v2744 = vpop.f32.mrb[0].mxu0
        %v2745 = vadd.f32 %v2625, %v2744
        %v2746 = vpop.f32.mrb[0].mxu0
        %v2747 = vpop.f32.mrb[0].mxu0
        %2748 = vdwg.mxu0
        %v2749 = vxor.u32 %v2745, 2147483648
        %v2750 = vmul.f32 %v2749, 1.442695
        %v2751 = vpow.pop %v2750
        %v2752 = vadd.f32 %v2751, 1.0
        %v2753 = vrcp.pop %v2752
        %v2754 = vmul.f32 1.0, %v2753
        %v2755 = vmul.f32 %v2743, %v2754
        %v2756 = vmul.f32 %v2755, %v2568
        %v2758 = vrot.slane %v2756, 5
        %vm2760 = vcmask 1042432
        %v2761 = vsel %vm2760, 0.0, %v2758
        %v2762 = vsel %vm2760, %v2758, 0.0
        %v2763 = vld [vmem:[#allocation19] sm:$0xff]
        %v2764 = vld [vmem:[#allocation21] sm:$0x1]
        %v2766 = vlaneseq
        %v2767 = vshrl.u32 %v2766, 7
        %v2768 = vsub.s32 0, %v2767
        %v2769 = vrot.slane %v2764, %v2768
        %v2771 = vadd.f32 %v2769, 0.0
        %v2772 = vlaneseq
        %v2773 = vshrl.u32 %v2772, 7
        %v2774 = vsub.s32 0, %v2773
        %v2775 = vrot.slane %v2763, %v2774
        %v2776 = vmul.f32 %v2761, %v2775
        %v2777 = vadd.f32 %v2771, %v2776
        %v2778 = vlaneseq
        %v2779 = vshrl.u32 %v2778, 7
        %v2780 = vsub.s32 1, %v2779
        %v2781 = vrot.slane %v2763, %v2780
        %v2782 = vmul.f32 %v2761, %v2781
        %v2783 = vmul.f32 %v2762, %v2781
        %vm2786 = vcmask 1046528
        %v2787 = vrot.slane %v2782, 1
        %v2788 = vrot.slane %v2783, 1
        %v2789 = vsel %vm2786, %v2787, %v2788
        %v2791 = vadd.f32 %v2777, %v2789
        %v2792 = vlaneseq
        %v2793 = vshrl.u32 %v2792, 7
        %v2794 = vsub.s32 2, %v2793
        %v2795 = vrot.slane %v2763, %v2794
        %v2796 = vmul.f32 %v2761, %v2795
        %v2797 = vmul.f32 %v2762, %v2795
        %vm2800 = vcmask 1045504
        %v2801 = vrot.slane %v2796, 2
        %v2802 = vrot.slane %v2797, 2
        %v2803 = vsel %vm2800, %v2801, %v2802
        %v2805 = vadd.f32 %v2791, %v2803
        %v2806 = vlaneseq
        %v2807 = vshrl.u32 %v2806, 7
        %v2808 = vsub.s32 3, %v2807
        %v2809 = vrot.slane %v2763, %v2808
        %v2810 = vmul.f32 %v2761, %v2809
        %v2811 = vmul.f32 %v2762, %v2809
        %vm2814 = vcmask 1044480
        %v2815 = vrot.slane %v2810, 3
        %v2816 = vrot.slane %v2811, 3
        %v2817 = vsel %vm2814, %v2815, %v2816
        %v2819 = vadd.f32 %v2805, %v2817
        %v2820 = vlaneseq
        %v2821 = vshrl.u32 %v2820, 7
        %v2822 = vsub.s32 4, %v2821
        %v2823 = vrot.slane %v2763, %v2822
        %v2824 = vmul.f32 %v2761, %v2823
        %v2825 = vmul.f32 %v2762, %v2823
        %v2828 = vrot.slane %v2824, 4
        %v2829 = vrot.slane %v2825, 4
        %v2830 = vsel %vm2145, %v2828, %v2829
        %v2832 = vadd.f32 %v2819, %v2830
        %v2833 = vlaneseq
        %v2834 = vshrl.u32 %v2833, 7
        %v2835 = vsub.s32 5, %v2834
        %v2836 = vrot.slane %v2763, %v2835
        %v2837 = vmul.f32 %v2761, %v2836
        %v2838 = vmul.f32 %v2762, %v2836
        %v2841 = vrot.slane %v2837, 5
        %v2842 = vrot.slane %v2838, 5
        %v2843 = vsel %vm2760, %v2841, %v2842
        %v2845 = vadd.f32 %v2832, %v2843
        %v2846 = vlaneseq
        %v2847 = vshrl.u32 %v2846, 7
        %v2848 = vsub.s32 6, %v2847
        %v2849 = vrot.slane %v2763, %v2848
        %v2850 = vmul.f32 %v2761, %v2849
        %v2851 = vmul.f32 %v2762, %v2849
        %vm2854 = vcmask 1041408
        %v2855 = vrot.slane %v2850, 6
        %v2856 = vrot.slane %v2851, 6
        %v2857 = vsel %vm2854, %v2855, %v2856
        %v2859 = vadd.f32 %v2845, %v2857
        %2860 = vadd.xlane.f32.xlu0 %v2859
        %v2861 = vpop.xlane.xlu0 %2860
        %v2862 = vmul.f32 %v2861, %v1352
        %v2863 = vsub.f32 %v2859, %v2862
        %v2864 = vmul.f32 %v2863, %v2863
        %2865 = vadd.xlane.f32.xlu0 %v2864
        %v2866 = vpop.xlane.xlu0 %2865
        %v2867 = vmul.f32 %v2866, %v1352
        %v2868 = vadd.f32 %v2867, 1e-05
        %v2869 = vrsqrt.pop %v2868
        %v2870 = vmul.f32 %v2863, %v2869
        %v2871 = vld [vmem:[#allocation22] sm:$0x1]
        %v2873 = vlaneseq
        %v2874 = vshrl.u32 %v2873, 7
        %v2875 = vsub.s32 0, %v2874
        %v2876 = vrot.slane %v2871, %v2875
        %v2878 = vmul.f32 %v2870, %v2876
        %v2879 = vld [vmem:[#allocation24] sm:$0x1]
        %v2881 = vlaneseq
        %v2882 = vshrl.u32 %v2881, 7
        %v2883 = vsub.s32 0, %v2882
        %v2884 = vrot.slane %v2879, %v2883
        %v2886 = vadd.f32 %v2878, %v2884
        %v2887 = vxor.u32 %v2886, 2147483648
        %v2888 = vmul.f32 %v2887, 1.442695
        %v2889 = vpow.pop %v2888
        %v2890 = vadd.f32 %v2889, 1.0
        %v2891 = vrcp.pop %v2890
        %v2892 = vmul.f32 1.0, %v2891
        %v2893 = vmul.f32 %v2886, %v2892
        %v2894 = vpack.c.bf16 %v2893, %v2893
        %v2895 = vld [vmem:[#allocation25] sm:$0xf]
        %v2896 = vld [vmem:[#allocation25 + $0x4] sm:$0xf]
        %v2897 = vld [vmem:[#allocation25 + $0x8] sm:$0xf]
        %v2898 = vld [vmem:[#allocation25 + $0xc] sm:$0xf]
        %v2899 = vld [vmem:[#allocation25 + $0x10] sm:$0xf]
        %v2900 = vld [vmem:[#allocation25 + $0x14] sm:$0xf]
        %v2901 = vld [vmem:[#allocation25 + $0x18] sm:$0xf]
        %v2902 = vld [vmem:[#allocation25 + $0x1c] sm:$0xf]
        %v2903 = vld [vmem:[#allocation25 + $0x20] sm:$0xf]
        %v2904 = vld [vmem:[#allocation25 + $0x24] sm:$0xf]
        %v2905 = vld [vmem:[#allocation25 + $0x28] sm:$0xf]
        %v2906 = vld [vmem:[#allocation25 + $0x2c] sm:$0xf]
        %v2907 = vld [vmem:[#allocation25 + $0x30] sm:$0xf]
        %v2908 = vld [vmem:[#allocation25 + $0x34] sm:$0xf]
        %v2909 = vld [vmem:[#allocation25 + $0x38] sm:$0xf]
        %v2910 = vld [vmem:[#allocation25 + $0x3c] sm:$0xf]
        %v2911 = vld [vmem:[#allocation27] sm:$0x1]
        %v2913 = vlaneseq
        %v2914 = vshrl.u32 %v2913, 7
        %v2915 = vsub.s32 0, %v2914
        %v2916 = vrot.slane %v2911, %v2915
        %v2934 = vunpack.c.l.b16 %v2895
        %v2935 = vunpack.c.l.b16 %v2896
        %v2936 = vunpack.c.l.b16 %v2897
        %v2937 = vunpack.c.l.b16 %v2898
        %v2938 = vunpack.c.l.b16 %v2899
        %v2939 = vunpack.c.l.b16 %v2900
        %v2940 = vunpack.c.l.b16 %v2901
        %v2941 = vunpack.c.l.b16 %v2902
        %v2942 = vunpack.c.l.b16 %v2903
        %v2943 = vunpack.c.l.b16 %v2904
        %v2944 = vunpack.c.l.b16 %v2905
        %v2945 = vunpack.c.l.b16 %v2906
        %v2946 = vunpack.c.l.b16 %v2907
        %v2947 = vunpack.c.l.b16 %v2908
        %v2948 = vunpack.c.l.b16 %v2909
        %v2949 = vunpack.c.l.b16 %v2910
        %v2950 = vpack.c.b16 %v2935, %v2934
        %v2951 = vpack.c.b16 %v2937, %v2936
        %v2952 = vpack.c.b16 %v2939, %v2938
        %v2953 = vpack.c.b16 %v2941, %v2940
        %v2954 = vpack.c.b16 %v2943, %v2942
        %v2955 = vpack.c.b16 %v2945, %v2944
        %v2956 = vpack.c.b16 %v2947, %v2946
        %v2957 = vpack.c.b16 %v2949, %v2948
        %2966 = vmatprep.subr.bf16.mxu0 0
        %2967 = vmatpush1.bf16.msra.mxu0 %v2950
        %2968 = vmatprep.subr.bf16.mxu0 0
        %2969 = vmatpush1.bf16.msra.mxu0 %v2951
        %2970 = vmatprep.subr.bf16.mxu0 0
        %2971 = vmatpush1.bf16.msra.mxu0 %v2952
        %2972 = vmatprep.subr.bf16.mxu0 0
        %2973 = vmatpush1.bf16.msra.mxu0 %v2953
        %2974 = vmatprep.subr.bf16.mxu0 0
        %2975 = vmatpush1.bf16.msra.mxu0 %v2954
        %2976 = vmatprep.subr.bf16.mxu0 0
        %2977 = vmatpush1.bf16.msra.mxu0 %v2955
        %2978 = vmatprep.subr.bf16.mxu0 0
        %2979 = vmatpush1.bf16.msra.mxu0 %v2956
        %2980 = vmatprep.subr.bf16.mxu0 0
        %2981 = vmatpush1.bf16.msra.mxu0 %v2957
        %2982 = vmatprep.subr.bf16.mxu0 0
        %2983 = vmatpush1.bf16.msra.mxu0 0
        %2984 = vmatprep.subr.bf16.mxu0 0
        %2985 = vmatpush1.bf16.msra.mxu0 0
        %2986 = vmatprep.subr.bf16.mxu0 0
        %2987 = vmatpush1.bf16.msra.mxu0 0
        %2988 = vmatprep.subr.bf16.mxu0 0
        %2989 = vmatpush1.bf16.msra.mxu0 0
        %2990 = vmatprep.subr.bf16.mxu0 0
        %2991 = vmatpush1.bf16.msra.mxu0 0
        %2992 = vmatprep.subr.bf16.mxu0 0
        %2993 = vmatpush1.bf16.msra.mxu0 0
        %2994 = vmatprep.subr.bf16.mxu0 0
        %2995 = vmatpush1.bf16.msra.mxu0 0
        %2996 = vmatprep.subr.bf16.mxu0 0
        %2997 = vmatpush1.bf16.msra.mxu0 0
        %2998 = vmatprep.mubr.bf16.mxu0 0
        %2999 = vmatmul.mubr.bf16.gmra.mrb[0].mxu0 %v2894
        %v3000 = vpop.f32.mrb[0].mxu0
        %v3001 = vadd.f32 %v2916, %v3000
        %v3002 = vpop.f32.mrb[0].mxu0
        %v3003 = vpop.f32.mrb[0].mxu0
        %v3004 = vpop.f32.mrb[0].mxu0
        %3005 = vdwg.mxu0
        %v3006 = vadd.f32 %v2571, %v3001
        %3007 = vadd.xlane.f32.xlu0 %v3006
        %v3008 = vpop.xlane.xlu0 %3007
        %v3009 = vmul.f32 %v3008, %v1352
        %v3010 = vsub.f32 %v3006, %v3009
        %v3011 = vmul.f32 %v3010, %v3010
        %3012 = vadd.xlane.f32.xlu0 %v3011
        %v3013 = vpop.xlane.xlu0 %3012
        %v3014 = vmul.f32 %v3013, %v1352
        %v3015 = vadd.f32 %v3014, 1e-05
        %v3016 = vrsqrt.pop %v3015
        %v3017 = vmul.f32 %v3010, %v3016
        %v3018 = vld [vmem:[#allocation28] sm:$0x1]
        %v3020 = vlaneseq
        %v3021 = vshrl.u32 %v3020, 7
        %v3022 = vsub.s32 0, %v3021
        %v3023 = vrot.slane %v3018, %v3022
        %v3025 = vmul.f32 %v3017, %v3023
        %v3026 = vld [vmem:[#allocation30] sm:$0x1]
        %v3028 = vlaneseq
        %v3029 = vshrl.u32 %v3028, 7
        %v3030 = vsub.s32 0, %v3029
        %v3031 = vrot.slane %v3026, %v3030
        %v3033 = vadd.f32 %v3025, %v3031
        %v3034 = vpack.c.bf16 %v3033, %v3033
        %v3035 = vld [vmem:[%s55] sm:$0xff]
        %v3036 = vld [vmem:[%s55 + $0x8] sm:$0xff]
        %v3037 = vld [vmem:[%s55 + $0x10] sm:$0xff]
        %v3038 = vld [vmem:[%s55 + $0x18] sm:$0xff]
        %v3039 = vld [vmem:[%s55 + $0x20] sm:$0xff]
        %v3040 = vld [vmem:[%s55 + $0x28] sm:$0xff]
        %v3041 = vld [vmem:[%s55 + $0x30] sm:$0xff]
        %v3042 = vld [vmem:[%s55 + $0x38] sm:$0xff]
        %v3043 = vld [vmem:[%s55 + $0x40] sm:$0xff]
        %v3044 = vld [vmem:[%s55 + $0x48] sm:$0xff]
        %v3045 = vld [vmem:[%s55 + $0x50] sm:$0xff]
        %v3046 = vld [vmem:[%s55 + $0x58] sm:$0xff]
        %v3047 = vld [vmem:[%s55 + $0x60] sm:$0xff]
        %v3048 = vld [vmem:[%s55 + $0x68] sm:$0xff]
        %v3049 = vld [vmem:[%s55 + $0x70] sm:$0xff]
        %v3050 = vld [vmem:[%s55 + $0x78] sm:$0xff]
        %v3051 = vld [vmem:[#allocation31] sm:$0x3]
        %v3053 = vlaneseq
        %v3054 = vshrl.u32 %v3053, 7
        %v3055 = vsub.s32 0, %v3054
        %v3056 = vrot.slane %v3051, %v3055
        %v3057 = vlaneseq
        %v3058 = vshrl.u32 %v3057, 7
        %v3059 = vsub.s32 1, %v3058
        %v3060 = vrot.slane %v3051, %v3059
        %v3079 = vunpack.c.l.b16 %v3035
        %v3080 = vunpack.c.h.b16 %v3035
        %v3081 = vunpack.c.l.b16 %v3036
        %v3082 = vunpack.c.h.b16 %v3036
        %v3083 = vunpack.c.l.b16 %v3037
        %v3084 = vunpack.c.h.b16 %v3037
        %v3085 = vunpack.c.l.b16 %v3038
        %v3086 = vunpack.c.h.b16 %v3038
        %v3087 = vunpack.c.l.b16 %v3039
        %v3088 = vunpack.c.h.b16 %v3039
        %v3089 = vunpack.c.l.b16 %v3040
        %v3090 = vunpack.c.h.b16 %v3040
        %v3091 = vunpack.c.l.b16 %v3041
        %v3092 = vunpack.c.h.b16 %v3041
        %v3093 = vunpack.c.l.b16 %v3042
        %v3094 = vunpack.c.h.b16 %v3042
        %v3095 = vunpack.c.l.b16 %v3043
        %v3096 = vunpack.c.h.b16 %v3043
        %v3097 = vunpack.c.l.b16 %v3044
        %v3098 = vunpack.c.h.b16 %v3044
        %v3099 = vunpack.c.l.b16 %v3045
        %v3100 = vunpack.c.h.b16 %v3045
        %v3101 = vunpack.c.l.b16 %v3046
        %v3102 = vunpack.c.h.b16 %v3046
        %v3103 = vunpack.c.l.b16 %v3047
        %v3104 = vunpack.c.h.b16 %v3047
        %v3105 = vunpack.c.l.b16 %v3048
        %v3106 = vunpack.c.h.b16 %v3048
        %v3107 = vunpack.c.l.b16 %v3049
        %v3108 = vunpack.c.h.b16 %v3049
        %v3109 = vunpack.c.l.b16 %v3050
        %v3110 = vunpack.c.h.b16 %v3050
        %v3111 = vpack.c.b16 %v3081, %v3079
        %v3112 = vpack.c.b16 %v3082, %v3080
        %v3113 = vpack.c.b16 %v3085, %v3083
        %v3114 = vpack.c.b16 %v3086, %v3084
        %v3115 = vpack.c.b16 %v3089, %v3087
        %v3116 = vpack.c.b16 %v3090, %v3088
        %v3117 = vpack.c.b16 %v3093, %v3091
        %v3118 = vpack.c.b16 %v3094, %v3092
        %v3119 = vpack.c.b16 %v3097, %v3095
        %v3120 = vpack.c.b16 %v3098, %v3096
        %v3121 = vpack.c.b16 %v3101, %v3099
        %v3122 = vpack.c.b16 %v3102, %v3100
        %v3123 = vpack.c.b16 %v3105, %v3103
        %v3124 = vpack.c.b16 %v3106, %v3104
        %v3125 = vpack.c.b16 %v3109, %v3107
        %v3126 = vpack.c.b16 %v3110, %v3108
        %3143 = vmatprep.subr.bf16.mxu0 %v3112
        %3144 = vmatpush1.bf16.msra.mxu0 %v3111
        %3145 = vmatprep.subr.bf16.mxu0 %v3114
        %3146 = vmatpush1.bf16.msra.mxu0 %v3113
        %3147 = vmatprep.subr.bf16.mxu0 %v3116
        %3148 = vmatpush1.bf16.msra.mxu0 %v3115
        %3149 = vmatprep.subr.bf16.mxu0 %v3118
        %3150 = vmatpush1.bf16.msra.mxu0 %v3117
        %3151 = vmatprep.subr.bf16.mxu0 %v3120
        %3152 = vmatpush1.bf16.msra.mxu0 %v3119
        %3153 = vmatprep.subr.bf16.mxu0 %v3122
        %3154 = vmatpush1.bf16.msra.mxu0 %v3121
        %3155 = vmatprep.subr.bf16.mxu0 %v3124
        %3156 = vmatpush1.bf16.msra.mxu0 %v3123
        %3157 = vmatprep.subr.bf16.mxu0 %v3126
        %3158 = vmatpush1.bf16.msra.mxu0 %v3125
        %3159 = vmatprep.subr.bf16.mxu0 0
        %3160 = vmatpush1.bf16.msra.mxu0 0
        %3161 = vmatprep.subr.bf16.mxu0 0
        %3162 = vmatpush1.bf16.msra.mxu0 0
        %3163 = vmatprep.subr.bf16.mxu0 0
        %3164 = vmatpush1.bf16.msra.mxu0 0
        %3165 = vmatprep.subr.bf16.mxu0 0
        %3166 = vmatpush1.bf16.msra.mxu0 0
        %3167 = vmatprep.subr.bf16.mxu0 0
        %3168 = vmatpush1.bf16.msra.mxu0 0
        %3169 = vmatprep.subr.bf16.mxu0 0
        %3170 = vmatpush1.bf16.msra.mxu0 0
        %3171 = vmatprep.subr.bf16.mxu0 0
        %3172 = vmatpush1.bf16.msra.mxu0 0
        %3173 = vmatprep.subr.bf16.mxu0 0
        %3174 = vmatpush1.bf16.msra.mxu0 0
        %3175 = vmatprep.mubr.bf16.mxu0 0
        %3176 = vmatmul.mubr.bf16.gmra.mrb[0].mxu0 %v3034
        %v3177 = vpop.f32.mrb[0].mxu0
        %v3178 = vadd.f32 %v3056, %v3177
        %v3179 = vpop.f32.mrb[0].mxu0
        %v3180 = vadd.f32 %v3060, %v3179
        %v3181 = vpop.f32.mrb[0].mxu0
        %v3182 = vpop.f32.mrb[0].mxu0
        %3183 = vdwg.mxu0
        %v3184 = vxor.u32 %v3178, 2147483648
        %v3185 = vxor.u32 %v3180, 2147483648
        %v3186 = vmul.f32 %v3184, 1.442695
        %v3187 = vpow.pop %v3186
        %v3188 = vmul.f32 %v3185, 1.442695
        %v3189 = vpow.pop %v3188
        %v3190 = vadd.f32 %v3187, 1.0
        %v3191 = vadd.f32 %v3189, 1.0
        %v3192 = vrcp.pop %v3190
        %v3193 = vmul.f32 1.0, %v3192
        %v3194 = vrcp.pop %v3191
        %v3195 = vmul.f32 1.0, %v3194
        %v3196 = vmul.f32 %v3178, %v3193
        %v3197 = vmul.f32 %v3180, %v3195
        %v3198 = vpack.c.bf16 %v3196, %v3196
        %v3199 = vpack.c.bf16 %v3197, %v3197
        %v3200 = vld [vmem:[#allocation33] sm:$0xf]
        %v3201 = vld [vmem:[#allocation33 + $0x4] sm:$0xf]
        %v3202 = vld [vmem:[#allocation33 + $0x8] sm:$0xf]
        %v3203 = vld [vmem:[#allocation33 + $0xc] sm:$0xf]
        %v3204 = vld [vmem:[#allocation33 + $0x10] sm:$0xf]
        %v3205 = vld [vmem:[#allocation33 + $0x14] sm:$0xf]
        %v3206 = vld [vmem:[#allocation33 + $0x18] sm:$0xf]
        %v3207 = vld [vmem:[#allocation33 + $0x1c] sm:$0xf]
        %v3208 = vld [vmem:[#allocation33 + $0x20] sm:$0xf]
        %v3209 = vld [vmem:[#allocation33 + $0x24] sm:$0xf]
        %v3210 = vld [vmem:[#allocation33 + $0x28] sm:$0xf]
        %v3211 = vld [vmem:[#allocation33 + $0x2c] sm:$0xf]
        %v3212 = vld [vmem:[#allocation33 + $0x30] sm:$0xf]
        %v3213 = vld [vmem:[#allocation33 + $0x34] sm:$0xf]
        %v3214 = vld [vmem:[#allocation33 + $0x38] sm:$0xf]
        %v3215 = vld [vmem:[#allocation33 + $0x3c] sm:$0xf]
        %v3216 = vld [vmem:[#allocation33 + $0x40] sm:$0xf]
        %v3217 = vld [vmem:[#allocation33 + $0x44] sm:$0xf]
        %v3218 = vld [vmem:[#allocation33 + $0x48] sm:$0xf]
        %v3219 = vld [vmem:[#allocation33 + $0x4c] sm:$0xf]
        %v3220 = vld [vmem:[#allocation33 + $0x50] sm:$0xf]
        %v3221 = vld [vmem:[#allocation33 + $0x54] sm:$0xf]
        %v3222 = vld [vmem:[#allocation33 + $0x58] sm:$0xf]
        %v3223 = vld [vmem:[#allocation33 + $0x5c] sm:$0xf]
        %v3224 = vld [vmem:[#allocation33 + $0x60] sm:$0xf]
        %v3225 = vld [vmem:[#allocation33 + $0x64] sm:$0xf]
        %v3226 = vld [vmem:[#allocation33 + $0x68] sm:$0xf]
        %v3227 = vld [vmem:[#allocation33 + $0x6c] sm:$0xf]
        %v3228 = vld [vmem:[#allocation33 + $0x70] sm:$0xf]
        %v3229 = vld [vmem:[#allocation33 + $0x74] sm:$0xf]
        %v3230 = vld [vmem:[#allocation33 + $0x78] sm:$0xf]
        %v3231 = vld [vmem:[#allocation33 + $0x7c] sm:$0xf]
        %v3232 = vld [vmem:[#allocation34] sm:$0x1]
        %v3234 = vlaneseq
        %v3235 = vshrl.u32 %v3234, 7
        %v3236 = vsub.s32 0, %v3235
        %v3237 = vrot.slane %v3232, %v3236
        %v3271 = vunpack.c.l.b16 %v3200
        %v3272 = vunpack.c.l.b16 %v3201
        %v3273 = vunpack.c.l.b16 %v3202
        %v3274 = vunpack.c.l.b16 %v3203
        %v3275 = vunpack.c.l.b16 %v3204
        %v3276 = vunpack.c.l.b16 %v3205
        %v3277 = vunpack.c.l.b16 %v3206
        %v3278 = vunpack.c.l.b16 %v3207
        %v3279 = vunpack.c.l.b16 %v3208
        %v3280 = vunpack.c.l.b16 %v3209
        %v3281 = vunpack.c.l.b16 %v3210
        %v3282 = vunpack.c.l.b16 %v3211
        %v3283 = vunpack.c.l.b16 %v3212
        %v3284 = vunpack.c.l.b16 %v3213
        %v3285 = vunpack.c.l.b16 %v3214
        %v3286 = vunpack.c.l.b16 %v3215
        %v3287 = vunpack.c.l.b16 %v3216
        %v3288 = vunpack.c.l.b16 %v3217
        %v3289 = vunpack.c.l.b16 %v3218
        %v3290 = vunpack.c.l.b16 %v3219
        %v3291 = vunpack.c.l.b16 %v3220
        %v3292 = vunpack.c.l.b16 %v3221
        %v3293 = vunpack.c.l.b16 %v3222
        %v3294 = vunpack.c.l.b16 %v3223
        %v3295 = vunpack.c.l.b16 %v3224
        %v3296 = vunpack.c.l.b16 %v3225
        %v3297 = vunpack.c.l.b16 %v3226
        %v3298 = vunpack.c.l.b16 %v3227
        %v3299 = vunpack.c.l.b16 %v3228
        %v3300 = vunpack.c.l.b16 %v3229
        %v3301 = vunpack.c.l.b16 %v3230
        %v3302 = vunpack.c.l.b16 %v3231
        %v3303 = vpack.c.b16 %v3272, %v3271
        %v3304 = vpack.c.b16 %v3274, %v3273
        %v3305 = vpack.c.b16 %v3276, %v3275
        %v3306 = vpack.c.b16 %v3278, %v3277
        %v3307 = vpack.c.b16 %v3280, %v3279
        %v3308 = vpack.c.b16 %v3282, %v3281
        %v3309 = vpack.c.b16 %v3284, %v3283
        %v3310 = vpack.c.b16 %v3286, %v3285
        %v3311 = vpack.c.b16 %v3288, %v3287
        %v3312 = vpack.c.b16 %v3290, %v3289
        %v3313 = vpack.c.b16 %v3292, %v3291
        %v3314 = vpack.c.b16 %v3294, %v3293
        %v3315 = vpack.c.b16 %v3296, %v3295
        %v3316 = vpack.c.b16 %v3298, %v3297
        %v3317 = vpack.c.b16 %v3300, %v3299
        %v3318 = vpack.c.b16 %v3302, %v3301
        %3335 = vmatprep.subr.bf16.mxu0 0
        %3336 = vmatpush1.bf16.msra.mxu0 %v3303
        %3337 = vmatprep.subr.bf16.mxu0 0
        %3338 = vmatpush1.bf16.msra.mxu0 %v3304
        %3339 = vmatprep.subr.bf16.mxu0 0
        %3340 = vmatpush1.bf16.msra.mxu0 %v3305
        %3341 = vmatprep.subr.bf16.mxu0 0
        %3342 = vmatpush1.bf16.msra.mxu0 %v3306
        %3343 = vmatprep.subr.bf16.mxu0 0
        %3344 = vmatpush1.bf16.msra.mxu0 %v3307
        %3345 = vmatprep.subr.bf16.mxu0 0
        %3346 = vmatpush1.bf16.msra.mxu0 %v3308
        %3347 = vmatprep.subr.bf16.mxu0 0
        %3348 = vmatpush1.bf16.msra.mxu0 %v3309
        %3349 = vmatprep.subr.bf16.mxu0 0
        %3350 = vmatpush1.bf16.msra.mxu0 %v3310
        %3351 = vmatprep.subr.bf16.mxu0 0
        %3352 = vmatpush1.bf16.msra.mxu0 %v3311
        %3353 = vmatprep.subr.bf16.mxu0 0
        %3354 = vmatpush1.bf16.msra.mxu0 %v3312
        %3355 = vmatprep.subr.bf16.mxu0 0
        %3356 = vmatpush1.bf16.msra.mxu0 %v3313
        %3357 = vmatprep.subr.bf16.mxu0 0
        %3358 = vmatpush1.bf16.msra.mxu0 %v3314
        %3359 = vmatprep.subr.bf16.mxu0 0
        %3360 = vmatpush1.bf16.msra.mxu0 %v3315
        %3361 = vmatprep.subr.bf16.mxu0 0
        %3362 = vmatpush1.bf16.msra.mxu0 %v3316
        %3363 = vmatprep.subr.bf16.mxu0 0
        %3364 = vmatpush1.bf16.msra.mxu0 %v3317
        %3365 = vmatprep.subr.bf16.mxu0 0
        %3366 = vmatpush1.bf16.msra.mxu0 %v3318
        %3367 = vmatprep.mubr.bf16.mxu0 %v3199
        %3368 = vmatmul.mubr.bf16.gmra.mrb[0].mxu0 %v3198
        %v3369 = vpop.f32.mrb[0].mxu0
        %v3370 = vadd.f32 %v3237, %v3369
        %v3371 = vpop.f32.mrb[0].mxu0
        %v3372 = vpop.f32.mrb[0].mxu0
        %v3373 = vpop.f32.mrb[0].mxu0
        %3374 = vdwg.mxu0
        %v3375 = vmul.f32 %v3370, 0.5
        %v3376 = vadd.f32 %v3006, %v3375
        %3377 = vadd.xlane.f32.xlu0 %v3376
        %v3378 = vpop.xlane.xlu0 %3377
        %v3379 = vmul.f32 %v3378, %v1352
        %v3380 = vsub.f32 %v3376, %v3379
        %v3381 = vmul.f32 %v3380, %v3380
        %3382 = vadd.xlane.f32.xlu0 %v3381
        %v3383 = vpop.xlane.xlu0 %3382
        %v3384 = vmul.f32 %v3383, %v1352
        %v3385 = vadd.f32 %v3384, 1e-05
        %v3386 = vrsqrt.pop %v3385
        %v3387 = vmul.f32 %v3380, %v3386
        %v3388 = vld [vmem:[#allocation36] sm:$0x1]
        %v3390 = vlaneseq
        %v3391 = vshrl.u32 %v3390, 7
        %v3392 = vsub.s32 0, %v3391
        %v3393 = vrot.slane %v3388, %v3392
        %v3395 = vmul.f32 %v3387, %v3393
        %v3396 = vld [vmem:[#allocation37] sm:$0x1]
        %v3398 = vlaneseq
        %v3399 = vshrl.u32 %v3398, 7
        %v3400 = vsub.s32 0, %v3399
        %v3401 = vrot.slane %v3396, %v3400
        %v3403 = vadd.f32 %v3395, %v3401
        %3404 = vst [vmem:[%s1345] sm:$0xff] %v3403
        %p3405 = scmp.lt.s32.totalorder %s91, 1
        %s3406 = scalar_select %p3405, %s91, 1
        %s3407 = smul.addr %s3406, 8
        %s3408 = scalar_lea.vmem %s67, %s3407
        // Predicated region
        $region249: #{forward.7} parent=151 // pred_check
          %p3409 = pneg %p817
        $region250: #{forward.7} parent=151 // pred_check_branch
          %3411 = sbr.rel (%p3409) target = $region252
        $region251: #{forward.7} parent=151 // pred_region
          _
        $region252: #{forward.7} parent=151 // pred_fallthru
          _
      $region152: #{forward.7} parent=5 // pred_fallthru
        _
      %p3412 = scmp.le.s32.totalorder 2, %s86
      // Predicated region
      $region253: #{forward.7} parent=5 // pred_check
        %p3413 = pneg %p3412
      $region254: #{forward.7} parent=5 // pred_check_branch
        %3415 = sbr.rel (%p3413) target = $region256
      $region255: #{forward.7} parent=5 // pred_region
        %s3416 = ssub.s32 %s86, 2
        // Predicated region
        $region257: #{forward.7} parent=255 // pred_check
          %p3417 = pneg %p823
        $region258: #{forward.7} parent=255 // pred_check_branch
          %3419 = sbr.rel (%p3417) target = $region260
        $region259: #{forward.7} parent=255 // pred_region
          %p3420 = scmp.lt.s32.totalorder %s92, 1
          %s3421 = scalar_select %p3420, %s92, 1
          %s3422 = smul.addr %s3421, 8
          %s3423 = scalar_lea.vmem %s67, %s3422
        $region260: #{forward.7} parent=255 // pred_fallthru
          _
      $region256: #{forward.7} parent=5 // pred_fallthru
        _
    $region6: #{forward.7} parent=1 // loop_footer
      %s90 = sadd.s32 1, %s86
    $region7: #{forward.7} parent=1 // loop_footer_branch
      %85 = sbr.rel target = $region3
    $region8: #{forward.7} parent=1 // loop_exit
      _
    %3424 = vsyncpa [#allocation3], 1
    %s3425 = scalar_lea.sflag [#allocation3], 1
    %3426 = vsyncpa %s3425, 1
    %3427 = vsyncpa [#allocation5], 1
    %3428 = vsyncpa [#allocation8], 1
    %3429 = vsyncpa [#allocation11], 1
    %3430 = vsyncpa [#allocation14], 1
    %3431 = vsyncpa [#allocation17], 1
    %3432 = vsyncpa [#allocation20], 1
    %3433 = vsyncpa [#allocation23], 1
    %3434 = vsyncpa [#allocation26], 1
    %3435 = vsyncpa [#allocation29], 1
    %3436 = vsyncpa [#allocation32], 1
    %3437 = vsyncpa [#allocation35], 1
    %3438 = vsyncpa [#allocation38], 1

// kernel: forward.8
$region0: #{forward.8}
  #allocation0 [shape = 'u32[]', space=smem, size = 0x4, offset = 0x4, fixed_abs, tag = 'smem constant byte address 0x4 - core index']
  #allocation1 [shape = 'u32[144,128]{1,0:T(1,128)}', space=vmem, size = 0x12000, scoped, tag = 'internal scratch']
  %s0 = inlined_call_operand.smem [shape: u32[34], index: -1, kind: input, shape index: {}]
  %s1 = sld [smem:[%s0]]
  %s2 = scalar_lea.smem %s0, 1
  %s3 = sld [smem:[%s2]]
  %s4 = scalar_lea.smem %s0, 2
  %s5 = sld [smem:[%s4]]
  %s6 = scalar_lea.smem %s0, 3
  %s7 = sld [smem:[%s6]]
  %s8 = scalar_lea.smem %s0, 4
  %s9 = sld [smem:[%s8]]
  %s10 = scalar_lea.smem %s0, 5
  %s11 = sld [smem:[%s10]]
  %s12 = scalar_lea.smem %s0, 6
  %s13 = sld [smem:[%s12]]
  %s14 = scalar_lea.smem %s0, 7
  %s15 = sld [smem:[%s14]]
  %s16 = scalar_lea.smem %s0, 8
  %s17 = sld [smem:[%s16]]
  %s18 = scalar_lea.smem %s0, 9
  %s19 = sld [smem:[%s18]]
  %s20 = scalar_lea.smem %s0, 10
  %s21 = sld [smem:[%s20]]
  %s22 = scalar_lea.smem %s0, 11
  %s23 = sld [smem:[%s22]]
  %s24 = scalar_lea.smem %s0, 12
  %s25 = sld [smem:[%s24]]
  %s26 = scalar_lea.smem %s0, 13
  %s27 = sld [smem:[%s26]]
  %s28 = scalar_lea.smem %s0, 14
  %s29 = sld [smem:[%s28]]
  %s30 = scalar_lea.smem %s0, 15
  %s31 = sld [smem:[%s30]]
  %s32 = scalar_lea.smem %s0, 16
  %s33 = sld [smem:[%s32]]
  %s34 = scalar_lea.smem %s0, 17
  %s35 = sld [smem:[%s34]]
  %s36 = scalar_lea.smem %s0, 18
  %s37 = sld [smem:[%s36]]
  %s38 = scalar_lea.smem %s0, 19
  %s39 = sld [smem:[%s38]]
  %s40 = scalar_lea.smem %s0, 20
  %s41 = sld [smem:[%s40]]
  %s42 = scalar_lea.smem %s0, 21
  %s43 = sld [smem:[%s42]]
  %s44 = scalar_lea.smem %s0, 22
  %s45 = sld [smem:[%s44]]
  %s46 = scalar_lea.smem %s0, 23
  %s47 = sld [smem:[%s46]]
  %s48 = scalar_lea.smem %s0, 24
  %s49 = sld [smem:[%s48]]
  %s50 = scalar_lea.smem %s0, 25
  %s51 = sld [smem:[%s50]]
  %s52 = scalar_lea.smem %s0, 26
  %s53 = sld [smem:[%s52]]
  %s54 = scalar_lea.smem %s0, 27
  %s55 = sld [smem:[%s54]]
  %s56 = scalar_lea.smem %s0, 28
  %s57 = sld [smem:[%s56]]
  %s58 = scalar_lea.smem %s0, 29
  %s59 = sld [smem:[%s58]]
  %s60 = scalar_lea.smem %s0, 30
  %s61 = sld [smem:[%s60]]
  %s62 = scalar_lea.smem %s0, 31
  %s63 = sld [smem:[%s62]]
  %s64 = scalar_lea.smem %s0, 32
  %s65 = sld [smem:[%s64]]
  %s66 = scalar_lea.smem %s0, 33
  %s67 = sld [smem:[%s66]]
  %s68 = sld [smem:[#allocation0]]
  $region165: #{forward.8} parent=0
    _
  %s70 = ssub.s32 1, %s68
  %s71 = scalar_select 0, %s70, %s68
  loop: start=0, step=1, limit=4
  $region2: #{forward.8} parent=0 // loop_pre_header
    _
  $region3: #{forward.8} parent=0 // loop_header
    %s73 = sphi 0, %s77
    %p74 = scmp.ge.s32.totalorder %s73, 4
    %s83 = sphi 0, %s85
    %s86 = sphi 0, %s83
    %s87 = sphi 0, %s86
    %s103 = sphi 0, %s87
    %s109 = sphi 0, %s111
    %s112 = sphi 0, %s109
    %s113 = sphi 0, %s112
    %s129 = sphi 0, %s113
    %s135 = sphi 0, %s137
    %s138 = sphi 0, %s135
    %s139 = sphi 0, %s138
    %s155 = sphi 0, %s139
    %s159 = sphi 0, %s159
    %s161 = sphi 0, %s159
    %s162 = sphi 0, %s161
    %s176 = sphi 0, %s162
    %s180 = sphi 0, %s180
    %s182 = sphi 0, %s180
    %s183 = sphi 0, %s182
    %s197 = sphi 0, %s183
    %s201 = sphi 0, %s201
    %s203 = sphi 0, %s201
    %s204 = sphi 0, %s203
    %s218 = sphi 0, %s204
    %s222 = sphi 0, %s222
    %s224 = sphi 0, %s222
    %s225 = sphi 0, %s224
    %s239 = sphi 0, %s225
    %s243 = sphi 0, %s243
    %s245 = sphi 0, %s243
    %s246 = sphi 0, %s245
    %s260 = sphi 0, %s246
    %s264 = sphi 0, %s264
    %s266 = sphi 0, %s264
    %s267 = sphi 0, %s266
    %s281 = sphi 0, %s267
    %s285 = sphi 0, %s285
    %s287 = sphi 0, %s285
    %s288 = sphi 0, %s287
    %s302 = sphi 0, %s288
    %s306 = sphi 0, %s306
    %s308 = sphi 0, %s306
    %s309 = sphi 0, %s308
    %s323 = sphi 0, %s309
    %s327 = sphi 0, %s327
    %s329 = sphi 0, %s327
    %s330 = sphi 0, %s329
    %s344 = sphi 0, %s330
    %s348 = sphi 0, %s348
    %s350 = sphi 0, %s348
    %s351 = sphi 0, %s350
    %s365 = sphi 0, %s351
    %s369 = sphi 0, %s369
    %s371 = sphi 0, %s369
    %s372 = sphi 0, %s371
    %s386 = sphi 0, %s372
    %s390 = sphi 0, %s390
    %s392 = sphi 0, %s390
    %s393 = sphi 0, %s392
    %s407 = sphi 0, %s393
    %s411 = sphi 0, %s411
    %s413 = sphi 0, %s411
    %s414 = sphi 0, %s413
    %s428 = sphi 0, %s414
    %s432 = sphi 0, %s432
    %s434 = sphi 0, %s432
    %s435 = sphi 0, %s434
    %s449 = sphi 0, %s435
    %s453 = sphi 0, %s453
    %s455 = sphi 0, %s453
    %s456 = sphi 0, %s455
    %s470 = sphi 0, %s456
    %s474 = sphi 0, %s474
    %s476 = sphi 0, %s474
    %s477 = sphi 0, %s476
    %s491 = sphi 0, %s477
    %s495 = sphi 0, %s495
    %s497 = sphi 0, %s495
    %s498 = sphi 0, %s497
    %s512 = sphi 0, %s498
    %s516 = sphi 0, %s516
    %s518 = sphi 0, %s516
    %s519 = sphi 0, %s518
    %s533 = sphi 0, %s519
    %s537 = sphi 0, %s537
    %s539 = sphi 0, %s537
    %s540 = sphi 0, %s539
    %s554 = sphi 0, %s540
    %s558 = sphi 0, %s558
    %s560 = sphi 0, %s558
    %s561 = sphi 0, %s560
    %s575 = sphi 0, %s561
    %s579 = sphi 0, %s579
    %s581 = sphi 0, %s579
    %s582 = sphi 0, %s581
    %s596 = sphi 0, %s582
    %s600 = sphi 0, %s600
    %s602 = sphi 0, %s600
    %s603 = sphi 0, %s602
    %s617 = sphi 0, %s603
    %s621 = sphi 0, %s621
    %s623 = sphi 0, %s621
    %s624 = sphi 0, %s623
    %s638 = sphi 0, %s624
    %s642 = sphi 0, %s642
    %s644 = sphi 0, %s642
    %s645 = sphi 0, %s644
    %s659 = sphi 0, %s645
    %s663 = sphi 0, %s663
    %s665 = sphi 0, %s663
    %s666 = sphi 0, %s665
    %s680 = sphi 0, %s666
    %s684 = sphi 0, %s684
    %s686 = sphi 0, %s684
    %s687 = sphi 0, %s686
    %s701 = sphi 0, %s687
    %s705 = sphi 0, %s705
    %s707 = sphi 0, %s705
    %s708 = sphi 0, %s707
    %s722 = sphi 0, %s708
    %s726 = sphi 0, %s726
    %s728 = sphi 0, %s726
    %s729 = sphi 0, %s728
    %s743 = sphi 0, %s729
    %s747 = sphi 0, %s747
    %s749 = sphi 0, %s747
    %s750 = sphi 0, %s749
    %s764 = sphi 0, %s750
    %s768 = sphi 0, %s768
    %s770 = sphi 0, %s768
    %s771 = sphi 0, %s770
    %s785 = sphi 0, %s771
    %s791 = sphi 0, %s793
    %s794 = sphi 0, %s791
    %s795 = sphi 0, %s794
    %s811 = sphi 0, %s795
  $region4: #{forward.8} parent=0 // loop_header_branch
    %76 = sbr.rel (%p74) target = $region8
  $region5: #{forward.8} parent=0 // loop_body
    %s78 = ssub.s32 %s73, 1
    %s79 = ssub.s32 %s73, 2
    %s80 = sadd.s32 %s73, 1
    %s81 = ssub.s32 %s73, %s80
    %p82 = scmp.eq.s32.totalorder %s81, 0
    %s84 = sadd.s32 %s83, 1
    %s85 = scalar_select %p82, %s83, %s84
    %p88 = pneg %p82
    %p89 = scmp.eq.s32.totalorder %s73, 1
    %p90 = por %p88, %p89
    %p91 = scmp.ne.s32.totalorder %s83, %s86
    %p92 = scmp.eq.s32.totalorder %s73, 0
    %p93 = por %p91, %p92
    %p94 = scmp.ne.s32.totalorder %s83, %s86
    %p95 = scmp.eq.s32.totalorder %s78, 1
    %p96 = por %p94, %p95
    %p97 = scmp.ne.s32.totalorder %s86, %s87
    %p98 = scmp.eq.s32.totalorder %s78, 0
    %p99 = por %p97, %p98
    %p100 = scmp.ne.s32.totalorder %s86, %s87
    %p101 = scmp.eq.s32.totalorder %s79, 1
    %p102 = por %p100, %p101
    %p104 = scmp.ne.s32.totalorder %s87, %s103
    %p105 = scmp.eq.s32.totalorder %s79, 0
    %p106 = por %p104, %p105
    %s107 = ssub.s32 %s73, %s80
    %p108 = scmp.eq.s32.totalorder %s107, 0
    %s110 = sadd.s32 %s109, 1
    %s111 = scalar_select %p108, %s109, %s110
    %p114 = pneg %p108
    %p115 = scmp.eq.s32.totalorder %s73, 1
    %p116 = por %p114, %p115
    %p117 = scmp.ne.s32.totalorder %s109, %s112
    %p118 = scmp.eq.s32.totalorder %s73, 0
    %p119 = por %p117, %p118
    %p120 = scmp.ne.s32.totalorder %s109, %s112
    %p121 = scmp.eq.s32.totalorder %s78, 1
    %p122 = por %p120, %p121
    %p123 = scmp.ne.s32.totalorder %s112, %s113
    %p124 = scmp.eq.s32.totalorder %s78, 0
    %p125 = por %p123, %p124
    %p126 = scmp.ne.s32.totalorder %s112, %s113
    %p127 = scmp.eq.s32.totalorder %s79, 1
    %p128 = por %p126, %p127
    %p130 = scmp.ne.s32.totalorder %s113, %s129
    %p131 = scmp.eq.s32.totalorder %s79, 0
    %p132 = por %p130, %p131
    %s133 = ssub.s32 %s73, %s80
    %p134 = scmp.eq.s32.totalorder %s133, 0
    %s136 = sadd.s32 %s135, 1
    %s137 = scalar_select %p134, %s135, %s136
    %p140 = pneg %p134
    %p141 = scmp.eq.s32.totalorder %s73, 1
    %p142 = por %p140, %p141
    %p143 = scmp.ne.s32.totalorder %s135, %s138
    %p144 = scmp.eq.s32.totalorder %s73, 0
    %p145 = por %p143, %p144
    %p146 = scmp.ne.s32.totalorder %s135, %s138
    %p147 = scmp.eq.s32.totalorder %s78, 1
    %p148 = por %p146, %p147
    %p149 = scmp.ne.s32.totalorder %s138, %s139
    %p150 = scmp.eq.s32.totalorder %s78, 0
    %p151 = por %p149, %p150
    %p152 = scmp.ne.s32.totalorder %s138, %s139
    %p153 = scmp.eq.s32.totalorder %s79, 1
    %p154 = por %p152, %p153
    %p156 = scmp.ne.s32.totalorder %s139, %s155
    %p157 = scmp.eq.s32.totalorder %s79, 0
    %p158 = por %p156, %p157
    %s160 = sadd.s32 %s159, 1
    %p163 = scmp.eq.s32.totalorder %s73, 1
    %p164 = scmp.ne.s32.totalorder %s159, %s161
    %p165 = scmp.eq.s32.totalorder %s73, 0
    %p166 = por %p164, %p165
    %p167 = scmp.ne.s32.totalorder %s159, %s161
    %p168 = scmp.eq.s32.totalorder %s78, 1
    %p169 = por %p167, %p168
    %p170 = scmp.ne.s32.totalorder %s161, %s162
    %p171 = scmp.eq.s32.totalorder %s78, 0
    %p172 = por %p170, %p171
    %p173 = scmp.ne.s32.totalorder %s161, %s162
    %p174 = scmp.eq.s32.totalorder %s79, 1
    %p175 = por %p173, %p174
    %p177 = scmp.ne.s32.totalorder %s162, %s176
    %p178 = scmp.eq.s32.totalorder %s79, 0
    %p179 = por %p177, %p178
    %s181 = sadd.s32 %s180, 1
    %p184 = scmp.eq.s32.totalorder %s73, 1
    %p185 = scmp.ne.s32.totalorder %s180, %s182
    %p186 = scmp.eq.s32.totalorder %s73, 0
    %p187 = por %p185, %p186
    %p188 = scmp.ne.s32.totalorder %s180, %s182
    %p189 = scmp.eq.s32.totalorder %s78, 1
    %p190 = por %p188, %p189
    %p191 = scmp.ne.s32.totalorder %s182, %s183
    %p192 = scmp.eq.s32.totalorder %s78, 0
    %p193 = por %p191, %p192
    %p194 = scmp.ne.s32.totalorder %s182, %s183
    %p195 = scmp.eq.s32.totalorder %s79, 1
    %p196 = por %p194, %p195
    %p198 = scmp.ne.s32.totalorder %s183, %s197
    %p199 = scmp.eq.s32.totalorder %s79, 0
    %p200 = por %p198, %p199
    %s202 = sadd.s32 %s201, 1
    %p205 = scmp.eq.s32.totalorder %s73, 1
    %p206 = scmp.ne.s32.totalorder %s201, %s203
    %p207 = scmp.eq.s32.totalorder %s73, 0
    %p208 = por %p206, %p207
    %p209 = scmp.ne.s32.totalorder %s201, %s203
    %p210 = scmp.eq.s32.totalorder %s78, 1
    %p211 = por %p209, %p210
    %p212 = scmp.ne.s32.totalorder %s203, %s204
    %p213 = scmp.eq.s32.totalorder %s78, 0
    %p214 = por %p212, %p213
    %p215 = scmp.ne.s32.totalorder %s203, %s204
    %p216 = scmp.eq.s32.totalorder %s79, 1
    %p217 = por %p215, %p216
    %p219 = scmp.ne.s32.totalorder %s204, %s218
    %p220 = scmp.eq.s32.totalorder %s79, 0
    %p221 = por %p219, %p220
    %s223 = sadd.s32 %s222, 1
    %p226 = scmp.eq.s32.totalorder %s73, 1
    %p227 = scmp.ne.s32.totalorder %s222, %s224
    %p228 = scmp.eq.s32.totalorder %s73, 0
    %p229 = por %p227, %p228
    %p230 = scmp.ne.s32.totalorder %s222, %s224
    %p231 = scmp.eq.s32.totalorder %s78, 1
    %p232 = por %p230, %p231
    %p233 = scmp.ne.s32.totalorder %s224, %s225
    %p234 = scmp.eq.s32.totalorder %s78, 0
    %p235 = por %p233, %p234
    %p236 = scmp.ne.s32.totalorder %s224, %s225
    %p237 = scmp.eq.s32.totalorder %s79, 1
    %p238 = por %p236, %p237
    %p240 = scmp.ne.s32.totalorder %s225, %s239
    %p241 = scmp.eq.s32.totalorder %s79, 0
    %p242 = por %p240, %p241
    %s244 = sadd.s32 %s243, 1
    %p247 = scmp.eq.s32.totalorder %s73, 1
    %p248 = scmp.ne.s32.totalorder %s243, %s245
    %p249 = scmp.eq.s32.totalorder %s73, 0
    %p250 = por %p248, %p249
    %p251 = scmp.ne.s32.totalorder %s243, %s245
    %p252 = scmp.eq.s32.totalorder %s78, 1
    %p253 = por %p251, %p252
    %p254 = scmp.ne.s32.totalorder %s245, %s246
    %p255 = scmp.eq.s32.totalorder %s78, 0
    %p256 = por %p254, %p255
    %p257 = scmp.ne.s32.totalorder %s245, %s246
    %p258 = scmp.eq.s32.totalorder %s79, 1
    %p259 = por %p257, %p258
    %p261 = scmp.ne.s32.totalorder %s246, %s260
    %p262 = scmp.eq.s32.totalorder %s79, 0
    %p263 = por %p261, %p262
    %s265 = sadd.s32 %s264, 1
    %p268 = scmp.eq.s32.totalorder %s73, 1
    %p269 = scmp.ne.s32.totalorder %s264, %s266
    %p270 = scmp.eq.s32.totalorder %s73, 0
    %p271 = por %p269, %p270
    %p272 = scmp.ne.s32.totalorder %s264, %s266
    %p273 = scmp.eq.s32.totalorder %s78, 1
    %p274 = por %p272, %p273
    %p275 = scmp.ne.s32.totalorder %s266, %s267
    %p276 = scmp.eq.s32.totalorder %s78, 0
    %p277 = por %p275, %p276
    %p278 = scmp.ne.s32.totalorder %s266, %s267
    %p279 = scmp.eq.s32.totalorder %s79, 1
    %p280 = por %p278, %p279
    %p282 = scmp.ne.s32.totalorder %s267, %s281
    %p283 = scmp.eq.s32.totalorder %s79, 0
    %p284 = por %p282, %p283
    %s286 = sadd.s32 %s285, 1
    %p289 = scmp.eq.s32.totalorder %s73, 1
    %p290 = scmp.ne.s32.totalorder %s285, %s287
    %p291 = scmp.eq.s32.totalorder %s73, 0
    %p292 = por %p290, %p291
    %p293 = scmp.ne.s32.totalorder %s285, %s287
    %p294 = scmp.eq.s32.totalorder %s78, 1
    %p295 = por %p293, %p294
    %p296 = scmp.ne.s32.totalorder %s287, %s288
    %p297 = scmp.eq.s32.totalorder %s78, 0
    %p298 = por %p296, %p297
    %p299 = scmp.ne.s32.totalorder %s287, %s288
    %p300 = scmp.eq.s32.totalorder %s79, 1
    %p301 = por %p299, %p300
    %p303 = scmp.ne.s32.totalorder %s288, %s302
    %p304 = scmp.eq.s32.totalorder %s79, 0
    %p305 = por %p303, %p304
    %s307 = sadd.s32 %s306, 1
    %p310 = scmp.eq.s32.totalorder %s73, 1
    %p311 = scmp.ne.s32.totalorder %s306, %s308
    %p312 = scmp.eq.s32.totalorder %s73, 0
    %p313 = por %p311, %p312
    %p314 = scmp.ne.s32.totalorder %s306, %s308
    %p315 = scmp.eq.s32.totalorder %s78, 1
    %p316 = por %p314, %p315
    %p317 = scmp.ne.s32.totalorder %s308, %s309
    %p318 = scmp.eq.s32.totalorder %s78, 0
    %p319 = por %p317, %p318
    %p320 = scmp.ne.s32.totalorder %s308, %s309
    %p321 = scmp.eq.s32.totalorder %s79, 1
    %p322 = por %p320, %p321
    %p324 = scmp.ne.s32.totalorder %s309, %s323
    %p325 = scmp.eq.s32.totalorder %s79, 0
    %p326 = por %p324, %p325
    %s328 = sadd.s32 %s327, 1
    %p331 = scmp.eq.s32.totalorder %s73, 1
    %p332 = scmp.ne.s32.totalorder %s327, %s329
    %p333 = scmp.eq.s32.totalorder %s73, 0
    %p334 = por %p332, %p333
    %p335 = scmp.ne.s32.totalorder %s327, %s329
    %p336 = scmp.eq.s32.totalorder %s78, 1
    %p337 = por %p335, %p336
    %p338 = scmp.ne.s32.totalorder %s329, %s330
    %p339 = scmp.eq.s32.totalorder %s78, 0
    %p340 = por %p338, %p339
    %p341 = scmp.ne.s32.totalorder %s329, %s330
    %p342 = scmp.eq.s32.totalorder %s79, 1
    %p343 = por %p341, %p342
    %p345 = scmp.ne.s32.totalorder %s330, %s344
    %p346 = scmp.eq.s32.totalorder %s79, 0
    %p347 = por %p345, %p346
    %s349 = sadd.s32 %s348, 1
    %p352 = scmp.eq.s32.totalorder %s73, 1
    %p353 = scmp.ne.s32.totalorder %s348, %s350
    %p354 = scmp.eq.s32.totalorder %s73, 0
    %p355 = por %p353, %p354
    %p356 = scmp.ne.s32.totalorder %s348, %s350
    %p357 = scmp.eq.s32.totalorder %s78, 1
    %p358 = por %p356, %p357
    %p359 = scmp.ne.s32.totalorder %s350, %s351
    %p360 = scmp.eq.s32.totalorder %s78, 0
    %p361 = por %p359, %p360
    %p362 = scmp.ne.s32.totalorder %s350, %s351
    %p363 = scmp.eq.s32.totalorder %s79, 1
    %p364 = por %p362, %p363
    %p366 = scmp.ne.s32.totalorder %s351, %s365
    %p367 = scmp.eq.s32.totalorder %s79, 0
    %p368 = por %p366, %p367
    %s370 = sadd.s32 %s369, 1
    %p373 = scmp.eq.s32.totalorder %s73, 1
    %p374 = scmp.ne.s32.totalorder %s369, %s371
    %p375 = scmp.eq.s32.totalorder %s73, 0
    %p376 = por %p374, %p375
    %p377 = scmp.ne.s32.totalorder %s369, %s371
    %p378 = scmp.eq.s32.totalorder %s78, 1
    %p379 = por %p377, %p378
    %p380 = scmp.ne.s32.totalorder %s371, %s372
    %p381 = scmp.eq.s32.totalorder %s78, 0
    %p382 = por %p380, %p381
    %p383 = scmp.ne.s32.totalorder %s371, %s372
    %p384 = scmp.eq.s32.totalorder %s79, 1
    %p385 = por %p383, %p384
    %p387 = scmp.ne.s32.totalorder %s372, %s386
    %p388 = scmp.eq.s32.totalorder %s79, 0
    %p389 = por %p387, %p388
    %s391 = sadd.s32 %s390, 1
    %p394 = scmp.eq.s32.totalorder %s73, 1
    %p395 = scmp.ne.s32.totalorder %s390, %s392
    %p396 = scmp.eq.s32.totalorder %s73, 0
    %p397 = por %p395, %p396
    %p398 = scmp.ne.s32.totalorder %s390, %s392
    %p399 = scmp.eq.s32.totalorder %s78, 1
    %p400 = por %p398, %p399
    %p401 = scmp.ne.s32.totalorder %s392, %s393
    %p402 = scmp.eq.s32.totalorder %s78, 0
    %p403 = por %p401, %p402
    %p404 = scmp.ne.s32.totalorder %s392, %s393
    %p405 = scmp.eq.s32.totalorder %s79, 1
    %p406 = por %p404, %p405
    %p408 = scmp.ne.s32.totalorder %s393, %s407
    %p409 = scmp.eq.s32.totalorder %s79, 0
    %p410 = por %p408, %p409
    %s412 = sadd.s32 %s411, 1
    %p415 = scmp.eq.s32.totalorder %s73, 1
    %p416 = scmp.ne.s32.totalorder %s411, %s413
    %p417 = scmp.eq.s32.totalorder %s73, 0
    %p418 = por %p416, %p417
    %p419 = scmp.ne.s32.totalorder %s411, %s413
    %p420 = scmp.eq.s32.totalorder %s78, 1
    %p421 = por %p419, %p420
    %p422 = scmp.ne.s32.totalorder %s413, %s414
    %p423 = scmp.eq.s32.totalorder %s78, 0
    %p424 = por %p422, %p423
    %p425 = scmp.ne.s32.totalorder %s413, %s414
    %p426 = scmp.eq.s32.totalorder %s79, 1
    %p427 = por %p425, %p426
    %p429 = scmp.ne.s32.totalorder %s414, %s428
    %p430 = scmp.eq.s32.totalorder %s79, 0
    %p431 = por %p429, %p430
    %s433 = sadd.s32 %s432, 1
    %p436 = scmp.eq.s32.totalorder %s73, 1
    %p437 = scmp.ne.s32.totalorder %s432, %s434
    %p438 = scmp.eq.s32.totalorder %s73, 0
    %p439 = por %p437, %p438
    %p440 = scmp.ne.s32.totalorder %s432, %s434
    %p441 = scmp.eq.s32.totalorder %s78, 1
    %p442 = por %p440, %p441
    %p443 = scmp.ne.s32.totalorder %s434, %s435
    %p444 = scmp.eq.s32.totalorder %s78, 0
    %p445 = por %p443, %p444
    %p446 = scmp.ne.s32.totalorder %s434, %s435
    %p447 = scmp.eq.s32.totalorder %s79, 1
    %p448 = por %p446, %p447
    %p450 = scmp.ne.s32.totalorder %s435, %s449
    %p451 = scmp.eq.s32.totalorder %s79, 0
    %p452 = por %p450, %p451
    %s454 = sadd.s32 %s453, 1
    %p457 = scmp.eq.s32.totalorder %s73, 1
    %p458 = scmp.ne.s32.totalorder %s453, %s455
    %p459 = scmp.eq.s32.totalorder %s73, 0
    %p460 = por %p458, %p459
    %p461 = scmp.ne.s32.totalorder %s453, %s455
    %p462 = scmp.eq.s32.totalorder %s78, 1
    %p463 = por %p461, %p462
    %p464 = scmp.ne.s32.totalorder %s455, %s456
    %p465 = scmp.eq.s32.totalorder %s78, 0
    %p466 = por %p464, %p465
    %p467 = scmp.ne.s32.totalorder %s455, %s456
    %p468 = scmp.eq.s32.totalorder %s79, 1
    %p469 = por %p467, %p468
    %p471 = scmp.ne.s32.totalorder %s456, %s470
    %p472 = scmp.eq.s32.totalorder %s79, 0
    %p473 = por %p471, %p472
    %s475 = sadd.s32 %s474, 1
    %p478 = scmp.eq.s32.totalorder %s73, 1
    %p479 = scmp.ne.s32.totalorder %s474, %s476
    %p480 = scmp.eq.s32.totalorder %s73, 0
    %p481 = por %p479, %p480
    %p482 = scmp.ne.s32.totalorder %s474, %s476
    %p483 = scmp.eq.s32.totalorder %s78, 1
    %p484 = por %p482, %p483
    %p485 = scmp.ne.s32.totalorder %s476, %s477
    %p486 = scmp.eq.s32.totalorder %s78, 0
    %p487 = por %p485, %p486
    %p488 = scmp.ne.s32.totalorder %s476, %s477
    %p489 = scmp.eq.s32.totalorder %s79, 1
    %p490 = por %p488, %p489
    %p492 = scmp.ne.s32.totalorder %s477, %s491
    %p493 = scmp.eq.s32.totalorder %s79, 0
    %p494 = por %p492, %p493
    %s496 = sadd.s32 %s495, 1
    %p499 = scmp.eq.s32.totalorder %s73, 1
    %p500 = scmp.ne.s32.totalorder %s495, %s497
    %p501 = scmp.eq.s32.totalorder %s73, 0
    %p502 = por %p500, %p501
    %p503 = scmp.ne.s32.totalorder %s495, %s497
    %p504 = scmp.eq.s32.totalorder %s78, 1
    %p505 = por %p503, %p504
    %p506 = scmp.ne.s32.totalorder %s497, %s498
    %p507 = scmp.eq.s32.totalorder %s78, 0
    %p508 = por %p506, %p507
    %p509 = scmp.ne.s32.totalorder %s497, %s498
    %p510 = scmp.eq.s32.totalorder %s79, 1
    %p511 = por %p509, %p510
    %p513 = scmp.ne.s32.totalorder %s498, %s512
    %p514 = scmp.eq.s32.totalorder %s79, 0
    %p515 = por %p513, %p514
    %s517 = sadd.s32 %s516, 1
    %p520 = scmp.eq.s32.totalorder %s73, 1
    %p521 = scmp.ne.s32.totalorder %s516, %s518
    %p522 = scmp.eq.s32.totalorder %s73, 0
    %p523 = por %p521, %p522
    %p524 = scmp.ne.s32.totalorder %s516, %s518
    %p525 = scmp.eq.s32.totalorder %s78, 1
    %p526 = por %p524, %p525
    %p527 = scmp.ne.s32.totalorder %s518, %s519
    %p528 = scmp.eq.s32.totalorder %s78, 0
    %p529 = por %p527, %p528
    %p530 = scmp.ne.s32.totalorder %s518, %s519
    %p531 = scmp.eq.s32.totalorder %s79, 1
    %p532 = por %p530, %p531
    %p534 = scmp.ne.s32.totalorder %s519, %s533
    %p535 = scmp.eq.s32.totalorder %s79, 0
    %p536 = por %p534, %p535
    %s538 = sadd.s32 %s537, 1
    %p541 = scmp.eq.s32.totalorder %s73, 1
    %p542 = scmp.ne.s32.totalorder %s537, %s539
    %p543 = scmp.eq.s32.totalorder %s73, 0
    %p544 = por %p542, %p543
    %p545 = scmp.ne.s32.totalorder %s537, %s539
    %p546 = scmp.eq.s32.totalorder %s78, 1
    %p547 = por %p545, %p546
    %p548 = scmp.ne.s32.totalorder %s539, %s540
    %p549 = scmp.eq.s32.totalorder %s78, 0
    %p550 = por %p548, %p549
    %p551 = scmp.ne.s32.totalorder %s539, %s540
    %p552 = scmp.eq.s32.totalorder %s79, 1
    %p553 = por %p551, %p552
    %p555 = scmp.ne.s32.totalorder %s540, %s554
    %p556 = scmp.eq.s32.totalorder %s79, 0
    %p557 = por %p555, %p556
    %s559 = sadd.s32 %s558, 1
    %p562 = scmp.eq.s32.totalorder %s73, 1
    %p563 = scmp.ne.s32.totalorder %s558, %s560
    %p564 = scmp.eq.s32.totalorder %s73, 0
    %p565 = por %p563, %p564
    %p566 = scmp.ne.s32.totalorder %s558, %s560
    %p567 = scmp.eq.s32.totalorder %s78, 1
    %p568 = por %p566, %p567
    %p569 = scmp.ne.s32.totalorder %s560, %s561
    %p570 = scmp.eq.s32.totalorder %s78, 0
    %p571 = por %p569, %p570
    %p572 = scmp.ne.s32.totalorder %s560, %s561
    %p573 = scmp.eq.s32.totalorder %s79, 1
    %p574 = por %p572, %p573
    %p576 = scmp.ne.s32.totalorder %s561, %s575
    %p577 = scmp.eq.s32.totalorder %s79, 0
    %p578 = por %p576, %p577
    %s580 = sadd.s32 %s579, 1
    %p583 = scmp.eq.s32.totalorder %s73, 1
    %p584 = scmp.ne.s32.totalorder %s579, %s581
    %p585 = scmp.eq.s32.totalorder %s73, 0
    %p586 = por %p584, %p585
    %p587 = scmp.ne.s32.totalorder %s579, %s581
    %p588 = scmp.eq.s32.totalorder %s78, 1
    %p589 = por %p587, %p588
    %p590 = scmp.ne.s32.totalorder %s581, %s582
    %p591 = scmp.eq.s32.totalorder %s78, 0
    %p592 = por %p590, %p591
    %p593 = scmp.ne.s32.totalorder %s581, %s582
    %p594 = scmp.eq.s32.totalorder %s79, 1
    %p595 = por %p593, %p594
    %p597 = scmp.ne.s32.totalorder %s582, %s596
    %p598 = scmp.eq.s32.totalorder %s79, 0
    %p599 = por %p597, %p598
    %s601 = sadd.s32 %s600, 1
    %p604 = scmp.eq.s32.totalorder %s73, 1
    %p605 = scmp.ne.s32.totalorder %s600, %s602
    %p606 = scmp.eq.s32.totalorder %s73, 0
    %p607 = por %p605, %p606
    %p608 = scmp.ne.s32.totalorder %s600, %s602
    %p609 = scmp.eq.s32.totalorder %s78, 1
    %p610 = por %p608, %p609
    %p611 = scmp.ne.s32.totalorder %s602, %s603
    %p612 = scmp.eq.s32.totalorder %s78, 0
    %p613 = por %p611, %p612
    %p614 = scmp.ne.s32.totalorder %s602, %s603
    %p615 = scmp.eq.s32.totalorder %s79, 1
    %p616 = por %p614, %p615
    %p618 = scmp.ne.s32.totalorder %s603, %s617
    %p619 = scmp.eq.s32.totalorder %s79, 0
    %p620 = por %p618, %p619
    %s622 = sadd.s32 %s621, 1
    %p625 = scmp.eq.s32.totalorder %s73, 1
    %p626 = scmp.ne.s32.totalorder %s621, %s623
    %p627 = scmp.eq.s32.totalorder %s73, 0
    %p628 = por %p626, %p627
    %p629 = scmp.ne.s32.totalorder %s621, %s623
    %p630 = scmp.eq.s32.totalorder %s78, 1
    %p631 = por %p629, %p630
    %p632 = scmp.ne.s32.totalorder %s623, %s624
    %p633 = scmp.eq.s32.totalorder %s78, 0
    %p634 = por %p632, %p633
    %p635 = scmp.ne.s32.totalorder %s623, %s624
    %p636 = scmp.eq.s32.totalorder %s79, 1
    %p637 = por %p635, %p636
    %p639 = scmp.ne.s32.totalorder %s624, %s638
    %p640 = scmp.eq.s32.totalorder %s79, 0
    %p641 = por %p639, %p640
    %s643 = sadd.s32 %s642, 1
    %p646 = scmp.eq.s32.totalorder %s73, 1
    %p647 = scmp.ne.s32.totalorder %s642, %s644
    %p648 = scmp.eq.s32.totalorder %s73, 0
    %p649 = por %p647, %p648
    %p650 = scmp.ne.s32.totalorder %s642, %s644
    %p651 = scmp.eq.s32.totalorder %s78, 1
    %p652 = por %p650, %p651
    %p653 = scmp.ne.s32.totalorder %s644, %s645
    %p654 = scmp.eq.s32.totalorder %s78, 0
    %p655 = por %p653, %p654
    %p656 = scmp.ne.s32.totalorder %s644, %s645
    %p657 = scmp.eq.s32.totalorder %s79, 1
    %p658 = por %p656, %p657
    %p660 = scmp.ne.s32.totalorder %s645, %s659
    %p661 = scmp.eq.s32.totalorder %s79, 0
    %p662 = por %p660, %p661
    %s664 = sadd.s32 %s663, 1
    %p667 = scmp.eq.s32.totalorder %s73, 1
    %p668 = scmp.ne.s32.totalorder %s663, %s665
    %p669 = scmp.eq.s32.totalorder %s73, 0
    %p670 = por %p668, %p669
    %p671 = scmp.ne.s32.totalorder %s663, %s665
    %p672 = scmp.eq.s32.totalorder %s78, 1
    %p673 = por %p671, %p672
    %p674 = scmp.ne.s32.totalorder %s665, %s666
    %p675 = scmp.eq.s32.totalorder %s78, 0
    %p676 = por %p674, %p675
    %p677 = scmp.ne.s32.totalorder %s665, %s666
    %p678 = scmp.eq.s32.totalorder %s79, 1
    %p679 = por %p677, %p678
    %p681 = scmp.ne.s32.totalorder %s666, %s680
    %p682 = scmp.eq.s32.totalorder %s79, 0
    %p683 = por %p681, %p682
    %s685 = sadd.s32 %s684, 1
    %p688 = scmp.eq.s32.totalorder %s73, 1
    %p689 = scmp.ne.s32.totalorder %s684, %s686
    %p690 = scmp.eq.s32.totalorder %s73, 0
    %p691 = por %p689, %p690
    %p692 = scmp.ne.s32.totalorder %s684, %s686
    %p693 = scmp.eq.s32.totalorder %s78, 1
    %p694 = por %p692, %p693
    %p695 = scmp.ne.s32.totalorder %s686, %s687
    %p696 = scmp.eq.s32.totalorder %s78, 0
    %p697 = por %p695, %p696
    %p698 = scmp.ne.s32.totalorder %s686, %s687
    %p699 = scmp.eq.s32.totalorder %s79, 1
    %p700 = por %p698, %p699
    %p702 = scmp.ne.s32.totalorder %s687, %s701
    %p703 = scmp.eq.s32.totalorder %s79, 0
    %p704 = por %p702, %p703
    %s706 = sadd.s32 %s705, 1
    %p709 = scmp.eq.s32.totalorder %s73, 1
    %p710 = scmp.ne.s32.totalorder %s705, %s707
    %p711 = scmp.eq.s32.totalorder %s73, 0
    %p712 = por %p710, %p711
    %p713 = scmp.ne.s32.totalorder %s705, %s707
    %p714 = scmp.eq.s32.totalorder %s78, 1
    %p715 = por %p713, %p714
    %p716 = scmp.ne.s32.totalorder %s707, %s708
    %p717 = scmp.eq.s32.totalorder %s78, 0
    %p718 = por %p716, %p717
    %p719 = scmp.ne.s32.totalorder %s707, %s708
    %p720 = scmp.eq.s32.totalorder %s79, 1
    %p721 = por %p719, %p720
    %p723 = scmp.ne.s32.totalorder %s708, %s722
    %p724 = scmp.eq.s32.totalorder %s79, 0
    %p725 = por %p723, %p724
    %s727 = sadd.s32 %s726, 1
    %p730 = scmp.eq.s32.totalorder %s73, 1
    %p731 = scmp.ne.s32.totalorder %s726, %s728
    %p732 = scmp.eq.s32.totalorder %s73, 0
    %p733 = por %p731, %p732
    %p734 = scmp.ne.s32.totalorder %s726, %s728
    %p735 = scmp.eq.s32.totalorder %s78, 1
    %p736 = por %p734, %p735
    %p737 = scmp.ne.s32.totalorder %s728, %s729
    %p738 = scmp.eq.s32.totalorder %s78, 0
    %p739 = por %p737, %p738
    %p740 = scmp.ne.s32.totalorder %s728, %s729
    %p741 = scmp.eq.s32.totalorder %s79, 1
    %p742 = por %p740, %p741
    %p744 = scmp.ne.s32.totalorder %s729, %s743
    %p745 = scmp.eq.s32.totalorder %s79, 0
    %p746 = por %p744, %p745
    %s748 = sadd.s32 %s747, 1
    %p751 = scmp.eq.s32.totalorder %s73, 1
    %p752 = scmp.ne.s32.totalorder %s747, %s749
    %p753 = scmp.eq.s32.totalorder %s73, 0
    %p754 = por %p752, %p753
    %p755 = scmp.ne.s32.totalorder %s747, %s749
    %p756 = scmp.eq.s32.totalorder %s78, 1
    %p757 = por %p755, %p756
    %p758 = scmp.ne.s32.totalorder %s749, %s750
    %p759 = scmp.eq.s32.totalorder %s78, 0
    %p760 = por %p758, %p759
    %p761 = scmp.ne.s32.totalorder %s749, %s750
    %p762 = scmp.eq.s32.totalorder %s79, 1
    %p763 = por %p761, %p762
    %p765 = scmp.ne.s32.totalorder %s750, %s764
    %p766 = scmp.eq.s32.totalorder %s79, 0
    %p767 = por %p765, %p766
    %s769 = sadd.s32 %s768, 1
    %p772 = scmp.eq.s32.totalorder %s73, 1
    %p773 = scmp.ne.s32.totalorder %s768, %s770
    %p774 = scmp.eq.s32.totalorder %s73, 0
    %p775 = por %p773, %p774
    %p776 = scmp.ne.s32.totalorder %s768, %s770
    %p777 = scmp.eq.s32.totalorder %s78, 1
    %p778 = por %p776, %p777
    %p779 = scmp.ne.s32.totalorder %s770, %s771
    %p780 = scmp.eq.s32.totalorder %s78, 0
    %p781 = por %p779, %p780
    %p782 = scmp.ne.s32.totalorder %s770, %s771
    %p783 = scmp.eq.s32.totalorder %s79, 1
    %p784 = por %p782, %p783
    %p786 = scmp.ne.s32.totalorder %s771, %s785
    %p787 = scmp.eq.s32.totalorder %s79, 0
    %p788 = por %p786, %p787
    %s789 = ssub.s32 %s73, %s80
    %p790 = scmp.eq.s32.totalorder %s789, 0
    %s792 = sadd.s32 %s791, 1
    %s793 = scalar_select %p790, %s791, %s792
    %p796 = pneg %p790
    %p797 = scmp.eq.s32.totalorder %s73, 1
    %p798 = por %p796, %p797
    %p799 = scmp.ne.s32.totalorder %s791, %s794
    %p800 = scmp.eq.s32.totalorder %s73, 0
    %p801 = por %p799, %p800
    %p802 = scmp.ne.s32.totalorder %s791, %s794
    %p803 = scmp.eq.s32.totalorder %s78, 1
    %p804 = por %p802, %p803
    %p805 = scmp.ne.s32.totalorder %s794, %s795
    %p806 = scmp.eq.s32.totalorder %s78, 0
    %p807 = por %p805, %p806
    %p808 = scmp.ne.s32.totalorder %s794, %s795
    %p809 = scmp.eq.s32.totalorder %s79, 1
    %p810 = por %p808, %p809
    %p812 = scmp.ne.s32.totalorder %s795, %s811
    %p813 = scmp.eq.s32.totalorder %s79, 0
    %p814 = por %p812, %p813
    %p815 = scmp.le.s32.totalorder 1, %s73
    %p816 = scmp.lt.s32.totalorder %s73, 3
    %p817 = pnand %p815, %p816
    %p818 = pneg %p817
    // Predicated region
    $region9: #{forward.8} parent=5 // pred_check
      _
    $region10: #{forward.8} parent=5 // pred_check_branch
      %820 = sbr.rel (%p817) target = $region12
    $region11: #{forward.8} parent=5 // pred_region
      %s821 = ssub.s32 %s73, 1
      // Predicated region
      $region13: #{forward.8} parent=11 // pred_check
        %p822 = pneg %p172
      $region14: #{forward.8} parent=11 // pred_check_branch
        %824 = sbr.rel (%p822) target = $region16
      $region15: #{forward.8} parent=11 // pred_region
        _
      $region16: #{forward.8} parent=11 // pred_fallthru
        _
      // Predicated region
      $region17: #{forward.8} parent=11 // pred_check
        %p825 = pneg %p193
      $region18: #{forward.8} parent=11 // pred_check_branch
        %827 = sbr.rel (%p825) target = $region20
      $region19: #{forward.8} parent=11 // pred_region
        _
      $region20: #{forward.8} parent=11 // pred_fallthru
        _
      // Predicated region
      $region21: #{forward.8} parent=11 // pred_check
        %p828 = pneg %p214
      $region22: #{forward.8} parent=11 // pred_check_branch
        %830 = sbr.rel (%p828) target = $region24
      $region23: #{forward.8} parent=11 // pred_region
        _
      $region24: #{forward.8} parent=11 // pred_fallthru
        _
      // Predicated region
      $region25: #{forward.8} parent=11 // pred_check
        %p831 = pneg %p235
      $region26: #{forward.8} parent=11 // pred_check_branch
        %833 = sbr.rel (%p831) target = $region28
      $region27: #{forward.8} parent=11 // pred_region
        _
      $region28: #{forward.8} parent=11 // pred_fallthru
        _
      // Predicated region
      $region29: #{forward.8} parent=11 // pred_check
        %p834 = pneg %p256
      $region30: #{forward.8} parent=11 // pred_check_branch
        %836 = sbr.rel (%p834) target = $region32
      $region31: #{forward.8} parent=11 // pred_region
        _
      $region32: #{forward.8} parent=11 // pred_fallthru
        _
      // Predicated region
      $region33: #{forward.8} parent=11 // pred_check
        %p837 = pneg %p277
      $region34: #{forward.8} parent=11 // pred_check_branch
        %839 = sbr.rel (%p837) target = $region36
      $region35: #{forward.8} parent=11 // pred_region
        _
      $region36: #{forward.8} parent=11 // pred_fallthru
        _
      // Predicated region
      $region37: #{forward.8} parent=11 // pred_check
        %p840 = pneg %p298
      $region38: #{forward.8} parent=11 // pred_check_branch
        %842 = sbr.rel (%p840) target = $region40
      $region39: #{forward.8} parent=11 // pred_region
        _
      $region40: #{forward.8} parent=11 // pred_fallthru
        _
      // Predicated region
      $region41: #{forward.8} parent=11 // pred_check
        %p843 = pneg %p319
      $region42: #{forward.8} parent=11 // pred_check_branch
        %845 = sbr.rel (%p843) target = $region44
      $region43: #{forward.8} parent=11 // pred_region
        _
      $region44: #{forward.8} parent=11 // pred_fallthru
        _
      // Predicated region
      $region45: #{forward.8} parent=11 // pred_check
        %p846 = pneg %p340
      $region46: #{forward.8} parent=11 // pred_check_branch
        %848 = sbr.rel (%p846) target = $region48
      $region47: #{forward.8} parent=11 // pred_region
        _
      $region48: #{forward.8} parent=11 // pred_fallthru
        _
      // Predicated region
      $region49: #{forward.8} parent=11 // pred_check
        %p849 = pneg %p361
      $region50: #{forward.8} parent=11 // pred_check_branch
        %851 = sbr.rel (%p849) target = $region52
      $region51: #{forward.8} parent=11 // pred_region
        _
      $region52: #{forward.8} parent=11 // pred_fallthru
        _
      // Predicated region
      $region53: #{forward.8} parent=11 // pred_check
        %p852 = pneg %p382
      $region54: #{forward.8} parent=11 // pred_check_branch
        %854 = sbr.rel (%p852) target = $region56
      $region55: #{forward.8} parent=11 // pred_region
        _
      $region56: #{forward.8} parent=11 // pred_fallthru
        _
      // Predicated region
      $region57: #{forward.8} parent=11 // pred_check
        %p855 = pneg %p403
      $region58: #{forward.8} parent=11 // pred_check_branch
        %857 = sbr.rel (%p855) target = $region60
      $region59: #{forward.8} parent=11 // pred_region
        _
      $region60: #{forward.8} parent=11 // pred_fallthru
        _
      // Predicated region
      $region61: #{forward.8} parent=11 // pred_check
        %p858 = pneg %p424
      $region62: #{forward.8} parent=11 // pred_check_branch
        %860 = sbr.rel (%p858) target = $region64
      $region63: #{forward.8} parent=11 // pred_region
        _
      $region64: #{forward.8} parent=11 // pred_fallthru
        _
      // Predicated region
      $region65: #{forward.8} parent=11 // pred_check
        %p861 = pneg %p445
      $region66: #{forward.8} parent=11 // pred_check_branch
        %863 = sbr.rel (%p861) target = $region68
      $region67: #{forward.8} parent=11 // pred_region
        _
      $region68: #{forward.8} parent=11 // pred_fallthru
        _
      // Predicated region
      $region69: #{forward.8} parent=11 // pred_check
        %p864 = pneg %p466
      $region70: #{forward.8} parent=11 // pred_check_branch
        %866 = sbr.rel (%p864) target = $region72
      $region71: #{forward.8} parent=11 // pred_region
        _
      $region72: #{forward.8} parent=11 // pred_fallthru
        _
      // Predicated region
      $region73: #{forward.8} parent=11 // pred_check
        %p867 = pneg %p487
      $region74: #{forward.8} parent=11 // pred_check_branch
        %869 = sbr.rel (%p867) target = $region76
      $region75: #{forward.8} parent=11 // pred_region
        _
      $region76: #{forward.8} parent=11 // pred_fallthru
        _
      // Predicated region
      $region77: #{forward.8} parent=11 // pred_check
        %p870 = pneg %p508
      $region78: #{forward.8} parent=11 // pred_check_branch
        %872 = sbr.rel (%p870) target = $region80
      $region79: #{forward.8} parent=11 // pred_region
        _
      $region80: #{forward.8} parent=11 // pred_fallthru
        _
      // Predicated region
      $region81: #{forward.8} parent=11 // pred_check
        %p873 = pneg %p529
      $region82: #{forward.8} parent=11 // pred_check_branch
        %875 = sbr.rel (%p873) target = $region84
      $region83: #{forward.8} parent=11 // pred_region
        _
      $region84: #{forward.8} parent=11 // pred_fallthru
        _
      // Predicated region
      $region85: #{forward.8} parent=11 // pred_check
        %p876 = pneg %p550
      $region86: #{forward.8} parent=11 // pred_check_branch
        %878 = sbr.rel (%p876) target = $region88
      $region87: #{forward.8} parent=11 // pred_region
        _
      $region88: #{forward.8} parent=11 // pred_fallthru
        _
      // Predicated region
      $region89: #{forward.8} parent=11 // pred_check
        %p879 = pneg %p571
      $region90: #{forward.8} parent=11 // pred_check_branch
        %881 = sbr.rel (%p879) target = $region92
      $region91: #{forward.8} parent=11 // pred_region
        _
      $region92: #{forward.8} parent=11 // pred_fallthru
        _
      // Predicated region
      $region93: #{forward.8} parent=11 // pred_check
        %p882 = pneg %p592
      $region94: #{forward.8} parent=11 // pred_check_branch
        %884 = sbr.rel (%p882) target = $region96
      $region95: #{forward.8} parent=11 // pred_region
        _
      $region96: #{forward.8} parent=11 // pred_fallthru
        _
      // Predicated region
      $region97: #{forward.8} parent=11 // pred_check
        %p885 = pneg %p613
      $region98: #{forward.8} parent=11 // pred_check_branch
        %887 = sbr.rel (%p885) target = $region100
      $region99: #{forward.8} parent=11 // pred_region
        _
      $region100: #{forward.8} parent=11 // pred_fallthru
        _
      // Predicated region
      $region101: #{forward.8} parent=11 // pred_check
        %p888 = pneg %p634
      $region102: #{forward.8} parent=11 // pred_check_branch
        %890 = sbr.rel (%p888) target = $region104
      $region103: #{forward.8} parent=11 // pred_region
        _
      $region104: #{forward.8} parent=11 // pred_fallthru
        _
      // Predicated region
      $region105: #{forward.8} parent=11 // pred_check
        %p891 = pneg %p655
      $region106: #{forward.8} parent=11 // pred_check_branch
        %893 = sbr.rel (%p891) target = $region108
      $region107: #{forward.8} parent=11 // pred_region
        _
      $region108: #{forward.8} parent=11 // pred_fallthru
        _
      // Predicated region
      $region109: #{forward.8} parent=11 // pred_check
        %p894 = pneg %p676
      $region110: #{forward.8} parent=11 // pred_check_branch
        %896 = sbr.rel (%p894) target = $region112
      $region111: #{forward.8} parent=11 // pred_region
        _
      $region112: #{forward.8} parent=11 // pred_fallthru
        _
      // Predicated region
      $region113: #{forward.8} parent=11 // pred_check
        %p897 = pneg %p697
      $region114: #{forward.8} parent=11 // pred_check_branch
        %899 = sbr.rel (%p897) target = $region116
      $region115: #{forward.8} parent=11 // pred_region
        _
      $region116: #{forward.8} parent=11 // pred_fallthru
        _
      // Predicated region
      $region117: #{forward.8} parent=11 // pred_check
        %p900 = pneg %p718
      $region118: #{forward.8} parent=11 // pred_check_branch
        %902 = sbr.rel (%p900) target = $region120
      $region119: #{forward.8} parent=11 // pred_region
        _
      $region120: #{forward.8} parent=11 // pred_fallthru
        _
      // Predicated region
      $region121: #{forward.8} parent=11 // pred_check
        %p903 = pneg %p739
      $region122: #{forward.8} parent=11 // pred_check_branch
        %905 = sbr.rel (%p903) target = $region124
      $region123: #{forward.8} parent=11 // pred_region
        _
      $region124: #{forward.8} parent=11 // pred_fallthru
        _
      // Predicated region
      $region125: #{forward.8} parent=11 // pred_check
        %p906 = pneg %p760
      $region126: #{forward.8} parent=11 // pred_check_branch
        %908 = sbr.rel (%p906) target = $region128
      $region127: #{forward.8} parent=11 // pred_region
        _
      $region128: #{forward.8} parent=11 // pred_fallthru
        _
      // Predicated region
      $region129: #{forward.8} parent=11 // pred_check
        %p909 = pneg %p781
      $region130: #{forward.8} parent=11 // pred_check_branch
        %911 = sbr.rel (%p909) target = $region132
      $region131: #{forward.8} parent=11 // pred_region
        _
      $region132: #{forward.8} parent=11 // pred_fallthru
        _
    $region12: #{forward.8} parent=5 // pred_fallthru
      _
    %p912 = scmp.lt.s32.totalorder %s73, 2
    // Predicated region
    $region133: #{forward.8} parent=5 // pred_check
      %p913 = pneg %p912
    $region134: #{forward.8} parent=5 // pred_check_branch
      %915 = sbr.rel (%p913) target = $region136
    $region135: #{forward.8} parent=5 // pred_region
      // Predicated region
      $region137: #{forward.8} parent=135 // pred_check
        %p916 = pneg %p93
      $region138: #{forward.8} parent=135 // pred_check_branch
        %918 = sbr.rel (%p916) target = $region140
      $region139: #{forward.8} parent=135 // pred_region
        %p919 = scmp.lt.s32.totalorder %s73, 1
        %s920 = scalar_select %p919, %s73, 1
        %s921 = smul.addr %s920, 8
        %s922 = scalar_lea.vmem %s1, %s921
      $region140: #{forward.8} parent=135 // pred_fallthru
        _
      // Predicated region
      $region141: #{forward.8} parent=135 // pred_check
        %p923 = pneg %p119
      $region142: #{forward.8} parent=135 // pred_check_branch
        %925 = sbr.rel (%p923) target = $region144
      $region143: #{forward.8} parent=135 // pred_region
        %p926 = scmp.lt.s32.totalorder %s73, 1
        %s927 = scalar_select %p926, %s73, 1
        %s928 = smul.addr %s927, 8
        %s929 = scalar_lea.vmem %s3, %s928
      $region144: #{forward.8} parent=135 // pred_fallthru
        _
      // Predicated region
      $region145: #{forward.8} parent=135 // pred_check
        %p930 = pneg %p145
      $region146: #{forward.8} parent=135 // pred_check_branch
        %932 = sbr.rel (%p930) target = $region148
      $region147: #{forward.8} parent=135 // pred_region
        %p933 = scmp.lt.s32.totalorder %s73, 1
        %s934 = scalar_select %p933, %s73, 1
        %s935 = scalar_lea.vmem %s5, %s934
      $region148: #{forward.8} parent=135 // pred_fallthru
        _
    $region136: #{forward.8} parent=5 // pred_fallthru
      _
    %p936 = scmp.le.s32.totalorder 1, %s73
    %p937 = scmp.lt.s32.totalorder %s73, 3
    %p938 = pnand %p936, %p937
    %p939 = pneg %p938
    // Predicated region
    $region149: #{forward.8} parent=5 // pred_check
      _
    $region150: #{forward.8} parent=5 // pred_check_branch
      %941 = sbr.rel (%p938) target = $region152
    $region151: #{forward.8} parent=5 // pred_region
      %s942 = ssub.s32 %s73, 1
      %p943 = scmp.lt.s32.totalorder %s78, 1
      %s944 = scalar_select %p943, %s78, 1
      %s945 = smul.addr %s944, 8
      %s946 = scalar_lea.vmem %s1, %s945
      %p947 = pneg %p99
      %p948 = pneg %p96
      %p949 = scmp.lt.s32.totalorder %s78, 1
      %s950 = scalar_select %p949, %s78, 1
      %s951 = smul.addr %s950, 8
      %s952 = scalar_lea.vmem %s3, %s951
      %p953 = pneg %p125
      %p954 = pneg %p122
      %p955 = scmp.lt.s32.totalorder %s78, 1
      %s956 = scalar_select %p955, %s78, 1
      %s957 = scalar_lea.vmem %s5, %s956
      %p958 = pneg %p151
      %p959 = pneg %p148
      %p960 = pneg %p172
      %p961 = pneg %p169
      %p962 = pneg %p193
      %p963 = pneg %p190
      %p964 = pneg %p214
      %p965 = pneg %p211
      %p966 = pneg %p235
      %p967 = pneg %p232
      %p968 = pneg %p256
      %p969 = pneg %p253
      %p970 = pneg %p277
      %p971 = pneg %p274
      %p972 = pneg %p298
      %p973 = pneg %p295
      %p974 = pneg %p319
      %p975 = pneg %p316
      %p976 = pneg %p340
      %p977 = pneg %p337
      %p978 = pneg %p361
      %p979 = pneg %p358
      %p980 = pneg %p382
      %p981 = pneg %p379
      %p982 = pneg %p403
      %p983 = pneg %p400
      %p984 = pneg %p424
      %p985 = pneg %p421
      %p986 = pneg %p445
      %p987 = pneg %p442
      %p988 = pneg %p466
      %p989 = pneg %p463
      %p990 = pneg %p487
      %p991 = pneg %p484
      %p992 = pneg %p508
      %p993 = pneg %p505
      %p994 = pneg %p529
      %p995 = pneg %p526
      %p996 = pneg %p550
      %p997 = pneg %p547
      %p998 = pneg %p571
      %p999 = pneg %p568
      %p1000 = pneg %p592
      %p1001 = pneg %p589
      %p1002 = pneg %p613
      %p1003 = pneg %p610
      %p1004 = pneg %p634
      %p1005 = pneg %p631
      %p1006 = pneg %p655
      %p1007 = pneg %p652
      %p1008 = pneg %p676
      %p1009 = pneg %p673
      %p1010 = pneg %p697
      %p1011 = pneg %p694
      %p1012 = pneg %p718
      %p1013 = pneg %p715
      %p1014 = pneg %p739
      %p1015 = pneg %p736
      %p1016 = pneg %p760
      %p1017 = pneg %p757
      %p1018 = pneg %p781
      %p1019 = pneg %p778
      %p1020 = pneg %p807
      %p1021 = pneg %p804
      %p1022 = scmp.lt.s32.totalorder %s78, 1
      %s1023 = scalar_select %p1022, %s78, 1
      %s1024 = smul.addr %s1023, 8
      %s1025 = scalar_lea.vmem %s67, %s1024
      %p1026 = scmp.lt.s32.totalorder %s78, 1
      %s1027 = scalar_select %p1026, %s78, 1
      %s1028 = smul.addr %s1027, 8
      %s1029 = scalar_lea.vmem %s1, %s1028
      %p1030 = scmp.lt.s32.totalorder %s78, 1
      %s1031 = scalar_select %p1030, %s78, 1
      %s1032 = smul.addr %s1031, 8
      %s1033 = scalar_lea.vmem %s3, %s1032
      %p1034 = scmp.lt.s32.totalorder %s78, 1
      %s1035 = scalar_select %p1034, %s78, 1
      %s1036 = scalar_lea.vmem %s5, %s1035
      %p1037 = scmp.lt.s32.totalorder %s78, 1
      %s1038 = scalar_select %p1037, %s78, 1
      %s1039 = smul.addr %s1038, 8
      %s1040 = scalar_lea.vmem %s67, %s1039
      %v1042 = vld [vmem:[%s1029] sm:$0xff]
      %v1043 = vld [vmem:[%s1033] sm:$0xff]
      %v1044 = vld [vmem:[%s1036] sm:$0x1]
      %1045 = vadd.xlane.f32.xlu0 %v1042
      %v1046 = vpop.xlane.xlu0 %1045
      %v1047 = vrcp.pop 128.0
      %v1048 = vmul.f32 %v1046, %v1047
      %v1049 = vsub.f32 %v1042, %v1048
      %v1050 = vmul.f32 %v1049, %v1049
      %1051 = vadd.xlane.f32.xlu0 %v1050
      %v1052 = vpop.xlane.xlu0 %1051
      %v1053 = vmul.f32 %v1052, %v1047
      %v1054 = vadd.f32 %v1053, 1e-05
      %v1055 = vrsqrt.pop %v1054
      %v1056 = vmul.f32 %v1049, %v1055
      %v1057 = vld [vmem:[%s7] sm:$0x1]
      %v1059 = vlaneseq
      %v1060 = vshrl.u32 %v1059, 7
      %v1061 = vsub.s32 0, %v1060
      %v1062 = vrot.slane %v1057, %v1061
      %v1064 = vmul.f32 %v1056, %v1062
      %v1065 = vld [vmem:[%s9] sm:$0x1]
      %v1067 = vlaneseq
      %v1068 = vshrl.u32 %v1067, 7
      %v1069 = vsub.s32 0, %v1068
      %v1070 = vrot.slane %v1065, %v1069
      %v1072 = vadd.f32 %v1064, %v1070
      %v1073 = vpack.c.bf16 %v1072, %v1072
      %v1074 = vld [vmem:[%s11] sm:$0xff]
      %v1075 = vld [vmem:[%s11 + $0x8] sm:$0xff]
      %v1076 = vld [vmem:[%s11 + $0x10] sm:$0xff]
      %v1077 = vld [vmem:[%s11 + $0x18] sm:$0xff]
      %v1078 = vld [vmem:[%s11 + $0x20] sm:$0xff]
      %v1079 = vld [vmem:[%s11 + $0x28] sm:$0xff]
      %v1080 = vld [vmem:[%s11 + $0x30] sm:$0xff]
      %v1081 = vld [vmem:[%s11 + $0x38] sm:$0xff]
      %v1082 = vld [vmem:[%s11 + $0x40] sm:$0xff]
      %v1083 = vld [vmem:[%s11 + $0x48] sm:$0xff]
      %v1084 = vld [vmem:[%s11 + $0x50] sm:$0xff]
      %v1085 = vld [vmem:[%s11 + $0x58] sm:$0xff]
      %v1086 = vld [vmem:[%s11 + $0x60] sm:$0xff]
      %v1087 = vld [vmem:[%s11 + $0x68] sm:$0xff]
      %v1088 = vld [vmem:[%s11 + $0x70] sm:$0xff]
      %v1089 = vld [vmem:[%s11 + $0x78] sm:$0xff]
      %v1090 = vld [vmem:[%s13] sm:$0x3]
      %v1092 = vlaneseq
      %v1093 = vshrl.u32 %v1092, 7
      %v1094 = vsub.s32 0, %v1093
      %v1095 = vrot.slane %v1090, %v1094
      %v1096 = vlaneseq
      %v1097 = vshrl.u32 %v1096, 7
      %v1098 = vsub.s32 1, %v1097
      %v1099 = vrot.slane %v1090, %v1098
      %v1118 = vunpack.c.l.b16 %v1074
      %v1119 = vunpack.c.h.b16 %v1074
      %v1120 = vunpack.c.l.b16 %v1075
      %v1121 = vunpack.c.h.b16 %v1075
      %v1122 = vunpack.c.l.b16 %v1076
      %v1123 = vunpack.c.h.b16 %v1076
      %v1124 = vunpack.c.l.b16 %v1077
      %v1125 = vunpack.c.h.b16 %v1077
      %v1126 = vunpack.c.l.b16 %v1078
      %v1127 = vunpack.c.h.b16 %v1078
      %v1128 = vunpack.c.l.b16 %v1079
      %v1129 = vunpack.c.h.b16 %v1079
      %v1130 = vunpack.c.l.b16 %v1080
      %v1131 = vunpack.c.h.b16 %v1080
      %v1132 = vunpack.c.l.b16 %v1081
      %v1133 = vunpack.c.h.b16 %v1081
      %v1134 = vunpack.c.l.b16 %v1082
      %v1135 = vunpack.c.h.b16 %v1082
      %v1136 = vunpack.c.l.b16 %v1083
      %v1137 = vunpack.c.h.b16 %v1083
      %v1138 = vunpack.c.l.b16 %v1084
      %v1139 = vunpack.c.h.b16 %v1084
      %v1140 = vunpack.c.l.b16 %v1085
      %v1141 = vunpack.c.h.b16 %v1085
      %v1142 = vunpack.c.l.b16 %v1086
      %v1143 = vunpack.c.h.b16 %v1086
      %v1144 = vunpack.c.l.b16 %v1087
      %v1145 = vunpack.c.h.b16 %v1087
      %v1146 = vunpack.c.l.b16 %v1088
      %v1147 = vunpack.c.h.b16 %v1088
      %v1148 = vunpack.c.l.b16 %v1089
      %v1149 = vunpack.c.h.b16 %v1089
      %v1150 = vpack.c.b16 %v1120, %v1118
      %v1151 = vpack.c.b16 %v1121, %v1119
      %v1152 = vpack.c.b16 %v1124, %v1122
      %v1153 = vpack.c.b16 %v1125, %v1123
      %v1154 = vpack.c.b16 %v1128, %v1126
      %v1155 = vpack.c.b16 %v1129, %v1127
      %v1156 = vpack.c.b16 %v1132, %v1130
      %v1157 = vpack.c.b16 %v1133, %v1131
      %v1158 = vpack.c.b16 %v1136, %v1134
      %v1159 = vpack.c.b16 %v1137, %v1135
      %v1160 = vpack.c.b16 %v1140, %v1138
      %v1161 = vpack.c.b16 %v1141, %v1139
      %v1162 = vpack.c.b16 %v1144, %v1142
      %v1163 = vpack.c.b16 %v1145, %v1143
      %v1164 = vpack.c.b16 %v1148, %v1146
      %v1165 = vpack.c.b16 %v1149, %v1147
      %1182 = vmatprep.subr.bf16.mxu0 %v1151
      %1183 = vmatpush1.bf16.msra.mxu0 %v1150
      %1184 = vmatprep.subr.bf16.mxu0 %v1153
      %1185 = vmatpush1.bf16.msra.mxu0 %v1152
      %1186 = vmatprep.subr.bf16.mxu0 %v1155
      %1187 = vmatpush1.bf16.msra.mxu0 %v1154
      %1188 = vmatprep.subr.bf16.mxu0 %v1157
      %1189 = vmatpush1.bf16.msra.mxu0 %v1156
      %1190 = vmatprep.subr.bf16.mxu0 %v1159
      %1191 = vmatpush1.bf16.msra.mxu0 %v1158
      %1192 = vmatprep.subr.bf16.mxu0 %v1161
      %1193 = vmatpush1.bf16.msra.mxu0 %v1160
      %1194 = vmatprep.subr.bf16.mxu0 %v1163
      %1195 = vmatpush1.bf16.msra.mxu0 %v1162
      %1196 = vmatprep.subr.bf16.mxu0 %v1165
      %1197 = vmatpush1.bf16.msra.mxu0 %v1164
      %1198 = vmatprep.subr.bf16.mxu0 0
      %1199 = vmatpush1.bf16.msra.mxu0 0
      %1200 = vmatprep.subr.bf16.mxu0 0
      %1201 = vmatpush1.bf16.msra.mxu0 0
      %1202 = vmatprep.subr.bf16.mxu0 0
      %1203 = vmatpush1.bf16.msra.mxu0 0
      %1204 = vmatprep.subr.bf16.mxu0 0
      %1205 = vmatpush1.bf16.msra.mxu0 0
      %1206 = vmatprep.subr.bf16.mxu0 0
      %1207 = vmatpush1.bf16.msra.mxu0 0
      %1208 = vmatprep.subr.bf16.mxu0 0
      %1209 = vmatpush1.bf16.msra.mxu0 0
      %1210 = vmatprep.subr.bf16.mxu0 0
      %1211 = vmatpush1.bf16.msra.mxu0 0
      %1212 = vmatprep.subr.bf16.mxu0 0
      %1213 = vmatpush1.bf16.msra.mxu0 0
      %1214 = vmatprep.mubr.bf16.mxu0 0
      %1215 = vmatmul.mubr.bf16.gmra.mrb[0].mxu0 %v1073
      %v1216 = vpop.f32.mrb[0].mxu0
      %v1217 = vadd.f32 %v1095, %v1216
      %v1218 = vpop.f32.mrb[0].mxu0
      %v1219 = vadd.f32 %v1099, %v1218
      %v1220 = vpop.f32.mrb[0].mxu0
      %v1221 = vpop.f32.mrb[0].mxu0
      %1222 = vdwg.mxu0
      %v1223 = vxor.u32 %v1217, 2147483648
      %v1224 = vxor.u32 %v1219, 2147483648
      %v1225 = vmul.f32 %v1223, 1.442695
      %v1226 = vpow.pop %v1225
      %v1227 = vmul.f32 %v1224, 1.442695
      %v1228 = vpow.pop %v1227
      %v1229 = vadd.f32 %v1226, 1.0
      %v1230 = vadd.f32 %v1228, 1.0
      %v1231 = vrcp.pop %v1229
      %v1232 = vmul.f32 1.0, %v1231
      %v1233 = vrcp.pop %v1230
      %v1234 = vmul.f32 1.0, %v1233
      %v1235 = vmul.f32 %v1217, %v1232
      %v1236 = vmul.f32 %v1219, %v1234
      %v1237 = vpack.c.bf16 %v1235, %v1235
      %v1238 = vpack.c.bf16 %v1236, %v1236
      %v1239 = vld [vmem:[%s15] sm:$0xf]
      %v1240 = vld [vmem:[%s15 + $0x4] sm:$0xf]
      %v1241 = vld [vmem:[%s15 + $0x8] sm:$0xf]
      %v1242 = vld [vmem:[%s15 + $0xc] sm:$0xf]
      %v1243 = vld [vmem:[%s15 + $0x10] sm:$0xf]
      %v1244 = vld [vmem:[%s15 + $0x14] sm:$0xf]
      %v1245 = vld [vmem:[%s15 + $0x18] sm:$0xf]
      %v1246 = vld [vmem:[%s15 + $0x1c] sm:$0xf]
      %v1247 = vld [vmem:[%s15 + $0x20] sm:$0xf]
      %v1248 = vld [vmem:[%s15 + $0x24] sm:$0xf]
      %v1249 = vld [vmem:[%s15 + $0x28] sm:$0xf]
      %v1250 = vld [vmem:[%s15 + $0x2c] sm:$0xf]
      %v1251 = vld [vmem:[%s15 + $0x30] sm:$0xf]
      %v1252 = vld [vmem:[%s15 + $0x34] sm:$0xf]
      %v1253 = vld [vmem:[%s15 + $0x38] sm:$0xf]
      %v1254 = vld [vmem:[%s15 + $0x3c] sm:$0xf]
      %v1255 = vld [vmem:[%s15 + $0x40] sm:$0xf]
      %v1256 = vld [vmem:[%s15 + $0x44] sm:$0xf]
      %v1257 = vld [vmem:[%s15 + $0x48] sm:$0xf]
      %v1258 = vld [vmem:[%s15 + $0x4c] sm:$0xf]
      %v1259 = vld [vmem:[%s15 + $0x50] sm:$0xf]
      %v1260 = vld [vmem:[%s15 + $0x54] sm:$0xf]
      %v1261 = vld [vmem:[%s15 + $0x58] sm:$0xf]
      %v1262 = vld [vmem:[%s15 + $0x5c] sm:$0xf]
      %v1263 = vld [vmem:[%s15 + $0x60] sm:$0xf]
      %v1264 = vld [vmem:[%s15 + $0x64] sm:$0xf]
      %v1265 = vld [vmem:[%s15 + $0x68] sm:$0xf]
      %v1266 = vld [vmem:[%s15 + $0x6c] sm:$0xf]
      %v1267 = vld [vmem:[%s15 + $0x70] sm:$0xf]
      %v1268 = vld [vmem:[%s15 + $0x74] sm:$0xf]
      %v1269 = vld [vmem:[%s15 + $0x78] sm:$0xf]
      %v1270 = vld [vmem:[%s15 + $0x7c] sm:$0xf]
      %v1271 = vld [vmem:[%s17] sm:$0x1]
      %v1273 = vlaneseq
      %v1274 = vshrl.u32 %v1273, 7
      %v1275 = vsub.s32 0, %v1274
      %v1276 = vrot.slane %v1271, %v1275
      %v1310 = vunpack.c.l.b16 %v1239
      %v1311 = vunpack.c.l.b16 %v1240
      %v1312 = vunpack.c.l.b16 %v1241
      %v1313 = vunpack.c.l.b16 %v1242
      %v1314 = vunpack.c.l.b16 %v1243
      %v1315 = vunpack.c.l.b16 %v1244
      %v1316 = vunpack.c.l.b16 %v1245
      %v1317 = vunpack.c.l.b16 %v1246
      %v1318 = vunpack.c.l.b16 %v1247
      %v1319 = vunpack.c.l.b16 %v1248
      %v1320 = vunpack.c.l.b16 %v1249
      %v1321 = vunpack.c.l.b16 %v1250
      %v1322 = vunpack.c.l.b16 %v1251
      %v1323 = vunpack.c.l.b16 %v1252
      %v1324 = vunpack.c.l.b16 %v1253
      %v1325 = vunpack.c.l.b16 %v1254
      %v1326 = vunpack.c.l.b16 %v1255
      %v1327 = vunpack.c.l.b16 %v1256
      %v1328 = vunpack.c.l.b16 %v1257
      %v1329 = vunpack.c.l.b16 %v1258
      %v1330 = vunpack.c.l.b16 %v1259
      %v1331 = vunpack.c.l.b16 %v1260
      %v1332 = vunpack.c.l.b16 %v1261
      %v1333 = vunpack.c.l.b16 %v1262
      %v1334 = vunpack.c.l.b16 %v1263
      %v1335 = vunpack.c.l.b16 %v1264
      %v1336 = vunpack.c.l.b16 %v1265
      %v1337 = vunpack.c.l.b16 %v1266
      %v1338 = vunpack.c.l.b16 %v1267
      %v1339 = vunpack.c.l.b16 %v1268
      %v1340 = vunpack.c.l.b16 %v1269
      %v1341 = vunpack.c.l.b16 %v1270
      %v1342 = vpack.c.b16 %v1311, %v1310
      %v1343 = vpack.c.b16 %v1313, %v1312
      %v1344 = vpack.c.b16 %v1315, %v1314
      %v1345 = vpack.c.b16 %v1317, %v1316
      %v1346 = vpack.c.b16 %v1319, %v1318
      %v1347 = vpack.c.b16 %v1321, %v1320
      %v1348 = vpack.c.b16 %v1323, %v1322
      %v1349 = vpack.c.b16 %v1325, %v1324
      %v1350 = vpack.c.b16 %v1327, %v1326
      %v1351 = vpack.c.b16 %v1329, %v1328
      %v1352 = vpack.c.b16 %v1331, %v1330
      %v1353 = vpack.c.b16 %v1333, %v1332
      %v1354 = vpack.c.b16 %v1335, %v1334
      %v1355 = vpack.c.b16 %v1337, %v1336
      %v1356 = vpack.c.b16 %v1339, %v1338
      %v1357 = vpack.c.b16 %v1341, %v1340
      %1374 = vmatprep.subr.bf16.mxu0 0
      %1375 = vmatpush1.bf16.msra.mxu0 %v1342
      %1376 = vmatprep.subr.bf16.mxu0 0
      %1377 = vmatpush1.bf16.msra.mxu0 %v1343
      %1378 = vmatprep.subr.bf16.mxu0 0
      %1379 = vmatpush1.bf16.msra.mxu0 %v1344
      %1380 = vmatprep.subr.bf16.mxu0 0
      %1381 = vmatpush1.bf16.msra.mxu0 %v1345
      %1382 = vmatprep.subr.bf16.mxu0 0
      %1383 = vmatpush1.bf16.msra.mxu0 %v1346
      %1384 = vmatprep.subr.bf16.mxu0 0
      %1385 = vmatpush1.bf16.msra.mxu0 %v1347
      %1386 = vmatprep.subr.bf16.mxu0 0
      %1387 = vmatpush1.bf16.msra.mxu0 %v1348
      %1388 = vmatprep.subr.bf16.mxu0 0
      %1389 = vmatpush1.bf16.msra.mxu0 %v1349
      %1390 = vmatprep.subr.bf16.mxu0 0
      %1391 = vmatpush1.bf16.msra.mxu0 %v1350
      %1392 = vmatprep.subr.bf16.mxu0 0
      %1393 = vmatpush1.bf16.msra.mxu0 %v1351
      %1394 = vmatprep.subr.bf16.mxu0 0
      %1395 = vmatpush1.bf16.msra.mxu0 %v1352
      %1396 = vmatprep.subr.bf16.mxu0 0
      %1397 = vmatpush1.bf16.msra.mxu0 %v1353
      %1398 = vmatprep.subr.bf16.mxu0 0
      %1399 = vmatpush1.bf16.msra.mxu0 %v1354
      %1400 = vmatprep.subr.bf16.mxu0 0
      %1401 = vmatpush1.bf16.msra.mxu0 %v1355
      %1402 = vmatprep.subr.bf16.mxu0 0
      %1403 = vmatpush1.bf16.msra.mxu0 %v1356
      %1404 = vmatprep.subr.bf16.mxu0 0
      %1405 = vmatpush1.bf16.msra.mxu0 %v1357
      %1406 = vmatprep.mubr.bf16.mxu0 %v1238
      %1407 = vmatmul.mubr.bf16.gmra.mrb[0].mxu0 %v1237
      %v1408 = vpop.f32.mrb[0].mxu0
      %v1409 = vadd.f32 %v1276, %v1408
      %v1410 = vpop.f32.mrb[0].mxu0
      %v1411 = vpop.f32.mrb[0].mxu0
      %v1412 = vpop.f32.mrb[0].mxu0
      %1413 = vdwg.mxu0
      %v1414 = vmul.f32 %v1409, 0.5
      %v1415 = vadd.f32 %v1042, %v1414
      %1416 = vadd.xlane.f32.xlu0 %v1415
      %v1417 = vpop.xlane.xlu0 %1416
      %v1418 = vmul.f32 %v1417, %v1047
      %v1419 = vsub.f32 %v1415, %v1418
      %v1420 = vmul.f32 %v1419, %v1419
      %1421 = vadd.xlane.f32.xlu0 %v1420
      %v1422 = vpop.xlane.xlu0 %1421
      %v1423 = vmul.f32 %v1422, %v1047
      %v1424 = vadd.f32 %v1423, 1e-05
      %v1425 = vrsqrt.pop %v1424
      %v1426 = vmul.f32 %v1419, %v1425
      %v1427 = vld [vmem:[%s19] sm:$0x1]
      %v1429 = vlaneseq
      %v1430 = vshrl.u32 %v1429, 7
      %v1431 = vsub.s32 0, %v1430
      %v1432 = vrot.slane %v1427, %v1431
      %v1434 = vmul.f32 %v1426, %v1432
      %v1435 = vld [vmem:[%s21] sm:$0x1]
      %v1437 = vlaneseq
      %v1438 = vshrl.u32 %v1437, 7
      %v1439 = vsub.s32 0, %v1438
      %v1440 = vrot.slane %v1435, %v1439
      %v1442 = vadd.f32 %v1434, %v1440
      %v1443 = vpack.c.bf16 %v1442, %v1442
      %v1444 = vld [vmem:[%s23] sm:$0xff]
      %v1445 = vld [vmem:[%s23 + $0x8] sm:$0xf]
      %v1446 = vld [vmem:[%s23 + $0xc] sm:$0xff]
      %v1447 = vld [vmem:[%s23 + $0x14] sm:$0xf]
      %v1448 = vld [vmem:[%s23 + $0x18] sm:$0xff]
      %v1449 = vld [vmem:[%s23 + $0x20] sm:$0xf]
      %v1450 = vld [vmem:[%s23 + $0x24] sm:$0xff]
      %v1451 = vld [vmem:[%s23 + $0x2c] sm:$0xf]
      %v1452 = vld [vmem:[%s23 + $0x30] sm:$0xff]
      %v1453 = vld [vmem:[%s23 + $0x38] sm:$0xf]
      %v1454 = vld [vmem:[%s23 + $0x3c] sm:$0xff]
      %v1455 = vld [vmem:[%s23 + $0x44] sm:$0xf]
      %v1456 = vld [vmem:[%s23 + $0x48] sm:$0xff]
      %v1457 = vld [vmem:[%s23 + $0x50] sm:$0xf]
      %v1458 = vld [vmem:[%s23 + $0x54] sm:$0xff]
      %v1459 = vld [vmem:[%s23 + $0x5c] sm:$0xf]
      %v1460 = vld [vmem:[%s23 + $0x60] sm:$0xff]
      %v1461 = vld [vmem:[%s23 + $0x68] sm:$0xf]
      %v1462 = vld [vmem:[%s23 + $0x6c] sm:$0xff]
      %v1463 = vld [vmem:[%s23 + $0x74] sm:$0xf]
      %v1464 = vld [vmem:[%s23 + $0x78] sm:$0xff]
      %v1465 = vld [vmem:[%s23 + $0x80] sm:$0xf]
      %v1466 = vld [vmem:[%s23 + $0x84] sm:$0xff]
      %v1467 = vld [vmem:[%s23 + $0x8c] sm:$0xf]
      %v1468 = vld [vmem:[%s23 + $0x90] sm:$0xff]
      %v1469 = vld [vmem:[%s23 + $0x98] sm:$0xf]
      %v1470 = vld [vmem:[%s23 + $0x9c] sm:$0xff]
      %v1471 = vld [vmem:[%s23 + $0xa4] sm:$0xf]
      %v1472 = vld [vmem:[%s23 + $0xa8] sm:$0xff]
      %v1473 = vld [vmem:[%s23 + $0xb0] sm:$0xf]
      %v1474 = vld [vmem:[%s23 + $0xb4] sm:$0xff]
      %v1475 = vld [vmem:[%s23 + $0xbc] sm:$0xf]
      %v1476 = vld [vmem:[%s25] sm:$0x7]
      %v1478 = vlaneseq
      %v1479 = vshrl.u32 %v1478, 7
      %v1480 = vsub.s32 0, %v1479
      %v1481 = vrot.slane %v1476, %v1480
      %v1482 = vlaneseq
      %v1483 = vshrl.u32 %v1482, 7
      %v1484 = vsub.s32 1, %v1483
      %v1485 = vrot.slane %v1476, %v1484
      %v1486 = vlaneseq
      %v1487 = vshrl.u32 %v1486, 7
      %v1488 = vsub.s32 2, %v1487
      %v1489 = vrot.slane %v1476, %v1488
      %v1525 = vunpack.c.l.b16 %v1444
      %v1526 = vunpack.c.h.b16 %v1444
      %v1527 = vunpack.c.l.b16 %v1445
      %v1528 = vunpack.c.l.b16 %v1446
      %v1529 = vunpack.c.h.b16 %v1446
      %v1530 = vunpack.c.l.b16 %v1447
      %v1531 = vunpack.c.l.b16 %v1448
      %v1532 = vunpack.c.h.b16 %v1448
      %v1533 = vunpack.c.l.b16 %v1449
      %v1534 = vunpack.c.l.b16 %v1450
      %v1535 = vunpack.c.h.b16 %v1450
      %v1536 = vunpack.c.l.b16 %v1451
      %v1537 = vunpack.c.l.b16 %v1452
      %v1538 = vunpack.c.h.b16 %v1452
      %v1539 = vunpack.c.l.b16 %v1453
      %v1540 = vunpack.c.l.b16 %v1454
      %v1541 = vunpack.c.h.b16 %v1454
      %v1542 = vunpack.c.l.b16 %v1455
      %v1543 = vunpack.c.l.b16 %v1456
      %v1544 = vunpack.c.h.b16 %v1456
      %v1545 = vunpack.c.l.b16 %v1457
      %v1546 = vunpack.c.l.b16 %v1458
      %v1547 = vunpack.c.h.b16 %v1458
      %v1548 = vunpack.c.l.b16 %v1459
      %v1549 = vunpack.c.l.b16 %v1460
      %v1550 = vunpack.c.h.b16 %v1460
      %v1551 = vunpack.c.l.b16 %v1461
      %v1552 = vunpack.c.l.b16 %v1462
      %v1553 = vunpack.c.h.b16 %v1462
      %v1554 = vunpack.c.l.b16 %v1463
      %v1555 = vunpack.c.l.b16 %v1464
      %v1556 = vunpack.c.h.b16 %v1464
      %v1557 = vunpack.c.l.b16 %v1465
      %v1558 = vunpack.c.l.b16 %v1466
      %v1559 = vunpack.c.h.b16 %v1466
      %v1560 = vunpack.c.l.b16 %v1467
      %v1561 = vunpack.c.l.b16 %v1468
      %v1562 = vunpack.c.h.b16 %v1468
      %v1563 = vunpack.c.l.b16 %v1469
      %v1564 = vunpack.c.l.b16 %v1470
      %v1565 = vunpack.c.h.b16 %v1470
      %v1566 = vunpack.c.l.b16 %v1471
      %v1567 = vunpack.c.l.b16 %v1472
      %v1568 = vunpack.c.h.b16 %v1472
      %v1569 = vunpack.c.l.b16 %v1473
      %v1570 = vunpack.c.l.b16 %v1474
      %v1571 = vunpack.c.h.b16 %v1474
      %v1572 = vunpack.c.l.b16 %v1475
      %v1573 = vpack.c.b16 %v1528, %v1525
      %v1574 = vpack.c.b16 %v1529, %v1526
      %v1575 = vpack.c.b16 %v1530, %v1527
      %v1576 = vpack.c.b16 %v1534, %v1531
      %v1577 = vpack.c.b16 %v1535, %v1532
      %v1578 = vpack.c.b16 %v1536, %v1533
      %v1579 = vpack.c.b16 %v1540, %v1537
      %v1580 = vpack.c.b16 %v1541, %v1538
      %v1581 = vpack.c.b16 %v1542, %v1539
      %v1582 = vpack.c.b16 %v1546, %v1543
      %v1583 = vpack.c.b16 %v1547, %v1544
      %v1584 = vpack.c.b16 %v1548, %v1545
      %v1585 = vpack.c.b16 %v1552, %v1549
      %v1586 = vpack.c.b16 %v1553, %v1550
      %v1587 = vpack.c.b16 %v1554, %v1551
      %v1588 = vpack.c.b16 %v1558, %v1555
      %v1589 = vpack.c.b16 %v1559, %v1556
      %v1590 = vpack.c.b16 %v1560, %v1557
      %v1591 = vpack.c.b16 %v1564, %v1561
      %v1592 = vpack.c.b16 %v1565, %v1562
      %v1593 = vpack.c.b16 %v1566, %v1563
      %v1594 = vpack.c.b16 %v1570, %v1567
      %v1595 = vpack.c.b16 %v1571, %v1568
      %v1596 = vpack.c.b16 %v1572, %v1569
      %1621 = vmatprep.subr.bf16.mxu0 %v1574
      %1622 = vmatpush1.bf16.msra.mxu0 %v1573
      %1623 = vmatprep.subr.bf16.mxu0 %v1577
      %1624 = vmatpush1.bf16.msra.mxu0 %v1576
      %1625 = vmatprep.subr.bf16.mxu0 %v1580
      %1626 = vmatpush1.bf16.msra.mxu0 %v1579
      %1627 = vmatprep.subr.bf16.mxu0 %v1583
      %1628 = vmatpush1.bf16.msra.mxu0 %v1582
      %1629 = vmatprep.subr.bf16.mxu0 %v1586
      %1630 = vmatpush1.bf16.msra.mxu0 %v1585
      %1631 = vmatprep.subr.bf16.mxu0 %v1589
      %1632 = vmatpush1.bf16.msra.mxu0 %v1588
      %1633 = vmatprep.subr.bf16.mxu0 %v1592
      %1634 = vmatpush1.bf16.msra.mxu0 %v1591
      %1635 = vmatprep.subr.bf16.mxu0 %v1595
      %1636 = vmatpush1.bf16.msra.mxu0 %v1594
      %1637 = vmatprep.subr.bf16.mxu0 0
      %1638 = vmatpush1.bf16.msra.mxu0 0
      %1639 = vmatprep.subr.bf16.mxu0 0
      %1640 = vmatpush1.bf16.msra.mxu0 0
      %1641 = vmatprep.subr.bf16.mxu0 0
      %1642 = vmatpush1.bf16.msra.mxu0 0
      %1643 = vmatprep.subr.bf16.mxu0 0
      %1644 = vmatpush1.bf16.msra.mxu0 0
      %1645 = vmatprep.subr.bf16.mxu0 0
      %1646 = vmatpush1.bf16.msra.mxu0 0
      %1647 = vmatprep.subr.bf16.mxu0 0
      %1648 = vmatpush1.bf16.msra.mxu0 0
      %1649 = vmatprep.subr.bf16.mxu0 0
      %1650 = vmatpush1.bf16.msra.mxu0 0
      %1651 = vmatprep.subr.bf16.mxu0 0
      %1652 = vmatpush1.bf16.msra.mxu0 0
      %1653 = vmatprep.mubr.bf16.mxu0 0
      %1654 = vmatmul.mubr.bf16.gmra.mrb[0].mxu0 %v1443
      %v1655 = vpop.f32.mrb[0].mxu0
      %v1656 = vadd.f32 %v1481, %v1655
      %v1657 = vpop.f32.mrb[0].mxu0
      %v1658 = vadd.f32 %v1485, %v1657
      %v1659 = vpop.f32.mrb[0].mxu0
      %v1660 = vpop.f32.mrb[0].mxu0
      %1661 = vdwg.mxu0
      %1662 = vmatprep.subr.bf16.mxu0 0
      %1663 = vmatpush1.bf16.msra.mxu0 %v1575
      %1664 = vmatprep.subr.bf16.mxu0 0
      %1665 = vmatpush1.bf16.msra.mxu0 %v1578
      %1666 = vmatprep.subr.bf16.mxu0 0
      %1667 = vmatpush1.bf16.msra.mxu0 %v1581
      %1668 = vmatprep.subr.bf16.mxu0 0
      %1669 = vmatpush1.bf16.msra.mxu0 %v1584
      %1670 = vmatprep.subr.bf16.mxu0 0
      %1671 = vmatpush1.bf16.msra.mxu0 %v1587
      %1672 = vmatprep.subr.bf16.mxu0 0
      %1673 = vmatpush1.bf16.msra.mxu0 %v1590
      %1674 = vmatprep.subr.bf16.mxu0 0
      %1675 = vmatpush1.bf16.msra.mxu0 %v1593
      %1676 = vmatprep.subr.bf16.mxu0 0
      %1677 = vmatpush1.bf16.msra.mxu0 %v1596
      %1678 = vmatprep.subr.bf16.mxu0 0
      %1679 = vmatpush1.bf16.msra.mxu0 0
      %1680 = vmatprep.subr.bf16.mxu0 0
      %1681 = vmatpush1.bf16.msra.mxu0 0
      %1682 = vmatprep.subr.bf16.mxu0 0
      %1683 = vmatpush1.bf16.msra.mxu0 0
      %1684 = vmatprep.subr.bf16.mxu0 0
      %1685 = vmatpush1.bf16.msra.mxu0 0
      %1686 = vmatprep.subr.bf16.mxu0 0
      %1687 = vmatpush1.bf16.msra.mxu0 0
      %1688 = vmatprep.subr.bf16.mxu0 0
      %1689 = vmatpush1.bf16.msra.mxu0 0
      %1690 = vmatprep.subr.bf16.mxu0 0
      %1691 = vmatpush1.bf16.msra.mxu0 0
      %1692 = vmatprep.subr.bf16.mxu0 0
      %1693 = vmatpush1.bf16.msra.mxu0 0
      %1694 = vmatprep.mubr.bf16.mxu0 0
      %1695 = vmatmul.mubr.bf16.gmra.mrb[0].mxu0 %v1443
      %v1696 = vpop.f32.mrb[0].mxu0
      %v1697 = vadd.f32 %v1489, %v1696
      %v1698 = vpop.f32.mrb[0].mxu0
      %v1699 = vpop.f32.mrb[0].mxu0
      %v1700 = vpop.f32.mrb[0].mxu0
      %1701 = vdwg.mxu0
      %v1702 = vlaneseq
      %v1703 = vand.u32 %v1702, 127
      %v1704 = vpack.c.bf16 %v1656, %v1656
      %vm1705 = vcmp.ge.s32.totalorder %v1703, 0
      %vm1706 = vcmp.lt.s32.totalorder %v1703, 32
      %vm1707 = vmand %vm1705, %vm1706
      %v1708 = vsel %vm1707, 1.0, 0.0
      %v1709 = vmul.f32 %v1658, %v1708
      %v1710 = vpack.c.bf16 %v1709, %v1709
      %1711 = vmatprep.subr.bf16.mxu0 0
      %1712 = vmatpush1.bf16.xpose.msra.mxu0 %v1710
      %1713 = vmatprep.subr.bf16.mxu0 0
      %1714 = vmatpush1.bf16.xpose.msra.mxu0 0
      %1715 = vmatprep.subr.bf16.mxu0 0
      %1716 = vmatpush1.bf16.xpose.msra.mxu0 0
      %1717 = vmatprep.subr.bf16.mxu0 0
      %1718 = vmatpush1.bf16.xpose.msra.mxu0 0
      %1719 = vmatprep.subr.bf16.mxu0 0
      %1720 = vmatpush1.bf16.xpose.msra.mxu0 0
      %1721 = vmatprep.subr.bf16.mxu0 0
      %1722 = vmatpush1.bf16.xpose.msra.mxu0 0
      %1723 = vmatprep.subr.bf16.mxu0 0
      %1724 = vmatpush1.bf16.xpose.msra.mxu0 0
      %1725 = vmatprep.subr.bf16.mxu0 0
      %1726 = vmatpush1.bf16.xpose.msra.mxu0 0
      %1727 = vmatprep.subr.bf16.mxu0 0
      %1728 = vmatpush1.bf16.xpose.msra.mxu0 0
      %1729 = vmatprep.subr.bf16.mxu0 0
      %1730 = vmatpush1.bf16.xpose.msra.mxu0 0
      %1731 = vmatprep.subr.bf16.mxu0 0
      %1732 = vmatpush1.bf16.xpose.msra.mxu0 0
      %1733 = vmatprep.subr.bf16.mxu0 0
      %1734 = vmatpush1.bf16.xpose.msra.mxu0 0
      %1735 = vmatprep.subr.bf16.mxu0 0
      %1736 = vmatpush1.bf16.xpose.msra.mxu0 0
      %1737 = vmatprep.subr.bf16.mxu0 0
      %1738 = vmatpush1.bf16.xpose.msra.mxu0 0
      %1739 = vmatprep.subr.bf16.mxu0 0
      %1740 = vmatpush1.bf16.xpose.msra.mxu0 0
      %1741 = vmatprep.subr.bf16.mxu0 0
      %1742 = vmatpush1.bf16.xpose.msra.mxu0 0
      %1743 = vmatprep.mubr.bf16.mxu0 0
      %1744 = vmatmul.mubr.bf16.gmra.mrb[0].mxu0 %v1704
      %v1745 = vpop.f32.mrb[0].mxu0
      %v1746 = vadd.f32 0.0, %v1745
      %v1747 = vpop.f32.mrb[0].mxu0
      %v1748 = vpop.f32.mrb[0].mxu0
      %v1749 = vpop.f32.mrb[0].mxu0
      %1750 = vdwg.mxu0
      %v1751 = vmul.f32 %v1746, 0.17677669
      %vm1752 = vcmp.gt.f32.partialorder %v1044, 0.5
      %v1753 = vsel %vm1752, 1, 0
      %v1754 = vlaneseq
      %v1755 = vshrl.u32 %v1754, 7
      %v1756 = vsub.s32 0, %v1755
      %v1757 = vrot.slane %v1753, %v1756
      %vm1758 = vcmp.eq.s32.totalorder %v1757, 1
      %v1759 = vsel %vm1758, %v1751, -1e+30
      %vm1760 = vcmask 64512
      %v1761 = vsel %vm1760, %v1759, -inf
      %1762 = vmax.xlane.f32.xlu0 %v1761
      %v1763 = vpop.xlane.xlu0 %1762
      %v1764 = vsub.f32 %v1759, %v1763
      %v1765 = vmul.f32 %v1764, 1.442695
      %v1766 = vpow.pop %v1765
      %v1767 = vsel %vm1760, %v1766, 0.0
      %1768 = vadd.xlane.f32.xlu0 %v1767
      %v1769 = vpop.xlane.xlu0 %1768
      %v1770 = vrcp.pop %v1769
      %v1771 = vmul.f32 %v1766, %v1770
      %v1772 = vmul.f32 %v1697, %v1708
      %v1773 = vpack.c.bf16 %v1772, %v1772
      %v1774 = vpack.c.bf16 %v1771, %v1771
      %vm1775 = vcmp.ge.s32.totalorder %v1703, 32
      %vm1776 = vcmp.lt.s32.totalorder %v1703, 64
      %vm1777 = vmand %vm1775, %vm1776
      %v1778 = vsel %vm1777, 1.0, 0.0
      %v1779 = vmul.f32 %v1658, %v1778
      %v1780 = vpack.c.bf16 %v1779, %v1779
      %1781 = vmatprep.subr.bf16.mxu0 0
      %1782 = vmatpush1.bf16.xpose.msra.mxu0 %v1780
      %1783 = vmatprep.subr.bf16.mxu0 0
      %1784 = vmatpush1.bf16.xpose.msra.mxu0 0
      %1785 = vmatprep.subr.bf16.mxu0 0
      %1786 = vmatpush1.bf16.xpose.msra.mxu0 0
      %1787 = vmatprep.subr.bf16.mxu0 0
      %1788 = vmatpush1.bf16.xpose.msra.mxu0 0
      %1789 = vmatprep.subr.bf16.mxu0 0
      %1790 = vmatpush1.bf16.xpose.msra.mxu0 0
      %1791 = vmatprep.subr.bf16.mxu0 0
      %1792 = vmatpush1.bf16.xpose.msra.mxu0 0
      %1793 = vmatprep.subr.bf16.mxu0 0
      %1794 = vmatpush1.bf16.xpose.msra.mxu0 0
      %1795 = vmatprep.subr.bf16.mxu0 0
      %1796 = vmatpush1.bf16.xpose.msra.mxu0 0
      %1797 = vmatprep.subr.bf16.mxu0 0
      %1798 = vmatpush1.bf16.xpose.msra.mxu0 0
      %1799 = vmatprep.subr.bf16.mxu0 0
      %1800 = vmatpush1.bf16.xpose.msra.mxu0 0
      %1801 = vmatprep.subr.bf16.mxu0 0
      %1802 = vmatpush1.bf16.xpose.msra.mxu0 0
      %1803 = vmatprep.subr.bf16.mxu0 0
      %1804 = vmatpush1.bf16.xpose.msra.mxu0 0
      %1805 = vmatprep.subr.bf16.mxu0 0
      %1806 = vmatpush1.bf16.xpose.msra.mxu0 0
      %1807 = vmatprep.subr.bf16.mxu0 0
      %1808 = vmatpush1.bf16.xpose.msra.mxu0 0
      %1809 = vmatprep.subr.bf16.mxu0 0
      %1810 = vmatpush1.bf16.xpose.msra.mxu0 0
      %1811 = vmatprep.subr.bf16.mxu0 0
      %1812 = vmatpush1.bf16.xpose.msra.mxu0 0
      %1813 = vmatprep.mubr.bf16.mxu0 0
      %1814 = vmatmul.mubr.bf16.gmra.mrb[0].mxu0 %v1704
      %v1815 = vpop.f32.mrb[0].mxu0
      %v1816 = vadd.f32 0.0, %v1815
      %v1817 = vpop.f32.mrb[0].mxu0
      %v1818 = vpop.f32.mrb[0].mxu0
      %v1819 = vpop.f32.mrb[0].mxu0
      %1820 = vdwg.mxu0
      %v1821 = vmul.f32 %v1816, 0.17677669
      %v1822 = vsel %vm1758, %v1821, -1e+30
      %v1823 = vsel %vm1760, %v1822, -inf
      %1824 = vmax.xlane.f32.xlu0 %v1823
      %v1825 = vpop.xlane.xlu0 %1824
      %v1826 = vsub.f32 %v1822, %v1825
      %v1827 = vmul.f32 %v1826, 1.442695
      %v1828 = vpow.pop %v1827
      %v1829 = vsel %vm1760, %v1828, 0.0
      %1830 = vadd.xlane.f32.xlu0 %v1829
      %v1831 = vpop.xlane.xlu0 %1830
      %v1832 = vrcp.pop %v1831
      %v1833 = vmul.f32 %v1828, %v1832
      %v1834 = vmul.f32 %v1697, %v1778
      %v1835 = vpack.c.bf16 %v1834, %v1834
      %v1836 = vpack.c.bf16 %v1833, %v1833
      %v1838 = vsel %vm1760, %v1836, 0
      %vm1840 = vcmask 1043456
      %v1842 = vsel %vm1840, %v1835, 0
      %1844 = vmatprep.subr.bf16.mxu0 0
      %1845 = vmatpush1.bf16.msra.mxu0 %v1842
      %1846 = vmatprep.subr.bf16.mxu0 0
      %1847 = vmatpush1.bf16.msra.mxu0 0
      %1848 = vmatprep.subr.bf16.mxu0 0
      %1849 = vmatpush1.bf16.msra.mxu0 0
      %1850 = vmatprep.subr.bf16.mxu0 0
      %1851 = vmatpush1.bf16.msra.mxu0 0
      %1852 = vmatprep.subr.bf16.mxu0 0
      %1853 = vmatpush1.bf16.msra.mxu0 0
      %1854 = vmatprep.subr.bf16.mxu0 0
      %1855 = vmatpush1.bf16.msra.mxu0 0
      %1856 = vmatprep.subr.bf16.mxu0 0
      %1857 = vmatpush1.bf16.msra.mxu0 0
      %1858 = vmatprep.subr.bf16.mxu0 0
      %1859 = vmatpush1.bf16.msra.mxu0 0
      %1860 = vmatprep.subr.bf16.mxu0 0
      %1861 = vmatpush1.bf16.msra.mxu0 0
      %1862 = vmatprep.subr.bf16.mxu0 0
      %1863 = vmatpush1.bf16.msra.mxu0 0
      %1864 = vmatprep.subr.bf16.mxu0 0
      %1865 = vmatpush1.bf16.msra.mxu0 0
      %1866 = vmatprep.subr.bf16.mxu0 0
      %1867 = vmatpush1.bf16.msra.mxu0 0
      %1868 = vmatprep.subr.bf16.mxu0 0
      %1869 = vmatpush1.bf16.msra.mxu0 0
      %1870 = vmatprep.subr.bf16.mxu0 0
      %1871 = vmatpush1.bf16.msra.mxu0 0
      %1872 = vmatprep.subr.bf16.mxu0 0
      %1873 = vmatpush1.bf16.msra.mxu0 0
      %1874 = vmatprep.subr.bf16.mxu0 0
      %1875 = vmatpush1.bf16.msra.mxu0 0
      %1876 = vmatprep.mubr.bf16.mxu0 0
      %1877 = vmatmul.mubr.bf16.gmra.mrb[0].mxu0 %v1838
      %v1878 = vpop.f32.mrb[0].mxu0
      %v1879 = vadd.f32 0.0, %v1878
      %v1880 = vpop.f32.mrb[0].mxu0
      %v1881 = vpop.f32.mrb[0].mxu0
      %v1882 = vpop.f32.mrb[0].mxu0
      %1883 = vdwg.mxu0
      %v1885 = vsel %vm1760, %v1774, 0
      %v1888 = vsel %vm1840, %v1773, 0
      %1890 = vmatprep.subr.bf16.mxu0 0
      %1891 = vmatpush1.bf16.msra.mxu0 %v1888
      %1892 = vmatprep.subr.bf16.mxu0 0
      %1893 = vmatpush1.bf16.msra.mxu0 0
      %1894 = vmatprep.subr.bf16.mxu0 0
      %1895 = vmatpush1.bf16.msra.mxu0 0
      %1896 = vmatprep.subr.bf16.mxu0 0
      %1897 = vmatpush1.bf16.msra.mxu0 0
      %1898 = vmatprep.subr.bf16.mxu0 0
      %1899 = vmatpush1.bf16.msra.mxu0 0
      %1900 = vmatprep.subr.bf16.mxu0 0
      %1901 = vmatpush1.bf16.msra.mxu0 0
      %1902 = vmatprep.subr.bf16.mxu0 0
      %1903 = vmatpush1.bf16.msra.mxu0 0
      %1904 = vmatprep.subr.bf16.mxu0 0
      %1905 = vmatpush1.bf16.msra.mxu0 0
      %1906 = vmatprep.subr.bf16.mxu0 0
      %1907 = vmatpush1.bf16.msra.mxu0 0
      %1908 = vmatprep.subr.bf16.mxu0 0
      %1909 = vmatpush1.bf16.msra.mxu0 0
      %1910 = vmatprep.subr.bf16.mxu0 0
      %1911 = vmatpush1.bf16.msra.mxu0 0
      %1912 = vmatprep.subr.bf16.mxu0 0
      %1913 = vmatpush1.bf16.msra.mxu0 0
      %1914 = vmatprep.subr.bf16.mxu0 0
      %1915 = vmatpush1.bf16.msra.mxu0 0
      %1916 = vmatprep.subr.bf16.mxu0 0
      %1917 = vmatpush1.bf16.msra.mxu0 0
      %1918 = vmatprep.subr.bf16.mxu0 0
      %1919 = vmatpush1.bf16.msra.mxu0 0
      %1920 = vmatprep.subr.bf16.mxu0 0
      %1921 = vmatpush1.bf16.msra.mxu0 0
      %1922 = vmatprep.mubr.bf16.mxu0 0
      %1923 = vmatmul.mubr.bf16.gmra.mrb[0].mxu0 %v1885
      %v1924 = vpop.f32.mrb[0].mxu0
      %v1925 = vadd.f32 %v1879, %v1924
      %v1926 = vpop.f32.mrb[0].mxu0
      %v1927 = vpop.f32.mrb[0].mxu0
      %v1928 = vpop.f32.mrb[0].mxu0
      %1929 = vdwg.mxu0
      %vm1930 = vcmp.ge.s32.totalorder %v1703, 64
      %vm1931 = vcmp.lt.s32.totalorder %v1703, 96
      %vm1932 = vmand %vm1930, %vm1931
      %v1933 = vsel %vm1932, 1.0, 0.0
      %v1934 = vmul.f32 %v1658, %v1933
      %v1935 = vpack.c.bf16 %v1934, %v1934
      %1936 = vmatprep.subr.bf16.mxu0 0
      %1937 = vmatpush1.bf16.xpose.msra.mxu0 %v1935
      %1938 = vmatprep.subr.bf16.mxu0 0
      %1939 = vmatpush1.bf16.xpose.msra.mxu0 0
      %1940 = vmatprep.subr.bf16.mxu0 0
      %1941 = vmatpush1.bf16.xpose.msra.mxu0 0
      %1942 = vmatprep.subr.bf16.mxu0 0
      %1943 = vmatpush1.bf16.xpose.msra.mxu0 0
      %1944 = vmatprep.subr.bf16.mxu0 0
      %1945 = vmatpush1.bf16.xpose.msra.mxu0 0
      %1946 = vmatprep.subr.bf16.mxu0 0
      %1947 = vmatpush1.bf16.xpose.msra.mxu0 0
      %1948 = vmatprep.subr.bf16.mxu0 0
      %1949 = vmatpush1.bf16.xpose.msra.mxu0 0
      %1950 = vmatprep.subr.bf16.mxu0 0
      %1951 = vmatpush1.bf16.xpose.msra.mxu0 0
      %1952 = vmatprep.subr.bf16.mxu0 0
      %1953 = vmatpush1.bf16.xpose.msra.mxu0 0
      %1954 = vmatprep.subr.bf16.mxu0 0
      %1955 = vmatpush1.bf16.xpose.msra.mxu0 0
      %1956 = vmatprep.subr.bf16.mxu0 0
      %1957 = vmatpush1.bf16.xpose.msra.mxu0 0
      %1958 = vmatprep.subr.bf16.mxu0 0
      %1959 = vmatpush1.bf16.xpose.msra.mxu0 0
      %1960 = vmatprep.subr.bf16.mxu0 0
      %1961 = vmatpush1.bf16.xpose.msra.mxu0 0
      %1962 = vmatprep.subr.bf16.mxu0 0
      %1963 = vmatpush1.bf16.xpose.msra.mxu0 0
      %1964 = vmatprep.subr.bf16.mxu0 0
      %1965 = vmatpush1.bf16.xpose.msra.mxu0 0
      %1966 = vmatprep.subr.bf16.mxu0 0
      %1967 = vmatpush1.bf16.xpose.msra.mxu0 0
      %1968 = vmatprep.mubr.bf16.mxu0 0
      %1969 = vmatmul.mubr.bf16.gmra.mrb[0].mxu0 %v1704
      %v1970 = vpop.f32.mrb[0].mxu0
      %v1971 = vadd.f32 0.0, %v1970
      %v1972 = vpop.f32.mrb[0].mxu0
      %v1973 = vpop.f32.mrb[0].mxu0
      %v1974 = vpop.f32.mrb[0].mxu0
      %1975 = vdwg.mxu0
      %v1976 = vmul.f32 %v1971, 0.17677669
      %v1977 = vsel %vm1758, %v1976, -1e+30
      %v1978 = vsel %vm1760, %v1977, -inf
      %1979 = vmax.xlane.f32.xlu0 %v1978
      %v1980 = vpop.xlane.xlu0 %1979
      %v1981 = vsub.f32 %v1977, %v1980
      %v1982 = vmul.f32 %v1981, 1.442695
      %v1983 = vpow.pop %v1982
      %v1984 = vsel %vm1760, %v1983, 0.0
      %1985 = vadd.xlane.f32.xlu0 %v1984
      %v1986 = vpop.xlane.xlu0 %1985
      %v1987 = vrcp.pop %v1986
      %v1988 = vmul.f32 %v1983, %v1987
      %v1989 = vmul.f32 %v1697, %v1933
      %v1990 = vpack.c.bf16 %v1989, %v1989
      %v1991 = vpack.c.bf16 %v1988, %v1988
      %v1993 = vsel %vm1760, %v1991, 0
      %v1996 = vsel %vm1840, %v1990, 0
      %1998 = vmatprep.subr.bf16.mxu0 0
      %1999 = vmatpush1.bf16.msra.mxu0 %v1996
      %2000 = vmatprep.subr.bf16.mxu0 0
      %2001 = vmatpush1.bf16.msra.mxu0 0
      %2002 = vmatprep.subr.bf16.mxu0 0
      %2003 = vmatpush1.bf16.msra.mxu0 0
      %2004 = vmatprep.subr.bf16.mxu0 0
      %2005 = vmatpush1.bf16.msra.mxu0 0
      %2006 = vmatprep.subr.bf16.mxu0 0
      %2007 = vmatpush1.bf16.msra.mxu0 0
      %2008 = vmatprep.subr.bf16.mxu0 0
      %2009 = vmatpush1.bf16.msra.mxu0 0
      %2010 = vmatprep.subr.bf16.mxu0 0
      %2011 = vmatpush1.bf16.msra.mxu0 0
      %2012 = vmatprep.subr.bf16.mxu0 0
      %2013 = vmatpush1.bf16.msra.mxu0 0
      %2014 = vmatprep.subr.bf16.mxu0 0
      %2015 = vmatpush1.bf16.msra.mxu0 0
      %2016 = vmatprep.subr.bf16.mxu0 0
      %2017 = vmatpush1.bf16.msra.mxu0 0
      %2018 = vmatprep.subr.bf16.mxu0 0
      %2019 = vmatpush1.bf16.msra.mxu0 0
      %2020 = vmatprep.subr.bf16.mxu0 0
      %2021 = vmatpush1.bf16.msra.mxu0 0
      %2022 = vmatprep.subr.bf16.mxu0 0
      %2023 = vmatpush1.bf16.msra.mxu0 0
      %2024 = vmatprep.subr.bf16.mxu0 0
      %2025 = vmatpush1.bf16.msra.mxu0 0
      %2026 = vmatprep.subr.bf16.mxu0 0
      %2027 = vmatpush1.bf16.msra.mxu0 0
      %2028 = vmatprep.subr.bf16.mxu0 0
      %2029 = vmatpush1.bf16.msra.mxu0 0
      %2030 = vmatprep.mubr.bf16.mxu0 0
      %2031 = vmatmul.mubr.bf16.gmra.mrb[0].mxu0 %v1993
      %v2032 = vpop.f32.mrb[0].mxu0
      %v2033 = vadd.f32 0.0, %v2032
      %v2034 = vpop.f32.mrb[0].mxu0
      %v2035 = vpop.f32.mrb[0].mxu0
      %v2036 = vpop.f32.mrb[0].mxu0
      %2037 = vdwg.mxu0
      %v2038 = vadd.f32 %v1925, %v2033
      %vm2039 = vcmp.ge.s32.totalorder %v1703, 96
      %vm2040 = vcmp.lt.s32.totalorder %v1703, 128
      %vm2041 = vmand %vm2039, %vm2040
      %v2042 = vsel %vm2041, 1.0, 0.0
      %v2043 = vmul.f32 %v1658, %v2042
      %v2044 = vpack.c.bf16 %v2043, %v2043
      %2045 = vmatprep.subr.bf16.mxu0 0
      %2046 = vmatpush1.bf16.xpose.msra.mxu0 %v2044
      %2047 = vmatprep.subr.bf16.mxu0 0
      %2048 = vmatpush1.bf16.xpose.msra.mxu0 0
      %2049 = vmatprep.subr.bf16.mxu0 0
      %2050 = vmatpush1.bf16.xpose.msra.mxu0 0
      %2051 = vmatprep.subr.bf16.mxu0 0
      %2052 = vmatpush1.bf16.xpose.msra.mxu0 0
      %2053 = vmatprep.subr.bf16.mxu0 0
      %2054 = vmatpush1.bf16.xpose.msra.mxu0 0
      %2055 = vmatprep.subr.bf16.mxu0 0
      %2056 = vmatpush1.bf16.xpose.msra.mxu0 0
      %2057 = vmatprep.subr.bf16.mxu0 0
      %2058 = vmatpush1.bf16.xpose.msra.mxu0 0
      %2059 = vmatprep.subr.bf16.mxu0 0
      %2060 = vmatpush1.bf16.xpose.msra.mxu0 0
      %2061 = vmatprep.subr.bf16.mxu0 0
      %2062 = vmatpush1.bf16.xpose.msra.mxu0 0
      %2063 = vmatprep.subr.bf16.mxu0 0
      %2064 = vmatpush1.bf16.xpose.msra.mxu0 0
      %2065 = vmatprep.subr.bf16.mxu0 0
      %2066 = vmatpush1.bf16.xpose.msra.mxu0 0
      %2067 = vmatprep.subr.bf16.mxu0 0
      %2068 = vmatpush1.bf16.xpose.msra.mxu0 0
      %2069 = vmatprep.subr.bf16.mxu0 0
      %2070 = vmatpush1.bf16.xpose.msra.mxu0 0
      %2071 = vmatprep.subr.bf16.mxu0 0
      %2072 = vmatpush1.bf16.xpose.msra.mxu0 0
      %2073 = vmatprep.subr.bf16.mxu0 0
      %2074 = vmatpush1.bf16.xpose.msra.mxu0 0
      %2075 = vmatprep.subr.bf16.mxu0 0
      %2076 = vmatpush1.bf16.xpose.msra.mxu0 0
      %2077 = vmatprep.mubr.bf16.mxu0 0
      %2078 = vmatmul.mubr.bf16.gmra.mrb[0].mxu0 %v1704
      %v2079 = vpop.f32.mrb[0].mxu0
      %v2080 = vadd.f32 0.0, %v2079
      %v2081 = vpop.f32.mrb[0].mxu0
      %v2082 = vpop.f32.mrb[0].mxu0
      %v2083 = vpop.f32.mrb[0].mxu0
      %2084 = vdwg.mxu0
      %v2085 = vmul.f32 %v2080, 0.17677669
      %v2086 = vsel %vm1758, %v2085, -1e+30
      %v2087 = vsel %vm1760, %v2086, -inf
      %2088 = vmax.xlane.f32.xlu0 %v2087
      %v2089 = vpop.xlane.xlu0 %2088
      %v2090 = vsub.f32 %v2086, %v2089
      %v2091 = vmul.f32 %v2090, 1.442695
      %v2092 = vpow.pop %v2091
      %v2093 = vsel %vm1760, %v2092, 0.0
      %2094 = vadd.xlane.f32.xlu0 %v2093
      %v2095 = vpop.xlane.xlu0 %2094
      %v2096 = vrcp.pop %v2095
      %v2097 = vmul.f32 %v2092, %v2096
      %v2098 = vmul.f32 %v1697, %v2042
      %v2099 = vpack.c.bf16 %v2098, %v2098
      %v2100 = vpack.c.bf16 %v2097, %v2097
      %v2102 = vsel %vm1760, %v2100, 0
      %v2105 = vsel %vm1840, %v2099, 0
      %2107 = vmatprep.subr.bf16.mxu0 0
      %2108 = vmatpush1.bf16.msra.mxu0 %v2105
      %2109 = vmatprep.subr.bf16.mxu0 0
      %2110 = vmatpush1.bf16.msra.mxu0 0
      %2111 = vmatprep.subr.bf16.mxu0 0
      %2112 = vmatpush1.bf16.msra.mxu0 0
      %2113 = vmatprep.subr.bf16.mxu0 0
      %2114 = vmatpush1.bf16.msra.mxu0 0
      %2115 = vmatprep.subr.bf16.mxu0 0
      %2116 = vmatpush1.bf16.msra.mxu0 0
      %2117 = vmatprep.subr.bf16.mxu0 0
      %2118 = vmatpush1.bf16.msra.mxu0 0
      %2119 = vmatprep.subr.bf16.mxu0 0
      %2120 = vmatpush1.bf16.msra.mxu0 0
      %2121 = vmatprep.subr.bf16.mxu0 0
      %2122 = vmatpush1.bf16.msra.mxu0 0
      %2123 = vmatprep.subr.bf16.mxu0 0
      %2124 = vmatpush1.bf16.msra.mxu0 0
      %2125 = vmatprep.subr.bf16.mxu0 0
      %2126 = vmatpush1.bf16.msra.mxu0 0
      %2127 = vmatprep.subr.bf16.mxu0 0
      %2128 = vmatpush1.bf16.msra.mxu0 0
      %2129 = vmatprep.subr.bf16.mxu0 0
      %2130 = vmatpush1.bf16.msra.mxu0 0
      %2131 = vmatprep.subr.bf16.mxu0 0
      %2132 = vmatpush1.bf16.msra.mxu0 0
      %2133 = vmatprep.subr.bf16.mxu0 0
      %2134 = vmatpush1.bf16.msra.mxu0 0
      %2135 = vmatprep.subr.bf16.mxu0 0
      %2136 = vmatpush1.bf16.msra.mxu0 0
      %2137 = vmatprep.subr.bf16.mxu0 0
      %2138 = vmatpush1.bf16.msra.mxu0 0
      %2139 = vmatprep.mubr.bf16.mxu0 0
      %2140 = vmatmul.mubr.bf16.gmra.mrb[0].mxu0 %v2102
      %v2141 = vpop.f32.mrb[0].mxu0
      %v2142 = vadd.f32 0.0, %v2141
      %v2143 = vpop.f32.mrb[0].mxu0
      %v2144 = vpop.f32.mrb[0].mxu0
      %v2145 = vpop.f32.mrb[0].mxu0
      %2146 = vdwg.mxu0
      %v2147 = vadd.f32 %v2038, %v2142
      %v2148 = vpack.c.bf16 %v2147, %v2147
      %v2149 = vld [vmem:[%s27] sm:$0xf]
      %v2150 = vld [vmem:[%s27 + $0x4] sm:$0xf]
      %v2151 = vld [vmem:[%s27 + $0x8] sm:$0xf]
      %v2152 = vld [vmem:[%s27 + $0xc] sm:$0xf]
      %v2153 = vld [vmem:[%s27 + $0x10] sm:$0xf]
      %v2154 = vld [vmem:[%s27 + $0x14] sm:$0xf]
      %v2155 = vld [vmem:[%s27 + $0x18] sm:$0xf]
      %v2156 = vld [vmem:[%s27 + $0x1c] sm:$0xf]
      %v2157 = vld [vmem:[%s27 + $0x20] sm:$0xf]
      %v2158 = vld [vmem:[%s27 + $0x24] sm:$0xf]
      %v2159 = vld [vmem:[%s27 + $0x28] sm:$0xf]
      %v2160 = vld [vmem:[%s27 + $0x2c] sm:$0xf]
      %v2161 = vld [vmem:[%s27 + $0x30] sm:$0xf]
      %v2162 = vld [vmem:[%s27 + $0x34] sm:$0xf]
      %v2163 = vld [vmem:[%s27 + $0x38] sm:$0xf]
      %v2164 = vld [vmem:[%s27 + $0x3c] sm:$0xf]
      %v2165 = vld [vmem:[%s29] sm:$0x1]
      %v2167 = vlaneseq
      %v2168 = vshrl.u32 %v2167, 7
      %v2169 = vsub.s32 0, %v2168
      %v2170 = vrot.slane %v2165, %v2169
      %v2188 = vunpack.c.l.b16 %v2149
      %v2189 = vunpack.c.l.b16 %v2150
      %v2190 = vunpack.c.l.b16 %v2151
      %v2191 = vunpack.c.l.b16 %v2152
      %v2192 = vunpack.c.l.b16 %v2153
      %v2193 = vunpack.c.l.b16 %v2154
      %v2194 = vunpack.c.l.b16 %v2155
      %v2195 = vunpack.c.l.b16 %v2156
      %v2196 = vunpack.c.l.b16 %v2157
      %v2197 = vunpack.c.l.b16 %v2158
      %v2198 = vunpack.c.l.b16 %v2159
      %v2199 = vunpack.c.l.b16 %v2160
      %v2200 = vunpack.c.l.b16 %v2161
      %v2201 = vunpack.c.l.b16 %v2162
      %v2202 = vunpack.c.l.b16 %v2163
      %v2203 = vunpack.c.l.b16 %v2164
      %v2204 = vpack.c.b16 %v2189, %v2188
      %v2205 = vpack.c.b16 %v2191, %v2190
      %v2206 = vpack.c.b16 %v2193, %v2192
      %v2207 = vpack.c.b16 %v2195, %v2194
      %v2208 = vpack.c.b16 %v2197, %v2196
      %v2209 = vpack.c.b16 %v2199, %v2198
      %v2210 = vpack.c.b16 %v2201, %v2200
      %v2211 = vpack.c.b16 %v2203, %v2202
      %2220 = vmatprep.subr.bf16.mxu0 0
      %2221 = vmatpush1.bf16.msra.mxu0 %v2204
      %2222 = vmatprep.subr.bf16.mxu0 0
      %2223 = vmatpush1.bf16.msra.mxu0 %v2205
      %2224 = vmatprep.subr.bf16.mxu0 0
      %2225 = vmatpush1.bf16.msra.mxu0 %v2206
      %2226 = vmatprep.subr.bf16.mxu0 0
      %2227 = vmatpush1.bf16.msra.mxu0 %v2207
      %2228 = vmatprep.subr.bf16.mxu0 0
      %2229 = vmatpush1.bf16.msra.mxu0 %v2208
      %2230 = vmatprep.subr.bf16.mxu0 0
      %2231 = vmatpush1.bf16.msra.mxu0 %v2209
      %2232 = vmatprep.subr.bf16.mxu0 0
      %2233 = vmatpush1.bf16.msra.mxu0 %v2210
      %2234 = vmatprep.subr.bf16.mxu0 0
      %2235 = vmatpush1.bf16.msra.mxu0 %v2211
      %2236 = vmatprep.subr.bf16.mxu0 0
      %2237 = vmatpush1.bf16.msra.mxu0 0
      %2238 = vmatprep.subr.bf16.mxu0 0
      %2239 = vmatpush1.bf16.msra.mxu0 0
      %2240 = vmatprep.subr.bf16.mxu0 0
      %2241 = vmatpush1.bf16.msra.mxu0 0
      %2242 = vmatprep.subr.bf16.mxu0 0
      %2243 = vmatpush1.bf16.msra.mxu0 0
      %2244 = vmatprep.subr.bf16.mxu0 0
      %2245 = vmatpush1.bf16.msra.mxu0 0
      %2246 = vmatprep.subr.bf16.mxu0 0
      %2247 = vmatpush1.bf16.msra.mxu0 0
      %2248 = vmatprep.subr.bf16.mxu0 0
      %2249 = vmatpush1.bf16.msra.mxu0 0
      %2250 = vmatprep.subr.bf16.mxu0 0
      %2251 = vmatpush1.bf16.msra.mxu0 0
      %2252 = vmatprep.mubr.bf16.mxu0 0
      %2253 = vmatmul.mubr.bf16.gmra.mrb[0].mxu0 %v2148
      %v2254 = vpop.f32.mrb[0].mxu0
      %v2255 = vadd.f32 %v2170, %v2254
      %v2256 = vpop.f32.mrb[0].mxu0
      %v2257 = vpop.f32.mrb[0].mxu0
      %v2258 = vpop.f32.mrb[0].mxu0
      %2259 = vdwg.mxu0
      %2261 = vset.pattern.permute.xlu0 0
      %2262 = vperm.xlu0 %2261, %v1043
      %v2263 = vpop.permute.xlu0 %2262
      %v2265 = vmul.f32 %v2255, %v2263
      %v2266 = vadd.f32 %v1415, %v2265
      %2267 = vadd.xlane.f32.xlu0 %v2266
      %v2268 = vpop.xlane.xlu0 %2267
      %v2269 = vmul.f32 %v2268, %v1047
      %v2270 = vsub.f32 %v2266, %v2269
      %v2271 = vmul.f32 %v2270, %v2270
      %2272 = vadd.xlane.f32.xlu0 %v2271
      %v2273 = vpop.xlane.xlu0 %2272
      %v2274 = vmul.f32 %v2273, %v1047
      %v2275 = vadd.f32 %v2274, 1e-05
      %v2276 = vrsqrt.pop %v2275
      %v2277 = vmul.f32 %v2270, %v2276
      %v2278 = vld [vmem:[%s31] sm:$0x1]
      %v2280 = vlaneseq
      %v2281 = vshrl.u32 %v2280, 7
      %v2282 = vsub.s32 0, %v2281
      %v2283 = vrot.slane %v2278, %v2282
      %v2285 = vmul.f32 %v2277, %v2283
      %v2286 = vld [vmem:[%s33] sm:$0x1]
      %v2288 = vlaneseq
      %v2289 = vshrl.u32 %v2288, 7
      %v2290 = vsub.s32 0, %v2289
      %v2291 = vrot.slane %v2286, %v2290
      %v2293 = vadd.f32 %v2285, %v2291
      %v2294 = vpack.c.bf16 %v2293, %v2293
      %v2295 = vld [vmem:[%s35] sm:$0xff]
      %v2296 = vld [vmem:[%s35 + $0x8] sm:$0xff]
      %v2297 = vld [vmem:[%s35 + $0x10] sm:$0xff]
      %v2298 = vld [vmem:[%s35 + $0x18] sm:$0xff]
      %v2299 = vld [vmem:[%s35 + $0x20] sm:$0xff]
      %v2300 = vld [vmem:[%s35 + $0x28] sm:$0xff]
      %v2301 = vld [vmem:[%s35 + $0x30] sm:$0xff]
      %v2302 = vld [vmem:[%s35 + $0x38] sm:$0xff]
      %v2303 = vld [vmem:[%s35 + $0x40] sm:$0xff]
      %v2304 = vld [vmem:[%s35 + $0x48] sm:$0xff]
      %v2305 = vld [vmem:[%s35 + $0x50] sm:$0xff]
      %v2306 = vld [vmem:[%s35 + $0x58] sm:$0xff]
      %v2307 = vld [vmem:[%s35 + $0x60] sm:$0xff]
      %v2308 = vld [vmem:[%s35 + $0x68] sm:$0xff]
      %v2309 = vld [vmem:[%s35 + $0x70] sm:$0xff]
      %v2310 = vld [vmem:[%s35 + $0x78] sm:$0xff]
      %v2311 = vld [vmem:[%s37] sm:$0x3]
      %v2313 = vlaneseq
      %v2314 = vshrl.u32 %v2313, 7
      %v2315 = vsub.s32 0, %v2314
      %v2316 = vrot.slane %v2311, %v2315
      %v2317 = vlaneseq
      %v2318 = vshrl.u32 %v2317, 7
      %v2319 = vsub.s32 1, %v2318
      %v2320 = vrot.slane %v2311, %v2319
      %v2339 = vunpack.c.l.b16 %v2295
      %v2340 = vunpack.c.h.b16 %v2295
      %v2341 = vunpack.c.l.b16 %v2296
      %v2342 = vunpack.c.h.b16 %v2296
      %v2343 = vunpack.c.l.b16 %v2297
      %v2344 = vunpack.c.h.b16 %v2297
      %v2345 = vunpack.c.l.b16 %v2298
      %v2346 = vunpack.c.h.b16 %v2298
      %v2347 = vunpack.c.l.b16 %v2299
      %v2348 = vunpack.c.h.b16 %v2299
      %v2349 = vunpack.c.l.b16 %v2300
      %v2350 = vunpack.c.h.b16 %v2300
      %v2351 = vunpack.c.l.b16 %v2301
      %v2352 = vunpack.c.h.b16 %v2301
      %v2353 = vunpack.c.l.b16 %v2302
      %v2354 = vunpack.c.h.b16 %v2302
      %v2355 = vunpack.c.l.b16 %v2303
      %v2356 = vunpack.c.h.b16 %v2303
      %v2357 = vunpack.c.l.b16 %v2304
      %v2358 = vunpack.c.h.b16 %v2304
      %v2359 = vunpack.c.l.b16 %v2305
      %v2360 = vunpack.c.h.b16 %v2305
      %v2361 = vunpack.c.l.b16 %v2306
      %v2362 = vunpack.c.h.b16 %v2306
      %v2363 = vunpack.c.l.b16 %v2307
      %v2364 = vunpack.c.h.b16 %v2307
      %v2365 = vunpack.c.l.b16 %v2308
      %v2366 = vunpack.c.h.b16 %v2308
      %v2367 = vunpack.c.l.b16 %v2309
      %v2368 = vunpack.c.h.b16 %v2309
      %v2369 = vunpack.c.l.b16 %v2310
      %v2370 = vunpack.c.h.b16 %v2310
      %v2371 = vpack.c.b16 %v2341, %v2339
      %v2372 = vpack.c.b16 %v2342, %v2340
      %v2373 = vpack.c.b16 %v2345, %v2343
      %v2374 = vpack.c.b16 %v2346, %v2344
      %v2375 = vpack.c.b16 %v2349, %v2347
      %v2376 = vpack.c.b16 %v2350, %v2348
      %v2377 = vpack.c.b16 %v2353, %v2351
      %v2378 = vpack.c.b16 %v2354, %v2352
      %v2379 = vpack.c.b16 %v2357, %v2355
      %v2380 = vpack.c.b16 %v2358, %v2356
      %v2381 = vpack.c.b16 %v2361, %v2359
      %v2382 = vpack.c.b16 %v2362, %v2360
      %v2383 = vpack.c.b16 %v2365, %v2363
      %v2384 = vpack.c.b16 %v2366, %v2364
      %v2385 = vpack.c.b16 %v2369, %v2367
      %v2386 = vpack.c.b16 %v2370, %v2368
      %2403 = vmatprep.subr.bf16.mxu0 %v2372
      %2404 = vmatpush1.bf16.msra.mxu0 %v2371
      %2405 = vmatprep.subr.bf16.mxu0 %v2374
      %2406 = vmatpush1.bf16.msra.mxu0 %v2373
      %2407 = vmatprep.subr.bf16.mxu0 %v2376
      %2408 = vmatpush1.bf16.msra.mxu0 %v2375
      %2409 = vmatprep.subr.bf16.mxu0 %v2378
      %2410 = vmatpush1.bf16.msra.mxu0 %v2377
      %2411 = vmatprep.subr.bf16.mxu0 %v2380
      %2412 = vmatpush1.bf16.msra.mxu0 %v2379
      %2413 = vmatprep.subr.bf16.mxu0 %v2382
      %2414 = vmatpush1.bf16.msra.mxu0 %v2381
      %2415 = vmatprep.subr.bf16.mxu0 %v2384
      %2416 = vmatpush1.bf16.msra.mxu0 %v2383
      %2417 = vmatprep.subr.bf16.mxu0 %v2386
      %2418 = vmatpush1.bf16.msra.mxu0 %v2385
      %2419 = vmatprep.subr.bf16.mxu0 0
      %2420 = vmatpush1.bf16.msra.mxu0 0
      %2421 = vmatprep.subr.bf16.mxu0 0
      %2422 = vmatpush1.bf16.msra.mxu0 0
      %2423 = vmatprep.subr.bf16.mxu0 0
      %2424 = vmatpush1.bf16.msra.mxu0 0
      %2425 = vmatprep.subr.bf16.mxu0 0
      %2426 = vmatpush1.bf16.msra.mxu0 0
      %2427 = vmatprep.subr.bf16.mxu0 0
      %2428 = vmatpush1.bf16.msra.mxu0 0
      %2429 = vmatprep.subr.bf16.mxu0 0
      %2430 = vmatpush1.bf16.msra.mxu0 0
      %2431 = vmatprep.subr.bf16.mxu0 0
      %2432 = vmatpush1.bf16.msra.mxu0 0
      %2433 = vmatprep.subr.bf16.mxu0 0
      %2434 = vmatpush1.bf16.msra.mxu0 0
      %2435 = vmatprep.mubr.bf16.mxu0 0
      %2436 = vmatmul.mubr.bf16.gmra.mrb[0].mxu0 %v2294
      %v2437 = vpop.f32.mrb[0].mxu0
      %v2438 = vadd.f32 %v2316, %v2437
      %v2439 = vpop.f32.mrb[0].mxu0
      %v2440 = vadd.f32 %v2320, %v2439
      %v2441 = vpop.f32.mrb[0].mxu0
      %v2442 = vpop.f32.mrb[0].mxu0
      %2443 = vdwg.mxu0
      %v2444 = vxor.u32 %v2440, 2147483648
      %v2445 = vmul.f32 %v2444, 1.442695
      %v2446 = vpow.pop %v2445
      %v2447 = vadd.f32 %v2446, 1.0
      %v2448 = vrcp.pop %v2447
      %v2449 = vmul.f32 1.0, %v2448
      %v2450 = vmul.f32 %v2438, %v2449
      %v2451 = vmul.f32 %v2450, %v2263
      %v2453 = vrot.slane %v2451, 5
      %vm2455 = vcmask 1042432
      %v2456 = vsel %vm2455, 0.0, %v2453
      %v2457 = vsel %vm2455, %v2453, 0.0
      %v2458 = vld [vmem:[%s39] sm:$0xff]
      %v2459 = vld [vmem:[%s41] sm:$0x1]
      %v2461 = vlaneseq
      %v2462 = vshrl.u32 %v2461, 7
      %v2463 = vsub.s32 0, %v2462
      %v2464 = vrot.slane %v2459, %v2463
      %v2466 = vadd.f32 %v2464, 0.0
      %v2467 = vlaneseq
      %v2468 = vshrl.u32 %v2467, 7
      %v2469 = vsub.s32 0, %v2468
      %v2470 = vrot.slane %v2458, %v2469
      %v2471 = vmul.f32 %v2456, %v2470
      %v2472 = vadd.f32 %v2466, %v2471
      %v2473 = vlaneseq
      %v2474 = vshrl.u32 %v2473, 7
      %v2475 = vsub.s32 1, %v2474
      %v2476 = vrot.slane %v2458, %v2475
      %v2477 = vmul.f32 %v2456, %v2476
      %v2478 = vmul.f32 %v2457, %v2476
      %vm2481 = vcmask 1046528
      %v2482 = vrot.slane %v2477, 1
      %v2483 = vrot.slane %v2478, 1
      %v2484 = vsel %vm2481, %v2482, %v2483
      %v2486 = vadd.f32 %v2472, %v2484
      %v2487 = vlaneseq
      %v2488 = vshrl.u32 %v2487, 7
      %v2489 = vsub.s32 2, %v2488
      %v2490 = vrot.slane %v2458, %v2489
      %v2491 = vmul.f32 %v2456, %v2490
      %v2492 = vmul.f32 %v2457, %v2490
      %vm2495 = vcmask 1045504
      %v2496 = vrot.slane %v2491, 2
      %v2497 = vrot.slane %v2492, 2
      %v2498 = vsel %vm2495, %v2496, %v2497
      %v2500 = vadd.f32 %v2486, %v2498
      %v2501 = vlaneseq
      %v2502 = vshrl.u32 %v2501, 7
      %v2503 = vsub.s32 3, %v2502
      %v2504 = vrot.slane %v2458, %v2503
      %v2505 = vmul.f32 %v2456, %v2504
      %v2506 = vmul.f32 %v2457, %v2504
      %vm2509 = vcmask 1044480
      %v2510 = vrot.slane %v2505, 3
      %v2511 = vrot.slane %v2506, 3
      %v2512 = vsel %vm2509, %v2510, %v2511
      %v2514 = vadd.f32 %v2500, %v2512
      %v2515 = vlaneseq
      %v2516 = vshrl.u32 %v2515, 7
      %v2517 = vsub.s32 4, %v2516
      %v2518 = vrot.slane %v2458, %v2517
      %v2519 = vmul.f32 %v2456, %v2518
      %v2520 = vmul.f32 %v2457, %v2518
      %v2523 = vrot.slane %v2519, 4
      %v2524 = vrot.slane %v2520, 4
      %v2525 = vsel %vm1840, %v2523, %v2524
      %v2527 = vadd.f32 %v2514, %v2525
      %v2528 = vlaneseq
      %v2529 = vshrl.u32 %v2528, 7
      %v2530 = vsub.s32 5, %v2529
      %v2531 = vrot.slane %v2458, %v2530
      %v2532 = vmul.f32 %v2456, %v2531
      %v2533 = vmul.f32 %v2457, %v2531
      %v2536 = vrot.slane %v2532, 5
      %v2537 = vrot.slane %v2533, 5
      %v2538 = vsel %vm2455, %v2536, %v2537
      %v2540 = vadd.f32 %v2527, %v2538
      %v2541 = vlaneseq
      %v2542 = vshrl.u32 %v2541, 7
      %v2543 = vsub.s32 6, %v2542
      %v2544 = vrot.slane %v2458, %v2543
      %v2545 = vmul.f32 %v2456, %v2544
      %v2546 = vmul.f32 %v2457, %v2544
      %vm2549 = vcmask 1041408
      %v2550 = vrot.slane %v2545, 6
      %v2551 = vrot.slane %v2546, 6
      %v2552 = vsel %vm2549, %v2550, %v2551
      %v2554 = vadd.f32 %v2540, %v2552
      %2555 = vadd.xlane.f32.xlu0 %v2554
      %v2556 = vpop.xlane.xlu0 %2555
      %v2557 = vmul.f32 %v2556, %v1047
      %v2558 = vsub.f32 %v2554, %v2557
      %v2559 = vmul.f32 %v2558, %v2558
      %2560 = vadd.xlane.f32.xlu0 %v2559
      %v2561 = vpop.xlane.xlu0 %2560
      %v2562 = vmul.f32 %v2561, %v1047
      %v2563 = vadd.f32 %v2562, 1e-05
      %v2564 = vrsqrt.pop %v2563
      %v2565 = vmul.f32 %v2558, %v2564
      %v2566 = vld [vmem:[%s43] sm:$0x1]
      %v2568 = vlaneseq
      %v2569 = vshrl.u32 %v2568, 7
      %v2570 = vsub.s32 0, %v2569
      %v2571 = vrot.slane %v2566, %v2570
      %v2573 = vmul.f32 %v2565, %v2571
      %v2574 = vld [vmem:[%s45] sm:$0x1]
      %v2576 = vlaneseq
      %v2577 = vshrl.u32 %v2576, 7
      %v2578 = vsub.s32 0, %v2577
      %v2579 = vrot.slane %v2574, %v2578
      %v2581 = vadd.f32 %v2573, %v2579
      %v2582 = vxor.u32 %v2581, 2147483648
      %v2583 = vmul.f32 %v2582, 1.442695
      %v2584 = vpow.pop %v2583
      %v2585 = vadd.f32 %v2584, 1.0
      %v2586 = vrcp.pop %v2585
      %v2587 = vmul.f32 1.0, %v2586
      %v2588 = vmul.f32 %v2581, %v2587
      %v2589 = vpack.c.bf16 %v2588, %v2588
      %v2590 = vld [vmem:[%s47] sm:$0xf]
      %v2591 = vld [vmem:[%s47 + $0x4] sm:$0xf]
      %v2592 = vld [vmem:[%s47 + $0x8] sm:$0xf]
      %v2593 = vld [vmem:[%s47 + $0xc] sm:$0xf]
      %v2594 = vld [vmem:[%s47 + $0x10] sm:$0xf]
      %v2595 = vld [vmem:[%s47 + $0x14] sm:$0xf]
      %v2596 = vld [vmem:[%s47 + $0x18] sm:$0xf]
      %v2597 = vld [vmem:[%s47 + $0x1c] sm:$0xf]
      %v2598 = vld [vmem:[%s47 + $0x20] sm:$0xf]
      %v2599 = vld [vmem:[%s47 + $0x24] sm:$0xf]
      %v2600 = vld [vmem:[%s47 + $0x28] sm:$0xf]
      %v2601 = vld [vmem:[%s47 + $0x2c] sm:$0xf]
      %v2602 = vld [vmem:[%s47 + $0x30] sm:$0xf]
      %v2603 = vld [vmem:[%s47 + $0x34] sm:$0xf]
      %v2604 = vld [vmem:[%s47 + $0x38] sm:$0xf]
      %v2605 = vld [vmem:[%s47 + $0x3c] sm:$0xf]
      %v2606 = vld [vmem:[%s49] sm:$0x1]
      %v2608 = vlaneseq
      %v2609 = vshrl.u32 %v2608, 7
      %v2610 = vsub.s32 0, %v2609
      %v2611 = vrot.slane %v2606, %v2610
      %v2629 = vunpack.c.l.b16 %v2590
      %v2630 = vunpack.c.l.b16 %v2591
      %v2631 = vunpack.c.l.b16 %v2592
      %v2632 = vunpack.c.l.b16 %v2593
      %v2633 = vunpack.c.l.b16 %v2594
      %v2634 = vunpack.c.l.b16 %v2595
      %v2635 = vunpack.c.l.b16 %v2596
      %v2636 = vunpack.c.l.b16 %v2597
      %v2637 = vunpack.c.l.b16 %v2598
      %v2638 = vunpack.c.l.b16 %v2599
      %v2639 = vunpack.c.l.b16 %v2600
      %v2640 = vunpack.c.l.b16 %v2601
      %v2641 = vunpack.c.l.b16 %v2602
      %v2642 = vunpack.c.l.b16 %v2603
      %v2643 = vunpack.c.l.b16 %v2604
      %v2644 = vunpack.c.l.b16 %v2605
      %v2645 = vpack.c.b16 %v2630, %v2629
      %v2646 = vpack.c.b16 %v2632, %v2631
      %v2647 = vpack.c.b16 %v2634, %v2633
      %v2648 = vpack.c.b16 %v2636, %v2635
      %v2649 = vpack.c.b16 %v2638, %v2637
      %v2650 = vpack.c.b16 %v2640, %v2639
      %v2651 = vpack.c.b16 %v2642, %v2641
      %v2652 = vpack.c.b16 %v2644, %v2643
      %2661 = vmatprep.subr.bf16.mxu0 0
      %2662 = vmatpush1.bf16.msra.mxu0 %v2645
      %2663 = vmatprep.subr.bf16.mxu0 0
      %2664 = vmatpush1.bf16.msra.mxu0 %v2646
      %2665 = vmatprep.subr.bf16.mxu0 0
      %2666 = vmatpush1.bf16.msra.mxu0 %v2647
      %2667 = vmatprep.subr.bf16.mxu0 0
      %2668 = vmatpush1.bf16.msra.mxu0 %v2648
      %2669 = vmatprep.subr.bf16.mxu0 0
      %2670 = vmatpush1.bf16.msra.mxu0 %v2649
      %2671 = vmatprep.subr.bf16.mxu0 0
      %2672 = vmatpush1.bf16.msra.mxu0 %v2650
      %2673 = vmatprep.subr.bf16.mxu0 0
      %2674 = vmatpush1.bf16.msra.mxu0 %v2651
      %2675 = vmatprep.subr.bf16.mxu0 0
      %2676 = vmatpush1.bf16.msra.mxu0 %v2652
      %2677 = vmatprep.subr.bf16.mxu0 0
      %2678 = vmatpush1.bf16.msra.mxu0 0
      %2679 = vmatprep.subr.bf16.mxu0 0
      %2680 = vmatpush1.bf16.msra.mxu0 0
      %2681 = vmatprep.subr.bf16.mxu0 0
      %2682 = vmatpush1.bf16.msra.mxu0 0
      %2683 = vmatprep.subr.bf16.mxu0 0
      %2684 = vmatpush1.bf16.msra.mxu0 0
      %2685 = vmatprep.subr.bf16.mxu0 0
      %2686 = vmatpush1.bf16.msra.mxu0 0
      %2687 = vmatprep.subr.bf16.mxu0 0
      %2688 = vmatpush1.bf16.msra.mxu0 0
      %2689 = vmatprep.subr.bf16.mxu0 0
      %2690 = vmatpush1.bf16.msra.mxu0 0
      %2691 = vmatprep.subr.bf16.mxu0 0
      %2692 = vmatpush1.bf16.msra.mxu0 0
      %2693 = vmatprep.mubr.bf16.mxu0 0
      %2694 = vmatmul.mubr.bf16.gmra.mrb[0].mxu0 %v2589
      %v2695 = vpop.f32.mrb[0].mxu0
      %v2696 = vadd.f32 %v2611, %v2695
      %v2697 = vpop.f32.mrb[0].mxu0
      %v2698 = vpop.f32.mrb[0].mxu0
      %v2699 = vpop.f32.mrb[0].mxu0
      %2700 = vdwg.mxu0
      %v2701 = vadd.f32 %v2266, %v2696
      %2702 = vadd.xlane.f32.xlu0 %v2701
      %v2703 = vpop.xlane.xlu0 %2702
      %v2704 = vmul.f32 %v2703, %v1047
      %v2705 = vsub.f32 %v2701, %v2704
      %v2706 = vmul.f32 %v2705, %v2705
      %2707 = vadd.xlane.f32.xlu0 %v2706
      %v2708 = vpop.xlane.xlu0 %2707
      %v2709 = vmul.f32 %v2708, %v1047
      %v2710 = vadd.f32 %v2709, 1e-05
      %v2711 = vrsqrt.pop %v2710
      %v2712 = vmul.f32 %v2705, %v2711
      %v2713 = vld [vmem:[%s51] sm:$0x1]
      %v2715 = vlaneseq
      %v2716 = vshrl.u32 %v2715, 7
      %v2717 = vsub.s32 0, %v2716
      %v2718 = vrot.slane %v2713, %v2717
      %v2720 = vmul.f32 %v2712, %v2718
      %v2721 = vld [vmem:[%s53] sm:$0x1]
      %v2723 = vlaneseq
      %v2724 = vshrl.u32 %v2723, 7
      %v2725 = vsub.s32 0, %v2724
      %v2726 = vrot.slane %v2721, %v2725
      %v2728 = vadd.f32 %v2720, %v2726
      %v2729 = vpack.c.bf16 %v2728, %v2728
      %v2730 = vld [vmem:[%s55] sm:$0xff]
      %v2731 = vld [vmem:[%s55 + $0x8] sm:$0xff]
      %v2732 = vld [vmem:[%s55 + $0x10] sm:$0xff]
      %v2733 = vld [vmem:[%s55 + $0x18] sm:$0xff]
      %v2734 = vld [vmem:[%s55 + $0x20] sm:$0xff]
      %v2735 = vld [vmem:[%s55 + $0x28] sm:$0xff]
      %v2736 = vld [vmem:[%s55 + $0x30] sm:$0xff]
      %v2737 = vld [vmem:[%s55 + $0x38] sm:$0xff]
      %v2738 = vld [vmem:[%s55 + $0x40] sm:$0xff]
      %v2739 = vld [vmem:[%s55 + $0x48] sm:$0xff]
      %v2740 = vld [vmem:[%s55 + $0x50] sm:$0xff]
      %v2741 = vld [vmem:[%s55 + $0x58] sm:$0xff]
      %v2742 = vld [vmem:[%s55 + $0x60] sm:$0xff]
      %v2743 = vld [vmem:[%s55 + $0x68] sm:$0xff]
      %v2744 = vld [vmem:[%s55 + $0x70] sm:$0xff]
      %v2745 = vld [vmem:[%s55 + $0x78] sm:$0xff]
      %v2746 = vld [vmem:[%s57] sm:$0x3]
      %v2748 = vlaneseq
      %v2749 = vshrl.u32 %v2748, 7
      %v2750 = vsub.s32 0, %v2749
      %v2751 = vrot.slane %v2746, %v2750
      %v2752 = vlaneseq
      %v2753 = vshrl.u32 %v2752, 7
      %v2754 = vsub.s32 1, %v2753
      %v2755 = vrot.slane %v2746, %v2754
      %v2774 = vunpack.c.l.b16 %v2730
      %v2775 = vunpack.c.h.b16 %v2730
      %v2776 = vunpack.c.l.b16 %v2731
      %v2777 = vunpack.c.h.b16 %v2731
      %v2778 = vunpack.c.l.b16 %v2732
      %v2779 = vunpack.c.h.b16 %v2732
      %v2780 = vunpack.c.l.b16 %v2733
      %v2781 = vunpack.c.h.b16 %v2733
      %v2782 = vunpack.c.l.b16 %v2734
      %v2783 = vunpack.c.h.b16 %v2734
      %v2784 = vunpack.c.l.b16 %v2735
      %v2785 = vunpack.c.h.b16 %v2735
      %v2786 = vunpack.c.l.b16 %v2736
      %v2787 = vunpack.c.h.b16 %v2736
      %v2788 = vunpack.c.l.b16 %v2737
      %v2789 = vunpack.c.h.b16 %v2737
      %v2790 = vunpack.c.l.b16 %v2738
      %v2791 = vunpack.c.h.b16 %v2738
      %v2792 = vunpack.c.l.b16 %v2739
      %v2793 = vunpack.c.h.b16 %v2739
      %v2794 = vunpack.c.l.b16 %v2740
      %v2795 = vunpack.c.h.b16 %v2740
      %v2796 = vunpack.c.l.b16 %v2741
      %v2797 = vunpack.c.h.b16 %v2741
      %v2798 = vunpack.c.l.b16 %v2742
      %v2799 = vunpack.c.h.b16 %v2742
      %v2800 = vunpack.c.l.b16 %v2743
      %v2801 = vunpack.c.h.b16 %v2743
      %v2802 = vunpack.c.l.b16 %v2744
      %v2803 = vunpack.c.h.b16 %v2744
      %v2804 = vunpack.c.l.b16 %v2745
      %v2805 = vunpack.c.h.b16 %v2745
      %v2806 = vpack.c.b16 %v2776, %v2774
      %v2807 = vpack.c.b16 %v2777, %v2775
      %v2808 = vpack.c.b16 %v2780, %v2778
      %v2809 = vpack.c.b16 %v2781, %v2779
      %v2810 = vpack.c.b16 %v2784, %v2782
      %v2811 = vpack.c.b16 %v2785, %v2783
      %v2812 = vpack.c.b16 %v2788, %v2786
      %v2813 = vpack.c.b16 %v2789, %v2787
      %v2814 = vpack.c.b16 %v2792, %v2790
      %v2815 = vpack.c.b16 %v2793, %v2791
      %v2816 = vpack.c.b16 %v2796, %v2794
      %v2817 = vpack.c.b16 %v2797, %v2795
      %v2818 = vpack.c.b16 %v2800, %v2798
      %v2819 = vpack.c.b16 %v2801, %v2799
      %v2820 = vpack.c.b16 %v2804, %v2802
      %v2821 = vpack.c.b16 %v2805, %v2803
      %2838 = vmatprep.subr.bf16.mxu0 %v2807
      %2839 = vmatpush1.bf16.msra.mxu0 %v2806
      %2840 = vmatprep.subr.bf16.mxu0 %v2809
      %2841 = vmatpush1.bf16.msra.mxu0 %v2808
      %2842 = vmatprep.subr.bf16.mxu0 %v2811
      %2843 = vmatpush1.bf16.msra.mxu0 %v2810
      %2844 = vmatprep.subr.bf16.mxu0 %v2813
      %2845 = vmatpush1.bf16.msra.mxu0 %v2812
      %2846 = vmatprep.subr.bf16.mxu0 %v2815
      %2847 = vmatpush1.bf16.msra.mxu0 %v2814
      %2848 = vmatprep.subr.bf16.mxu0 %v2817
      %2849 = vmatpush1.bf16.msra.mxu0 %v2816
      %2850 = vmatprep.subr.bf16.mxu0 %v2819
      %2851 = vmatpush1.bf16.msra.mxu0 %v2818
      %2852 = vmatprep.subr.bf16.mxu0 %v2821
      %2853 = vmatpush1.bf16.msra.mxu0 %v2820
      %2854 = vmatprep.subr.bf16.mxu0 0
      %2855 = vmatpush1.bf16.msra.mxu0 0
      %2856 = vmatprep.subr.bf16.mxu0 0
      %2857 = vmatpush1.bf16.msra.mxu0 0
      %2858 = vmatprep.subr.bf16.mxu0 0
      %2859 = vmatpush1.bf16.msra.mxu0 0
      %2860 = vmatprep.subr.bf16.mxu0 0
      %2861 = vmatpush1.bf16.msra.mxu0 0
      %2862 = vmatprep.subr.bf16.mxu0 0
      %2863 = vmatpush1.bf16.msra.mxu0 0
      %2864 = vmatprep.subr.bf16.mxu0 0
      %2865 = vmatpush1.bf16.msra.mxu0 0
      %2866 = vmatprep.subr.bf16.mxu0 0
      %2867 = vmatpush1.bf16.msra.mxu0 0
      %2868 = vmatprep.subr.bf16.mxu0 0
      %2869 = vmatpush1.bf16.msra.mxu0 0
      %2870 = vmatprep.mubr.bf16.mxu0 0
      %2871 = vmatmul.mubr.bf16.gmra.mrb[0].mxu0 %v2729
      %v2872 = vpop.f32.mrb[0].mxu0
      %v2873 = vadd.f32 %v2751, %v2872
      %v2874 = vpop.f32.mrb[0].mxu0
      %v2875 = vadd.f32 %v2755, %v2874
      %v2876 = vpop.f32.mrb[0].mxu0
      %v2877 = vpop.f32.mrb[0].mxu0
      %2878 = vdwg.mxu0
      %v2879 = vxor.u32 %v2873, 2147483648
      %v2880 = vxor.u32 %v2875, 2147483648
      %v2881 = vmul.f32 %v2879, 1.442695
      %v2882 = vpow.pop %v2881
      %v2883 = vmul.f32 %v2880, 1.442695
      %v2884 = vpow.pop %v2883
      %v2885 = vadd.f32 %v2882, 1.0
      %v2886 = vadd.f32 %v2884, 1.0
      %v2887 = vrcp.pop %v2885
      %v2888 = vmul.f32 1.0, %v2887
      %v2889 = vrcp.pop %v2886
      %v2890 = vmul.f32 1.0, %v2889
      %v2891 = vmul.f32 %v2873, %v2888
      %v2892 = vmul.f32 %v2875, %v2890
      %v2893 = vpack.c.bf16 %v2891, %v2891
      %v2894 = vpack.c.bf16 %v2892, %v2892
      %v2895 = vld [vmem:[%s59] sm:$0xf]
      %v2896 = vld [vmem:[%s59 + $0x4] sm:$0xf]
      %v2897 = vld [vmem:[%s59 + $0x8] sm:$0xf]
      %v2898 = vld [vmem:[%s59 + $0xc] sm:$0xf]
      %v2899 = vld [vmem:[%s59 + $0x10] sm:$0xf]
      %v2900 = vld [vmem:[%s59 + $0x14] sm:$0xf]
      %v2901 = vld [vmem:[%s59 + $0x18] sm:$0xf]
      %v2902 = vld [vmem:[%s59 + $0x1c] sm:$0xf]
      %v2903 = vld [vmem:[%s59 + $0x20] sm:$0xf]
      %v2904 = vld [vmem:[%s59 + $0x24] sm:$0xf]
      %v2905 = vld [vmem:[%s59 + $0x28] sm:$0xf]
      %v2906 = vld [vmem:[%s59 + $0x2c] sm:$0xf]
      %v2907 = vld [vmem:[%s59 + $0x30] sm:$0xf]
      %v2908 = vld [vmem:[%s59 + $0x34] sm:$0xf]
      %v2909 = vld [vmem:[%s59 + $0x38] sm:$0xf]
      %v2910 = vld [vmem:[%s59 + $0x3c] sm:$0xf]
      %v2911 = vld [vmem:[%s59 + $0x40] sm:$0xf]
      %v2912 = vld [vmem:[%s59 + $0x44] sm:$0xf]
      %v2913 = vld [vmem:[%s59 + $0x48] sm:$0xf]
      %v2914 = vld [vmem:[%s59 + $0x4c] sm:$0xf]
      %v2915 = vld [vmem:[%s59 + $0x50] sm:$0xf]
      %v2916 = vld [vmem:[%s59 + $0x54] sm:$0xf]
      %v2917 = vld [vmem:[%s59 + $0x58] sm:$0xf]
      %v2918 = vld [vmem:[%s59 + $0x5c] sm:$0xf]
      %v2919 = vld [vmem:[%s59 + $0x60] sm:$0xf]
      %v2920 = vld [vmem:[%s59 + $0x64] sm:$0xf]
      %v2921 = vld [vmem:[%s59 + $0x68] sm:$0xf]
      %v2922 = vld [vmem:[%s59 + $0x6c] sm:$0xf]
      %v2923 = vld [vmem:[%s59 + $0x70] sm:$0xf]
      %v2924 = vld [vmem:[%s59 + $0x74] sm:$0xf]
      %v2925 = vld [vmem:[%s59 + $0x78] sm:$0xf]
      %v2926 = vld [vmem:[%s59 + $0x7c] sm:$0xf]
      %v2927 = vld [vmem:[%s61] sm:$0x1]
      %v2929 = vlaneseq
      %v2930 = vshrl.u32 %v2929, 7
      %v2931 = vsub.s32 0, %v2930
      %v2932 = vrot.slane %v2927, %v2931
      %v2966 = vunpack.c.l.b16 %v2895
      %v2967 = vunpack.c.l.b16 %v2896
      %v2968 = vunpack.c.l.b16 %v2897
      %v2969 = vunpack.c.l.b16 %v2898
      %v2970 = vunpack.c.l.b16 %v2899
      %v2971 = vunpack.c.l.b16 %v2900
      %v2972 = vunpack.c.l.b16 %v2901
      %v2973 = vunpack.c.l.b16 %v2902
      %v2974 = vunpack.c.l.b16 %v2903
      %v2975 = vunpack.c.l.b16 %v2904
      %v2976 = vunpack.c.l.b16 %v2905
      %v2977 = vunpack.c.l.b16 %v2906
      %v2978 = vunpack.c.l.b16 %v2907
      %v2979 = vunpack.c.l.b16 %v2908
      %v2980 = vunpack.c.l.b16 %v2909
      %v2981 = vunpack.c.l.b16 %v2910
      %v2982 = vunpack.c.l.b16 %v2911
      %v2983 = vunpack.c.l.b16 %v2912
      %v2984 = vunpack.c.l.b16 %v2913
      %v2985 = vunpack.c.l.b16 %v2914
      %v2986 = vunpack.c.l.b16 %v2915
      %v2987 = vunpack.c.l.b16 %v2916
      %v2988 = vunpack.c.l.b16 %v2917
      %v2989 = vunpack.c.l.b16 %v2918
      %v2990 = vunpack.c.l.b16 %v2919
      %v2991 = vunpack.c.l.b16 %v2920
      %v2992 = vunpack.c.l.b16 %v2921
      %v2993 = vunpack.c.l.b16 %v2922
      %v2994 = vunpack.c.l.b16 %v2923
      %v2995 = vunpack.c.l.b16 %v2924
      %v2996 = vunpack.c.l.b16 %v2925
      %v2997 = vunpack.c.l.b16 %v2926
      %v2998 = vpack.c.b16 %v2967, %v2966
      %v2999 = vpack.c.b16 %v2969, %v2968
      %v3000 = vpack.c.b16 %v2971, %v2970
      %v3001 = vpack.c.b16 %v2973, %v2972
      %v3002 = vpack.c.b16 %v2975, %v2974
      %v3003 = vpack.c.b16 %v2977, %v2976
      %v3004 = vpack.c.b16 %v2979, %v2978
      %v3005 = vpack.c.b16 %v2981, %v2980
      %v3006 = vpack.c.b16 %v2983, %v2982
      %v3007 = vpack.c.b16 %v2985, %v2984
      %v3008 = vpack.c.b16 %v2987, %v2986
      %v3009 = vpack.c.b16 %v2989, %v2988
      %v3010 = vpack.c.b16 %v2991, %v2990
      %v3011 = vpack.c.b16 %v2993, %v2992
      %v3012 = vpack.c.b16 %v2995, %v2994
      %v3013 = vpack.c.b16 %v2997, %v2996
      %3030 = vmatprep.subr.bf16.mxu0 0
      %3031 = vmatpush1.bf16.msra.mxu0 %v2998
      %3032 = vmatprep.subr.bf16.mxu0 0
      %3033 = vmatpush1.bf16.msra.mxu0 %v2999
      %3034 = vmatprep.subr.bf16.mxu0 0
      %3035 = vmatpush1.bf16.msra.mxu0 %v3000
      %3036 = vmatprep.subr.bf16.mxu0 0
      %3037 = vmatpush1.bf16.msra.mxu0 %v3001
      %3038 = vmatprep.subr.bf16.mxu0 0
      %3039 = vmatpush1.bf16.msra.mxu0 %v3002
      %3040 = vmatprep.subr.bf16.mxu0 0
      %3041 = vmatpush1.bf16.msra.mxu0 %v3003
      %3042 = vmatprep.subr.bf16.mxu0 0
      %3043 = vmatpush1.bf16.msra.mxu0 %v3004
      %3044 = vmatprep.subr.bf16.mxu0 0
      %3045 = vmatpush1.bf16.msra.mxu0 %v3005
      %3046 = vmatprep.subr.bf16.mxu0 0
      %3047 = vmatpush1.bf16.msra.mxu0 %v3006
      %3048 = vmatprep.subr.bf16.mxu0 0
      %3049 = vmatpush1.bf16.msra.mxu0 %v3007
      %3050 = vmatprep.subr.bf16.mxu0 0
      %3051 = vmatpush1.bf16.msra.mxu0 %v3008
      %3052 = vmatprep.subr.bf16.mxu0 0
      %3053 = vmatpush1.bf16.msra.mxu0 %v3009
      %3054 = vmatprep.subr.bf16.mxu0 0
      %3055 = vmatpush1.bf16.msra.mxu0 %v3010
      %3056 = vmatprep.subr.bf16.mxu0 0
      %3057 = vmatpush1.bf16.msra.mxu0 %v3011
      %3058 = vmatprep.subr.bf16.mxu0 0
      %3059 = vmatpush1.bf16.msra.mxu0 %v3012
      %3060 = vmatprep.subr.bf16.mxu0 0
      %3061 = vmatpush1.bf16.msra.mxu0 %v3013
      %3062 = vmatprep.mubr.bf16.mxu0 %v2894
      %3063 = vmatmul.mubr.bf16.gmra.mrb[0].mxu0 %v2893
      %v3064 = vpop.f32.mrb[0].mxu0
      %v3065 = vadd.f32 %v2932, %v3064
      %v3066 = vpop.f32.mrb[0].mxu0
      %v3067 = vpop.f32.mrb[0].mxu0
      %v3068 = vpop.f32.mrb[0].mxu0
      %3069 = vdwg.mxu0
      %v3070 = vmul.f32 %v3065, 0.5
      %v3071 = vadd.f32 %v2701, %v3070
      %3072 = vadd.xlane.f32.xlu0 %v3071
      %v3073 = vpop.xlane.xlu0 %3072
      %v3074 = vmul.f32 %v3073, %v1047
      %v3075 = vsub.f32 %v3071, %v3074
      %v3076 = vmul.f32 %v3075, %v3075
      %3077 = vadd.xlane.f32.xlu0 %v3076
      %v3078 = vpop.xlane.xlu0 %3077
      %v3079 = vmul.f32 %v3078, %v1047
      %v3080 = vadd.f32 %v3079, 1e-05
      %v3081 = vrsqrt.pop %v3080
      %v3082 = vmul.f32 %v3075, %v3081
      %v3083 = vld [vmem:[%s63] sm:$0x1]
      %v3085 = vlaneseq
      %v3086 = vshrl.u32 %v3085, 7
      %v3087 = vsub.s32 0, %v3086
      %v3088 = vrot.slane %v3083, %v3087
      %v3090 = vmul.f32 %v3082, %v3088
      %v3091 = vld [vmem:[%s65] sm:$0x1]
      %v3093 = vlaneseq
      %v3094 = vshrl.u32 %v3093, 7
      %v3095 = vsub.s32 0, %v3094
      %v3096 = vrot.slane %v3091, %v3095
      %v3098 = vadd.f32 %v3090, %v3096
      %3099 = vst [vmem:[%s1040] sm:$0xff] %v3098
      %p3100 = scmp.lt.s32.totalorder %s78, 1
      %s3101 = scalar_select %p3100, %s78, 1
      %s3102 = smul.addr %s3101, 8
      %s3103 = scalar_lea.vmem %s67, %s3102
      // Predicated region
      $region153: #{forward.8} parent=151 // pred_check
        %p3104 = pneg %p804
      $region154: #{forward.8} parent=151 // pred_check_branch
        %3106 = sbr.rel (%p3104) target = $region156
      $region155: #{forward.8} parent=151 // pred_region
        _
      $region156: #{forward.8} parent=151 // pred_fallthru
        _
    $region152: #{forward.8} parent=5 // pred_fallthru
      _
    %p3107 = scmp.le.s32.totalorder 2, %s73
    // Predicated region
    $region157: #{forward.8} parent=5 // pred_check
      %p3108 = pneg %p3107
    $region158: #{forward.8} parent=5 // pred_check_branch
      %3110 = sbr.rel (%p3108) target = $region160
    $region159: #{forward.8} parent=5 // pred_region
      %s3111 = ssub.s32 %s73, 2
      // Predicated region
      $region161: #{forward.8} parent=159 // pred_check
        %p3112 = pneg %p810
      $region162: #{forward.8} parent=159 // pred_check_branch
        %3114 = sbr.rel (%p3112) target = $region164
      $region163: #{forward.8} parent=159 // pred_region
        %p3115 = scmp.lt.s32.totalorder %s79, 1
        %s3116 = scalar_select %p3115, %s79, 1
        %s3117 = smul.addr %s3116, 8
        %s3118 = scalar_lea.vmem %s67, %s3117
      $region164: #{forward.8} parent=159 // pred_fallthru
        _
    $region160: #{forward.8} parent=5 // pred_fallthru
      _
  $region6: #{forward.8} parent=0 // loop_footer
    %s77 = sadd.s32 1, %s73
  $region7: #{forward.8} parent=0 // loop_footer_branch
    %72 = sbr.rel target = $region3
  $region8: #{forward.8} parent=0 // loop_exit
    _

</llo_original>
